<compile_context>
chip_gen: v7x
topology: tpu7x:2x2x1
jax: 0.10.0
libtpu: 0.0.40
codegen_flags: <defaults>
</compile_context>

<pallas_src>
import functools

import jax
import jax.numpy as jnp
from jax.experimental import pallas as pl
from jax.experimental.pallas import tpu as pltpu


CPAD = 128                       # lane-dense output-channel padding
MAX_TM = 2048                    # row-tile cap (v7x 64 MiB VMEM safe; v5e/v6e could go higher)
VMEM_LIMIT = 64 * 1024 * 1024    # scoped-VMEM ceiling for the larger row tiles


# ----------------------------- small helpers --------------------------------

def _round_up(x, m):
    return ((x + m - 1) // m) * m


def _tile_rows(m):
    """Row tile <= MAX_TM, multiple of 8; returns (tm, n_blocks, padded_rows)."""
    nb = max(1, -(-m // MAX_TM))
    tm = _round_up(-(-m // nb), 8)
    return tm, nb, tm * nb


def _pad_rows(a, rows):
    if a.shape[0] == rows:
        return a
    return jnp.pad(a, ((0, rows - a.shape[0]),) + ((0, 0),) * (a.ndim - 1))


# ----------------------------- Pallas kernels ------------------------------

def _conv_bn_stats_kernel(p_ref, w_ref, y_ref, st_ref):
    """y = patches @ w (bf16 -> f32 acc), emit per-block BN partial stats."""
    y = jnp.dot(p_ref[...], w_ref[...], preferred_element_type=jnp.float32)
    y_ref[...] = y.astype(y_ref.dtype)
    s = jnp.sum(y, axis=0, keepdims=True)
    q = jnp.sum(y * y, axis=0, keepdims=True)
    pad = jnp.zeros((6, y.shape[1]), jnp.float32)
    st_ref[...] = jnp.concatenate([s, q, pad], axis=0)[None]


def _conv_bn_stats_ds_kernel(p_ref, w_ref, i_ref, y_ref, st_ref):
    """As above, plus BN partial stats of the (strided) identity branch."""
    y = jnp.dot(p_ref[...], w_ref[...], preferred_element_type=jnp.float32)
    y_ref[...] = y.astype(y_ref.dtype)
    idn = i_ref[...].astype(jnp.float32)
    s = jnp.sum(y, axis=0, keepdims=True)
    q = jnp.sum(y * y, axis=0, keepdims=True)
    ds = jnp.sum(idn, axis=0, keepdims=True)
    dq = jnp.sum(idn * idn, axis=0, keepdims=True)
    pad = jnp.zeros((4, y.shape[1]), jnp.float32)
    st_ref[...] = jnp.concatenate([s, q, ds, dq, pad], axis=0)[None]


def _affine_relu_kernel(y_ref, s_ref, b_ref, o_ref):
    # relu(bn(y))
    y = y_ref[...].astype(jnp.float32)
    o_ref[...] = jnp.maximum(y * s_ref[...] + b_ref[...], 0.0).astype(o_ref.dtype)


def _affine_res_relu_kernel(y_ref, s_ref, b_ref, r_ref, o_ref):
    # relu(bn(y) + identity)
    y = y_ref[...].astype(jnp.float32)
    r = r_ref[...].astype(jnp.float32)
    o_ref[...] = jnp.maximum(y * s_ref[...] + b_ref[...] + r, 0.0).astype(o_ref.dtype)


def _affine_res_ds_relu_kernel(y_ref, s_ref, b_ref, i_ref, sd_ref, bd_ref, o_ref):
    # relu(bn2(y) + bn_d(avgpool-identity)); padded gamma/beta are zero so the
    # PyTorch zero-channel concat is implicit (no HBM zeros materialized).
    y = y_ref[...].astype(jnp.float32)
    idn = i_ref[...].astype(jnp.float32)
    o_ref[...] = jnp.maximum(
        y * s_ref[...] + b_ref[...] + idn * sd_ref[...] + bd_ref[...],
        0.0).astype(o_ref.dtype)


def _pool_fc_kernel(x_ref, w_ref, b_ref, o_ref):
    # x block: (tn, H*W, C) -> global average pool over axis 1, then FC + bias.
    pooled = jnp.mean(x_ref[...].astype(jnp.float32), axis=1)
    o_ref[...] = (jnp.dot(pooled, w_ref[...],
                          preferred_element_type=jnp.float32) + b_ref[...])


# ----------------------------- Pallas wrappers ------------------------------

def conv_matmul_stats(patches, wmat, idn=None):
    """(M, K)bf16 @ (K, CPAD)bf16 -> (Mp, CPAD)bf16 plus packed BN partials.

    Partial stats are packed per row-block into (nb, 8, CPAD) f32:
      row 0 = sum(y), row 1 = sum(y*y), rows 2/3 = identity sum / sumsq (ds).
    Zero-padded rows contribute 0 to all sums, so dividing by the true M in the
    glue is exact.  The grid is fully parallel (megacore-shardable)."""
    M, K = patches.shape
    Kw, C = wmat.shape
    assert K == Kw and C == CPAD, (patches.shape, wmat.shape)
    tm, nb, mp = _tile_rows(M)
    patches = _pad_rows(patches, mp)

    p_spec = pl.BlockSpec((tm, K), lambda i: (i, 0))
    w_spec = pl.BlockSpec((K, C), lambda i: (0, 0))
    row_spec = pl.BlockSpec((tm, C), lambda i: (i, 0))
    stat_spec = pl.BlockSpec((1, 8, C), lambda i: (i, 0, 0))
    y_shape = jax.ShapeDtypeStruct((mp, C), jnp.bfloat16)
    st_shape = jax.ShapeDtypeStruct((nb, 8, C), jnp.float32)
    cparams = pltpu.CompilerParams(dimension_semantics=("parallel",),
                                   vmem_limit_bytes=VMEM_LIMIT)

    if idn is None:
        return pl.pallas_call(
            _conv_bn_stats_kernel,
            grid=(nb,),
            in_specs=(p_spec, w_spec),
            out_specs=(row_spec, stat_spec),
            out_shape=(y_shape, st_shape),
            compiler_params=cparams,
        )(patches, wmat)

    idn = _pad_rows(idn, mp)
    return pl.pallas_call(
        _conv_bn_stats_ds_kernel,
        grid=(nb,),
        in_specs=(p_spec, w_spec, row_spec),
        out_specs=(row_spec, stat_spec),
        out_shape=(y_shape, st_shape),
        compiler_params=cparams,
    )(patches, wmat, idn)


def _fused_epilogue(kernel, args, row_flags):
    """Fused per-element epilogue, tiled over rows; bf16 output."""
    mp, C = args[0].shape
    tm, nb, mp2 = _tile_rows(mp)
    assert mp2 == mp and mp % tm == 0, (mp, tm)
    in_specs = tuple(
        pl.BlockSpec((tm, C), lambda i: (i, 0)) if rf
        else pl.BlockSpec((1, C), lambda i: (0, 0))
        for rf in row_flags)
    return pl.pallas_call(
        kernel,
        grid=(mp // tm,),
        in_specs=in_specs,
        out_specs=pl.BlockSpec((tm, C), lambda i: (i, 0)),
        out_shape=jax.ShapeDtypeStruct((mp, C), jnp.bfloat16),
        compiler_params=pltpu.CompilerParams(
            dimension_semantics=("parallel",),
            vmem_limit_bytes=VMEM_LIMIT),
    )(*args)


def affine_relu(y, s, b):
    return _fused_epilogue(_affine_relu_kernel, (y, s, b),
                           (True, False, False))


def affine_res_relu(y, s, b, r):
    return _fused_epilogue(_affine_res_relu_kernel, (y, s, b, r),
                           (True, False, False, True))


def affine_res_ds_relu(y, s, b, idn, sd, bd):
    return _fused_epilogue(_affine_res_ds_relu_kernel, (y, s, b, idn, sd, bd),
                           (True, False, False, True, False, False))


def pool_fc(x_nhwc, fc_w, fc_b):
    """Global average pool + FC, blocked over the batch dimension."""
    N, H, W, C = x_nhwc.shape
    HW = H * W
    x3 = x_nhwc.reshape(N, HW, C)
    tn = N if N <= 64 else 64
    Np = _round_up(N, tn)
    x3 = _pad_rows(x3, Np)
    out = pl.pallas_call(
        _pool_fc_kernel,
        grid=(Np // tn,),
        in_specs=(pl.BlockSpec((tn, HW, C), lambda i: (i, 0, 0)),
                  pl.BlockSpec((C, C), lambda i: (0, 0)),
                  pl.BlockSpec((1, C), lambda i: (0, 0))),
        out_specs=pl.BlockSpec((tn, C), lambda i: (i, 0)),
        out_shape=jax.ShapeDtypeStruct((Np, C), jnp.float32),
        compiler_params=pltpu.CompilerParams(
            dimension_semantics=("parallel",),
            vmem_limit_bytes=VMEM_LIMIT),
    )(x3, fc_w, fc_b)
    return out[:N]


# ----------------------------- glue ------------------------------------------

def _unpack_stat(st, row):
    """(nb, 8, C) packed partials -> (1, C) total for the given row slot."""
    return jnp.sum(st[:, row, :], axis=0, keepdims=True)


def bn_scale_shift(ssum, ssq, count, gamma, beta, eps=1e-5):
    """Train-mode BatchNorm scale/shift from per-channel sum / sum-of-squares.

    Biased variance (as torch uses for normalization in train mode); clamped
    at zero to guard against cancellation in E[x^2]-E[x]^2."""
    mean = ssum / count
    var = jnp.maximum(ssq / count - mean * mean, 0.0)
    scale = gamma / jnp.sqrt(var + eps)
    shift = beta - mean * scale
    return scale, shift


def im2col_3x3(x, cin, stride):
    """3x3 / padding=1 patch extraction using only the real `cin` channels.

    Output K = 9*cin zero-padded to the next multiple of 128 (bf16)."""
    N, H, W, _ = x.shape
    xr = x[..., :cin]
    xp = jnp.pad(xr, ((0, 0), (1, 1), (1, 1), (0, 0)))
    Ho = (H - 1) // stride + 1
    Wo = (W - 1) // stride + 1
    cols = [xp[:, kh:kh + (Ho - 1) * stride + 1:stride,
               kw:kw + (Wo - 1) * stride + 1:stride, :]
            for kh in range(3) for kw in range(3)]
    patches = jnp.concatenate(cols, axis=-1).reshape(N * Ho * Wo, 9 * cin)
    Kp = _round_up(9 * cin, 128)
    if Kp != 9 * cin:
        patches = jnp.pad(patches, ((0, 0), (0, Kp - 9 * cin)))
    return patches, (Ho, Wo)


# ----------------------------- parameters ------------------------------------

def _conv_w_raw(key, cin, cout):
    # kaiming_normal_(mode='fan_out', relu): std = sqrt(2/(cout*9))
    std = (2.0 / (cout * 9)) ** 0.5
    return jax.random.normal(key, (3, 3, cin, cout), jnp.float32) * std


def _pad_conv_w(w):
    """(3,3,cin,cout) -> (round_up(9*cin,128), CPAD) bf16 weight matrix."""
    _, _, cin, cout = w.shape
    K = 9 * cin
    Kp = _round_up(K, 128)
    wm = w.reshape(K, cout)
    wm = jnp.pad(wm, ((0, Kp - K), (0, CPAD - cout)))
    return wm.astype(jnp.bfloat16)


def _bn_params(c_real, gamma_val):
    g = jnp.zeros((1, CPAD), jnp.float32).at[0, :c_real].set(gamma_val)
    b = jnp.zeros((1, CPAD), jnp.float32)
    return g, b


def _block_params(key, inplanes, planes, has_downsample):
    k1, k2 = jax.random.split(key)
    g1, b1 = _bn_params(planes, 1.0)
    g2, b2 = _bn_params(planes, 0.0)          # bn2.weight init'd to 0 in module
    p = dict(w1=_pad_conv_w(_conv_w_raw(k1, inplanes, planes)), g1=g1, b1=b1,
             w2=_pad_conv_w(_conv_w_raw(k2, planes, planes)), g2=g2, b2=b2)
    if has_downsample:
        p['gd'], p['bd'] = _bn_params(inplanes, 1.0)
    return p


def init_resnet_params(key, layers=(1, 1, 1), num_classes=10):
    nblocks = sum(layers)
    keys = jax.random.split(key, 2 + nblocks)
    g1, b1 = _bn_params(16, 1.0)
    # nn.Linear(64, num_classes), kaiming fan_out: std = sqrt(2/num_classes)
    fc_raw = (jax.random.normal(keys[1], (64, num_classes), jnp.float32)
              * (2.0 / num_classes) ** 0.5)
    fc_w = jnp.zeros((CPAD, CPAD), jnp.float32).at[:64, :num_classes].set(fc_raw)
    fc_b = jnp.zeros((1, CPAD), jnp.float32)
    params = dict(conv1=_pad_conv_w(_conv_w_raw(keys[0], 3, 16)),
                  g1=g1, b1=b1, fc_w=fc_w, fc_b=fc_b)
    blocks, cfg = [], []
    inplanes, ki = 16, 2
    for planes, n, stride in zip((16, 32, 64), layers, (1, 2, 2)):
        for b in range(n):
            s = stride if b == 0 else 1
            ds = (s != 1)
            blocks.append(_block_params(keys[ki], inplanes, planes, ds))
            cfg.append((inplanes, planes, s, ds))
            inplanes = planes
            ki += 1
    params['blocks'] = blocks
    return params, tuple(cfg)


# ----------------------------- forward ---------------------------------------

def conv_bn_relu(x, w, gamma, beta, cin, stride):
    """conv3x3 -> train-mode BN -> ReLU; returns (N, Ho, Wo, CPAD) bf16."""
    N = x.shape[0]
    patches, (Ho, Wo) = im2col_3x3(x, cin, stride)
    M = N * Ho * Wo
    y, st = conv_matmul_stats(patches, w)
    s, b = bn_scale_shift(_unpack_stat(st, 0), _unpack_stat(st, 1), M, gamma, beta)
    h = affine_relu(y, s, b)
    return h[:M].reshape(N, Ho, Wo, CPAD)


def basic_block_fwd(x, p, inplanes, planes, stride, has_ds):
    N, H, W, C = x.shape                       # C == CPAD
    # conv1 -> bn1 -> relu
    h1 = conv_bn_relu(x, p['w1'], p['g1'], p['b1'], inplanes, stride)
    _, Ho, Wo, _ = h1.shape
    M = N * Ho * Wo

    patches2, _ = im2col_3x3(h1, planes, 1)

    if has_ds:
        # downsample = AvgPool2d(1, stride) -> strided subsample (bf16); its BN
        # stats are reduced inside the conv2 kernel, and the zero-channel
        # concat is implicit via zero-padded gamma/beta.
        idn = x[:, ::stride, ::stride, :].reshape(M, C)
        y2, st2 = conv_matmul_stats(patches2, p['w2'], idn)
        s2, b2 = bn_scale_shift(_unpack_stat(st2, 0), _unpack_stat(st2, 1),
                                M, p['g2'], p['b2'])
        sd, bd = bn_scale_shift(_unpack_stat(st2, 2), _unpack_stat(st2, 3),
                                M, p['gd'], p['bd'])
        out = affine_res_ds_relu(y2, s2, b2, _pad_rows(idn, y2.shape[0]), sd, bd)
    else:
        y2, st2 = conv_matmul_stats(patches2, p['w2'])
        s2, b2 = bn_scale_shift(_unpack_stat(st2, 0), _unpack_stat(st2, 1),
                                M, p['g2'], p['b2'])
        r = _pad_rows(x.reshape(M, C), y2.shape[0])
        out = affine_res_relu(y2, s2, b2, r)

    return out[:M].reshape(N, Ho, Wo, CPAD)


def resnet_forward(params, x_nchw, cfg, num_classes=10):
    x = jnp.transpose(x_nchw, (0, 2, 3, 1)).astype(jnp.bfloat16)   # NCHW -> NHWC

    # stem: conv1 -> bn1 -> relu (real cin=3, K padded 27 -> 128)
    x = conv_bn_relu(x, params['conv1'], params['g1'], params['b1'], 3, 1)

    for p, (inplanes, planes, stride, ds) in zip(params['blocks'], cfg):
        x = basic_block_fwd(x, p, inplanes, planes, stride, ds)

    # global average pool + fc in one blocked kernel (padded to 128 classes).
    logits_pad = pool_fc(x, params['fc_w'], params['fc_b'])
    return logits_pad[:, :num_classes]


# ----------------------------- main -------------------------------------------

if __name__ == "__main__":
    key = jax.random.PRNGKey(0)
    pkey, xkey = jax.random.split(key)

    params, cfg = init_resnet_params(pkey, layers=(1, 1, 1), num_classes=10)

    # Small input consistent with the module: NCHW, 3 input channels.
    x = jax.random.normal(xkey, (2, 3, 16, 16), jnp.float32)

    fwd = jax.jit(functools.partial(resnet_forward, cfg=cfg, num_classes=10))
    logits = jax.block_until_ready(fwd(params, x))

    assert logits.shape == (2, 10), logits.shape
    assert bool(jnp.all(jnp.isfinite(logits)))
    print("KERNEL_OK")
</pallas_src>

<mosaic_0001>
module attributes {stable_mosaic.version = 11 : i64} {
  func.func @_conv_bn_stats_kernel(%arg0: i32, %arg1: memref<512x128xbf16, #tpu.memory_space<vmem>>, %arg2: memref<128x128xbf16, #tpu.memory_space<vmem>>, %arg3: memref<512x128xbf16, #tpu.memory_space<vmem>>, %arg4: memref<1x8x128xf32, #tpu.memory_space<vmem>>) attributes {dimension_semantics = [#tpu.dimension_semantics<parallel>], iteration_bounds = array<i64: 1>, scalar_prefetch = 0 : i64, scratch_operands = 0 : i64, tpu.core_type = #tpu.core_type<tc>, window_params = [{transform_indices = @transform_0, window_bounds = array<i64: 512, 128>}, {pipeline_mode = #tpu.pipeline_mode<synchronous>, transform_indices = @transform_1, window_bounds = array<i64: 128, 128>}, {transform_indices = @transform_2, window_bounds = array<i64: 512, 128>}, {transform_indices = @transform_3, window_bounds = array<i64: 1, 8, 128>}]} {
    %c0 = arith.constant 0 : index
    %c0_0 = arith.constant 0 : index
    %0 = vector.load %arg1[%c0, %c0_0] : memref<512x128xbf16, #tpu.memory_space<vmem>>, vector<512x128xbf16>
    %c0_1 = arith.constant 0 : index
    %c0_2 = arith.constant 0 : index
    %1 = vector.load %arg2[%c0_1, %c0_2] : memref<128x128xbf16, #tpu.memory_space<vmem>>, vector<128x128xbf16>
    %cst = arith.constant dense<0.000000e+00> : vector<512x128xf32>
    %2 = tpu.matmul %0, %1, %cst {dimension_numbers = #tpu.dot_dimension_numbers<[1], [0], [0], [1], [0, 0, 1, 1], [], []>} : vector<512x128xbf16>, vector<128x128xbf16>, vector<512x128xf32> -> vector<512x128xf32>
    %3 = arith.truncf %2 : vector<512x128xf32> to vector<512x128xbf16>
    %c0_3 = arith.constant 0 : index
    %c0_4 = arith.constant 0 : index
    %4 = vector.load %arg3[%c0_3, %c0_4] : memref<512x128xbf16, #tpu.memory_space<vmem>>, vector<512x128xbf16>
    tpu.vector_store %arg3[%c0_3, %c0_4], %3 {strides = array<i32>} : memref<512x128xbf16, #tpu.memory_space<vmem>>, vector<512x128xbf16>,
    %cst_5 = arith.constant dense<0.000000e+00> : vector<128xf32>
    %5 = vector.multi_reduction <add>, %2, %cst_5 [0] : vector<512x128xf32> to vector<128xf32>
    %6 = vector.shape_cast %5 : vector<128xf32> to vector<1x128xf32>
    %7 = arith.mulf %2, %2 : vector<512x128xf32>
    %cst_6 = arith.constant dense<0.000000e+00> : vector<128xf32>
    %8 = vector.multi_reduction <add>, %7, %cst_6 [0] : vector<512x128xf32> to vector<128xf32>
    %9 = vector.shape_cast %8 : vector<128xf32> to vector<1x128xf32>
    %cst_7 = arith.constant 0.000000e+00 : f32
    %10 = vector.broadcast %cst_7 : f32 to vector<6x128xf32>
    %11 = tpu.concatenate %6, %9, %10 in 0 : vector<1x128xf32>, vector<1x128xf32>, vector<6x128xf32> -> vector<8x128xf32>
    %12 = vector.shape_cast %11 : vector<8x128xf32> to vector<1x8x128xf32>
    %c0_8 = arith.constant 0 : index
    %c0_9 = arith.constant 0 : index
    %c0_10 = arith.constant 0 : index
    %13 = vector.load %arg4[%c0_8, %c0_9, %c0_10] : memref<1x8x128xf32, #tpu.memory_space<vmem>>, vector<1x8x128xf32>
    tpu.vector_store %arg4[%c0_8, %c0_9, %c0_10], %12 {strides = array<i32>} : memref<1x8x128xf32, #tpu.memory_space<vmem>>, vector<1x8x128xf32>,
    return
  }
  func.func @transform_0(%arg0: i32) -> (i32, i32) {
    %c0_i32 = arith.constant 0 : i32
    %c0_i32_0 = arith.constant 0 : i32
    return %arg0, %c0_i32 : i32, i32
  }
  func.func @transform_1(%arg0: i32) -> (i32, i32) {
    %c0_i32 = arith.constant 0 : i32
    %c0_i32_0 = arith.constant 0 : i32
    %c0_i32_1 = arith.constant 0 : i32
    return %c0_i32, %c0_i32_0 : i32, i32
  }
  func.func @transform_2(%arg0: i32) -> (i32, i32) {
    %c0_i32 = arith.constant 0 : i32
    %c0_i32_0 = arith.constant 0 : i32
    return %arg0, %c0_i32 : i32, i32
  }
  func.func @transform_3(%arg0: i32) -> (i32, i32, i32) {
    %c0_i32 = arith.constant 0 : i32
    %c0_i32_0 = arith.constant 0 : i32
    %c0_i32_1 = arith.constant 0 : i32
    return %arg0, %c0_i32, %c0_i32_0 : i32, i32, i32
  }
}

module attributes {stable_mosaic.version = 11 : i64} {
  func.func @_affine_relu_kernel(%arg0: i32, %arg1: memref<512x128xbf16, #tpu.memory_space<vmem>>, %arg2: memref<1x128xf32, #tpu.memory_space<vmem>>, %arg3: memref<1x128xf32, #tpu.memory_space<vmem>>, %arg4: memref<512x128xbf16, #tpu.memory_space<vmem>>) attributes {dimension_semantics = [#tpu.dimension_semantics<parallel>], iteration_bounds = array<i64: 1>, scalar_prefetch = 0 : i64, scratch_operands = 0 : i64, tpu.core_type = #tpu.core_type<tc>, window_params = [{transform_indices = @transform_0, window_bounds = array<i64: 512, 128>}, {pipeline_mode = #tpu.pipeline_mode<synchronous>, transform_indices = @transform_1, window_bounds = array<i64: 1, 128>}, {pipeline_mode = #tpu.pipeline_mode<synchronous>, transform_indices = @transform_2, window_bounds = array<i64: 1, 128>}, {transform_indices = @transform_3, window_bounds = array<i64: 512, 128>}]} {
    %c0 = arith.constant 0 : index
    %c0_0 = arith.constant 0 : index
    %0 = vector.load %arg1[%c0, %c0_0] : memref<512x128xbf16, #tpu.memory_space<vmem>>, vector<512x128xbf16>
    %1 = arith.extf %0 : vector<512x128xbf16> to vector<512x128xf32>
    %c0_1 = arith.constant 0 : index
    %c0_2 = arith.constant 0 : index
    %2 = vector.load %arg2[%c0_1, %c0_2] : memref<1x128xf32, #tpu.memory_space<vmem>>, vector<1x128xf32>
    %3 = vector.broadcast %2 : vector<1x128xf32> to vector<512x128xf32>
    %4 = arith.mulf %1, %3 : vector<512x128xf32>
    %c0_3 = arith.constant 0 : index
    %c0_4 = arith.constant 0 : index
    %5 = vector.load %arg3[%c0_3, %c0_4] : memref<1x128xf32, #tpu.memory_space<vmem>>, vector<1x128xf32>
    %6 = vector.broadcast %5 : vector<1x128xf32> to vector<512x128xf32>
    %7 = arith.addf %4, %6 : vector<512x128xf32>
    %cst = arith.constant 0.000000e+00 : f32
    %8 = vector.broadcast %cst : f32 to vector<512x128xf32>
    %9 = arith.maximumf %7, %8 : vector<512x128xf32>
    %10 = arith.truncf %9 : vector<512x128xf32> to vector<512x128xbf16>
    %c0_5 = arith.constant 0 : index
    %c0_6 = arith.constant 0 : index
    %11 = vector.load %arg4[%c0_5, %c0_6] : memref<512x128xbf16, #tpu.memory_space<vmem>>, vector<512x128xbf16>
    tpu.vector_store %arg4[%c0_5, %c0_6], %10 {strides = array<i32>} : memref<512x128xbf16, #tpu.memory_space<vmem>>, vector<512x128xbf16>,
    return
  }
  func.func @transform_0(%arg0: i32) -> (i32, i32) {
    %c0_i32 = arith.constant 0 : i32
    %c0_i32_0 = arith.constant 0 : i32
    return %arg0, %c0_i32 : i32, i32
  }
  func.func @transform_1(%arg0: i32) -> (i32, i32) {
    %c0_i32 = arith.constant 0 : i32
    %c0_i32_0 = arith.constant 0 : i32
    %c0_i32_1 = arith.constant 0 : i32
    return %c0_i32, %c0_i32_0 : i32, i32
  }
  func.func @transform_2(%arg0: i32) -> (i32, i32) {
    %c0_i32 = arith.constant 0 : i32
    %c0_i32_0 = arith.constant 0 : i32
    %c0_i32_1 = arith.constant 0 : i32
    return %c0_i32, %c0_i32_0 : i32, i32
  }
  func.func @transform_3(%arg0: i32) -> (i32, i32) {
    %c0_i32 = arith.constant 0 : i32
    %c0_i32_0 = arith.constant 0 : i32
    return %arg0, %c0_i32 : i32, i32
  }
}

module attributes {stable_mosaic.version = 11 : i64} {
  func.func @_conv_bn_stats_kernel(%arg0: i32, %arg1: memref<512x256xbf16, #tpu.memory_space<vmem>>, %arg2: memref<256x128xbf16, #tpu.memory_space<vmem>>, %arg3: memref<512x128xbf16, #tpu.memory_space<vmem>>, %arg4: memref<1x8x128xf32, #tpu.memory_space<vmem>>) attributes {dimension_semantics = [#tpu.dimension_semantics<parallel>], iteration_bounds = array<i64: 1>, scalar_prefetch = 0 : i64, scratch_operands = 0 : i64, tpu.core_type = #tpu.core_type<tc>, window_params = [{transform_indices = @transform_0, window_bounds = array<i64: 512, 256>}, {pipeline_mode = #tpu.pipeline_mode<synchronous>, transform_indices = @transform_1, window_bounds = array<i64: 256, 128>}, {transform_indices = @transform_2, window_bounds = array<i64: 512, 128>}, {transform_indices = @transform_3, window_bounds = array<i64: 1, 8, 128>}]} {
    %c0 = arith.constant 0 : index
    %c0_0 = arith.constant 0 : index
    %0 = vector.load %arg1[%c0, %c0_0] : memref<512x256xbf16, #tpu.memory_space<vmem>>, vector<512x256xbf16>
    %c0_1 = arith.constant 0 : index
    %c0_2 = arith.constant 0 : index
    %1 = vector.load %arg2[%c0_1, %c0_2] : memref<256x128xbf16, #tpu.memory_space<vmem>>, vector<256x128xbf16>
    %cst = arith.constant dense<0.000000e+00> : vector<512x128xf32>
    %2 = tpu.matmul %0, %1, %cst {dimension_numbers = #tpu.dot_dimension_numbers<[1], [0], [0], [1], [0, 0, 1, 1], [], []>} : vector<512x256xbf16>, vector<256x128xbf16>, vector<512x128xf32> -> vector<512x128xf32>
    %3 = arith.truncf %2 : vector<512x128xf32> to vector<512x128xbf16>
    %c0_3 = arith.constant 0 : index
    %c0_4 = arith.constant 0 : index
    %4 = vector.load %arg3[%c0_3, %c0_4] : memref<512x128xbf16, #tpu.memory_space<vmem>>, vector<512x128xbf16>
    tpu.vector_store %arg3[%c0_3, %c0_4], %3 {strides = array<i32>} : memref<512x128xbf16, #tpu.memory_space<vmem>>, vector<512x128xbf16>,
    %cst_5 = arith.constant dense<0.000000e+00> : vector<128xf32>
    %5 = vector.multi_reduction <add>, %2, %cst_5 [0] : vector<512x128xf32> to vector<128xf32>
    %6 = vector.shape_cast %5 : vector<128xf32> to vector<1x128xf32>
    %7 = arith.mulf %2, %2 : vector<512x128xf32>
    %cst_6 = arith.constant dense<0.000000e+00> : vector<128xf32>
    %8 = vector.multi_reduction <add>, %7, %cst_6 [0] : vector<512x128xf32> to vector<128xf32>
    %9 = vector.shape_cast %8 : vector<128xf32> to vector<1x128xf32>
    %cst_7 = arith.constant 0.000000e+00 : f32
    %10 = vector.broadcast %cst_7 : f32 to vector<6x128xf32>
    %11 = tpu.concatenate %6, %9, %10 in 0 : vector<1x128xf32>, vector<1x128xf32>, vector<6x128xf32> -> vector<8x128xf32>
    %12 = vector.shape_cast %11 : vector<8x128xf32> to vector<1x8x128xf32>
    %c0_8 = arith.constant 0 : index
    %c0_9 = arith.constant 0 : index
    %c0_10 = arith.constant 0 : index
    %13 = vector.load %arg4[%c0_8, %c0_9, %c0_10] : memref<1x8x128xf32, #tpu.memory_space<vmem>>, vector<1x8x128xf32>
    tpu.vector_store %arg4[%c0_8, %c0_9, %c0_10], %12 {strides = array<i32>} : memref<1x8x128xf32, #tpu.memory_space<vmem>>, vector<1x8x128xf32>,
    return
  }
  func.func @transform_0(%arg0: i32) -> (i32, i32) {
    %c0_i32 = arith.constant 0 : i32
    %c0_i32_0 = arith.constant 0 : i32
    return %arg0, %c0_i32 : i32, i32
  }
  func.func @transform_1(%arg0: i32) -> (i32, i32) {
    %c0_i32 = arith.constant 0 : i32
    %c0_i32_0 = arith.constant 0 : i32
    %c0_i32_1 = arith.constant 0 : i32
    return %c0_i32, %c0_i32_0 : i32, i32
  }
  func.func @transform_2(%arg0: i32) -> (i32, i32) {
    %c0_i32 = arith.constant 0 : i32
    %c0_i32_0 = arith.constant 0 : i32
    return %arg0, %c0_i32 : i32, i32
  }
  func.func @transform_3(%arg0: i32) -> (i32, i32, i32) {
    %c0_i32 = arith.constant 0 : i32
    %c0_i32_0 = arith.constant 0 : i32
    %c0_i32_1 = arith.constant 0 : i32
    return %arg0, %c0_i32, %c0_i32_0 : i32, i32, i32
  }
}

module attributes {stable_mosaic.version = 11 : i64} {
  func.func @_affine_res_relu_kernel(%arg0: i32, %arg1: memref<512x128xbf16, #tpu.memory_space<vmem>>, %arg2: memref<1x128xf32, #tpu.memory_space<vmem>>, %arg3: memref<1x128xf32, #tpu.memory_space<vmem>>, %arg4: memref<512x128xbf16, #tpu.memory_space<vmem>>, %arg5: memref<512x128xbf16, #tpu.memory_space<vmem>>) attributes {dimension_semantics = [#tpu.dimension_semantics<parallel>], iteration_bounds = array<i64: 1>, scalar_prefetch = 0 : i64, scratch_operands = 0 : i64, tpu.core_type = #tpu.core_type<tc>, window_params = [{transform_indices = @transform_0, window_bounds = array<i64: 512, 128>}, {pipeline_mode = #tpu.pipeline_mode<synchronous>, transform_indices = @transform_1, window_bounds = array<i64: 1, 128>}, {pipeline_mode = #tpu.pipeline_mode<synchronous>, transform_indices = @transform_2, window_bounds = array<i64: 1, 128>}, {transform_indices = @transform_3, window_bounds = array<i64: 512, 128>}, {transform_indices = @transform_4, window_bounds = array<i64: 512, 128>}]} {
    %c0 = arith.constant 0 : index
    %c0_0 = arith.constant 0 : index
    %0 = vector.load %arg1[%c0, %c0_0] : memref<512x128xbf16, #tpu.memory_space<vmem>>, vector<512x128xbf16>
    %1 = arith.extf %0 : vector<512x128xbf16> to vector<512x128xf32>
    %c0_1 = arith.constant 0 : index
    %c0_2 = arith.constant 0 : index
    %2 = vector.load %arg4[%c0_1, %c0_2] : memref<512x128xbf16, #tpu.memory_space<vmem>>, vector<512x128xbf16>
    %3 = arith.extf %2 : vector<512x128xbf16> to vector<512x128xf32>
    %c0_3 = arith.constant 0 : index
    %c0_4 = arith.constant 0 : index
    %4 = vector.load %arg2[%c0_3, %c0_4] : memref<1x128xf32, #tpu.memory_space<vmem>>, vector<1x128xf32>
    %5 = vector.broadcast %4 : vector<1x128xf32> to vector<512x128xf32>
    %6 = arith.mulf %1, %5 : vector<512x128xf32>
    %c0_5 = arith.constant 0 : index
    %c0_6 = arith.constant 0 : index
    %7 = vector.load %arg3[%c0_5, %c0_6] : memref<1x128xf32, #tpu.memory_space<vmem>>, vector<1x128xf32>
    %8 = vector.broadcast %7 : vector<1x128xf32> to vector<512x128xf32>
    %9 = arith.addf %6, %8 : vector<512x128xf32>
    %10 = arith.addf %9, %3 : vector<512x128xf32>
    %cst = arith.constant 0.000000e+00 : f32
    %11 = vector.broadcast %cst : f32 to vector<512x128xf32>
    %12 = arith.maximumf %10, %11 : vector<512x128xf32>
    %13 = arith.truncf %12 : vector<512x128xf32> to vector<512x128xbf16>
    %c0_7 = arith.constant 0 : index
    %c0_8 = arith.constant 0 : index
    %14 = vector.load %arg5[%c0_7, %c0_8] : memref<512x128xbf16, #tpu.memory_space<vmem>>, vector<512x128xbf16>
    tpu.vector_store %arg5[%c0_7, %c0_8], %13 {strides = array<i32>} : memref<512x128xbf16, #tpu.memory_space<vmem>>, vector<512x128xbf16>,
    return
  }
  func.func @transform_0(%arg0: i32) -> (i32, i32) {
    %c0_i32 = arith.constant 0 : i32
    %c0_i32_0 = arith.constant 0 : i32
    return %arg0, %c0_i32 : i32, i32
  }
  func.func @transform_1(%arg0: i32) -> (i32, i32) {
    %c0_i32 = arith.constant 0 : i32
    %c0_i32_0 = arith.constant 0 : i32
    %c0_i32_1 = arith.constant 0 : i32
    return %c0_i32, %c0_i32_0 : i32, i32
  }
  func.func @transform_2(%arg0: i32) -> (i32, i32) {
    %c0_i32 = arith.constant 0 : i32
    %c0_i32_0 = arith.constant 0 : i32
    %c0_i32_1 = arith.constant 0 : i32
    return %c0_i32, %c0_i32_0 : i32, i32
  }
  func.func @transform_3(%arg0: i32) -> (i32, i32) {
    %c0_i32 = arith.constant 0 : i32
    %c0_i32_0 = arith.constant 0 : i32
    return %arg0, %c0_i32 : i32, i32
  }
  func.func @transform_4(%arg0: i32) -> (i32, i32) {
    %c0_i32 = arith.constant 0 : i32
    %c0_i32_0 = arith.constant 0 : i32
    return %arg0, %c0_i32 : i32, i32
  }
}

module attributes {stable_mosaic.version = 11 : i64} {
  func.func @_conv_bn_stats_kernel(%arg0: i32, %arg1: memref<128x256xbf16, #tpu.memory_space<vmem>>, %arg2: memref<256x128xbf16, #tpu.memory_space<vmem>>, %arg3: memref<128x128xbf16, #tpu.memory_space<vmem>>, %arg4: memref<1x8x128xf32, #tpu.memory_space<vmem>>) attributes {dimension_semantics = [#tpu.dimension_semantics<parallel>], iteration_bounds = array<i64: 1>, scalar_prefetch = 0 : i64, scratch_operands = 0 : i64, tpu.core_type = #tpu.core_type<tc>, window_params = [{transform_indices = @transform_0, window_bounds = array<i64: 128, 256>}, {pipeline_mode = #tpu.pipeline_mode<synchronous>, transform_indices = @transform_1, window_bounds = array<i64: 256, 128>}, {transform_indices = @transform_2, window_bounds = array<i64: 128, 128>}, {transform_indices = @transform_3, window_bounds = array<i64: 1, 8, 128>}]} {
    %c0 = arith.constant 0 : index
    %c0_0 = arith.constant 0 : index
    %0 = vector.load %arg1[%c0, %c0_0] : memref<128x256xbf16, #tpu.memory_space<vmem>>, vector<128x256xbf16>
    %c0_1 = arith.constant 0 : index
    %c0_2 = arith.constant 0 : index
    %1 = vector.load %arg2[%c0_1, %c0_2] : memref<256x128xbf16, #tpu.memory_space<vmem>>, vector<256x128xbf16>
    %cst = arith.constant dense<0.000000e+00> : vector<128x128xf32>
    %2 = tpu.matmul %0, %1, %cst {dimension_numbers = #tpu.dot_dimension_numbers<[1], [0], [0], [1], [0, 0, 1, 1], [], []>} : vector<128x256xbf16>, vector<256x128xbf16>, vector<128x128xf32> -> vector<128x128xf32>
    %3 = arith.truncf %2 : vector<128x128xf32> to vector<128x128xbf16>
    %c0_3 = arith.constant 0 : index
    %c0_4 = arith.constant 0 : index
    %4 = vector.load %arg3[%c0_3, %c0_4] : memref<128x128xbf16, #tpu.memory_space<vmem>>, vector<128x128xbf16>
    tpu.vector_store %arg3[%c0_3, %c0_4], %3 {strides = array<i32>} : memref<128x128xbf16, #tpu.memory_space<vmem>>, vector<128x128xbf16>,
    %cst_5 = arith.constant dense<0.000000e+00> : vector<128xf32>
    %5 = vector.multi_reduction <add>, %2, %cst_5 [0] : vector<128x128xf32> to vector<128xf32>
    %6 = vector.shape_cast %5 : vector<128xf32> to vector<1x128xf32>
    %7 = arith.mulf %2, %2 : vector<128x128xf32>
    %cst_6 = arith.constant dense<0.000000e+00> : vector<128xf32>
    %8 = vector.multi_reduction <add>, %7, %cst_6 [0] : vector<128x128xf32> to vector<128xf32>
    %9 = vector.shape_cast %8 : vector<128xf32> to vector<1x128xf32>
    %cst_7 = arith.constant 0.000000e+00 : f32
    %10 = vector.broadcast %cst_7 : f32 to vector<6x128xf32>
    %11 = tpu.concatenate %6, %9, %10 in 0 : vector<1x128xf32>, vector<1x128xf32>, vector<6x128xf32> -> vector<8x128xf32>
    %12 = vector.shape_cast %11 : vector<8x128xf32> to vector<1x8x128xf32>
    %c0_8 = arith.constant 0 : index
    %c0_9 = arith.constant 0 : index
    %c0_10 = arith.constant 0 : index
    %13 = vector.load %arg4[%c0_8, %c0_9, %c0_10] : memref<1x8x128xf32, #tpu.memory_space<vmem>>, vector<1x8x128xf32>
    tpu.vector_store %arg4[%c0_8, %c0_9, %c0_10], %12 {strides = array<i32>} : memref<1x8x128xf32, #tpu.memory_space<vmem>>, vector<1x8x128xf32>,
    return
  }
  func.func @transform_0(%arg0: i32) -> (i32, i32) {
    %c0_i32 = arith.constant 0 : i32
    %c0_i32_0 = arith.constant 0 : i32
    return %arg0, %c0_i32 : i32, i32
  }
  func.func @transform_1(%arg0: i32) -> (i32, i32) {
    %c0_i32 = arith.constant 0 : i32
    %c0_i32_0 = arith.constant 0 : i32
    %c0_i32_1 = arith.constant 0 : i32
    return %c0_i32, %c0_i32_0 : i32, i32
  }
  func.func @transform_2(%arg0: i32) -> (i32, i32) {
    %c0_i32 = arith.constant 0 : i32
    %c0_i32_0 = arith.constant 0 : i32
    return %arg0, %c0_i32 : i32, i32
  }
  func.func @transform_3(%arg0: i32) -> (i32, i32, i32) {
    %c0_i32 = arith.constant 0 : i32
    %c0_i32_0 = arith.constant 0 : i32
    %c0_i32_1 = arith.constant 0 : i32
    return %arg0, %c0_i32, %c0_i32_0 : i32, i32, i32
  }
}

module attributes {stable_mosaic.version = 11 : i64} {
  func.func @_affine_relu_kernel(%arg0: i32, %arg1: memref<128x128xbf16, #tpu.memory_space<vmem>>, %arg2: memref<1x128xf32, #tpu.memory_space<vmem>>, %arg3: memref<1x128xf32, #tpu.memory_space<vmem>>, %arg4: memref<128x128xbf16, #tpu.memory_space<vmem>>) attributes {dimension_semantics = [#tpu.dimension_semantics<parallel>], iteration_bounds = array<i64: 1>, scalar_prefetch = 0 : i64, scratch_operands = 0 : i64, tpu.core_type = #tpu.core_type<tc>, window_params = [{transform_indices = @transform_0, window_bounds = array<i64: 128, 128>}, {pipeline_mode = #tpu.pipeline_mode<synchronous>, transform_indices = @transform_1, window_bounds = array<i64: 1, 128>}, {pipeline_mode = #tpu.pipeline_mode<synchronous>, transform_indices = @transform_2, window_bounds = array<i64: 1, 128>}, {transform_indices = @transform_3, window_bounds = array<i64: 128, 128>}]} {
    %c0 = arith.constant 0 : index
    %c0_0 = arith.constant 0 : index
    %0 = vector.load %arg1[%c0, %c0_0] : memref<128x128xbf16, #tpu.memory_space<vmem>>, vector<128x128xbf16>
    %1 = arith.extf %0 : vector<128x128xbf16> to vector<128x128xf32>
    %c0_1 = arith.constant 0 : index
    %c0_2 = arith.constant 0 : index
    %2 = vector.load %arg2[%c0_1, %c0_2] : memref<1x128xf32, #tpu.memory_space<vmem>>, vector<1x128xf32>
    %3 = vector.broadcast %2 : vector<1x128xf32> to vector<128x128xf32>
    %4 = arith.mulf %1, %3 : vector<128x128xf32>
    %c0_3 = arith.constant 0 : index
    %c0_4 = arith.constant 0 : index
    %5 = vector.load %arg3[%c0_3, %c0_4] : memref<1x128xf32, #tpu.memory_space<vmem>>, vector<1x128xf32>
    %6 = vector.broadcast %5 : vector<1x128xf32> to vector<128x128xf32>
    %7 = arith.addf %4, %6 : vector<128x128xf32>
    %cst = arith.constant 0.000000e+00 : f32
    %8 = vector.broadcast %cst : f32 to vector<128x128xf32>
    %9 = arith.maximumf %7, %8 : vector<128x128xf32>
    %10 = arith.truncf %9 : vector<128x128xf32> to vector<128x128xbf16>
    %c0_5 = arith.constant 0 : index
    %c0_6 = arith.constant 0 : index
    %11 = vector.load %arg4[%c0_5, %c0_6] : memref<128x128xbf16, #tpu.memory_space<vmem>>, vector<128x128xbf16>
    tpu.vector_store %arg4[%c0_5, %c0_6], %10 {strides = array<i32>} : memref<128x128xbf16, #tpu.memory_space<vmem>>, vector<128x128xbf16>,
    return
  }
  func.func @transform_0(%arg0: i32) -> (i32, i32) {
    %c0_i32 = arith.constant 0 : i32
    %c0_i32_0 = arith.constant 0 : i32
    return %arg0, %c0_i32 : i32, i32
  }
  func.func @transform_1(%arg0: i32) -> (i32, i32) {
    %c0_i32 = arith.constant 0 : i32
    %c0_i32_0 = arith.constant 0 : i32
    %c0_i32_1 = arith.constant 0 : i32
    return %c0_i32, %c0_i32_0 : i32, i32
  }
  func.func @transform_2(%arg0: i32) -> (i32, i32) {
    %c0_i32 = arith.constant 0 : i32
    %c0_i32_0 = arith.constant 0 : i32
    %c0_i32_1 = arith.constant 0 : i32
    return %c0_i32, %c0_i32_0 : i32, i32
  }
  func.func @transform_3(%arg0: i32) -> (i32, i32) {
    %c0_i32 = arith.constant 0 : i32
    %c0_i32_0 = arith.constant 0 : i32
    return %arg0, %c0_i32 : i32, i32
  }
}

module attributes {stable_mosaic.version = 11 : i64} {
  func.func @_conv_bn_stats_ds_kernel(%arg0: i32, %arg1: memref<128x384xbf16, #tpu.memory_space<vmem>>, %arg2: memref<384x128xbf16, #tpu.memory_space<vmem>>, %arg3: memref<128x128xbf16, #tpu.memory_space<vmem>>, %arg4: memref<128x128xbf16, #tpu.memory_space<vmem>>, %arg5: memref<1x8x128xf32, #tpu.memory_space<vmem>>) attributes {dimension_semantics = [#tpu.dimension_semantics<parallel>], iteration_bounds = array<i64: 1>, scalar_prefetch = 0 : i64, scratch_operands = 0 : i64, tpu.core_type = #tpu.core_type<tc>, window_params = [{transform_indices = @transform_0, window_bounds = array<i64: 128, 384>}, {pipeline_mode = #tpu.pipeline_mode<synchronous>, transform_indices = @transform_1, window_bounds = array<i64: 384, 128>}, {transform_indices = @transform_2, window_bounds = array<i64: 128, 128>}, {transform_indices = @transform_3, window_bounds = array<i64: 128, 128>}, {transform_indices = @transform_4, window_bounds = array<i64: 1, 8, 128>}]} {
    %c0 = arith.constant 0 : index
    %c0_0 = arith.constant 0 : index
    %0 = vector.load %arg1[%c0, %c0_0] : memref<128x384xbf16, #tpu.memory_space<vmem>>, vector<128x384xbf16>
    %c0_1 = arith.constant 0 : index
    %c0_2 = arith.constant 0 : index
    %1 = vector.load %arg2[%c0_1, %c0_2] : memref<384x128xbf16, #tpu.memory_space<vmem>>, vector<384x128xbf16>
    %cst = arith.constant dense<0.000000e+00> : vector<128x128xf32>
    %2 = tpu.matmul %0, %1, %cst {dimension_numbers = #tpu.dot_dimension_numbers<[1], [0], [0], [1], [0, 0, 1, 1], [], []>} : vector<128x384xbf16>, vector<384x128xbf16>, vector<128x128xf32> -> vector<128x128xf32>
    %3 = arith.truncf %2 : vector<128x128xf32> to vector<128x128xbf16>
    %c0_3 = arith.constant 0 : index
    %c0_4 = arith.constant 0 : index
    %4 = vector.load %arg4[%c0_3, %c0_4] : memref<128x128xbf16, #tpu.memory_space<vmem>>, vector<128x128xbf16>
    tpu.vector_store %arg4[%c0_3, %c0_4], %3 {strides = array<i32>} : memref<128x128xbf16, #tpu.memory_space<vmem>>, vector<128x128xbf16>,
    %c0_5 = arith.constant 0 : index
    %c0_6 = arith.constant 0 : index
    %5 = vector.load %arg3[%c0_5, %c0_6] : memref<128x128xbf16, #tpu.memory_space<vmem>>, vector<128x128xbf16>
    %6 = arith.extf %5 : vector<128x128xbf16> to vector<128x128xf32>
    %cst_7 = arith.constant dense<0.000000e+00> : vector<128xf32>
    %7 = vector.multi_reduction <add>, %2, %cst_7 [0] : vector<128x128xf32> to vector<128xf32>
    %8 = vector.shape_cast %7 : vector<128xf32> to vector<1x128xf32>
    %9 = arith.mulf %2, %2 : vector<128x128xf32>
    %cst_8 = arith.constant dense<0.000000e+00> : vector<128xf32>
    %10 = vector.multi_reduction <add>, %9, %cst_8 [0] : vector<128x128xf32> to vector<128xf32>
    %11 = vector.shape_cast %10 : vector<128xf32> to vector<1x128xf32>
    %cst_9 = arith.constant dense<0.000000e+00> : vector<128xf32>
    %12 = vector.multi_reduction <add>, %6, %cst_9 [0] : vector<128x128xf32> to vector<128xf32>
    %13 = vector.shape_cast %12 : vector<128xf32> to vector<1x128xf32>
    %14 = arith.mulf %6, %6 : vector<128x128xf32>
    %cst_10 = arith.constant dense<0.000000e+00> : vector<128xf32>
    %15 = vector.multi_reduction <add>, %14, %cst_10 [0] : vector<128x128xf32> to vector<128xf32>
    %16 = vector.shape_cast %15 : vector<128xf32> to vector<1x128xf32>
    %cst_11 = arith.constant 0.000000e+00 : f32
    %17 = vector.broadcast %cst_11 : f32 to vector<4x128xf32>
    %18 = tpu.concatenate %8, %11, %13, %16, %17 in 0 : vector<1x128xf32>, vector<1x128xf32>, vector<1x128xf32>, vector<1x128xf32>, vector<4x128xf32> -> vector<8x128xf32>
    %19 = vector.shape_cast %18 : vector<8x128xf32> to vector<1x8x128xf32>
    %c0_12 = arith.constant 0 : index
    %c0_13 = arith.constant 0 : index
    %c0_14 = arith.constant 0 : index
    %20 = vector.load %arg5[%c0_12, %c0_13, %c0_14] : memref<1x8x128xf32, #tpu.memory_space<vmem>>, vector<1x8x128xf32>
    tpu.vector_store %arg5[%c0_12, %c0_13, %c0_14], %19 {strides = array<i32>} : memref<1x8x128xf32, #tpu.memory_space<vmem>>, vector<1x8x128xf32>,
    return
  }
  func.func @transform_0(%arg0: i32) -> (i32, i32) {
    %c0_i32 = arith.constant 0 : i32
    %c0_i32_0 = arith.constant 0 : i32
    return %arg0, %c0_i32 : i32, i32
  }
  func.func @transform_1(%arg0: i32) -> (i32, i32) {
    %c0_i32 = arith.constant 0 : i32
    %c0_i32_0 = arith.constant 0 : i32
    %c0_i32_1 = arith.constant 0 : i32
    return %c0_i32, %c0_i32_0 : i32, i32
  }
  func.func @transform_2(%arg0: i32) -> (i32, i32) {
    %c0_i32 = arith.constant 0 : i32
    %c0_i32_0 = arith.constant 0 : i32
    return %arg0, %c0_i32 : i32, i32
  }
  func.func @transform_3(%arg0: i32) -> (i32, i32) {
    %c0_i32 = arith.constant 0 : i32
    %c0_i32_0 = arith.constant 0 : i32
    return %arg0, %c0_i32 : i32, i32
  }
  func.func @transform_4(%arg0: i32) -> (i32, i32, i32) {
    %c0_i32 = arith.constant 0 : i32
    %c0_i32_0 = arith.constant 0 : i32
    %c0_i32_1 = arith.constant 0 : i32
    return %arg0, %c0_i32, %c0_i32_0 : i32, i32, i32
  }
}

module attributes {stable_mosaic.version = 11 : i64} {
  func.func @_affine_res_ds_relu_kernel(%arg0: i32, %arg1: memref<128x128xbf16, #tpu.memory_space<vmem>>, %arg2: memref<1x128xf32, #tpu.memory_space<vmem>>, %arg3: memref<1x128xf32, #tpu.memory_space<vmem>>, %arg4: memref<128x128xbf16, #tpu.memory_space<vmem>>, %arg5: memref<1x128xf32, #tpu.memory_space<vmem>>, %arg6: memref<1x128xf32, #tpu.memory_space<vmem>>, %arg7: memref<128x128xbf16, #tpu.memory_space<vmem>>) attributes {dimension_semantics = [#tpu.dimension_semantics<parallel>], iteration_bounds = array<i64: 1>, scalar_prefetch = 0 : i64, scratch_operands = 0 : i64, tpu.core_type = #tpu.core_type<tc>, window_params = [{transform_indices = @transform_0, window_bounds = array<i64: 128, 128>}, {pipeline_mode = #tpu.pipeline_mode<synchronous>, transform_indices = @transform_1, window_bounds = array<i64: 1, 128>}, {pipeline_mode = #tpu.pipeline_mode<synchronous>, transform_indices = @transform_2, window_bounds = array<i64: 1, 128>}, {transform_indices = @transform_3, window_bounds = array<i64: 128, 128>}, {pipeline_mode = #tpu.pipeline_mode<synchronous>, transform_indices = @transform_4, window_bounds = array<i64: 1, 128>}, {pipeline_mode = #tpu.pipeline_mode<synchronous>, transform_indices = @transform_5, window_bounds = array<i64: 1, 128>}, {transform_indices = @transform_6, window_bounds = array<i64: 128, 128>}]} {
    %c0 = arith.constant 0 : index
    %c0_0 = arith.constant 0 : index
    %0 = vector.load %arg1[%c0, %c0_0] : memref<128x128xbf16, #tpu.memory_space<vmem>>, vector<128x128xbf16>
    %1 = arith.extf %0 : vector<128x128xbf16> to vector<128x128xf32>
    %c0_1 = arith.constant 0 : index
    %c0_2 = arith.constant 0 : index
    %2 = vector.load %arg4[%c0_1, %c0_2] : memref<128x128xbf16, #tpu.memory_space<vmem>>, vector<128x128xbf16>
    %3 = arith.extf %2 : vector<128x128xbf16> to vector<128x128xf32>
    %c0_3 = arith.constant 0 : index
    %c0_4 = arith.constant 0 : index
    %4 = vector.load %arg2[%c0_3, %c0_4] : memref<1x128xf32, #tpu.memory_space<vmem>>, vector<1x128xf32>
    %5 = vector.broadcast %4 : vector<1x128xf32> to vector<128x128xf32>
    %6 = arith.mulf %1, %5 : vector<128x128xf32>
    %c0_5 = arith.constant 0 : index
    %c0_6 = arith.constant 0 : index
    %7 = vector.load %arg3[%c0_5, %c0_6] : memref<1x128xf32, #tpu.memory_space<vmem>>, vector<1x128xf32>
    %8 = vector.broadcast %7 : vector<1x128xf32> to vector<128x128xf32>
    %9 = arith.addf %6, %8 : vector<128x128xf32>
    %c0_7 = arith.constant 0 : index
    %c0_8 = arith.constant 0 : index
    %10 = vector.load %arg5[%c0_7, %c0_8] : memref<1x128xf32, #tpu.memory_space<vmem>>, vector<1x128xf32>
    %11 = vector.broadcast %10 : vector<1x128xf32> to vector<128x128xf32>
    %12 = arith.mulf %3, %11 : vector<128x128xf32>
    %13 = arith.addf %9, %12 : vector<128x128xf32>
    %c0_9 = arith.constant 0 : index
    %c0_10 = arith.constant 0 : index
    %14 = vector.load %arg6[%c0_9, %c0_10] : memref<1x128xf32, #tpu.memory_space<vmem>>, vector<1x128xf32>
    %15 = vector.broadcast %14 : vector<1x128xf32> to vector<128x128xf32>
    %16 = arith.addf %13, %15 : vector<128x128xf32>
    %cst = arith.constant 0.000000e+00 : f32
    %17 = vector.broadcast %cst : f32 to vector<128x128xf32>
    %18 = arith.maximumf %16, %17 : vector<128x128xf32>
    %19 = arith.truncf %18 : vector<128x128xf32> to vector<128x128xbf16>
    %c0_11 = arith.constant 0 : index
    %c0_12 = arith.constant 0 : index
    %20 = vector.load %arg7[%c0_11, %c0_12] : memref<128x128xbf16, #tpu.memory_space<vmem>>, vector<128x128xbf16>
    tpu.vector_store %arg7[%c0_11, %c0_12], %19 {strides = array<i32>} : memref<128x128xbf16, #tpu.memory_space<vmem>>, vector<128x128xbf16>,
    return
  }
  func.func @transform_0(%arg0: i32) -> (i32, i32) {
    %c0_i32 = arith.constant 0 : i32
    %c0_i32_0 = arith.constant 0 : i32
    return %arg0, %c0_i32 : i32, i32
  }
  func.func @transform_1(%arg0: i32) -> (i32, i32) {
    %c0_i32 = arith.constant 0 : i32
    %c0_i32_0 = arith.constant 0 : i32
    %c0_i32_1 = arith.constant 0 : i32
    return %c0_i32, %c0_i32_0 : i32, i32
  }
  func.func @transform_2(%arg0: i32) -> (i32, i32) {
    %c0_i32 = arith.constant 0 : i32
    %c0_i32_0 = arith.constant 0 : i32
    %c0_i32_1 = arith.constant 0 : i32
    return %c0_i32, %c0_i32_0 : i32, i32
  }
  func.func @transform_3(%arg0: i32) -> (i32, i32) {
    %c0_i32 = arith.constant 0 : i32
    %c0_i32_0 = arith.constant 0 : i32
    return %arg0, %c0_i32 : i32, i32
  }
  func.func @transform_4(%arg0: i32) -> (i32, i32) {
    %c0_i32 = arith.constant 0 : i32
    %c0_i32_0 = arith.constant 0 : i32
    %c0_i32_1 = arith.constant 0 : i32
    return %c0_i32, %c0_i32_0 : i32, i32
  }
  func.func @transform_5(%arg0: i32) -> (i32, i32) {
    %c0_i32 = arith.constant 0 : i32
    %c0_i32_0 = arith.constant 0 : i32
    %c0_i32_1 = arith.constant 0 : i32
    return %c0_i32, %c0_i32_0 : i32, i32
  }
  func.func @transform_6(%arg0: i32) -> (i32, i32) {
    %c0_i32 = arith.constant 0 : i32
    %c0_i32_0 = arith.constant 0 : i32
    return %arg0, %c0_i32 : i32, i32
  }
}

module attributes {stable_mosaic.version = 11 : i64} {
  func.func @_conv_bn_stats_kernel(%arg0: i32, %arg1: memref<32x384xbf16, #tpu.memory_space<vmem>>, %arg2: memref<384x128xbf16, #tpu.memory_space<vmem>>, %arg3: memref<32x128xbf16, #tpu.memory_space<vmem>>, %arg4: memref<1x8x128xf32, #tpu.memory_space<vmem>>) attributes {dimension_semantics = [#tpu.dimension_semantics<parallel>], iteration_bounds = array<i64: 1>, scalar_prefetch = 0 : i64, scratch_operands = 0 : i64, tpu.core_type = #tpu.core_type<tc>, window_params = [{transform_indices = @transform_0, window_bounds = array<i64: 32, 384>}, {pipeline_mode = #tpu.pipeline_mode<synchronous>, transform_indices = @transform_1, window_bounds = array<i64: 384, 128>}, {transform_indices = @transform_2, window_bounds = array<i64: 32, 128>}, {transform_indices = @transform_3, window_bounds = array<i64: 1, 8, 128>}]} {
    %c0 = arith.constant 0 : index
    %c0_0 = arith.constant 0 : index
    %0 = vector.load %arg1[%c0, %c0_0] : memref<32x384xbf16, #tpu.memory_space<vmem>>, vector<32x384xbf16>
    %c0_1 = arith.constant 0 : index
    %c0_2 = arith.constant 0 : index
    %1 = vector.load %arg2[%c0_1, %c0_2] : memref<384x128xbf16, #tpu.memory_space<vmem>>, vector<384x128xbf16>
    %cst = arith.constant dense<0.000000e+00> : vector<32x128xf32>
    %2 = tpu.matmul %0, %1, %cst {dimension_numbers = #tpu.dot_dimension_numbers<[1], [0], [0], [1], [0, 0, 1, 1], [], []>} : vector<32x384xbf16>, vector<384x128xbf16>, vector<32x128xf32> -> vector<32x128xf32>
    %3 = arith.truncf %2 : vector<32x128xf32> to vector<32x128xbf16>
    %c0_3 = arith.constant 0 : index
    %c0_4 = arith.constant 0 : index
    %4 = vector.load %arg3[%c0_3, %c0_4] : memref<32x128xbf16, #tpu.memory_space<vmem>>, vector<32x128xbf16>
    tpu.vector_store %arg3[%c0_3, %c0_4], %3 {strides = array<i32>} : memref<32x128xbf16, #tpu.memory_space<vmem>>, vector<32x128xbf16>,
    %cst_5 = arith.constant dense<0.000000e+00> : vector<128xf32>
    %5 = vector.multi_reduction <add>, %2, %cst_5 [0] : vector<32x128xf32> to vector<128xf32>
    %6 = vector.shape_cast %5 : vector<128xf32> to vector<1x128xf32>
    %7 = arith.mulf %2, %2 : vector<32x128xf32>
    %cst_6 = arith.constant dense<0.000000e+00> : vector<128xf32>
    %8 = vector.multi_reduction <add>, %7, %cst_6 [0] : vector<32x128xf32> to vector<128xf32>
    %9 = vector.shape_cast %8 : vector<128xf32> to vector<1x128xf32>
    %cst_7 = arith.constant 0.000000e+00 : f32
    %10 = vector.broadcast %cst_7 : f32 to vector<6x128xf32>
    %11 = tpu.concatenate %6, %9, %10 in 0 : vector<1x128xf32>, vector<1x128xf32>, vector<6x128xf32> -> vector<8x128xf32>
    %12 = vector.shape_cast %11 : vector<8x128xf32> to vector<1x8x128xf32>
    %c0_8 = arith.constant 0 : index
    %c0_9 = arith.constant 0 : index
    %c0_10 = arith.constant 0 : index
    %13 = vector.load %arg4[%c0_8, %c0_9, %c0_10] : memref<1x8x128xf32, #tpu.memory_space<vmem>>, vector<1x8x128xf32>
    tpu.vector_store %arg4[%c0_8, %c0_9, %c0_10], %12 {strides = array<i32>} : memref<1x8x128xf32, #tpu.memory_space<vmem>>, vector<1x8x128xf32>,
    return
  }
  func.func @transform_0(%arg0: i32) -> (i32, i32) {
    %c0_i32 = arith.constant 0 : i32
    %c0_i32_0 = arith.constant 0 : i32
    return %arg0, %c0_i32 : i32, i32
  }
  func.func @transform_1(%arg0: i32) -> (i32, i32) {
    %c0_i32 = arith.constant 0 : i32
    %c0_i32_0 = arith.constant 0 : i32
    %c0_i32_1 = arith.constant 0 : i32
    return %c0_i32, %c0_i32_0 : i32, i32
  }
  func.func @transform_2(%arg0: i32) -> (i32, i32) {
    %c0_i32 = arith.constant 0 : i32
    %c0_i32_0 = arith.constant 0 : i32
    return %arg0, %c0_i32 : i32, i32
  }
  func.func @transform_3(%arg0: i32) -> (i32, i32, i32) {
    %c0_i32 = arith.constant 0 : i32
    %c0_i32_0 = arith.constant 0 : i32
    %c0_i32_1 = arith.constant 0 : i32
    return %arg0, %c0_i32, %c0_i32_0 : i32, i32, i32
  }
}

module attributes {stable_mosaic.version = 11 : i64} {
  func.func @_affine_relu_kernel(%arg0: i32, %arg1: memref<32x128xbf16, #tpu.memory_space<vmem>>, %arg2: memref<1x128xf32, #tpu.memory_space<vmem>>, %arg3: memref<1x128xf32, #tpu.memory_space<vmem>>, %arg4: memref<32x128xbf16, #tpu.memory_space<vmem>>) attributes {dimension_semantics = [#tpu.dimension_semantics<parallel>], iteration_bounds = array<i64: 1>, scalar_prefetch = 0 : i64, scratch_operands = 0 : i64, tpu.core_type = #tpu.core_type<tc>, window_params = [{transform_indices = @transform_0, window_bounds = array<i64: 32, 128>}, {pipeline_mode = #tpu.pipeline_mode<synchronous>, transform_indices = @transform_1, window_bounds = array<i64: 1, 128>}, {pipeline_mode = #tpu.pipeline_mode<synchronous>, transform_indices = @transform_2, window_bounds = array<i64: 1, 128>}, {transform_indices = @transform_3, window_bounds = array<i64: 32, 128>}]} {
    %c0 = arith.constant 0 : index
    %c0_0 = arith.constant 0 : index
    %0 = vector.load %arg1[%c0, %c0_0] : memref<32x128xbf16, #tpu.memory_space<vmem>>, vector<32x128xbf16>
    %1 = arith.extf %0 : vector<32x128xbf16> to vector<32x128xf32>
    %c0_1 = arith.constant 0 : index
    %c0_2 = arith.constant 0 : index
    %2 = vector.load %arg2[%c0_1, %c0_2] : memref<1x128xf32, #tpu.memory_space<vmem>>, vector<1x128xf32>
    %3 = vector.broadcast %2 : vector<1x128xf32> to vector<32x128xf32>
    %4 = arith.mulf %1, %3 : vector<32x128xf32>
    %c0_3 = arith.constant 0 : index
    %c0_4 = arith.constant 0 : index
    %5 = vector.load %arg3[%c0_3, %c0_4] : memref<1x128xf32, #tpu.memory_space<vmem>>, vector<1x128xf32>
    %6 = vector.broadcast %5 : vector<1x128xf32> to vector<32x128xf32>
    %7 = arith.addf %4, %6 : vector<32x128xf32>
    %cst = arith.constant 0.000000e+00 : f32
    %8 = vector.broadcast %cst : f32 to vector<32x128xf32>
    %9 = arith.maximumf %7, %8 : vector<32x128xf32>
    %10 = arith.truncf %9 : vector<32x128xf32> to vector<32x128xbf16>
    %c0_5 = arith.constant 0 : index
    %c0_6 = arith.constant 0 : index
    %11 = vector.load %arg4[%c0_5, %c0_6] : memref<32x128xbf16, #tpu.memory_space<vmem>>, vector<32x128xbf16>
    tpu.vector_store %arg4[%c0_5, %c0_6], %10 {strides = array<i32>} : memref<32x128xbf16, #tpu.memory_space<vmem>>, vector<32x128xbf16>,
    return
  }
  func.func @transform_0(%arg0: i32) -> (i32, i32) {
    %c0_i32 = arith.constant 0 : i32
    %c0_i32_0 = arith.constant 0 : i32
    return %arg0, %c0_i32 : i32, i32
  }
  func.func @transform_1(%arg0: i32) -> (i32, i32) {
    %c0_i32 = arith.constant 0 : i32
    %c0_i32_0 = arith.constant 0 : i32
    %c0_i32_1 = arith.constant 0 : i32
    return %c0_i32, %c0_i32_0 : i32, i32
  }
  func.func @transform_2(%arg0: i32) -> (i32, i32) {
    %c0_i32 = arith.constant 0 : i32
    %c0_i32_0 = arith.constant 0 : i32
    %c0_i32_1 = arith.constant 0 : i32
    return %c0_i32, %c0_i32_0 : i32, i32
  }
  func.func @transform_3(%arg0: i32) -> (i32, i32) {
    %c0_i32 = arith.constant 0 : i32
    %c0_i32_0 = arith.constant 0 : i32
    return %arg0, %c0_i32 : i32, i32
  }
}

module attributes {stable_mosaic.version = 11 : i64} {
  func.func @_affine_res_ds_relu_kernel(%arg0: i32, %arg1: memref<32x128xbf16, #tpu.memory_space<vmem>>, %arg2: memref<1x128xf32, #tpu.memory_space<vmem>>, %arg3: memref<1x128xf32, #tpu.memory_space<vmem>>, %arg4: memref<32x128xbf16, #tpu.memory_space<vmem>>, %arg5: memref<1x128xf32, #tpu.memory_space<vmem>>, %arg6: memref<1x128xf32, #tpu.memory_space<vmem>>, %arg7: memref<32x128xbf16, #tpu.memory_space<vmem>>) attributes {dimension_semantics = [#tpu.dimension_semantics<parallel>], iteration_bounds = array<i64: 1>, scalar_prefetch = 0 : i64, scratch_operands = 0 : i64, tpu.core_type = #tpu.core_type<tc>, window_params = [{transform_indices = @transform_0, window_bounds = array<i64: 32, 128>}, {pipeline_mode = #tpu.pipeline_mode<synchronous>, transform_indices = @transform_1, window_bounds = array<i64: 1, 128>}, {pipeline_mode = #tpu.pipeline_mode<synchronous>, transform_indices = @transform_2, window_bounds = array<i64: 1, 128>}, {transform_indices = @transform_3, window_bounds = array<i64: 32, 128>}, {pipeline_mode = #tpu.pipeline_mode<synchronous>, transform_indices = @transform_4, window_bounds = array<i64: 1, 128>}, {pipeline_mode = #tpu.pipeline_mode<synchronous>, transform_indices = @transform_5, window_bounds = array<i64: 1, 128>}, {transform_indices = @transform_6, window_bounds = array<i64: 32, 128>}]} {
    %c0 = arith.constant 0 : index
    %c0_0 = arith.constant 0 : index
    %0 = vector.load %arg1[%c0, %c0_0] : memref<32x128xbf16, #tpu.memory_space<vmem>>, vector<32x128xbf16>
    %1 = arith.extf %0 : vector<32x128xbf16> to vector<32x128xf32>
    %c0_1 = arith.constant 0 : index
    %c0_2 = arith.constant 0 : index
    %2 = vector.load %arg4[%c0_1, %c0_2] : memref<32x128xbf16, #tpu.memory_space<vmem>>, vector<32x128xbf16>
    %3 = arith.extf %2 : vector<32x128xbf16> to vector<32x128xf32>
    %c0_3 = arith.constant 0 : index
    %c0_4 = arith.constant 0 : index
    %4 = vector.load %arg2[%c0_3, %c0_4] : memref<1x128xf32, #tpu.memory_space<vmem>>, vector<1x128xf32>
    %5 = vector.broadcast %4 : vector<1x128xf32> to vector<32x128xf32>
    %6 = arith.mulf %1, %5 : vector<32x128xf32>
    %c0_5 = arith.constant 0 : index
    %c0_6 = arith.constant 0 : index
    %7 = vector.load %arg3[%c0_5, %c0_6] : memref<1x128xf32, #tpu.memory_space<vmem>>, vector<1x128xf32>
    %8 = vector.broadcast %7 : vector<1x128xf32> to vector<32x128xf32>
    %9 = arith.addf %6, %8 : vector<32x128xf32>
    %c0_7 = arith.constant 0 : index
    %c0_8 = arith.constant 0 : index
    %10 = vector.load %arg5[%c0_7, %c0_8] : memref<1x128xf32, #tpu.memory_space<vmem>>, vector<1x128xf32>
    %11 = vector.broadcast %10 : vector<1x128xf32> to vector<32x128xf32>
    %12 = arith.mulf %3, %11 : vector<32x128xf32>
    %13 = arith.addf %9, %12 : vector<32x128xf32>
    %c0_9 = arith.constant 0 : index
    %c0_10 = arith.constant 0 : index
    %14 = vector.load %arg6[%c0_9, %c0_10] : memref<1x128xf32, #tpu.memory_space<vmem>>, vector<1x128xf32>
    %15 = vector.broadcast %14 : vector<1x128xf32> to vector<32x128xf32>
    %16 = arith.addf %13, %15 : vector<32x128xf32>
    %cst = arith.constant 0.000000e+00 : f32
    %17 = vector.broadcast %cst : f32 to vector<32x128xf32>
    %18 = arith.maximumf %16, %17 : vector<32x128xf32>
    %19 = arith.truncf %18 : vector<32x128xf32> to vector<32x128xbf16>
    %c0_11 = arith.constant 0 : index
    %c0_12 = arith.constant 0 : index
    %20 = vector.load %arg7[%c0_11, %c0_12] : memref<32x128xbf16, #tpu.memory_space<vmem>>, vector<32x128xbf16>
    tpu.vector_store %arg7[%c0_11, %c0_12], %19 {strides = array<i32>} : memref<32x128xbf16, #tpu.memory_space<vmem>>, vector<32x128xbf16>,
    return
  }
  func.func @transform_0(%arg0: i32) -> (i32, i32) {
    %c0_i32 = arith.constant 0 : i32
    %c0_i32_0 = arith.constant 0 : i32
    return %arg0, %c0_i32 : i32, i32
  }
  func.func @transform_1(%arg0: i32) -> (i32, i32) {
    %c0_i32 = arith.constant 0 : i32
    %c0_i32_0 = arith.constant 0 : i32
    %c0_i32_1 = arith.constant 0 : i32
    return %c0_i32, %c0_i32_0 : i32, i32
  }
  func.func @transform_2(%arg0: i32) -> (i32, i32) {
    %c0_i32 = arith.constant 0 : i32
    %c0_i32_0 = arith.constant 0 : i32
    %c0_i32_1 = arith.constant 0 : i32
    return %c0_i32, %c0_i32_0 : i32, i32
  }
  func.func @transform_3(%arg0: i32) -> (i32, i32) {
    %c0_i32 = arith.constant 0 : i32
    %c0_i32_0 = arith.constant 0 : i32
    return %arg0, %c0_i32 : i32, i32
  }
  func.func @transform_4(%arg0: i32) -> (i32, i32) {
    %c0_i32 = arith.constant 0 : i32
    %c0_i32_0 = arith.constant 0 : i32
    %c0_i32_1 = arith.constant 0 : i32
    return %c0_i32, %c0_i32_0 : i32, i32
  }
  func.func @transform_5(%arg0: i32) -> (i32, i32) {
    %c0_i32 = arith.constant 0 : i32
    %c0_i32_0 = arith.constant 0 : i32
    %c0_i32_1 = arith.constant 0 : i32
    return %c0_i32, %c0_i32_0 : i32, i32
  }
  func.func @transform_6(%arg0: i32) -> (i32, i32) {
    %c0_i32 = arith.constant 0 : i32
    %c0_i32_0 = arith.constant 0 : i32
    return %arg0, %c0_i32 : i32, i32
  }
}

module attributes {stable_mosaic.version = 11 : i64} {
  func.func @_conv_bn_stats_ds_kernel(%arg0: i32, %arg1: memref<32x640xbf16, #tpu.memory_space<vmem>>, %arg2: memref<640x128xbf16, #tpu.memory_space<vmem>>, %arg3: memref<32x128xbf16, #tpu.memory_space<vmem>>, %arg4: memref<32x128xbf16, #tpu.memory_space<vmem>>, %arg5: memref<1x8x128xf32, #tpu.memory_space<vmem>>) attributes {dimension_semantics = [#tpu.dimension_semantics<parallel>], iteration_bounds = array<i64: 1>, scalar_prefetch = 0 : i64, scratch_operands = 0 : i64, tpu.core_type = #tpu.core_type<tc>, window_params = [{transform_indices = @transform_0, window_bounds = array<i64: 32, 640>}, {pipeline_mode = #tpu.pipeline_mode<synchronous>, transform_indices = @transform_1, window_bounds = array<i64: 640, 128>}, {transform_indices = @transform_2, window_bounds = array<i64: 32, 128>}, {transform_indices = @transform_3, window_bounds = array<i64: 32, 128>}, {transform_indices = @transform_4, window_bounds = array<i64: 1, 8, 128>}]} {
    %c0 = arith.constant 0 : index
    %c0_0 = arith.constant 0 : index
    %0 = vector.load %arg1[%c0, %c0_0] : memref<32x640xbf16, #tpu.memory_space<vmem>>, vector<32x640xbf16>
    %c0_1 = arith.constant 0 : index
    %c0_2 = arith.constant 0 : index
    %1 = vector.load %arg2[%c0_1, %c0_2] : memref<640x128xbf16, #tpu.memory_space<vmem>>, vector<640x128xbf16>
    %cst = arith.constant dense<0.000000e+00> : vector<32x128xf32>
    %2 = tpu.matmul %0, %1, %cst {dimension_numbers = #tpu.dot_dimension_numbers<[1], [0], [0], [1], [0, 0, 1, 1], [], []>} : vector<32x640xbf16>, vector<640x128xbf16>, vector<32x128xf32> -> vector<32x128xf32>
    %3 = arith.truncf %2 : vector<32x128xf32> to vector<32x128xbf16>
    %c0_3 = arith.constant 0 : index
    %c0_4 = arith.constant 0 : index
    %4 = vector.load %arg4[%c0_3, %c0_4] : memref<32x128xbf16, #tpu.memory_space<vmem>>, vector<32x128xbf16>
    tpu.vector_store %arg4[%c0_3, %c0_4], %3 {strides = array<i32>} : memref<32x128xbf16, #tpu.memory_space<vmem>>, vector<32x128xbf16>,
    %c0_5 = arith.constant 0 : index
    %c0_6 = arith.constant 0 : index
    %5 = vector.load %arg3[%c0_5, %c0_6] : memref<32x128xbf16, #tpu.memory_space<vmem>>, vector<32x128xbf16>
    %6 = arith.extf %5 : vector<32x128xbf16> to vector<32x128xf32>
    %cst_7 = arith.constant dense<0.000000e+00> : vector<128xf32>
    %7 = vector.multi_reduction <add>, %2, %cst_7 [0] : vector<32x128xf32> to vector<128xf32>
    %8 = vector.shape_cast %7 : vector<128xf32> to vector<1x128xf32>
    %9 = arith.mulf %2, %2 : vector<32x128xf32>
    %cst_8 = arith.constant dense<0.000000e+00> : vector<128xf32>
    %10 = vector.multi_reduction <add>, %9, %cst_8 [0] : vector<32x128xf32> to vector<128xf32>
    %11 = vector.shape_cast %10 : vector<128xf32> to vector<1x128xf32>
    %cst_9 = arith.constant dense<0.000000e+00> : vector<128xf32>
    %12 = vector.multi_reduction <add>, %6, %cst_9 [0] : vector<32x128xf32> to vector<128xf32>
    %13 = vector.shape_cast %12 : vector<128xf32> to vector<1x128xf32>
    %14 = arith.mulf %6, %6 : vector<32x128xf32>
    %cst_10 = arith.constant dense<0.000000e+00> : vector<128xf32>
    %15 = vector.multi_reduction <add>, %14, %cst_10 [0] : vector<32x128xf32> to vector<128xf32>
    %16 = vector.shape_cast %15 : vector<128xf32> to vector<1x128xf32>
    %cst_11 = arith.constant 0.000000e+00 : f32
    %17 = vector.broadcast %cst_11 : f32 to vector<4x128xf32>
    %18 = tpu.concatenate %8, %11, %13, %16, %17 in 0 : vector<1x128xf32>, vector<1x128xf32>, vector<1x128xf32>, vector<1x128xf32>, vector<4x128xf32> -> vector<8x128xf32>
    %19 = vector.shape_cast %18 : vector<8x128xf32> to vector<1x8x128xf32>
    %c0_12 = arith.constant 0 : index
    %c0_13 = arith.constant 0 : index
    %c0_14 = arith.constant 0 : index
    %20 = vector.load %arg5[%c0_12, %c0_13, %c0_14] : memref<1x8x128xf32, #tpu.memory_space<vmem>>, vector<1x8x128xf32>
    tpu.vector_store %arg5[%c0_12, %c0_13, %c0_14], %19 {strides = array<i32>} : memref<1x8x128xf32, #tpu.memory_space<vmem>>, vector<1x8x128xf32>,
    return
  }
  func.func @transform_0(%arg0: i32) -> (i32, i32) {
    %c0_i32 = arith.constant 0 : i32
    %c0_i32_0 = arith.constant 0 : i32
    return %arg0, %c0_i32 : i32, i32
  }
  func.func @transform_1(%arg0: i32) -> (i32, i32) {
    %c0_i32 = arith.constant 0 : i32
    %c0_i32_0 = arith.constant 0 : i32
    %c0_i32_1 = arith.constant 0 : i32
    return %c0_i32, %c0_i32_0 : i32, i32
  }
  func.func @transform_2(%arg0: i32) -> (i32, i32) {
    %c0_i32 = arith.constant 0 : i32
    %c0_i32_0 = arith.constant 0 : i32
    return %arg0, %c0_i32 : i32, i32
  }
  func.func @transform_3(%arg0: i32) -> (i32, i32) {
    %c0_i32 = arith.constant 0 : i32
    %c0_i32_0 = arith.constant 0 : i32
    return %arg0, %c0_i32 : i32, i32
  }
  func.func @transform_4(%arg0: i32) -> (i32, i32, i32) {
    %c0_i32 = arith.constant 0 : i32
    %c0_i32_0 = arith.constant 0 : i32
    %c0_i32_1 = arith.constant 0 : i32
    return %arg0, %c0_i32, %c0_i32_0 : i32, i32, i32
  }
}

module attributes {stable_mosaic.version = 11 : i64} {
  func.func @_pool_fc_kernel(%arg0: i32, %arg1: memref<2x16x128xbf16, #tpu.memory_space<vmem>>, %arg2: memref<128x128xf32, #tpu.memory_space<vmem>>, %arg3: memref<1x128xf32, #tpu.memory_space<vmem>>, %arg4: memref<2x128xf32, #tpu.memory_space<vmem>>) attributes {dimension_semantics = [#tpu.dimension_semantics<parallel>], iteration_bounds = array<i64: 1>, scalar_prefetch = 0 : i64, scratch_operands = 0 : i64, tpu.core_type = #tpu.core_type<tc>, window_params = [{transform_indices = @transform_0, window_bounds = array<i64: 2, 16, 128>}, {pipeline_mode = #tpu.pipeline_mode<synchronous>, transform_indices = @transform_1, window_bounds = array<i64: 128, 128>}, {pipeline_mode = #tpu.pipeline_mode<synchronous>, transform_indices = @transform_2, window_bounds = array<i64: 1, 128>}, {transform_indices = @transform_3, window_bounds = array<i64: 2, 128>}]} {
    %c0 = arith.constant 0 : index
    %c0_0 = arith.constant 0 : index
    %c0_1 = arith.constant 0 : index
    %0 = vector.load %arg1[%c0, %c0_0, %c0_1] : memref<2x16x128xbf16, #tpu.memory_space<vmem>>, vector<2x16x128xbf16>
    %1 = arith.extf %0 : vector<2x16x128xbf16> to vector<2x16x128xf32>
    %cst = arith.constant dense<0.000000e+00> : vector<2x128xf32>
    %2 = vector.multi_reduction <add>, %1, %cst [1] : vector<2x16x128xf32> to vector<2x128xf32>
    %cst_2 = arith.constant 1.600000e+01 : f32
    %3 = vector.broadcast %cst_2 : f32 to vector<2x128xf32>
    %4 = arith.divf %2, %3 : vector<2x128xf32>
    %c0_3 = arith.constant 0 : index
    %c0_4 = arith.constant 0 : index
    %5 = vector.load %arg2[%c0_3, %c0_4] : memref<128x128xf32, #tpu.memory_space<vmem>>, vector<128x128xf32>
    %cst_5 = arith.constant dense<0.000000e+00> : vector<2x128xf32>
    %6 = tpu.matmul %4, %5, %cst_5 {dimension_numbers = #tpu.dot_dimension_numbers<[1], [0], [0], [1], [0, 0, 1, 1], [], []>} : vector<2x128xf32>, vector<128x128xf32>, vector<2x128xf32> -> vector<2x128xf32>
    %c0_6 = arith.constant 0 : index
    %c0_7 = arith.constant 0 : index
    %7 = vector.load %arg3[%c0_6, %c0_7] : memref<1x128xf32, #tpu.memory_space<vmem>>, vector<1x128xf32>
    %8 = vector.broadcast %7 : vector<1x128xf32> to vector<2x128xf32>
    %9 = arith.addf %6, %8 : vector<2x128xf32>
    %c0_8 = arith.constant 0 : index
    %c0_9 = arith.constant 0 : index
    %10 = vector.load %arg4[%c0_8, %c0_9] : memref<2x128xf32, #tpu.memory_space<vmem>>, vector<2x128xf32>
    tpu.vector_store %arg4[%c0_8, %c0_9], %9 {strides = array<i32>} : memref<2x128xf32, #tpu.memory_space<vmem>>, vector<2x128xf32>,
    return
  }
  func.func @transform_0(%arg0: i32) -> (i32, i32, i32) {
    %c0_i32 = arith.constant 0 : i32
    %c0_i32_0 = arith.constant 0 : i32
    %c0_i32_1 = arith.constant 0 : i32
    return %arg0, %c0_i32, %c0_i32_0 : i32, i32, i32
  }
  func.func @transform_1(%arg0: i32) -> (i32, i32) {
    %c0_i32 = arith.constant 0 : i32
    %c0_i32_0 = arith.constant 0 : i32
    %c0_i32_1 = arith.constant 0 : i32
    return %c0_i32, %c0_i32_0 : i32, i32
  }
  func.func @transform_2(%arg0: i32) -> (i32, i32) {
    %c0_i32 = arith.constant 0 : i32
    %c0_i32_0 = arith.constant 0 : i32
    %c0_i32_1 = arith.constant 0 : i32
    return %c0_i32, %c0_i32_0 : i32, i32
  }
  func.func @transform_3(%arg0: i32) -> (i32, i32) {
    %c0_i32 = arith.constant 0 : i32
    %c0_i32_0 = arith.constant 0 : i32
    return %arg0, %c0_i32 : i32, i32
  }
}

</mosaic_0001>

<llo_original>
// kernel: resnet_forward.16
$region0: #{resnet_forward.16}
  #allocation0 [shape = 'u32[]', space=smem, size = 0x4, offset = 0x4, fixed_abs, tag = 'smem constant byte address 0x4 - core index']
  #allocation1 [shape = 'u32[144,128]{1,0:T(1,128)}', space=vmem, size = 0x12000, scoped, tag = 'internal scratch']
  %s0 = inlined_call_operand.hbm [shape: bf16[512,128], index: 0, kind: input, shape index: {}]
  %s1 = inlined_call_operand.hbm [shape: f32[1,128], index: 1, kind: input, shape index: {}]
  %s2 = inlined_call_operand.hbm [shape: f32[1,128], index: 2, kind: input, shape index: {}]
  %s3 = inlined_call_operand.hbm [shape: bf16[512,128], index: 3, kind: output, shape index: {}]
  %s4 = sld [smem:[#allocation0]]
  $region34: #{resnet_forward.16} parent=0
    _
  %s6 = ssub.s32 1, %s4
  %s7 = scalar_select 0, %s6, %s4
  $region1: #{resnet_forward.16} parent=0
    #allocation2 [shape = 'u8[131072]{0}', space=vmem, size = 0x20000, scoped, tag = 'input window, operand 0, single buffered']
    #allocation3 [shape = 's32[1]{0}', space=sflag, size = 0x4, scoped, tag = 'scoped memory for resnet_forward.16']
    #allocation4 [shape = 's32[1]{0}', space=sflag, size = 0x4, scoped, tag = 'scoped memory for resnet_forward.16']
    #allocation5 [shape = 'u8[512]{0}', space=vmem, size = 0x400, scoped, tag = 'input window, operand 1, single buffered']
    #allocation6 [shape = 's32[1]{0}', space=sflag, size = 0x4, scoped, tag = 'scoped memory for resnet_forward.16']
    #allocation7 [shape = 'u8[512]{0}', space=vmem, size = 0x400, scoped, tag = 'input window, operand 2, single buffered']
    #allocation8 [shape = 'u8[131072]{0}', space=vmem, size = 0x20000, scoped, tag = 'output window, operand 0, single buffered']
    %8 = vsyncpa [#allocation3], 0
    %9 = vsyncpa [#allocation6], 0
    %10 = vsyncpa [#allocation4], 0
    // Predicated region
    $region2: #{resnet_forward.16} parent=1 // pred_check
      _
    $region3: #{resnet_forward.16} parent=1 // pred_check_branch
      %12 = sbr.rel (0) target = $region5
    $region4: #{resnet_forward.16} parent=1 // pred_region
      %s14 = ssub.s32 4096, 4096
      %15 = vsyncadd [#allocation3], %s14
      %s16 = sshll.u32 [#allocation2], 4
      %s17 = int_to_ptr.vmem [resolvable:$true] %s16
      %22 = dma.hbm_to_vmem [thread:$0]  %s0, 4096, %s17, [#allocation3], 64, 64, 4
    $region5: #{resnet_forward.16} parent=1 // pred_fallthru
      _
    // Predicated region
    $region6: #{resnet_forward.16} parent=1 // pred_check
      _
    $region7: #{resnet_forward.16} parent=1 // pred_check_branch
      %24 = sbr.rel (0) target = $region9
    $region8: #{resnet_forward.16} parent=1 // pred_region
      %s26 = ssub.s32 16, 16
      %27 = vsyncadd [#allocation6], %s26
      %s29 = sshll.u32 [#allocation5], 4
      %s30 = int_to_ptr.vmem [resolvable:$true] %s29
      %32 = dma.hbm_to_vmem [thread:$0]  %s1, 16, %s30, [#allocation6]
    $region9: #{resnet_forward.16} parent=1 // pred_fallthru
      _
    // Predicated region
    $region10: #{resnet_forward.16} parent=1 // pred_check
      _
    $region11: #{resnet_forward.16} parent=1 // pred_check_branch
      %34 = sbr.rel (0) target = $region13
    $region12: #{resnet_forward.16} parent=1 // pred_region
      %s36 = ssub.s32 16, 16
      %37 = vsyncadd [#allocation6], %s36
      %s39 = sshll.u32 [#allocation7], 4
      %s40 = int_to_ptr.vmem [resolvable:$true] %s39
      %42 = dma.hbm_to_vmem [thread:$0]  %s2, 16, %s40, [#allocation6]
    $region13: #{resnet_forward.16} parent=1 // pred_fallthru
      _
    // Predicated region
    $region14: #{resnet_forward.16} parent=1 // pred_check
      _
    $region15: #{resnet_forward.16} parent=1 // pred_check_branch
      %44 = sbr.rel (0) target = $region17
    $region16: #{resnet_forward.16} parent=1 // pred_region
      %45 = dma.done [#allocation3], 4096
    $region17: #{resnet_forward.16} parent=1 // pred_fallthru
      _
    // Predicated region
    $region18: #{resnet_forward.16} parent=1 // pred_check
      _
    $region19: #{resnet_forward.16} parent=1 // pred_check_branch
      %47 = sbr.rel (0) target = $region21
    $region20: #{resnet_forward.16} parent=1 // pred_region
      %48 = dma.done [#allocation6], 16
    $region21: #{resnet_forward.16} parent=1 // pred_fallthru
      _
    // Predicated region
    $region22: #{resnet_forward.16} parent=1 // pred_check
      _
    $region23: #{resnet_forward.16} parent=1 // pred_check_branch
      %50 = sbr.rel (0) target = $region25
    $region24: #{resnet_forward.16} parent=1 // pred_region
      %51 = dma.done [#allocation6], 16
    $region25: #{resnet_forward.16} parent=1 // pred_fallthru
      _
    %v52 = vld [vmem:[#allocation2] sm:$0xf]
    %v53 = vld [vmem:[#allocation2 + $0x4] sm:$0xf]
    %v54 = vld [vmem:[#allocation2 + $0x8] sm:$0xf]
    %v55 = vld [vmem:[#allocation2 + $0xc] sm:$0xf]
    %v56 = vld [vmem:[#allocation2 + $0x10] sm:$0xf]
    %v57 = vld [vmem:[#allocation2 + $0x14] sm:$0xf]
    %v58 = vld [vmem:[#allocation2 + $0x18] sm:$0xf]
    %v59 = vld [vmem:[#allocation2 + $0x1c] sm:$0xf]
    %v60 = vld [vmem:[#allocation2 + $0x20] sm:$0xf]
    %v61 = vld [vmem:[#allocation2 + $0x24] sm:$0xf]
    %v62 = vld [vmem:[#allocation2 + $0x28] sm:$0xf]
    %v63 = vld [vmem:[#allocation2 + $0x2c] sm:$0xf]
    %v64 = vld [vmem:[#allocation2 + $0x30] sm:$0xf]
    %v65 = vld [vmem:[#allocation2 + $0x34] sm:$0xf]
    %v66 = vld [vmem:[#allocation2 + $0x38] sm:$0xf]
    %v67 = vld [vmem:[#allocation2 + $0x3c] sm:$0xf]
    %v68 = vld [vmem:[#allocation2 + $0x40] sm:$0xf]
    %v69 = vld [vmem:[#allocation2 + $0x44] sm:$0xf]
    %v70 = vld [vmem:[#allocation2 + $0x48] sm:$0xf]
    %v71 = vld [vmem:[#allocation2 + $0x4c] sm:$0xf]
    %v72 = vld [vmem:[#allocation2 + $0x50] sm:$0xf]
    %v73 = vld [vmem:[#allocation2 + $0x54] sm:$0xf]
    %v74 = vld [vmem:[#allocation2 + $0x58] sm:$0xf]
    %v75 = vld [vmem:[#allocation2 + $0x5c] sm:$0xf]
    %v76 = vld [vmem:[#allocation2 + $0x60] sm:$0xf]
    %v77 = vld [vmem:[#allocation2 + $0x64] sm:$0xf]
    %v78 = vld [vmem:[#allocation2 + $0x68] sm:$0xf]
    %v79 = vld [vmem:[#allocation2 + $0x6c] sm:$0xf]
    %v80 = vld [vmem:[#allocation2 + $0x70] sm:$0xf]
    %v81 = vld [vmem:[#allocation2 + $0x74] sm:$0xf]
    %v82 = vld [vmem:[#allocation2 + $0x78] sm:$0xf]
    %v83 = vld [vmem:[#allocation2 + $0x7c] sm:$0xf]
    %v84 = vld [vmem:[#allocation2 + $0x80] sm:$0xf]
    %v85 = vld [vmem:[#allocation2 + $0x84] sm:$0xf]
    %v86 = vld [vmem:[#allocation2 + $0x88] sm:$0xf]
    %v87 = vld [vmem:[#allocation2 + $0x8c] sm:$0xf]
    %v88 = vld [vmem:[#allocation2 + $0x90] sm:$0xf]
    %v89 = vld [vmem:[#allocation2 + $0x94] sm:$0xf]
    %v90 = vld [vmem:[#allocation2 + $0x98] sm:$0xf]
    %v91 = vld [vmem:[#allocation2 + $0x9c] sm:$0xf]
    %v92 = vld [vmem:[#allocation2 + $0xa0] sm:$0xf]
    %v93 = vld [vmem:[#allocation2 + $0xa4] sm:$0xf]
    %v94 = vld [vmem:[#allocation2 + $0xa8] sm:$0xf]
    %v95 = vld [vmem:[#allocation2 + $0xac] sm:$0xf]
    %v96 = vld [vmem:[#allocation2 + $0xb0] sm:$0xf]
    %v97 = vld [vmem:[#allocation2 + $0xb4] sm:$0xf]
    %v98 = vld [vmem:[#allocation2 + $0xb8] sm:$0xf]
    %v99 = vld [vmem:[#allocation2 + $0xbc] sm:$0xf]
    %v100 = vld [vmem:[#allocation2 + $0xc0] sm:$0xf]
    %v101 = vld [vmem:[#allocation2 + $0xc4] sm:$0xf]
    %v102 = vld [vmem:[#allocation2 + $0xc8] sm:$0xf]
    %v103 = vld [vmem:[#allocation2 + $0xcc] sm:$0xf]
    %v104 = vld [vmem:[#allocation2 + $0xd0] sm:$0xf]
    %v105 = vld [vmem:[#allocation2 + $0xd4] sm:$0xf]
    %v106 = vld [vmem:[#allocation2 + $0xd8] sm:$0xf]
    %v107 = vld [vmem:[#allocation2 + $0xdc] sm:$0xf]
    %v108 = vld [vmem:[#allocation2 + $0xe0] sm:$0xf]
    %v109 = vld [vmem:[#allocation2 + $0xe4] sm:$0xf]
    %v110 = vld [vmem:[#allocation2 + $0xe8] sm:$0xf]
    %v111 = vld [vmem:[#allocation2 + $0xec] sm:$0xf]
    %v112 = vld [vmem:[#allocation2 + $0xf0] sm:$0xf]
    %v113 = vld [vmem:[#allocation2 + $0xf4] sm:$0xf]
    %v114 = vld [vmem:[#allocation2 + $0xf8] sm:$0xf]
    %v115 = vld [vmem:[#allocation2 + $0xfc] sm:$0xf]
    %v116 = vunpack.c.l.bf16 %v52
    %v117 = vunpack.c.l.bf16 %v53
    %v118 = vunpack.c.l.bf16 %v54
    %v119 = vunpack.c.l.bf16 %v55
    %v120 = vunpack.c.l.bf16 %v56
    %v121 = vunpack.c.l.bf16 %v57
    %v122 = vunpack.c.l.bf16 %v58
    %v123 = vunpack.c.l.bf16 %v59
    %v124 = vunpack.c.l.bf16 %v60
    %v125 = vunpack.c.l.bf16 %v61
    %v126 = vunpack.c.l.bf16 %v62
    %v127 = vunpack.c.l.bf16 %v63
    %v128 = vunpack.c.l.bf16 %v64
    %v129 = vunpack.c.l.bf16 %v65
    %v130 = vunpack.c.l.bf16 %v66
    %v131 = vunpack.c.l.bf16 %v67
    %v132 = vunpack.c.l.bf16 %v68
    %v133 = vunpack.c.l.bf16 %v69
    %v134 = vunpack.c.l.bf16 %v70
    %v135 = vunpack.c.l.bf16 %v71
    %v136 = vunpack.c.l.bf16 %v72
    %v137 = vunpack.c.l.bf16 %v73
    %v138 = vunpack.c.l.bf16 %v74
    %v139 = vunpack.c.l.bf16 %v75
    %v140 = vunpack.c.l.bf16 %v76
    %v141 = vunpack.c.l.bf16 %v77
    %v142 = vunpack.c.l.bf16 %v78
    %v143 = vunpack.c.l.bf16 %v79
    %v144 = vunpack.c.l.bf16 %v80
    %v145 = vunpack.c.l.bf16 %v81
    %v146 = vunpack.c.l.bf16 %v82
    %v147 = vunpack.c.l.bf16 %v83
    %v148 = vunpack.c.l.bf16 %v84
    %v149 = vunpack.c.l.bf16 %v85
    %v150 = vunpack.c.l.bf16 %v86
    %v151 = vunpack.c.l.bf16 %v87
    %v152 = vunpack.c.l.bf16 %v88
    %v153 = vunpack.c.l.bf16 %v89
    %v154 = vunpack.c.l.bf16 %v90
    %v155 = vunpack.c.l.bf16 %v91
    %v156 = vunpack.c.l.bf16 %v92
    %v157 = vunpack.c.l.bf16 %v93
    %v158 = vunpack.c.l.bf16 %v94
    %v159 = vunpack.c.l.bf16 %v95
    %v160 = vunpack.c.l.bf16 %v96
    %v161 = vunpack.c.l.bf16 %v97
    %v162 = vunpack.c.l.bf16 %v98
    %v163 = vunpack.c.l.bf16 %v99
    %v164 = vunpack.c.l.bf16 %v100
    %v165 = vunpack.c.l.bf16 %v101
    %v166 = vunpack.c.l.bf16 %v102
    %v167 = vunpack.c.l.bf16 %v103
    %v168 = vunpack.c.l.bf16 %v104
    %v169 = vunpack.c.l.bf16 %v105
    %v170 = vunpack.c.l.bf16 %v106
    %v171 = vunpack.c.l.bf16 %v107
    %v172 = vunpack.c.l.bf16 %v108
    %v173 = vunpack.c.l.bf16 %v109
    %v174 = vunpack.c.l.bf16 %v110
    %v175 = vunpack.c.l.bf16 %v111
    %v176 = vunpack.c.l.bf16 %v112
    %v177 = vunpack.c.l.bf16 %v113
    %v178 = vunpack.c.l.bf16 %v114
    %v179 = vunpack.c.l.bf16 %v115
    %v180 = vld [vmem:[#allocation5] sm:$0x1]
    %v182 = vlaneseq
    %v183 = vshrl.u32 %v182, 7
    %v184 = vsub.s32 0, %v183
    %v185 = vrot.slane %v180, %v184
    %v187 = vmul.f32 %v116, %v185
    %v188 = vmul.f32 %v117, %v185
    %v189 = vmul.f32 %v118, %v185
    %v190 = vmul.f32 %v119, %v185
    %v191 = vmul.f32 %v120, %v185
    %v192 = vmul.f32 %v121, %v185
    %v193 = vmul.f32 %v122, %v185
    %v194 = vmul.f32 %v123, %v185
    %v195 = vmul.f32 %v124, %v185
    %v196 = vmul.f32 %v125, %v185
    %v197 = vmul.f32 %v126, %v185
    %v198 = vmul.f32 %v127, %v185
    %v199 = vmul.f32 %v128, %v185
    %v200 = vmul.f32 %v129, %v185
    %v201 = vmul.f32 %v130, %v185
    %v202 = vmul.f32 %v131, %v185
    %v203 = vmul.f32 %v132, %v185
    %v204 = vmul.f32 %v133, %v185
    %v205 = vmul.f32 %v134, %v185
    %v206 = vmul.f32 %v135, %v185
    %v207 = vmul.f32 %v136, %v185
    %v208 = vmul.f32 %v137, %v185
    %v209 = vmul.f32 %v138, %v185
    %v210 = vmul.f32 %v139, %v185
    %v211 = vmul.f32 %v140, %v185
    %v212 = vmul.f32 %v141, %v185
    %v213 = vmul.f32 %v142, %v185
    %v214 = vmul.f32 %v143, %v185
    %v215 = vmul.f32 %v144, %v185
    %v216 = vmul.f32 %v145, %v185
    %v217 = vmul.f32 %v146, %v185
    %v218 = vmul.f32 %v147, %v185
    %v219 = vmul.f32 %v148, %v185
    %v220 = vmul.f32 %v149, %v185
    %v221 = vmul.f32 %v150, %v185
    %v222 = vmul.f32 %v151, %v185
    %v223 = vmul.f32 %v152, %v185
    %v224 = vmul.f32 %v153, %v185
    %v225 = vmul.f32 %v154, %v185
    %v226 = vmul.f32 %v155, %v185
    %v227 = vmul.f32 %v156, %v185
    %v228 = vmul.f32 %v157, %v185
    %v229 = vmul.f32 %v158, %v185
    %v230 = vmul.f32 %v159, %v185
    %v231 = vmul.f32 %v160, %v185
    %v232 = vmul.f32 %v161, %v185
    %v233 = vmul.f32 %v162, %v185
    %v234 = vmul.f32 %v163, %v185
    %v235 = vmul.f32 %v164, %v185
    %v236 = vmul.f32 %v165, %v185
    %v237 = vmul.f32 %v166, %v185
    %v238 = vmul.f32 %v167, %v185
    %v239 = vmul.f32 %v168, %v185
    %v240 = vmul.f32 %v169, %v185
    %v241 = vmul.f32 %v170, %v185
    %v242 = vmul.f32 %v171, %v185
    %v243 = vmul.f32 %v172, %v185
    %v244 = vmul.f32 %v173, %v185
    %v245 = vmul.f32 %v174, %v185
    %v246 = vmul.f32 %v175, %v185
    %v247 = vmul.f32 %v176, %v185
    %v248 = vmul.f32 %v177, %v185
    %v249 = vmul.f32 %v178, %v185
    %v250 = vmul.f32 %v179, %v185
    %v251 = vld [vmem:[#allocation7] sm:$0x1]
    %v253 = vlaneseq
    %v254 = vshrl.u32 %v253, 7
    %v255 = vsub.s32 0, %v254
    %v256 = vrot.slane %v251, %v255
    %v258 = vadd.f32 %v187, %v256
    %v259 = vadd.f32 %v188, %v256
    %v260 = vadd.f32 %v189, %v256
    %v261 = vadd.f32 %v190, %v256
    %v262 = vadd.f32 %v191, %v256
    %v263 = vadd.f32 %v192, %v256
    %v264 = vadd.f32 %v193, %v256
    %v265 = vadd.f32 %v194, %v256
    %v266 = vadd.f32 %v195, %v256
    %v267 = vadd.f32 %v196, %v256
    %v268 = vadd.f32 %v197, %v256
    %v269 = vadd.f32 %v198, %v256
    %v270 = vadd.f32 %v199, %v256
    %v271 = vadd.f32 %v200, %v256
    %v272 = vadd.f32 %v201, %v256
    %v273 = vadd.f32 %v202, %v256
    %v274 = vadd.f32 %v203, %v256
    %v275 = vadd.f32 %v204, %v256
    %v276 = vadd.f32 %v205, %v256
    %v277 = vadd.f32 %v206, %v256
    %v278 = vadd.f32 %v207, %v256
    %v279 = vadd.f32 %v208, %v256
    %v280 = vadd.f32 %v209, %v256
    %v281 = vadd.f32 %v210, %v256
    %v282 = vadd.f32 %v211, %v256
    %v283 = vadd.f32 %v212, %v256
    %v284 = vadd.f32 %v213, %v256
    %v285 = vadd.f32 %v214, %v256
    %v286 = vadd.f32 %v215, %v256
    %v287 = vadd.f32 %v216, %v256
    %v288 = vadd.f32 %v217, %v256
    %v289 = vadd.f32 %v218, %v256
    %v290 = vadd.f32 %v219, %v256
    %v291 = vadd.f32 %v220, %v256
    %v292 = vadd.f32 %v221, %v256
    %v293 = vadd.f32 %v222, %v256
    %v294 = vadd.f32 %v223, %v256
    %v295 = vadd.f32 %v224, %v256
    %v296 = vadd.f32 %v225, %v256
    %v297 = vadd.f32 %v226, %v256
    %v298 = vadd.f32 %v227, %v256
    %v299 = vadd.f32 %v228, %v256
    %v300 = vadd.f32 %v229, %v256
    %v301 = vadd.f32 %v230, %v256
    %v302 = vadd.f32 %v231, %v256
    %v303 = vadd.f32 %v232, %v256
    %v304 = vadd.f32 %v233, %v256
    %v305 = vadd.f32 %v234, %v256
    %v306 = vadd.f32 %v235, %v256
    %v307 = vadd.f32 %v236, %v256
    %v308 = vadd.f32 %v237, %v256
    %v309 = vadd.f32 %v238, %v256
    %v310 = vadd.f32 %v239, %v256
    %v311 = vadd.f32 %v240, %v256
    %v312 = vadd.f32 %v241, %v256
    %v313 = vadd.f32 %v242, %v256
    %v314 = vadd.f32 %v243, %v256
    %v315 = vadd.f32 %v244, %v256
    %v316 = vadd.f32 %v245, %v256
    %v317 = vadd.f32 %v246, %v256
    %v318 = vadd.f32 %v247, %v256
    %v319 = vadd.f32 %v248, %v256
    %v320 = vadd.f32 %v249, %v256
    %v321 = vadd.f32 %v250, %v256
    %v322 = vmax.f32 %v258, 0.0
    %v323 = vmax.f32 %v259, 0.0
    %v324 = vmax.f32 %v260, 0.0
    %v325 = vmax.f32 %v261, 0.0
    %v326 = vmax.f32 %v262, 0.0
    %v327 = vmax.f32 %v263, 0.0
    %v328 = vmax.f32 %v264, 0.0
    %v329 = vmax.f32 %v265, 0.0
    %v330 = vmax.f32 %v266, 0.0
    %v331 = vmax.f32 %v267, 0.0
    %v332 = vmax.f32 %v268, 0.0
    %v333 = vmax.f32 %v269, 0.0
    %v334 = vmax.f32 %v270, 0.0
    %v335 = vmax.f32 %v271, 0.0
    %v336 = vmax.f32 %v272, 0.0
    %v337 = vmax.f32 %v273, 0.0
    %v338 = vmax.f32 %v274, 0.0
    %v339 = vmax.f32 %v275, 0.0
    %v340 = vmax.f32 %v276, 0.0
    %v341 = vmax.f32 %v277, 0.0
    %v342 = vmax.f32 %v278, 0.0
    %v343 = vmax.f32 %v279, 0.0
    %v344 = vmax.f32 %v280, 0.0
    %v345 = vmax.f32 %v281, 0.0
    %v346 = vmax.f32 %v282, 0.0
    %v347 = vmax.f32 %v283, 0.0
    %v348 = vmax.f32 %v284, 0.0
    %v349 = vmax.f32 %v285, 0.0
    %v350 = vmax.f32 %v286, 0.0
    %v351 = vmax.f32 %v287, 0.0
    %v352 = vmax.f32 %v288, 0.0
    %v353 = vmax.f32 %v289, 0.0
    %v354 = vmax.f32 %v290, 0.0
    %v355 = vmax.f32 %v291, 0.0
    %v356 = vmax.f32 %v292, 0.0
    %v357 = vmax.f32 %v293, 0.0
    %v358 = vmax.f32 %v294, 0.0
    %v359 = vmax.f32 %v295, 0.0
    %v360 = vmax.f32 %v296, 0.0
    %v361 = vmax.f32 %v297, 0.0
    %v362 = vmax.f32 %v298, 0.0
    %v363 = vmax.f32 %v299, 0.0
    %v364 = vmax.f32 %v300, 0.0
    %v365 = vmax.f32 %v301, 0.0
    %v366 = vmax.f32 %v302, 0.0
    %v367 = vmax.f32 %v303, 0.0
    %v368 = vmax.f32 %v304, 0.0
    %v369 = vmax.f32 %v305, 0.0
    %v370 = vmax.f32 %v306, 0.0
    %v371 = vmax.f32 %v307, 0.0
    %v372 = vmax.f32 %v308, 0.0
    %v373 = vmax.f32 %v309, 0.0
    %v374 = vmax.f32 %v310, 0.0
    %v375 = vmax.f32 %v311, 0.0
    %v376 = vmax.f32 %v312, 0.0
    %v377 = vmax.f32 %v313, 0.0
    %v378 = vmax.f32 %v314, 0.0
    %v379 = vmax.f32 %v315, 0.0
    %v380 = vmax.f32 %v316, 0.0
    %v381 = vmax.f32 %v317, 0.0
    %v382 = vmax.f32 %v318, 0.0
    %v383 = vmax.f32 %v319, 0.0
    %v384 = vmax.f32 %v320, 0.0
    %v385 = vmax.f32 %v321, 0.0
    %v386 = vpack.c.bf16 %v323, %v322
    %v387 = vpack.c.bf16 %v325, %v324
    %v388 = vpack.c.bf16 %v327, %v326
    %v389 = vpack.c.bf16 %v329, %v328
    %v390 = vpack.c.bf16 %v331, %v330
    %v391 = vpack.c.bf16 %v333, %v332
    %v392 = vpack.c.bf16 %v335, %v334
    %v393 = vpack.c.bf16 %v337, %v336
    %v394 = vpack.c.bf16 %v339, %v338
    %v395 = vpack.c.bf16 %v341, %v340
    %v396 = vpack.c.bf16 %v343, %v342
    %v397 = vpack.c.bf16 %v345, %v344
    %v398 = vpack.c.bf16 %v347, %v346
    %v399 = vpack.c.bf16 %v349, %v348
    %v400 = vpack.c.bf16 %v351, %v350
    %v401 = vpack.c.bf16 %v353, %v352
    %v402 = vpack.c.bf16 %v355, %v354
    %v403 = vpack.c.bf16 %v357, %v356
    %v404 = vpack.c.bf16 %v359, %v358
    %v405 = vpack.c.bf16 %v361, %v360
    %v406 = vpack.c.bf16 %v363, %v362
    %v407 = vpack.c.bf16 %v365, %v364
    %v408 = vpack.c.bf16 %v367, %v366
    %v409 = vpack.c.bf16 %v369, %v368
    %v410 = vpack.c.bf16 %v371, %v370
    %v411 = vpack.c.bf16 %v373, %v372
    %v412 = vpack.c.bf16 %v375, %v374
    %v413 = vpack.c.bf16 %v377, %v376
    %v414 = vpack.c.bf16 %v379, %v378
    %v415 = vpack.c.bf16 %v381, %v380
    %v416 = vpack.c.bf16 %v383, %v382
    %v417 = vpack.c.bf16 %v385, %v384
    %v450 = vunpack.c.l.b16 %v386
    %v451 = vunpack.c.h.b16 %v386
    %v452 = vunpack.c.l.b16 %v387
    %v453 = vunpack.c.h.b16 %v387
    %v454 = vunpack.c.l.b16 %v388
    %v455 = vunpack.c.h.b16 %v388
    %v456 = vunpack.c.l.b16 %v389
    %v457 = vunpack.c.h.b16 %v389
    %v458 = vunpack.c.l.b16 %v390
    %v459 = vunpack.c.h.b16 %v390
    %v460 = vunpack.c.l.b16 %v391
    %v461 = vunpack.c.h.b16 %v391
    %v462 = vunpack.c.l.b16 %v392
    %v463 = vunpack.c.h.b16 %v392
    %v464 = vunpack.c.l.b16 %v393
    %v465 = vunpack.c.h.b16 %v393
    %v466 = vunpack.c.l.b16 %v394
    %v467 = vunpack.c.h.b16 %v394
    %v468 = vunpack.c.l.b16 %v395
    %v469 = vunpack.c.h.b16 %v395
    %v470 = vunpack.c.l.b16 %v396
    %v471 = vunpack.c.h.b16 %v396
    %v472 = vunpack.c.l.b16 %v397
    %v473 = vunpack.c.h.b16 %v397
    %v474 = vunpack.c.l.b16 %v398
    %v475 = vunpack.c.h.b16 %v398
    %v476 = vunpack.c.l.b16 %v399
    %v477 = vunpack.c.h.b16 %v399
    %v478 = vunpack.c.l.b16 %v400
    %v479 = vunpack.c.h.b16 %v400
    %v480 = vunpack.c.l.b16 %v401
    %v481 = vunpack.c.h.b16 %v401
    %v482 = vunpack.c.l.b16 %v402
    %v483 = vunpack.c.h.b16 %v402
    %v484 = vunpack.c.l.b16 %v403
    %v485 = vunpack.c.h.b16 %v403
    %v486 = vunpack.c.l.b16 %v404
    %v487 = vunpack.c.h.b16 %v404
    %v488 = vunpack.c.l.b16 %v405
    %v489 = vunpack.c.h.b16 %v405
    %v490 = vunpack.c.l.b16 %v406
    %v491 = vunpack.c.h.b16 %v406
    %v492 = vunpack.c.l.b16 %v407
    %v493 = vunpack.c.h.b16 %v407
    %v494 = vunpack.c.l.b16 %v408
    %v495 = vunpack.c.h.b16 %v408
    %v496 = vunpack.c.l.b16 %v409
    %v497 = vunpack.c.h.b16 %v409
    %v498 = vunpack.c.l.b16 %v410
    %v499 = vunpack.c.h.b16 %v410
    %v500 = vunpack.c.l.b16 %v411
    %v501 = vunpack.c.h.b16 %v411
    %v502 = vunpack.c.l.b16 %v412
    %v503 = vunpack.c.h.b16 %v412
    %v504 = vunpack.c.l.b16 %v413
    %v505 = vunpack.c.h.b16 %v413
    %v506 = vunpack.c.l.b16 %v414
    %v507 = vunpack.c.h.b16 %v414
    %v508 = vunpack.c.l.b16 %v415
    %v509 = vunpack.c.h.b16 %v415
    %v510 = vunpack.c.l.b16 %v416
    %v511 = vunpack.c.h.b16 %v416
    %v512 = vunpack.c.l.b16 %v417
    %v513 = vunpack.c.h.b16 %v417
    %v514 = vpack.c.b16 %v450, %v450
    %v515 = vpack.c.b16 %v451, %v451
    %v516 = vpack.c.b16 %v452, %v452
    %v517 = vpack.c.b16 %v453, %v453
    %v518 = vpack.c.b16 %v454, %v454
    %v519 = vpack.c.b16 %v455, %v455
    %v520 = vpack.c.b16 %v456, %v456
    %v521 = vpack.c.b16 %v457, %v457
    %v522 = vpack.c.b16 %v458, %v458
    %v523 = vpack.c.b16 %v459, %v459
    %v524 = vpack.c.b16 %v460, %v460
    %v525 = vpack.c.b16 %v461, %v461
    %v526 = vpack.c.b16 %v462, %v462
    %v527 = vpack.c.b16 %v463, %v463
    %v528 = vpack.c.b16 %v464, %v464
    %v529 = vpack.c.b16 %v465, %v465
    %v530 = vpack.c.b16 %v466, %v466
    %v531 = vpack.c.b16 %v467, %v467
    %v532 = vpack.c.b16 %v468, %v468
    %v533 = vpack.c.b16 %v469, %v469
    %v534 = vpack.c.b16 %v470, %v470
    %v535 = vpack.c.b16 %v471, %v471
    %v536 = vpack.c.b16 %v472, %v472
    %v537 = vpack.c.b16 %v473, %v473
    %v538 = vpack.c.b16 %v474, %v474
    %v539 = vpack.c.b16 %v475, %v475
    %v540 = vpack.c.b16 %v476, %v476
    %v541 = vpack.c.b16 %v477, %v477
    %v542 = vpack.c.b16 %v478, %v478
    %v543 = vpack.c.b16 %v479, %v479
    %v544 = vpack.c.b16 %v480, %v480
    %v545 = vpack.c.b16 %v481, %v481
    %v546 = vpack.c.b16 %v482, %v482
    %v547 = vpack.c.b16 %v483, %v483
    %v548 = vpack.c.b16 %v484, %v484
    %v549 = vpack.c.b16 %v485, %v485
    %v550 = vpack.c.b16 %v486, %v486
    %v551 = vpack.c.b16 %v487, %v487
    %v552 = vpack.c.b16 %v488, %v488
    %v553 = vpack.c.b16 %v489, %v489
    %v554 = vpack.c.b16 %v490, %v490
    %v555 = vpack.c.b16 %v491, %v491
    %v556 = vpack.c.b16 %v492, %v492
    %v557 = vpack.c.b16 %v493, %v493
    %v558 = vpack.c.b16 %v494, %v494
    %v559 = vpack.c.b16 %v495, %v495
    %v560 = vpack.c.b16 %v496, %v496
    %v561 = vpack.c.b16 %v497, %v497
    %v562 = vpack.c.b16 %v498, %v498
    %v563 = vpack.c.b16 %v499, %v499
    %v564 = vpack.c.b16 %v500, %v500
    %v565 = vpack.c.b16 %v501, %v501
    %v566 = vpack.c.b16 %v502, %v502
    %v567 = vpack.c.b16 %v503, %v503
    %v568 = vpack.c.b16 %v504, %v504
    %v569 = vpack.c.b16 %v505, %v505
    %v570 = vpack.c.b16 %v506, %v506
    %v571 = vpack.c.b16 %v507, %v507
    %v572 = vpack.c.b16 %v508, %v508
    %v573 = vpack.c.b16 %v509, %v509
    %v574 = vpack.c.b16 %v510, %v510
    %v575 = vpack.c.b16 %v511, %v511
    %v576 = vpack.c.b16 %v512, %v512
    %v577 = vpack.c.b16 %v513, %v513
    %642 = vst [vmem:[#allocation8] sm:$0xf] %v514
    %643 = vst [vmem:[#allocation8 + $0x4] sm:$0xf] %v515
    %644 = vst [vmem:[#allocation8 + $0x8] sm:$0xf] %v516
    %645 = vst [vmem:[#allocation8 + $0xc] sm:$0xf] %v517
    %646 = vst [vmem:[#allocation8 + $0x10] sm:$0xf] %v518
    %647 = vst [vmem:[#allocation8 + $0x14] sm:$0xf] %v519
    %648 = vst [vmem:[#allocation8 + $0x18] sm:$0xf] %v520
    %649 = vst [vmem:[#allocation8 + $0x1c] sm:$0xf] %v521
    %650 = vst [vmem:[#allocation8 + $0x20] sm:$0xf] %v522
    %651 = vst [vmem:[#allocation8 + $0x24] sm:$0xf] %v523
    %652 = vst [vmem:[#allocation8 + $0x28] sm:$0xf] %v524
    %653 = vst [vmem:[#allocation8 + $0x2c] sm:$0xf] %v525
    %654 = vst [vmem:[#allocation8 + $0x30] sm:$0xf] %v526
    %655 = vst [vmem:[#allocation8 + $0x34] sm:$0xf] %v527
    %656 = vst [vmem:[#allocation8 + $0x38] sm:$0xf] %v528
    %657 = vst [vmem:[#allocation8 + $0x3c] sm:$0xf] %v529
    %658 = vst [vmem:[#allocation8 + $0x40] sm:$0xf] %v530
    %659 = vst [vmem:[#allocation8 + $0x44] sm:$0xf] %v531
    %660 = vst [vmem:[#allocation8 + $0x48] sm:$0xf] %v532
    %661 = vst [vmem:[#allocation8 + $0x4c] sm:$0xf] %v533
    %662 = vst [vmem:[#allocation8 + $0x50] sm:$0xf] %v534
    %663 = vst [vmem:[#allocation8 + $0x54] sm:$0xf] %v535
    %664 = vst [vmem:[#allocation8 + $0x58] sm:$0xf] %v536
    %665 = vst [vmem:[#allocation8 + $0x5c] sm:$0xf] %v537
    %666 = vst [vmem:[#allocation8 + $0x60] sm:$0xf] %v538
    %667 = vst [vmem:[#allocation8 + $0x64] sm:$0xf] %v539
    %668 = vst [vmem:[#allocation8 + $0x68] sm:$0xf] %v540
    %669 = vst [vmem:[#allocation8 + $0x6c] sm:$0xf] %v541
    %670 = vst [vmem:[#allocation8 + $0x70] sm:$0xf] %v542
    %671 = vst [vmem:[#allocation8 + $0x74] sm:$0xf] %v543
    %672 = vst [vmem:[#allocation8 + $0x78] sm:$0xf] %v544
    %673 = vst [vmem:[#allocation8 + $0x7c] sm:$0xf] %v545
    %674 = vst [vmem:[#allocation8 + $0x80] sm:$0xf] %v546
    %675 = vst [vmem:[#allocation8 + $0x84] sm:$0xf] %v547
    %676 = vst [vmem:[#allocation8 + $0x88] sm:$0xf] %v548
    %677 = vst [vmem:[#allocation8 + $0x8c] sm:$0xf] %v549
    %678 = vst [vmem:[#allocation8 + $0x90] sm:$0xf] %v550
    %679 = vst [vmem:[#allocation8 + $0x94] sm:$0xf] %v551
    %680 = vst [vmem:[#allocation8 + $0x98] sm:$0xf] %v552
    %681 = vst [vmem:[#allocation8 + $0x9c] sm:$0xf] %v553
    %682 = vst [vmem:[#allocation8 + $0xa0] sm:$0xf] %v554
    %683 = vst [vmem:[#allocation8 + $0xa4] sm:$0xf] %v555
    %684 = vst [vmem:[#allocation8 + $0xa8] sm:$0xf] %v556
    %685 = vst [vmem:[#allocation8 + $0xac] sm:$0xf] %v557
    %686 = vst [vmem:[#allocation8 + $0xb0] sm:$0xf] %v558
    %687 = vst [vmem:[#allocation8 + $0xb4] sm:$0xf] %v559
    %688 = vst [vmem:[#allocation8 + $0xb8] sm:$0xf] %v560
    %689 = vst [vmem:[#allocation8 + $0xbc] sm:$0xf] %v561
    %690 = vst [vmem:[#allocation8 + $0xc0] sm:$0xf] %v562
    %691 = vst [vmem:[#allocation8 + $0xc4] sm:$0xf] %v563
    %692 = vst [vmem:[#allocation8 + $0xc8] sm:$0xf] %v564
    %693 = vst [vmem:[#allocation8 + $0xcc] sm:$0xf] %v565
    %694 = vst [vmem:[#allocation8 + $0xd0] sm:$0xf] %v566
    %695 = vst [vmem:[#allocation8 + $0xd4] sm:$0xf] %v567
    %696 = vst [vmem:[#allocation8 + $0xd8] sm:$0xf] %v568
    %697 = vst [vmem:[#allocation8 + $0xdc] sm:$0xf] %v569
    %698 = vst [vmem:[#allocation8 + $0xe0] sm:$0xf] %v570
    %699 = vst [vmem:[#allocation8 + $0xe4] sm:$0xf] %v571
    %700 = vst [vmem:[#allocation8 + $0xe8] sm:$0xf] %v572
    %701 = vst [vmem:[#allocation8 + $0xec] sm:$0xf] %v573
    %702 = vst [vmem:[#allocation8 + $0xf0] sm:$0xf] %v574
    %703 = vst [vmem:[#allocation8 + $0xf4] sm:$0xf] %v575
    %704 = vst [vmem:[#allocation8 + $0xf8] sm:$0xf] %v576
    %705 = vst [vmem:[#allocation8 + $0xfc] sm:$0xf] %v577
    // Predicated region
    $region26: #{resnet_forward.16} parent=1 // pred_check
      _
    $region27: #{resnet_forward.16} parent=1 // pred_check_branch
      %707 = sbr.rel (0) target = $region29
    $region28: #{resnet_forward.16} parent=1 // pred_region
      %s709 = ssub.s32 4096, 4096
      %710 = vsyncadd [#allocation4], %s709
      %s711 = sshll.u32 [#allocation8], 4
      %s712 = int_to_ptr.vmem [resolvable:$true] %s711
      %717 = dma.vmem_to_hbm [thread:$0]  %s712, 4096, %s3, [#allocation4], 64, 64, 4
    $region29: #{resnet_forward.16} parent=1 // pred_fallthru
      _
    // Predicated region
    $region30: #{resnet_forward.16} parent=1 // pred_check
      _
    $region31: #{resnet_forward.16} parent=1 // pred_check_branch
      %719 = sbr.rel (0) target = $region33
    $region32: #{resnet_forward.16} parent=1 // pred_region
      %720 = dma.done [#allocation4], 4096
    $region33: #{resnet_forward.16} parent=1 // pred_fallthru
      _
    %721 = vsyncpa [#allocation3], 1
    %722 = vsyncpa [#allocation6], 1
    %723 = vsyncpa [#allocation4], 1

// kernel: resnet_forward.15
$region0: #{resnet_forward.15}
  #allocation0 [shape = 'u32[]', space=smem, size = 0x4, offset = 0x4, fixed_abs, tag = 'smem constant byte address 0x4 - core index']
  #allocation1 [shape = 'u32[144,128]{1,0:T(1,128)}', space=vmem, size = 0x12000, scoped, tag = 'internal scratch']
  %s0 = inlined_call_operand.hbm [shape: bf16[512,128], index: 0, kind: input, shape index: {}]
  %s1 = inlined_call_operand.hbm [shape: bf16[128,128], index: 1, kind: input, shape index: {}]
  %s2 = inlined_call_operand.hbm [shape: bf16[512,128], index: 2, kind: output, shape index: {0}]
  %s3 = inlined_call_operand.hbm [shape: f32[1,8,128], index: 3, kind: output, shape index: {1}]
  %4 = xla_tuple %s2, %s3
  %s5 = sld [smem:[#allocation0]]
  $region34: #{resnet_forward.15} parent=0
    _
  %s7 = ssub.s32 1, %s5
  %s8 = scalar_select 0, %s7, %s5
  $region1: #{resnet_forward.15} parent=0
    #allocation2 [shape = 'u8[131072]{0}', space=vmem, size = 0x20000, scoped, tag = 'input window, operand 0, single buffered']
    #allocation3 [shape = 's32[1]{0}', space=sflag, size = 0x4, scoped, tag = 'scoped memory for resnet_forward.15']
    #allocation4 [shape = 's32[1]{0}', space=sflag, size = 0x4, scoped, tag = 'scoped memory for resnet_forward.15']
    #allocation5 [shape = 'u8[32768]{0}', space=vmem, size = 0x8000, scoped, tag = 'input window, operand 1, single buffered']
    #allocation6 [shape = 's32[1]{0}', space=sflag, size = 0x4, scoped, tag = 'scoped memory for resnet_forward.15']
    #allocation7 [shape = 'u8[131072]{0}', space=vmem, size = 0x20000, scoped, tag = 'output window, operand 0, single buffered']
    #allocation8 [shape = 'u8[4096]{0}', space=vmem, size = 0x1000, scoped, tag = 'output window, operand 1, single buffered']
    #allocation9 [shape = 's32[1]{0}', space=sflag, size = 0x4, scoped, tag = 'scoped memory for resnet_forward.15']
    %9 = vsyncpa [#allocation3], 0
    %10 = vsyncpa [#allocation6], 0
    %11 = vsyncpa [#allocation4], 0
    %12 = vsyncpa [#allocation9], 0
    // Predicated region
    $region2: #{resnet_forward.15} parent=1 // pred_check
      _
    $region3: #{resnet_forward.15} parent=1 // pred_check_branch
      %14 = sbr.rel (0) target = $region5
    $region4: #{resnet_forward.15} parent=1 // pred_region
      %s16 = ssub.s32 4096, 4096
      %17 = vsyncadd [#allocation3], %s16
      %s18 = sshll.u32 [#allocation2], 4
      %s19 = int_to_ptr.vmem [resolvable:$true] %s18
      %24 = dma.hbm_to_vmem [thread:$0]  %s0, 4096, %s19, [#allocation3], 64, 64, 4
    $region5: #{resnet_forward.15} parent=1 // pred_fallthru
      _
    // Predicated region
    $region6: #{resnet_forward.15} parent=1 // pred_check
      _
    $region7: #{resnet_forward.15} parent=1 // pred_check_branch
      %26 = sbr.rel (0) target = $region9
    $region8: #{resnet_forward.15} parent=1 // pred_region
      %s28 = ssub.s32 1024, 1024
      %29 = vsyncadd [#allocation6], %s28
      %s30 = sshll.u32 [#allocation5], 4
      %s31 = int_to_ptr.vmem [resolvable:$true] %s30
      %36 = dma.hbm_to_vmem [thread:$0]  %s1, 1024, %s31, [#allocation6], 64, 64, 4
    $region9: #{resnet_forward.15} parent=1 // pred_fallthru
      _
    // Predicated region
    $region10: #{resnet_forward.15} parent=1 // pred_check
      _
    $region11: #{resnet_forward.15} parent=1 // pred_check_branch
      %38 = sbr.rel (0) target = $region13
    $region12: #{resnet_forward.15} parent=1 // pred_region
      %39 = dma.done [#allocation3], 4096
    $region13: #{resnet_forward.15} parent=1 // pred_fallthru
      _
    // Predicated region
    $region14: #{resnet_forward.15} parent=1 // pred_check
      _
    $region15: #{resnet_forward.15} parent=1 // pred_check_branch
      %41 = sbr.rel (0) target = $region17
    $region16: #{resnet_forward.15} parent=1 // pred_region
      %42 = dma.done [#allocation6], 1024
    $region17: #{resnet_forward.15} parent=1 // pred_fallthru
      _
    %v44 = vld [vmem:[#allocation2] sm:$0xf]
    %v45 = vld [vmem:[#allocation2 + $0x4] sm:$0xf]
    %v46 = vld [vmem:[#allocation2 + $0x8] sm:$0xf]
    %v47 = vld [vmem:[#allocation2 + $0xc] sm:$0xf]
    %v48 = vld [vmem:[#allocation2 + $0x10] sm:$0xf]
    %v49 = vld [vmem:[#allocation2 + $0x14] sm:$0xf]
    %v50 = vld [vmem:[#allocation2 + $0x18] sm:$0xf]
    %v51 = vld [vmem:[#allocation2 + $0x1c] sm:$0xf]
    %v52 = vld [vmem:[#allocation2 + $0x20] sm:$0xf]
    %v53 = vld [vmem:[#allocation2 + $0x24] sm:$0xf]
    %v54 = vld [vmem:[#allocation2 + $0x28] sm:$0xf]
    %v55 = vld [vmem:[#allocation2 + $0x2c] sm:$0xf]
    %v56 = vld [vmem:[#allocation2 + $0x30] sm:$0xf]
    %v57 = vld [vmem:[#allocation2 + $0x34] sm:$0xf]
    %v58 = vld [vmem:[#allocation2 + $0x38] sm:$0xf]
    %v59 = vld [vmem:[#allocation2 + $0x3c] sm:$0xf]
    %v60 = vld [vmem:[#allocation2 + $0x40] sm:$0xf]
    %v61 = vld [vmem:[#allocation2 + $0x44] sm:$0xf]
    %v62 = vld [vmem:[#allocation2 + $0x48] sm:$0xf]
    %v63 = vld [vmem:[#allocation2 + $0x4c] sm:$0xf]
    %v64 = vld [vmem:[#allocation2 + $0x50] sm:$0xf]
    %v65 = vld [vmem:[#allocation2 + $0x54] sm:$0xf]
    %v66 = vld [vmem:[#allocation2 + $0x58] sm:$0xf]
    %v67 = vld [vmem:[#allocation2 + $0x5c] sm:$0xf]
    %v68 = vld [vmem:[#allocation2 + $0x60] sm:$0xf]
    %v69 = vld [vmem:[#allocation2 + $0x64] sm:$0xf]
    %v70 = vld [vmem:[#allocation2 + $0x68] sm:$0xf]
    %v71 = vld [vmem:[#allocation2 + $0x6c] sm:$0xf]
    %v72 = vld [vmem:[#allocation2 + $0x70] sm:$0xf]
    %v73 = vld [vmem:[#allocation2 + $0x74] sm:$0xf]
    %v74 = vld [vmem:[#allocation2 + $0x78] sm:$0xf]
    %v75 = vld [vmem:[#allocation2 + $0x7c] sm:$0xf]
    %v76 = vld [vmem:[#allocation2 + $0x80] sm:$0xf]
    %v77 = vld [vmem:[#allocation2 + $0x84] sm:$0xf]
    %v78 = vld [vmem:[#allocation2 + $0x88] sm:$0xf]
    %v79 = vld [vmem:[#allocation2 + $0x8c] sm:$0xf]
    %v80 = vld [vmem:[#allocation2 + $0x90] sm:$0xf]
    %v81 = vld [vmem:[#allocation2 + $0x94] sm:$0xf]
    %v82 = vld [vmem:[#allocation2 + $0x98] sm:$0xf]
    %v83 = vld [vmem:[#allocation2 + $0x9c] sm:$0xf]
    %v84 = vld [vmem:[#allocation2 + $0xa0] sm:$0xf]
    %v85 = vld [vmem:[#allocation2 + $0xa4] sm:$0xf]
    %v86 = vld [vmem:[#allocation2 + $0xa8] sm:$0xf]
    %v87 = vld [vmem:[#allocation2 + $0xac] sm:$0xf]
    %v88 = vld [vmem:[#allocation2 + $0xb0] sm:$0xf]
    %v89 = vld [vmem:[#allocation2 + $0xb4] sm:$0xf]
    %v90 = vld [vmem:[#allocation2 + $0xb8] sm:$0xf]
    %v91 = vld [vmem:[#allocation2 + $0xbc] sm:$0xf]
    %v92 = vld [vmem:[#allocation2 + $0xc0] sm:$0xf]
    %v93 = vld [vmem:[#allocation2 + $0xc4] sm:$0xf]
    %v94 = vld [vmem:[#allocation2 + $0xc8] sm:$0xf]
    %v95 = vld [vmem:[#allocation2 + $0xcc] sm:$0xf]
    %v96 = vld [vmem:[#allocation2 + $0xd0] sm:$0xf]
    %v97 = vld [vmem:[#allocation2 + $0xd4] sm:$0xf]
    %v98 = vld [vmem:[#allocation2 + $0xd8] sm:$0xf]
    %v99 = vld [vmem:[#allocation2 + $0xdc] sm:$0xf]
    %v100 = vld [vmem:[#allocation2 + $0xe0] sm:$0xf]
    %v101 = vld [vmem:[#allocation2 + $0xe4] sm:$0xf]
    %v102 = vld [vmem:[#allocation2 + $0xe8] sm:$0xf]
    %v103 = vld [vmem:[#allocation2 + $0xec] sm:$0xf]
    %v104 = vld [vmem:[#allocation2 + $0xf0] sm:$0xf]
    %v105 = vld [vmem:[#allocation2 + $0xf4] sm:$0xf]
    %v106 = vld [vmem:[#allocation2 + $0xf8] sm:$0xf]
    %v107 = vld [vmem:[#allocation2 + $0xfc] sm:$0xf]
    %v108 = vld [vmem:[#allocation5] sm:$0xf]
    %v109 = vld [vmem:[#allocation5 + $0x4] sm:$0xf]
    %v110 = vld [vmem:[#allocation5 + $0x8] sm:$0xf]
    %v111 = vld [vmem:[#allocation5 + $0xc] sm:$0xf]
    %v112 = vld [vmem:[#allocation5 + $0x10] sm:$0xf]
    %v113 = vld [vmem:[#allocation5 + $0x14] sm:$0xf]
    %v114 = vld [vmem:[#allocation5 + $0x18] sm:$0xf]
    %v115 = vld [vmem:[#allocation5 + $0x1c] sm:$0xf]
    %v116 = vld [vmem:[#allocation5 + $0x20] sm:$0xf]
    %v117 = vld [vmem:[#allocation5 + $0x24] sm:$0xf]
    %v118 = vld [vmem:[#allocation5 + $0x28] sm:$0xf]
    %v119 = vld [vmem:[#allocation5 + $0x2c] sm:$0xf]
    %v120 = vld [vmem:[#allocation5 + $0x30] sm:$0xf]
    %v121 = vld [vmem:[#allocation5 + $0x34] sm:$0xf]
    %v122 = vld [vmem:[#allocation5 + $0x38] sm:$0xf]
    %v123 = vld [vmem:[#allocation5 + $0x3c] sm:$0xf]
    %v188 = vunpack.c.l.b16 %v44
    %v189 = vunpack.c.l.b16 %v45
    %v190 = vunpack.c.l.b16 %v46
    %v191 = vunpack.c.l.b16 %v47
    %v192 = vunpack.c.l.b16 %v48
    %v193 = vunpack.c.l.b16 %v49
    %v194 = vunpack.c.l.b16 %v50
    %v195 = vunpack.c.l.b16 %v51
    %v196 = vunpack.c.l.b16 %v52
    %v197 = vunpack.c.l.b16 %v53
    %v198 = vunpack.c.l.b16 %v54
    %v199 = vunpack.c.l.b16 %v55
    %v200 = vunpack.c.l.b16 %v56
    %v201 = vunpack.c.l.b16 %v57
    %v202 = vunpack.c.l.b16 %v58
    %v203 = vunpack.c.l.b16 %v59
    %v204 = vunpack.c.l.b16 %v60
    %v205 = vunpack.c.l.b16 %v61
    %v206 = vunpack.c.l.b16 %v62
    %v207 = vunpack.c.l.b16 %v63
    %v208 = vunpack.c.l.b16 %v64
    %v209 = vunpack.c.l.b16 %v65
    %v210 = vunpack.c.l.b16 %v66
    %v211 = vunpack.c.l.b16 %v67
    %v212 = vunpack.c.l.b16 %v68
    %v213 = vunpack.c.l.b16 %v69
    %v214 = vunpack.c.l.b16 %v70
    %v215 = vunpack.c.l.b16 %v71
    %v216 = vunpack.c.l.b16 %v72
    %v217 = vunpack.c.l.b16 %v73
    %v218 = vunpack.c.l.b16 %v74
    %v219 = vunpack.c.l.b16 %v75
    %v220 = vunpack.c.l.b16 %v76
    %v221 = vunpack.c.l.b16 %v77
    %v222 = vunpack.c.l.b16 %v78
    %v223 = vunpack.c.l.b16 %v79
    %v224 = vunpack.c.l.b16 %v80
    %v225 = vunpack.c.l.b16 %v81
    %v226 = vunpack.c.l.b16 %v82
    %v227 = vunpack.c.l.b16 %v83
    %v228 = vunpack.c.l.b16 %v84
    %v229 = vunpack.c.l.b16 %v85
    %v230 = vunpack.c.l.b16 %v86
    %v231 = vunpack.c.l.b16 %v87
    %v232 = vunpack.c.l.b16 %v88
    %v233 = vunpack.c.l.b16 %v89
    %v234 = vunpack.c.l.b16 %v90
    %v235 = vunpack.c.l.b16 %v91
    %v236 = vunpack.c.l.b16 %v92
    %v237 = vunpack.c.l.b16 %v93
    %v238 = vunpack.c.l.b16 %v94
    %v239 = vunpack.c.l.b16 %v95
    %v240 = vunpack.c.l.b16 %v96
    %v241 = vunpack.c.l.b16 %v97
    %v242 = vunpack.c.l.b16 %v98
    %v243 = vunpack.c.l.b16 %v99
    %v244 = vunpack.c.l.b16 %v100
    %v245 = vunpack.c.l.b16 %v101
    %v246 = vunpack.c.l.b16 %v102
    %v247 = vunpack.c.l.b16 %v103
    %v248 = vunpack.c.l.b16 %v104
    %v249 = vunpack.c.l.b16 %v105
    %v250 = vunpack.c.l.b16 %v106
    %v251 = vunpack.c.l.b16 %v107
    %v252 = vpack.c.b16 %v189, %v188
    %v253 = vpack.c.b16 %v191, %v190
    %v254 = vpack.c.b16 %v193, %v192
    %v255 = vpack.c.b16 %v195, %v194
    %v256 = vpack.c.b16 %v197, %v196
    %v257 = vpack.c.b16 %v199, %v198
    %v258 = vpack.c.b16 %v201, %v200
    %v259 = vpack.c.b16 %v203, %v202
    %v260 = vpack.c.b16 %v205, %v204
    %v261 = vpack.c.b16 %v207, %v206
    %v262 = vpack.c.b16 %v209, %v208
    %v263 = vpack.c.b16 %v211, %v210
    %v264 = vpack.c.b16 %v213, %v212
    %v265 = vpack.c.b16 %v215, %v214
    %v266 = vpack.c.b16 %v217, %v216
    %v267 = vpack.c.b16 %v219, %v218
    %v268 = vpack.c.b16 %v221, %v220
    %v269 = vpack.c.b16 %v223, %v222
    %v270 = vpack.c.b16 %v225, %v224
    %v271 = vpack.c.b16 %v227, %v226
    %v272 = vpack.c.b16 %v229, %v228
    %v273 = vpack.c.b16 %v231, %v230
    %v274 = vpack.c.b16 %v233, %v232
    %v275 = vpack.c.b16 %v235, %v234
    %v276 = vpack.c.b16 %v237, %v236
    %v277 = vpack.c.b16 %v239, %v238
    %v278 = vpack.c.b16 %v241, %v240
    %v279 = vpack.c.b16 %v243, %v242
    %v280 = vpack.c.b16 %v245, %v244
    %v281 = vpack.c.b16 %v247, %v246
    %v282 = vpack.c.b16 %v249, %v248
    %v283 = vpack.c.b16 %v251, %v250
    %v332 = vunpack.c.l.b16 %v108
    %v333 = vunpack.c.l.b16 %v109
    %v334 = vunpack.c.l.b16 %v110
    %v335 = vunpack.c.l.b16 %v111
    %v336 = vunpack.c.l.b16 %v112
    %v337 = vunpack.c.l.b16 %v113
    %v338 = vunpack.c.l.b16 %v114
    %v339 = vunpack.c.l.b16 %v115
    %v340 = vunpack.c.l.b16 %v116
    %v341 = vunpack.c.l.b16 %v117
    %v342 = vunpack.c.l.b16 %v118
    %v343 = vunpack.c.l.b16 %v119
    %v344 = vunpack.c.l.b16 %v120
    %v345 = vunpack.c.l.b16 %v121
    %v346 = vunpack.c.l.b16 %v122
    %v347 = vunpack.c.l.b16 %v123
    %v348 = vpack.c.b16 %v333, %v332
    %v349 = vpack.c.b16 %v335, %v334
    %v350 = vpack.c.b16 %v337, %v336
    %v351 = vpack.c.b16 %v339, %v338
    %v352 = vpack.c.b16 %v341, %v340
    %v353 = vpack.c.b16 %v343, %v342
    %v354 = vpack.c.b16 %v345, %v344
    %v355 = vpack.c.b16 %v347, %v346
    %364 = vmatprep.subr.bf16.mxu0 0
    %365 = vmatpush1.bf16.msra.mxu0 %v348
    %366 = vmatprep.subr.bf16.mxu0 0
    %367 = vmatpush1.bf16.msra.mxu0 %v349
    %368 = vmatprep.subr.bf16.mxu0 0
    %369 = vmatpush1.bf16.msra.mxu0 %v350
    %370 = vmatprep.subr.bf16.mxu0 0
    %371 = vmatpush1.bf16.msra.mxu0 %v351
    %372 = vmatprep.subr.bf16.mxu0 0
    %373 = vmatpush1.bf16.msra.mxu0 %v352
    %374 = vmatprep.subr.bf16.mxu0 0
    %375 = vmatpush1.bf16.msra.mxu0 %v353
    %376 = vmatprep.subr.bf16.mxu0 0
    %377 = vmatpush1.bf16.msra.mxu0 %v354
    %378 = vmatprep.subr.bf16.mxu0 0
    %379 = vmatpush1.bf16.msra.mxu0 %v355
    %380 = vmatprep.subr.bf16.mxu0 0
    %381 = vmatpush1.bf16.msra.mxu0 0
    %382 = vmatprep.subr.bf16.mxu0 0
    %383 = vmatpush1.bf16.msra.mxu0 0
    %384 = vmatprep.subr.bf16.mxu0 0
    %385 = vmatpush1.bf16.msra.mxu0 0
    %386 = vmatprep.subr.bf16.mxu0 0
    %387 = vmatpush1.bf16.msra.mxu0 0
    %388 = vmatprep.subr.bf16.mxu0 0
    %389 = vmatpush1.bf16.msra.mxu0 0
    %390 = vmatprep.subr.bf16.mxu0 0
    %391 = vmatpush1.bf16.msra.mxu0 0
    %392 = vmatprep.subr.bf16.mxu0 0
    %393 = vmatpush1.bf16.msra.mxu0 0
    %394 = vmatprep.subr.bf16.mxu0 0
    %395 = vmatpush1.bf16.msra.mxu0 0
    %396 = vmatprep.mubr.bf16.mxu0 0
    %397 = vmatmul.mubr.bf16.gmra.mrb[0].mxu0 %v252
    %v398 = vpop.f32.mrb[0].mxu0
    %v399 = vadd.f32 0.0, %v398
    %v400 = vpop.f32.mrb[0].mxu0
    %v401 = vpop.f32.mrb[0].mxu0
    %v402 = vadd.f32 0.0, %v401
    %v403 = vpop.f32.mrb[0].mxu0
    %404 = vmatprep.mubr.bf16.mxu0 0
    %405 = vmatmul.mubr.bf16.gmra.mrb[0].mxu0 %v253
    %v406 = vpop.f32.mrb[0].mxu0
    %v407 = vadd.f32 0.0, %v406
    %v408 = vpop.f32.mrb[0].mxu0
    %v409 = vpop.f32.mrb[0].mxu0
    %v410 = vadd.f32 0.0, %v409
    %v411 = vpop.f32.mrb[0].mxu0
    %412 = vmatprep.mubr.bf16.mxu0 0
    %413 = vmatmul.mubr.bf16.gmra.mrb[0].mxu0 %v254
    %v414 = vpop.f32.mrb[0].mxu0
    %v415 = vadd.f32 0.0, %v414
    %v416 = vpop.f32.mrb[0].mxu0
    %v417 = vpop.f32.mrb[0].mxu0
    %v418 = vadd.f32 0.0, %v417
    %v419 = vpop.f32.mrb[0].mxu0
    %420 = vmatprep.mubr.bf16.mxu0 0
    %421 = vmatmul.mubr.bf16.gmra.mrb[0].mxu0 %v255
    %v422 = vpop.f32.mrb[0].mxu0
    %v423 = vadd.f32 0.0, %v422
    %v424 = vpop.f32.mrb[0].mxu0
    %v425 = vpop.f32.mrb[0].mxu0
    %v426 = vadd.f32 0.0, %v425
    %v427 = vpop.f32.mrb[0].mxu0
    %428 = vmatprep.mubr.bf16.mxu0 0
    %429 = vmatmul.mubr.bf16.gmra.mrb[0].mxu0 %v256
    %v430 = vpop.f32.mrb[0].mxu0
    %v431 = vadd.f32 0.0, %v430
    %v432 = vpop.f32.mrb[0].mxu0
    %v433 = vpop.f32.mrb[0].mxu0
    %v434 = vadd.f32 0.0, %v433
    %v435 = vpop.f32.mrb[0].mxu0
    %436 = vmatprep.mubr.bf16.mxu0 0
    %437 = vmatmul.mubr.bf16.gmra.mrb[0].mxu0 %v257
    %v438 = vpop.f32.mrb[0].mxu0
    %v439 = vadd.f32 0.0, %v438
    %v440 = vpop.f32.mrb[0].mxu0
    %v441 = vpop.f32.mrb[0].mxu0
    %v442 = vadd.f32 0.0, %v441
    %v443 = vpop.f32.mrb[0].mxu0
    %444 = vmatprep.mubr.bf16.mxu0 0
    %445 = vmatmul.mubr.bf16.gmra.mrb[0].mxu0 %v258
    %v446 = vpop.f32.mrb[0].mxu0
    %v447 = vadd.f32 0.0, %v446
    %v448 = vpop.f32.mrb[0].mxu0
    %v449 = vpop.f32.mrb[0].mxu0
    %v450 = vadd.f32 0.0, %v449
    %v451 = vpop.f32.mrb[0].mxu0
    %452 = vmatprep.mubr.bf16.mxu0 0
    %453 = vmatmul.mubr.bf16.gmra.mrb[0].mxu0 %v259
    %v454 = vpop.f32.mrb[0].mxu0
    %v455 = vadd.f32 0.0, %v454
    %v456 = vpop.f32.mrb[0].mxu0
    %v457 = vpop.f32.mrb[0].mxu0
    %v458 = vadd.f32 0.0, %v457
    %v459 = vpop.f32.mrb[0].mxu0
    %460 = vmatprep.mubr.bf16.mxu0 0
    %461 = vmatmul.mubr.bf16.gmra.mrb[0].mxu0 %v260
    %v462 = vpop.f32.mrb[0].mxu0
    %v463 = vadd.f32 0.0, %v462
    %v464 = vpop.f32.mrb[0].mxu0
    %v465 = vpop.f32.mrb[0].mxu0
    %v466 = vadd.f32 0.0, %v465
    %v467 = vpop.f32.mrb[0].mxu0
    %468 = vmatprep.mubr.bf16.mxu0 0
    %469 = vmatmul.mubr.bf16.gmra.mrb[0].mxu0 %v261
    %v470 = vpop.f32.mrb[0].mxu0
    %v471 = vadd.f32 0.0, %v470
    %v472 = vpop.f32.mrb[0].mxu0
    %v473 = vpop.f32.mrb[0].mxu0
    %v474 = vadd.f32 0.0, %v473
    %v475 = vpop.f32.mrb[0].mxu0
    %476 = vmatprep.mubr.bf16.mxu0 0
    %477 = vmatmul.mubr.bf16.gmra.mrb[0].mxu0 %v262
    %v478 = vpop.f32.mrb[0].mxu0
    %v479 = vadd.f32 0.0, %v478
    %v480 = vpop.f32.mrb[0].mxu0
    %v481 = vpop.f32.mrb[0].mxu0
    %v482 = vadd.f32 0.0, %v481
    %v483 = vpop.f32.mrb[0].mxu0
    %484 = vmatprep.mubr.bf16.mxu0 0
    %485 = vmatmul.mubr.bf16.gmra.mrb[0].mxu0 %v263
    %v486 = vpop.f32.mrb[0].mxu0
    %v487 = vadd.f32 0.0, %v486
    %v488 = vpop.f32.mrb[0].mxu0
    %v489 = vpop.f32.mrb[0].mxu0
    %v490 = vadd.f32 0.0, %v489
    %v491 = vpop.f32.mrb[0].mxu0
    %492 = vmatprep.mubr.bf16.mxu0 0
    %493 = vmatmul.mubr.bf16.gmra.mrb[0].mxu0 %v264
    %v494 = vpop.f32.mrb[0].mxu0
    %v495 = vadd.f32 0.0, %v494
    %v496 = vpop.f32.mrb[0].mxu0
    %v497 = vpop.f32.mrb[0].mxu0
    %v498 = vadd.f32 0.0, %v497
    %v499 = vpop.f32.mrb[0].mxu0
    %500 = vmatprep.mubr.bf16.mxu0 0
    %501 = vmatmul.mubr.bf16.gmra.mrb[0].mxu0 %v265
    %v502 = vpop.f32.mrb[0].mxu0
    %v503 = vadd.f32 0.0, %v502
    %v504 = vpop.f32.mrb[0].mxu0
    %v505 = vpop.f32.mrb[0].mxu0
    %v506 = vadd.f32 0.0, %v505
    %v507 = vpop.f32.mrb[0].mxu0
    %508 = vmatprep.mubr.bf16.mxu0 0
    %509 = vmatmul.mubr.bf16.gmra.mrb[0].mxu0 %v266
    %v510 = vpop.f32.mrb[0].mxu0
    %v511 = vadd.f32 0.0, %v510
    %v512 = vpop.f32.mrb[0].mxu0
    %v513 = vpop.f32.mrb[0].mxu0
    %v514 = vadd.f32 0.0, %v513
    %v515 = vpop.f32.mrb[0].mxu0
    %516 = vmatprep.mubr.bf16.mxu0 0
    %517 = vmatmul.mubr.bf16.gmra.mrb[0].mxu0 %v267
    %v518 = vpop.f32.mrb[0].mxu0
    %v519 = vadd.f32 0.0, %v518
    %v520 = vpop.f32.mrb[0].mxu0
    %v521 = vpop.f32.mrb[0].mxu0
    %v522 = vadd.f32 0.0, %v521
    %v523 = vpop.f32.mrb[0].mxu0
    %524 = vmatprep.mubr.bf16.mxu0 0
    %525 = vmatmul.mubr.bf16.gmra.mrb[0].mxu0 %v268
    %v526 = vpop.f32.mrb[0].mxu0
    %v527 = vadd.f32 0.0, %v526
    %v528 = vpop.f32.mrb[0].mxu0
    %v529 = vpop.f32.mrb[0].mxu0
    %v530 = vadd.f32 0.0, %v529
    %v531 = vpop.f32.mrb[0].mxu0
    %532 = vmatprep.mubr.bf16.mxu0 0
    %533 = vmatmul.mubr.bf16.gmra.mrb[0].mxu0 %v269
    %v534 = vpop.f32.mrb[0].mxu0
    %v535 = vadd.f32 0.0, %v534
    %v536 = vpop.f32.mrb[0].mxu0
    %v537 = vpop.f32.mrb[0].mxu0
    %v538 = vadd.f32 0.0, %v537
    %v539 = vpop.f32.mrb[0].mxu0
    %540 = vmatprep.mubr.bf16.mxu0 0
    %541 = vmatmul.mubr.bf16.gmra.mrb[0].mxu0 %v270
    %v542 = vpop.f32.mrb[0].mxu0
    %v543 = vadd.f32 0.0, %v542
    %v544 = vpop.f32.mrb[0].mxu0
    %v545 = vpop.f32.mrb[0].mxu0
    %v546 = vadd.f32 0.0, %v545
    %v547 = vpop.f32.mrb[0].mxu0
    %548 = vmatprep.mubr.bf16.mxu0 0
    %549 = vmatmul.mubr.bf16.gmra.mrb[0].mxu0 %v271
    %v550 = vpop.f32.mrb[0].mxu0
    %v551 = vadd.f32 0.0, %v550
    %v552 = vpop.f32.mrb[0].mxu0
    %v553 = vpop.f32.mrb[0].mxu0
    %v554 = vadd.f32 0.0, %v553
    %v555 = vpop.f32.mrb[0].mxu0
    %556 = vmatprep.mubr.bf16.mxu0 0
    %557 = vmatmul.mubr.bf16.gmra.mrb[0].mxu0 %v272
    %v558 = vpop.f32.mrb[0].mxu0
    %v559 = vadd.f32 0.0, %v558
    %v560 = vpop.f32.mrb[0].mxu0
    %v561 = vpop.f32.mrb[0].mxu0
    %v562 = vadd.f32 0.0, %v561
    %v563 = vpop.f32.mrb[0].mxu0
    %564 = vmatprep.mubr.bf16.mxu0 0
    %565 = vmatmul.mubr.bf16.gmra.mrb[0].mxu0 %v273
    %v566 = vpop.f32.mrb[0].mxu0
    %v567 = vadd.f32 0.0, %v566
    %v568 = vpop.f32.mrb[0].mxu0
    %v569 = vpop.f32.mrb[0].mxu0
    %v570 = vadd.f32 0.0, %v569
    %v571 = vpop.f32.mrb[0].mxu0
    %572 = vmatprep.mubr.bf16.mxu0 0
    %573 = vmatmul.mubr.bf16.gmra.mrb[0].mxu0 %v274
    %v574 = vpop.f32.mrb[0].mxu0
    %v575 = vadd.f32 0.0, %v574
    %v576 = vpop.f32.mrb[0].mxu0
    %v577 = vpop.f32.mrb[0].mxu0
    %v578 = vadd.f32 0.0, %v577
    %v579 = vpop.f32.mrb[0].mxu0
    %580 = vmatprep.mubr.bf16.mxu0 0
    %581 = vmatmul.mubr.bf16.gmra.mrb[0].mxu0 %v275
    %v582 = vpop.f32.mrb[0].mxu0
    %v583 = vadd.f32 0.0, %v582
    %v584 = vpop.f32.mrb[0].mxu0
    %v585 = vpop.f32.mrb[0].mxu0
    %v586 = vadd.f32 0.0, %v585
    %v587 = vpop.f32.mrb[0].mxu0
    %588 = vmatprep.mubr.bf16.mxu0 0
    %589 = vmatmul.mubr.bf16.gmra.mrb[0].mxu0 %v276
    %v590 = vpop.f32.mrb[0].mxu0
    %v591 = vadd.f32 0.0, %v590
    %v592 = vpop.f32.mrb[0].mxu0
    %v593 = vpop.f32.mrb[0].mxu0
    %v594 = vadd.f32 0.0, %v593
    %v595 = vpop.f32.mrb[0].mxu0
    %596 = vmatprep.mubr.bf16.mxu0 0
    %597 = vmatmul.mubr.bf16.gmra.mrb[0].mxu0 %v277
    %v598 = vpop.f32.mrb[0].mxu0
    %v599 = vadd.f32 0.0, %v598
    %v600 = vpop.f32.mrb[0].mxu0
    %v601 = vpop.f32.mrb[0].mxu0
    %v602 = vadd.f32 0.0, %v601
    %v603 = vpop.f32.mrb[0].mxu0
    %604 = vmatprep.mubr.bf16.mxu0 0
    %605 = vmatmul.mubr.bf16.gmra.mrb[0].mxu0 %v278
    %v606 = vpop.f32.mrb[0].mxu0
    %v607 = vadd.f32 0.0, %v606
    %v608 = vpop.f32.mrb[0].mxu0
    %v609 = vpop.f32.mrb[0].mxu0
    %v610 = vadd.f32 0.0, %v609
    %v611 = vpop.f32.mrb[0].mxu0
    %612 = vmatprep.mubr.bf16.mxu0 0
    %613 = vmatmul.mubr.bf16.gmra.mrb[0].mxu0 %v279
    %v614 = vpop.f32.mrb[0].mxu0
    %v615 = vadd.f32 0.0, %v614
    %v616 = vpop.f32.mrb[0].mxu0
    %v617 = vpop.f32.mrb[0].mxu0
    %v618 = vadd.f32 0.0, %v617
    %v619 = vpop.f32.mrb[0].mxu0
    %620 = vmatprep.mubr.bf16.mxu0 0
    %621 = vmatmul.mubr.bf16.gmra.mrb[0].mxu0 %v280
    %v622 = vpop.f32.mrb[0].mxu0
    %v623 = vadd.f32 0.0, %v622
    %v624 = vpop.f32.mrb[0].mxu0
    %v625 = vpop.f32.mrb[0].mxu0
    %v626 = vadd.f32 0.0, %v625
    %v627 = vpop.f32.mrb[0].mxu0
    %628 = vmatprep.mubr.bf16.mxu0 0
    %629 = vmatmul.mubr.bf16.gmra.mrb[0].mxu0 %v281
    %v630 = vpop.f32.mrb[0].mxu0
    %v631 = vadd.f32 0.0, %v630
    %v632 = vpop.f32.mrb[0].mxu0
    %v633 = vpop.f32.mrb[0].mxu0
    %v634 = vadd.f32 0.0, %v633
    %v635 = vpop.f32.mrb[0].mxu0
    %636 = vmatprep.mubr.bf16.mxu0 0
    %637 = vmatmul.mubr.bf16.gmra.mrb[0].mxu0 %v282
    %v638 = vpop.f32.mrb[0].mxu0
    %v639 = vadd.f32 0.0, %v638
    %v640 = vpop.f32.mrb[0].mxu0
    %v641 = vpop.f32.mrb[0].mxu0
    %v642 = vadd.f32 0.0, %v641
    %v643 = vpop.f32.mrb[0].mxu0
    %644 = vmatprep.mubr.bf16.mxu0 0
    %645 = vmatmul.mubr.bf16.gmra.mrb[0].mxu0 %v283
    %v646 = vpop.f32.mrb[0].mxu0
    %v647 = vadd.f32 0.0, %v646
    %v648 = vpop.f32.mrb[0].mxu0
    %v649 = vpop.f32.mrb[0].mxu0
    %v650 = vadd.f32 0.0, %v649
    %v651 = vpop.f32.mrb[0].mxu0
    %652 = vdwg.mxu0
    %v653 = vpack.c.bf16 %v402, %v399
    %v654 = vpack.c.bf16 %v410, %v407
    %v655 = vpack.c.bf16 %v418, %v415
    %v656 = vpack.c.bf16 %v426, %v423
    %v657 = vpack.c.bf16 %v434, %v431
    %v658 = vpack.c.bf16 %v442, %v439
    %v659 = vpack.c.bf16 %v450, %v447
    %v660 = vpack.c.bf16 %v458, %v455
    %v661 = vpack.c.bf16 %v466, %v463
    %v662 = vpack.c.bf16 %v474, %v471
    %v663 = vpack.c.bf16 %v482, %v479
    %v664 = vpack.c.bf16 %v490, %v487
    %v665 = vpack.c.bf16 %v498, %v495
    %v666 = vpack.c.bf16 %v506, %v503
    %v667 = vpack.c.bf16 %v514, %v511
    %v668 = vpack.c.bf16 %v522, %v519
    %v669 = vpack.c.bf16 %v530, %v527
    %v670 = vpack.c.bf16 %v538, %v535
    %v671 = vpack.c.bf16 %v546, %v543
    %v672 = vpack.c.bf16 %v554, %v551
    %v673 = vpack.c.bf16 %v562, %v559
    %v674 = vpack.c.bf16 %v570, %v567
    %v675 = vpack.c.bf16 %v578, %v575
    %v676 = vpack.c.bf16 %v586, %v583
    %v677 = vpack.c.bf16 %v594, %v591
    %v678 = vpack.c.bf16 %v602, %v599
    %v679 = vpack.c.bf16 %v610, %v607
    %v680 = vpack.c.bf16 %v618, %v615
    %v681 = vpack.c.bf16 %v626, %v623
    %v682 = vpack.c.bf16 %v634, %v631
    %v683 = vpack.c.bf16 %v642, %v639
    %v684 = vpack.c.bf16 %v650, %v647
    %v717 = vunpack.c.l.b16 %v653
    %v718 = vunpack.c.h.b16 %v653
    %v719 = vunpack.c.l.b16 %v654
    %v720 = vunpack.c.h.b16 %v654
    %v721 = vunpack.c.l.b16 %v655
    %v722 = vunpack.c.h.b16 %v655
    %v723 = vunpack.c.l.b16 %v656
    %v724 = vunpack.c.h.b16 %v656
    %v725 = vunpack.c.l.b16 %v657
    %v726 = vunpack.c.h.b16 %v657
    %v727 = vunpack.c.l.b16 %v658
    %v728 = vunpack.c.h.b16 %v658
    %v729 = vunpack.c.l.b16 %v659
    %v730 = vunpack.c.h.b16 %v659
    %v731 = vunpack.c.l.b16 %v660
    %v732 = vunpack.c.h.b16 %v660
    %v733 = vunpack.c.l.b16 %v661
    %v734 = vunpack.c.h.b16 %v661
    %v735 = vunpack.c.l.b16 %v662
    %v736 = vunpack.c.h.b16 %v662
    %v737 = vunpack.c.l.b16 %v663
    %v738 = vunpack.c.h.b16 %v663
    %v739 = vunpack.c.l.b16 %v664
    %v740 = vunpack.c.h.b16 %v664
    %v741 = vunpack.c.l.b16 %v665
    %v742 = vunpack.c.h.b16 %v665
    %v743 = vunpack.c.l.b16 %v666
    %v744 = vunpack.c.h.b16 %v666
    %v745 = vunpack.c.l.b16 %v667
    %v746 = vunpack.c.h.b16 %v667
    %v747 = vunpack.c.l.b16 %v668
    %v748 = vunpack.c.h.b16 %v668
    %v749 = vunpack.c.l.b16 %v669
    %v750 = vunpack.c.h.b16 %v669
    %v751 = vunpack.c.l.b16 %v670
    %v752 = vunpack.c.h.b16 %v670
    %v753 = vunpack.c.l.b16 %v671
    %v754 = vunpack.c.h.b16 %v671
    %v755 = vunpack.c.l.b16 %v672
    %v756 = vunpack.c.h.b16 %v672
    %v757 = vunpack.c.l.b16 %v673
    %v758 = vunpack.c.h.b16 %v673
    %v759 = vunpack.c.l.b16 %v674
    %v760 = vunpack.c.h.b16 %v674
    %v761 = vunpack.c.l.b16 %v675
    %v762 = vunpack.c.h.b16 %v675
    %v763 = vunpack.c.l.b16 %v676
    %v764 = vunpack.c.h.b16 %v676
    %v765 = vunpack.c.l.b16 %v677
    %v766 = vunpack.c.h.b16 %v677
    %v767 = vunpack.c.l.b16 %v678
    %v768 = vunpack.c.h.b16 %v678
    %v769 = vunpack.c.l.b16 %v679
    %v770 = vunpack.c.h.b16 %v679
    %v771 = vunpack.c.l.b16 %v680
    %v772 = vunpack.c.h.b16 %v680
    %v773 = vunpack.c.l.b16 %v681
    %v774 = vunpack.c.h.b16 %v681
    %v775 = vunpack.c.l.b16 %v682
    %v776 = vunpack.c.h.b16 %v682
    %v777 = vunpack.c.l.b16 %v683
    %v778 = vunpack.c.h.b16 %v683
    %v779 = vunpack.c.l.b16 %v684
    %v780 = vunpack.c.h.b16 %v684
    %v781 = vpack.c.b16 %v717, %v717
    %v782 = vpack.c.b16 %v718, %v718
    %v783 = vpack.c.b16 %v719, %v719
    %v784 = vpack.c.b16 %v720, %v720
    %v785 = vpack.c.b16 %v721, %v721
    %v786 = vpack.c.b16 %v722, %v722
    %v787 = vpack.c.b16 %v723, %v723
    %v788 = vpack.c.b16 %v724, %v724
    %v789 = vpack.c.b16 %v725, %v725
    %v790 = vpack.c.b16 %v726, %v726
    %v791 = vpack.c.b16 %v727, %v727
    %v792 = vpack.c.b16 %v728, %v728
    %v793 = vpack.c.b16 %v729, %v729
    %v794 = vpack.c.b16 %v730, %v730
    %v795 = vpack.c.b16 %v731, %v731
    %v796 = vpack.c.b16 %v732, %v732
    %v797 = vpack.c.b16 %v733, %v733
    %v798 = vpack.c.b16 %v734, %v734
    %v799 = vpack.c.b16 %v735, %v735
    %v800 = vpack.c.b16 %v736, %v736
    %v801 = vpack.c.b16 %v737, %v737
    %v802 = vpack.c.b16 %v738, %v738
    %v803 = vpack.c.b16 %v739, %v739
    %v804 = vpack.c.b16 %v740, %v740
    %v805 = vpack.c.b16 %v741, %v741
    %v806 = vpack.c.b16 %v742, %v742
    %v807 = vpack.c.b16 %v743, %v743
    %v808 = vpack.c.b16 %v744, %v744
    %v809 = vpack.c.b16 %v745, %v745
    %v810 = vpack.c.b16 %v746, %v746
    %v811 = vpack.c.b16 %v747, %v747
    %v812 = vpack.c.b16 %v748, %v748
    %v813 = vpack.c.b16 %v749, %v749
    %v814 = vpack.c.b16 %v750, %v750
    %v815 = vpack.c.b16 %v751, %v751
    %v816 = vpack.c.b16 %v752, %v752
    %v817 = vpack.c.b16 %v753, %v753
    %v818 = vpack.c.b16 %v754, %v754
    %v819 = vpack.c.b16 %v755, %v755
    %v820 = vpack.c.b16 %v756, %v756
    %v821 = vpack.c.b16 %v757, %v757
    %v822 = vpack.c.b16 %v758, %v758
    %v823 = vpack.c.b16 %v759, %v759
    %v824 = vpack.c.b16 %v760, %v760
    %v825 = vpack.c.b16 %v761, %v761
    %v826 = vpack.c.b16 %v762, %v762
    %v827 = vpack.c.b16 %v763, %v763
    %v828 = vpack.c.b16 %v764, %v764
    %v829 = vpack.c.b16 %v765, %v765
    %v830 = vpack.c.b16 %v766, %v766
    %v831 = vpack.c.b16 %v767, %v767
    %v832 = vpack.c.b16 %v768, %v768
    %v833 = vpack.c.b16 %v769, %v769
    %v834 = vpack.c.b16 %v770, %v770
    %v835 = vpack.c.b16 %v771, %v771
    %v836 = vpack.c.b16 %v772, %v772
    %v837 = vpack.c.b16 %v773, %v773
    %v838 = vpack.c.b16 %v774, %v774
    %v839 = vpack.c.b16 %v775, %v775
    %v840 = vpack.c.b16 %v776, %v776
    %v841 = vpack.c.b16 %v777, %v777
    %v842 = vpack.c.b16 %v778, %v778
    %v843 = vpack.c.b16 %v779, %v779
    %v844 = vpack.c.b16 %v780, %v780
    %909 = vst [vmem:[#allocation7] sm:$0xf] %v781
    %910 = vst [vmem:[#allocation7 + $0x4] sm:$0xf] %v782
    %911 = vst [vmem:[#allocation7 + $0x8] sm:$0xf] %v783
    %912 = vst [vmem:[#allocation7 + $0xc] sm:$0xf] %v784
    %913 = vst [vmem:[#allocation7 + $0x10] sm:$0xf] %v785
    %914 = vst [vmem:[#allocation7 + $0x14] sm:$0xf] %v786
    %915 = vst [vmem:[#allocation7 + $0x18] sm:$0xf] %v787
    %916 = vst [vmem:[#allocation7 + $0x1c] sm:$0xf] %v788
    %917 = vst [vmem:[#allocation7 + $0x20] sm:$0xf] %v789
    %918 = vst [vmem:[#allocation7 + $0x24] sm:$0xf] %v790
    %919 = vst [vmem:[#allocation7 + $0x28] sm:$0xf] %v791
    %920 = vst [vmem:[#allocation7 + $0x2c] sm:$0xf] %v792
    %921 = vst [vmem:[#allocation7 + $0x30] sm:$0xf] %v793
    %922 = vst [vmem:[#allocation7 + $0x34] sm:$0xf] %v794
    %923 = vst [vmem:[#allocation7 + $0x38] sm:$0xf] %v795
    %924 = vst [vmem:[#allocation7 + $0x3c] sm:$0xf] %v796
    %925 = vst [vmem:[#allocation7 + $0x40] sm:$0xf] %v797
    %926 = vst [vmem:[#allocation7 + $0x44] sm:$0xf] %v798
    %927 = vst [vmem:[#allocation7 + $0x48] sm:$0xf] %v799
    %928 = vst [vmem:[#allocation7 + $0x4c] sm:$0xf] %v800
    %929 = vst [vmem:[#allocation7 + $0x50] sm:$0xf] %v801
    %930 = vst [vmem:[#allocation7 + $0x54] sm:$0xf] %v802
    %931 = vst [vmem:[#allocation7 + $0x58] sm:$0xf] %v803
    %932 = vst [vmem:[#allocation7 + $0x5c] sm:$0xf] %v804
    %933 = vst [vmem:[#allocation7 + $0x60] sm:$0xf] %v805
    %934 = vst [vmem:[#allocation7 + $0x64] sm:$0xf] %v806
    %935 = vst [vmem:[#allocation7 + $0x68] sm:$0xf] %v807
    %936 = vst [vmem:[#allocation7 + $0x6c] sm:$0xf] %v808
    %937 = vst [vmem:[#allocation7 + $0x70] sm:$0xf] %v809
    %938 = vst [vmem:[#allocation7 + $0x74] sm:$0xf] %v810
    %939 = vst [vmem:[#allocation7 + $0x78] sm:$0xf] %v811
    %940 = vst [vmem:[#allocation7 + $0x7c] sm:$0xf] %v812
    %941 = vst [vmem:[#allocation7 + $0x80] sm:$0xf] %v813
    %942 = vst [vmem:[#allocation7 + $0x84] sm:$0xf] %v814
    %943 = vst [vmem:[#allocation7 + $0x88] sm:$0xf] %v815
    %944 = vst [vmem:[#allocation7 + $0x8c] sm:$0xf] %v816
    %945 = vst [vmem:[#allocation7 + $0x90] sm:$0xf] %v817
    %946 = vst [vmem:[#allocation7 + $0x94] sm:$0xf] %v818
    %947 = vst [vmem:[#allocation7 + $0x98] sm:$0xf] %v819
    %948 = vst [vmem:[#allocation7 + $0x9c] sm:$0xf] %v820
    %949 = vst [vmem:[#allocation7 + $0xa0] sm:$0xf] %v821
    %950 = vst [vmem:[#allocation7 + $0xa4] sm:$0xf] %v822
    %951 = vst [vmem:[#allocation7 + $0xa8] sm:$0xf] %v823
    %952 = vst [vmem:[#allocation7 + $0xac] sm:$0xf] %v824
    %953 = vst [vmem:[#allocation7 + $0xb0] sm:$0xf] %v825
    %954 = vst [vmem:[#allocation7 + $0xb4] sm:$0xf] %v826
    %955 = vst [vmem:[#allocation7 + $0xb8] sm:$0xf] %v827
    %956 = vst [vmem:[#allocation7 + $0xbc] sm:$0xf] %v828
    %957 = vst [vmem:[#allocation7 + $0xc0] sm:$0xf] %v829
    %958 = vst [vmem:[#allocation7 + $0xc4] sm:$0xf] %v830
    %959 = vst [vmem:[#allocation7 + $0xc8] sm:$0xf] %v831
    %960 = vst [vmem:[#allocation7 + $0xcc] sm:$0xf] %v832
    %961 = vst [vmem:[#allocation7 + $0xd0] sm:$0xf] %v833
    %962 = vst [vmem:[#allocation7 + $0xd4] sm:$0xf] %v834
    %963 = vst [vmem:[#allocation7 + $0xd8] sm:$0xf] %v835
    %964 = vst [vmem:[#allocation7 + $0xdc] sm:$0xf] %v836
    %965 = vst [vmem:[#allocation7 + $0xe0] sm:$0xf] %v837
    %966 = vst [vmem:[#allocation7 + $0xe4] sm:$0xf] %v838
    %967 = vst [vmem:[#allocation7 + $0xe8] sm:$0xf] %v839
    %968 = vst [vmem:[#allocation7 + $0xec] sm:$0xf] %v840
    %969 = vst [vmem:[#allocation7 + $0xf0] sm:$0xf] %v841
    %970 = vst [vmem:[#allocation7 + $0xf4] sm:$0xf] %v842
    %971 = vst [vmem:[#allocation7 + $0xf8] sm:$0xf] %v843
    %972 = vst [vmem:[#allocation7 + $0xfc] sm:$0xf] %v844
    %v973 = vadd.f32 %v399, %v402
    %v974 = vadd.f32 %v973, %v407
    %v975 = vadd.f32 %v974, %v410
    %v976 = vadd.f32 %v975, %v415
    %v977 = vadd.f32 %v976, %v418
    %v978 = vadd.f32 %v977, %v423
    %v979 = vadd.f32 %v978, %v426
    %v980 = vadd.f32 %v979, %v431
    %v981 = vadd.f32 %v980, %v434
    %v982 = vadd.f32 %v981, %v439
    %v983 = vadd.f32 %v982, %v442
    %v984 = vadd.f32 %v983, %v447
    %v985 = vadd.f32 %v984, %v450
    %v986 = vadd.f32 %v985, %v455
    %v987 = vadd.f32 %v986, %v458
    %v988 = vadd.f32 %v987, %v463
    %v989 = vadd.f32 %v988, %v466
    %v990 = vadd.f32 %v989, %v471
    %v991 = vadd.f32 %v990, %v474
    %v992 = vadd.f32 %v991, %v479
    %v993 = vadd.f32 %v992, %v482
    %v994 = vadd.f32 %v993, %v487
    %v995 = vadd.f32 %v994, %v490
    %v996 = vadd.f32 %v995, %v495
    %v997 = vadd.f32 %v996, %v498
    %v998 = vadd.f32 %v997, %v503
    %v999 = vadd.f32 %v998, %v506
    %v1000 = vadd.f32 %v999, %v511
    %v1001 = vadd.f32 %v1000, %v514
    %v1002 = vadd.f32 %v1001, %v519
    %v1003 = vadd.f32 %v1002, %v522
    %v1004 = vadd.f32 %v1003, %v527
    %v1005 = vadd.f32 %v1004, %v530
    %v1006 = vadd.f32 %v1005, %v535
    %v1007 = vadd.f32 %v1006, %v538
    %v1008 = vadd.f32 %v1007, %v543
    %v1009 = vadd.f32 %v1008, %v546
    %v1010 = vadd.f32 %v1009, %v551
    %v1011 = vadd.f32 %v1010, %v554
    %v1012 = vadd.f32 %v1011, %v559
    %v1013 = vadd.f32 %v1012, %v562
    %v1014 = vadd.f32 %v1013, %v567
    %v1015 = vadd.f32 %v1014, %v570
    %v1016 = vadd.f32 %v1015, %v575
    %v1017 = vadd.f32 %v1016, %v578
    %v1018 = vadd.f32 %v1017, %v583
    %v1019 = vadd.f32 %v1018, %v586
    %v1020 = vadd.f32 %v1019, %v591
    %v1021 = vadd.f32 %v1020, %v594
    %v1022 = vadd.f32 %v1021, %v599
    %v1023 = vadd.f32 %v1022, %v602
    %v1024 = vadd.f32 %v1023, %v607
    %v1025 = vadd.f32 %v1024, %v610
    %v1026 = vadd.f32 %v1025, %v615
    %v1027 = vadd.f32 %v1026, %v618
    %v1028 = vadd.f32 %v1027, %v623
    %v1029 = vadd.f32 %v1028, %v626
    %v1030 = vadd.f32 %v1029, %v631
    %v1031 = vadd.f32 %v1030, %v634
    %v1032 = vadd.f32 %v1031, %v639
    %v1033 = vadd.f32 %v1032, %v642
    %v1034 = vadd.f32 %v1033, %v647
    %v1035 = vadd.f32 %v1034, %v650
    %v1036 = vrot.slane %v1035, 4
    %v1037 = vadd.f32 %v1035, %v1036
    %v1038 = vrot.slane %v1037, 2
    %v1039 = vadd.f32 %v1037, %v1038
    %v1040 = vrot.slane %v1039, 1
    %v1041 = vadd.f32 %v1039, %v1040
    %v1042 = vmul.f32 %v399, %v399
    %v1043 = vmul.f32 %v402, %v402
    %v1044 = vmul.f32 %v407, %v407
    %v1045 = vmul.f32 %v410, %v410
    %v1046 = vmul.f32 %v415, %v415
    %v1047 = vmul.f32 %v418, %v418
    %v1048 = vmul.f32 %v423, %v423
    %v1049 = vmul.f32 %v426, %v426
    %v1050 = vmul.f32 %v431, %v431
    %v1051 = vmul.f32 %v434, %v434
    %v1052 = vmul.f32 %v439, %v439
    %v1053 = vmul.f32 %v442, %v442
    %v1054 = vmul.f32 %v447, %v447
    %v1055 = vmul.f32 %v450, %v450
    %v1056 = vmul.f32 %v455, %v455
    %v1057 = vmul.f32 %v458, %v458
    %v1058 = vmul.f32 %v463, %v463
    %v1059 = vmul.f32 %v466, %v466
    %v1060 = vmul.f32 %v471, %v471
    %v1061 = vmul.f32 %v474, %v474
    %v1062 = vmul.f32 %v479, %v479
    %v1063 = vmul.f32 %v482, %v482
    %v1064 = vmul.f32 %v487, %v487
    %v1065 = vmul.f32 %v490, %v490
    %v1066 = vmul.f32 %v495, %v495
    %v1067 = vmul.f32 %v498, %v498
    %v1068 = vmul.f32 %v503, %v503
    %v1069 = vmul.f32 %v506, %v506
    %v1070 = vmul.f32 %v511, %v511
    %v1071 = vmul.f32 %v514, %v514
    %v1072 = vmul.f32 %v519, %v519
    %v1073 = vmul.f32 %v522, %v522
    %v1074 = vmul.f32 %v527, %v527
    %v1075 = vmul.f32 %v530, %v530
    %v1076 = vmul.f32 %v535, %v535
    %v1077 = vmul.f32 %v538, %v538
    %v1078 = vmul.f32 %v543, %v543
    %v1079 = vmul.f32 %v546, %v546
    %v1080 = vmul.f32 %v551, %v551
    %v1081 = vmul.f32 %v554, %v554
    %v1082 = vmul.f32 %v559, %v559
    %v1083 = vmul.f32 %v562, %v562
    %v1084 = vmul.f32 %v567, %v567
    %v1085 = vmul.f32 %v570, %v570
    %v1086 = vmul.f32 %v575, %v575
    %v1087 = vmul.f32 %v578, %v578
    %v1088 = vmul.f32 %v583, %v583
    %v1089 = vmul.f32 %v586, %v586
    %v1090 = vmul.f32 %v591, %v591
    %v1091 = vmul.f32 %v594, %v594
    %v1092 = vmul.f32 %v599, %v599
    %v1093 = vmul.f32 %v602, %v602
    %v1094 = vmul.f32 %v607, %v607
    %v1095 = vmul.f32 %v610, %v610
    %v1096 = vmul.f32 %v615, %v615
    %v1097 = vmul.f32 %v618, %v618
    %v1098 = vmul.f32 %v623, %v623
    %v1099 = vmul.f32 %v626, %v626
    %v1100 = vmul.f32 %v631, %v631
    %v1101 = vmul.f32 %v634, %v634
    %v1102 = vmul.f32 %v639, %v639
    %v1103 = vmul.f32 %v642, %v642
    %v1104 = vmul.f32 %v647, %v647
    %v1105 = vmul.f32 %v650, %v650
    %v1106 = vadd.f32 %v1042, %v1043
    %v1107 = vadd.f32 %v1106, %v1044
    %v1108 = vadd.f32 %v1107, %v1045
    %v1109 = vadd.f32 %v1108, %v1046
    %v1110 = vadd.f32 %v1109, %v1047
    %v1111 = vadd.f32 %v1110, %v1048
    %v1112 = vadd.f32 %v1111, %v1049
    %v1113 = vadd.f32 %v1112, %v1050
    %v1114 = vadd.f32 %v1113, %v1051
    %v1115 = vadd.f32 %v1114, %v1052
    %v1116 = vadd.f32 %v1115, %v1053
    %v1117 = vadd.f32 %v1116, %v1054
    %v1118 = vadd.f32 %v1117, %v1055
    %v1119 = vadd.f32 %v1118, %v1056
    %v1120 = vadd.f32 %v1119, %v1057
    %v1121 = vadd.f32 %v1120, %v1058
    %v1122 = vadd.f32 %v1121, %v1059
    %v1123 = vadd.f32 %v1122, %v1060
    %v1124 = vadd.f32 %v1123, %v1061
    %v1125 = vadd.f32 %v1124, %v1062
    %v1126 = vadd.f32 %v1125, %v1063
    %v1127 = vadd.f32 %v1126, %v1064
    %v1128 = vadd.f32 %v1127, %v1065
    %v1129 = vadd.f32 %v1128, %v1066
    %v1130 = vadd.f32 %v1129, %v1067
    %v1131 = vadd.f32 %v1130, %v1068
    %v1132 = vadd.f32 %v1131, %v1069
    %v1133 = vadd.f32 %v1132, %v1070
    %v1134 = vadd.f32 %v1133, %v1071
    %v1135 = vadd.f32 %v1134, %v1072
    %v1136 = vadd.f32 %v1135, %v1073
    %v1137 = vadd.f32 %v1136, %v1074
    %v1138 = vadd.f32 %v1137, %v1075
    %v1139 = vadd.f32 %v1138, %v1076
    %v1140 = vadd.f32 %v1139, %v1077
    %v1141 = vadd.f32 %v1140, %v1078
    %v1142 = vadd.f32 %v1141, %v1079
    %v1143 = vadd.f32 %v1142, %v1080
    %v1144 = vadd.f32 %v1143, %v1081
    %v1145 = vadd.f32 %v1144, %v1082
    %v1146 = vadd.f32 %v1145, %v1083
    %v1147 = vadd.f32 %v1146, %v1084
    %v1148 = vadd.f32 %v1147, %v1085
    %v1149 = vadd.f32 %v1148, %v1086
    %v1150 = vadd.f32 %v1149, %v1087
    %v1151 = vadd.f32 %v1150, %v1088
    %v1152 = vadd.f32 %v1151, %v1089
    %v1153 = vadd.f32 %v1152, %v1090
    %v1154 = vadd.f32 %v1153, %v1091
    %v1155 = vadd.f32 %v1154, %v1092
    %v1156 = vadd.f32 %v1155, %v1093
    %v1157 = vadd.f32 %v1156, %v1094
    %v1158 = vadd.f32 %v1157, %v1095
    %v1159 = vadd.f32 %v1158, %v1096
    %v1160 = vadd.f32 %v1159, %v1097
    %v1161 = vadd.f32 %v1160, %v1098
    %v1162 = vadd.f32 %v1161, %v1099
    %v1163 = vadd.f32 %v1162, %v1100
    %v1164 = vadd.f32 %v1163, %v1101
    %v1165 = vadd.f32 %v1164, %v1102
    %v1166 = vadd.f32 %v1165, %v1103
    %v1167 = vadd.f32 %v1166, %v1104
    %v1168 = vadd.f32 %v1167, %v1105
    %v1169 = vrot.slane %v1168, 4
    %v1170 = vadd.f32 %v1168, %v1169
    %v1171 = vrot.slane %v1170, 2
    %v1172 = vadd.f32 %v1170, %v1171
    %v1173 = vrot.slane %v1172, 1
    %v1174 = vadd.f32 %v1172, %v1173
    %vm1175 = vcmask 1040384
    %v1176 = vsel %vm1175, %v1041, %v1174
    %vm1177 = vcmask 1041408
    %v1178 = vsel %vm1177, %v1176, 0.0
    %1179 = vst [vmem:[#allocation8] sm:$0xff] %v1178
    // Predicated region
    $region18: #{resnet_forward.15} parent=1 // pred_check
      _
    $region19: #{resnet_forward.15} parent=1 // pred_check_branch
      %1181 = sbr.rel (0) target = $region21
    $region20: #{resnet_forward.15} parent=1 // pred_region
      %s1183 = ssub.s32 4096, 4096
      %1184 = vsyncadd [#allocation4], %s1183
      %s1185 = sshll.u32 [#allocation7], 4
      %s1186 = int_to_ptr.vmem [resolvable:$true] %s1185
      %1191 = dma.vmem_to_hbm [thread:$0]  %s1186, 4096, %s2, [#allocation4], 64, 64, 4
    $region21: #{resnet_forward.15} parent=1 // pred_fallthru
      _
    // Predicated region
    $region22: #{resnet_forward.15} parent=1 // pred_check
      _
    $region23: #{resnet_forward.15} parent=1 // pred_check_branch
      %1193 = sbr.rel (0) target = $region25
    $region24: #{resnet_forward.15} parent=1 // pred_region
      %s1195 = ssub.s32 128, 128
      %1196 = vsyncadd [#allocation9], %s1195
      %s1198 = sshll.u32 [#allocation8], 4
      %s1199 = int_to_ptr.vmem [resolvable:$true] %s1198
      %1201 = dma.vmem_to_hbm [thread:$0]  %s1199, 128, %s3, [#allocation9]
    $region25: #{resnet_forward.15} parent=1 // pred_fallthru
      _
    // Predicated region
    $region26: #{resnet_forward.15} parent=1 // pred_check
      _
    $region27: #{resnet_forward.15} parent=1 // pred_check_branch
      %1203 = sbr.rel (0) target = $region29
    $region28: #{resnet_forward.15} parent=1 // pred_region
      %1204 = dma.done [#allocation4], 4096
    $region29: #{resnet_forward.15} parent=1 // pred_fallthru
      _
    // Predicated region
    $region30: #{resnet_forward.15} parent=1 // pred_check
      _
    $region31: #{resnet_forward.15} parent=1 // pred_check_branch
      %1206 = sbr.rel (0) target = $region33
    $region32: #{resnet_forward.15} parent=1 // pred_region
      %1207 = dma.done [#allocation9], 128
    $region33: #{resnet_forward.15} parent=1 // pred_fallthru
      _
    %1208 = vsyncpa [#allocation3], 1
    %1209 = vsyncpa [#allocation6], 1
    %1210 = vsyncpa [#allocation4], 1
    %1211 = vsyncpa [#allocation9], 1

// kernel: resnet_forward.20
$region0: #{resnet_forward.20}
  #allocation0 [shape = 'u32[]', space=smem, size = 0x4, offset = 0x4, fixed_abs, tag = 'smem constant byte address 0x4 - core index']
  #allocation1 [shape = 'u32[144,128]{1,0:T(1,128)}', space=vmem, size = 0x12000, scoped, tag = 'internal scratch']
  %s0 = inlined_call_operand.hbm [shape: bf16[512,128], index: 0, kind: input, shape index: {}]
  %s1 = inlined_call_operand.hbm [shape: f32[1,128], index: 1, kind: input, shape index: {}]
  %s2 = inlined_call_operand.hbm [shape: f32[1,128], index: 2, kind: input, shape index: {}]
  %s3 = inlined_call_operand.hbm [shape: bf16[512,128], index: 3, kind: input, shape index: {}]
  %s4 = inlined_call_operand.hbm [shape: bf16[512,128], index: 4, kind: output, shape index: {}]
  %s5 = sld [smem:[#allocation0]]
  $region42: #{resnet_forward.20} parent=0
    _
  %s7 = ssub.s32 1, %s5
  %s8 = scalar_select 0, %s7, %s5
  $region1: #{resnet_forward.20} parent=0
    #allocation2 [shape = 'u8[131072]{0}', space=vmem, size = 0x20000, scoped, tag = 'input window, operand 0, single buffered']
    #allocation3 [shape = 's32[1]{0}', space=sflag, size = 0x4, scoped, tag = 'scoped memory for resnet_forward.20']
    #allocation4 [shape = 's32[1]{0}', space=sflag, size = 0x4, scoped, tag = 'scoped memory for resnet_forward.20']
    #allocation5 [shape = 'u8[512]{0}', space=vmem, size = 0x400, scoped, tag = 'input window, operand 1, single buffered']
    #allocation6 [shape = 's32[1]{0}', space=sflag, size = 0x4, scoped, tag = 'scoped memory for resnet_forward.20']
    #allocation7 [shape = 'u8[512]{0}', space=vmem, size = 0x400, scoped, tag = 'input window, operand 2, single buffered']
    #allocation8 [shape = 'u8[131072]{0}', space=vmem, size = 0x20000, scoped, tag = 'input window, operand 3, single buffered']
    #allocation9 [shape = 's32[1]{0}', space=sflag, size = 0x4, scoped, tag = 'scoped memory for resnet_forward.20']
    #allocation10 [shape = 'u8[131072]{0}', space=vmem, size = 0x20000, scoped, tag = 'output window, operand 0, single buffered']
    %9 = vsyncpa [#allocation3], 0
    %10 = vsyncpa [#allocation6], 0
    %11 = vsyncpa [#allocation9], 0
    %12 = vsyncpa [#allocation4], 0
    // Predicated region
    $region2: #{resnet_forward.20} parent=1 // pred_check
      _
    $region3: #{resnet_forward.20} parent=1 // pred_check_branch
      %14 = sbr.rel (0) target = $region5
    $region4: #{resnet_forward.20} parent=1 // pred_region
      %s16 = ssub.s32 4096, 4096
      %17 = vsyncadd [#allocation3], %s16
      %s18 = sshll.u32 [#allocation2], 4
      %s19 = int_to_ptr.vmem [resolvable:$true] %s18
      %24 = dma.hbm_to_vmem [thread:$0]  %s0, 4096, %s19, [#allocation3], 64, 64, 4
    $region5: #{resnet_forward.20} parent=1 // pred_fallthru
      _
    // Predicated region
    $region6: #{resnet_forward.20} parent=1 // pred_check
      _
    $region7: #{resnet_forward.20} parent=1 // pred_check_branch
      %26 = sbr.rel (0) target = $region9
    $region8: #{resnet_forward.20} parent=1 // pred_region
      %s28 = ssub.s32 16, 16
      %29 = vsyncadd [#allocation6], %s28
      %s31 = sshll.u32 [#allocation5], 4
      %s32 = int_to_ptr.vmem [resolvable:$true] %s31
      %34 = dma.hbm_to_vmem [thread:$0]  %s1, 16, %s32, [#allocation6]
    $region9: #{resnet_forward.20} parent=1 // pred_fallthru
      _
    // Predicated region
    $region10: #{resnet_forward.20} parent=1 // pred_check
      _
    $region11: #{resnet_forward.20} parent=1 // pred_check_branch
      %36 = sbr.rel (0) target = $region13
    $region12: #{resnet_forward.20} parent=1 // pred_region
      %s38 = ssub.s32 16, 16
      %39 = vsyncadd [#allocation6], %s38
      %s41 = sshll.u32 [#allocation7], 4
      %s42 = int_to_ptr.vmem [resolvable:$true] %s41
      %44 = dma.hbm_to_vmem [thread:$0]  %s2, 16, %s42, [#allocation6]
    $region13: #{resnet_forward.20} parent=1 // pred_fallthru
      _
    // Predicated region
    $region14: #{resnet_forward.20} parent=1 // pred_check
      _
    $region15: #{resnet_forward.20} parent=1 // pred_check_branch
      %46 = sbr.rel (0) target = $region17
    $region16: #{resnet_forward.20} parent=1 // pred_region
      %s48 = ssub.s32 4096, 4096
      %49 = vsyncadd [#allocation9], %s48
      %s50 = sshll.u32 [#allocation8], 4
      %s51 = int_to_ptr.vmem [resolvable:$true] %s50
      %56 = dma.hbm_to_vmem [thread:$0]  %s3, 4096, %s51, [#allocation9], 64, 64, 4
    $region17: #{resnet_forward.20} parent=1 // pred_fallthru
      _
    // Predicated region
    $region18: #{resnet_forward.20} parent=1 // pred_check
      _
    $region19: #{resnet_forward.20} parent=1 // pred_check_branch
      %58 = sbr.rel (0) target = $region21
    $region20: #{resnet_forward.20} parent=1 // pred_region
      %59 = dma.done [#allocation3], 4096
    $region21: #{resnet_forward.20} parent=1 // pred_fallthru
      _
    // Predicated region
    $region22: #{resnet_forward.20} parent=1 // pred_check
      _
    $region23: #{resnet_forward.20} parent=1 // pred_check_branch
      %61 = sbr.rel (0) target = $region25
    $region24: #{resnet_forward.20} parent=1 // pred_region
      %62 = dma.done [#allocation6], 16
    $region25: #{resnet_forward.20} parent=1 // pred_fallthru
      _
    // Predicated region
    $region26: #{resnet_forward.20} parent=1 // pred_check
      _
    $region27: #{resnet_forward.20} parent=1 // pred_check_branch
      %64 = sbr.rel (0) target = $region29
    $region28: #{resnet_forward.20} parent=1 // pred_region
      %65 = dma.done [#allocation6], 16
    $region29: #{resnet_forward.20} parent=1 // pred_fallthru
      _
    // Predicated region
    $region30: #{resnet_forward.20} parent=1 // pred_check
      _
    $region31: #{resnet_forward.20} parent=1 // pred_check_branch
      %67 = sbr.rel (0) target = $region33
    $region32: #{resnet_forward.20} parent=1 // pred_region
      %68 = dma.done [#allocation9], 4096
    $region33: #{resnet_forward.20} parent=1 // pred_fallthru
      _
    %v69 = vld [vmem:[#allocation2] sm:$0xf]
    %v70 = vld [vmem:[#allocation2 + $0x4] sm:$0xf]
    %v71 = vld [vmem:[#allocation2 + $0x8] sm:$0xf]
    %v72 = vld [vmem:[#allocation2 + $0xc] sm:$0xf]
    %v73 = vld [vmem:[#allocation2 + $0x10] sm:$0xf]
    %v74 = vld [vmem:[#allocation2 + $0x14] sm:$0xf]
    %v75 = vld [vmem:[#allocation2 + $0x18] sm:$0xf]
    %v76 = vld [vmem:[#allocation2 + $0x1c] sm:$0xf]
    %v77 = vld [vmem:[#allocation2 + $0x20] sm:$0xf]
    %v78 = vld [vmem:[#allocation2 + $0x24] sm:$0xf]
    %v79 = vld [vmem:[#allocation2 + $0x28] sm:$0xf]
    %v80 = vld [vmem:[#allocation2 + $0x2c] sm:$0xf]
    %v81 = vld [vmem:[#allocation2 + $0x30] sm:$0xf]
    %v82 = vld [vmem:[#allocation2 + $0x34] sm:$0xf]
    %v83 = vld [vmem:[#allocation2 + $0x38] sm:$0xf]
    %v84 = vld [vmem:[#allocation2 + $0x3c] sm:$0xf]
    %v85 = vld [vmem:[#allocation2 + $0x40] sm:$0xf]
    %v86 = vld [vmem:[#allocation2 + $0x44] sm:$0xf]
    %v87 = vld [vmem:[#allocation2 + $0x48] sm:$0xf]
    %v88 = vld [vmem:[#allocation2 + $0x4c] sm:$0xf]
    %v89 = vld [vmem:[#allocation2 + $0x50] sm:$0xf]
    %v90 = vld [vmem:[#allocation2 + $0x54] sm:$0xf]
    %v91 = vld [vmem:[#allocation2 + $0x58] sm:$0xf]
    %v92 = vld [vmem:[#allocation2 + $0x5c] sm:$0xf]
    %v93 = vld [vmem:[#allocation2 + $0x60] sm:$0xf]
    %v94 = vld [vmem:[#allocation2 + $0x64] sm:$0xf]
    %v95 = vld [vmem:[#allocation2 + $0x68] sm:$0xf]
    %v96 = vld [vmem:[#allocation2 + $0x6c] sm:$0xf]
    %v97 = vld [vmem:[#allocation2 + $0x70] sm:$0xf]
    %v98 = vld [vmem:[#allocation2 + $0x74] sm:$0xf]
    %v99 = vld [vmem:[#allocation2 + $0x78] sm:$0xf]
    %v100 = vld [vmem:[#allocation2 + $0x7c] sm:$0xf]
    %v101 = vld [vmem:[#allocation2 + $0x80] sm:$0xf]
    %v102 = vld [vmem:[#allocation2 + $0x84] sm:$0xf]
    %v103 = vld [vmem:[#allocation2 + $0x88] sm:$0xf]
    %v104 = vld [vmem:[#allocation2 + $0x8c] sm:$0xf]
    %v105 = vld [vmem:[#allocation2 + $0x90] sm:$0xf]
    %v106 = vld [vmem:[#allocation2 + $0x94] sm:$0xf]
    %v107 = vld [vmem:[#allocation2 + $0x98] sm:$0xf]
    %v108 = vld [vmem:[#allocation2 + $0x9c] sm:$0xf]
    %v109 = vld [vmem:[#allocation2 + $0xa0] sm:$0xf]
    %v110 = vld [vmem:[#allocation2 + $0xa4] sm:$0xf]
    %v111 = vld [vmem:[#allocation2 + $0xa8] sm:$0xf]
    %v112 = vld [vmem:[#allocation2 + $0xac] sm:$0xf]
    %v113 = vld [vmem:[#allocation2 + $0xb0] sm:$0xf]
    %v114 = vld [vmem:[#allocation2 + $0xb4] sm:$0xf]
    %v115 = vld [vmem:[#allocation2 + $0xb8] sm:$0xf]
    %v116 = vld [vmem:[#allocation2 + $0xbc] sm:$0xf]
    %v117 = vld [vmem:[#allocation2 + $0xc0] sm:$0xf]
    %v118 = vld [vmem:[#allocation2 + $0xc4] sm:$0xf]
    %v119 = vld [vmem:[#allocation2 + $0xc8] sm:$0xf]
    %v120 = vld [vmem:[#allocation2 + $0xcc] sm:$0xf]
    %v121 = vld [vmem:[#allocation2 + $0xd0] sm:$0xf]
    %v122 = vld [vmem:[#allocation2 + $0xd4] sm:$0xf]
    %v123 = vld [vmem:[#allocation2 + $0xd8] sm:$0xf]
    %v124 = vld [vmem:[#allocation2 + $0xdc] sm:$0xf]
    %v125 = vld [vmem:[#allocation2 + $0xe0] sm:$0xf]
    %v126 = vld [vmem:[#allocation2 + $0xe4] sm:$0xf]
    %v127 = vld [vmem:[#allocation2 + $0xe8] sm:$0xf]
    %v128 = vld [vmem:[#allocation2 + $0xec] sm:$0xf]
    %v129 = vld [vmem:[#allocation2 + $0xf0] sm:$0xf]
    %v130 = vld [vmem:[#allocation2 + $0xf4] sm:$0xf]
    %v131 = vld [vmem:[#allocation2 + $0xf8] sm:$0xf]
    %v132 = vld [vmem:[#allocation2 + $0xfc] sm:$0xf]
    %v133 = vunpack.c.l.bf16 %v69
    %v134 = vunpack.c.l.bf16 %v70
    %v135 = vunpack.c.l.bf16 %v71
    %v136 = vunpack.c.l.bf16 %v72
    %v137 = vunpack.c.l.bf16 %v73
    %v138 = vunpack.c.l.bf16 %v74
    %v139 = vunpack.c.l.bf16 %v75
    %v140 = vunpack.c.l.bf16 %v76
    %v141 = vunpack.c.l.bf16 %v77
    %v142 = vunpack.c.l.bf16 %v78
    %v143 = vunpack.c.l.bf16 %v79
    %v144 = vunpack.c.l.bf16 %v80
    %v145 = vunpack.c.l.bf16 %v81
    %v146 = vunpack.c.l.bf16 %v82
    %v147 = vunpack.c.l.bf16 %v83
    %v148 = vunpack.c.l.bf16 %v84
    %v149 = vunpack.c.l.bf16 %v85
    %v150 = vunpack.c.l.bf16 %v86
    %v151 = vunpack.c.l.bf16 %v87
    %v152 = vunpack.c.l.bf16 %v88
    %v153 = vunpack.c.l.bf16 %v89
    %v154 = vunpack.c.l.bf16 %v90
    %v155 = vunpack.c.l.bf16 %v91
    %v156 = vunpack.c.l.bf16 %v92
    %v157 = vunpack.c.l.bf16 %v93
    %v158 = vunpack.c.l.bf16 %v94
    %v159 = vunpack.c.l.bf16 %v95
    %v160 = vunpack.c.l.bf16 %v96
    %v161 = vunpack.c.l.bf16 %v97
    %v162 = vunpack.c.l.bf16 %v98
    %v163 = vunpack.c.l.bf16 %v99
    %v164 = vunpack.c.l.bf16 %v100
    %v165 = vunpack.c.l.bf16 %v101
    %v166 = vunpack.c.l.bf16 %v102
    %v167 = vunpack.c.l.bf16 %v103
    %v168 = vunpack.c.l.bf16 %v104
    %v169 = vunpack.c.l.bf16 %v105
    %v170 = vunpack.c.l.bf16 %v106
    %v171 = vunpack.c.l.bf16 %v107
    %v172 = vunpack.c.l.bf16 %v108
    %v173 = vunpack.c.l.bf16 %v109
    %v174 = vunpack.c.l.bf16 %v110
    %v175 = vunpack.c.l.bf16 %v111
    %v176 = vunpack.c.l.bf16 %v112
    %v177 = vunpack.c.l.bf16 %v113
    %v178 = vunpack.c.l.bf16 %v114
    %v179 = vunpack.c.l.bf16 %v115
    %v180 = vunpack.c.l.bf16 %v116
    %v181 = vunpack.c.l.bf16 %v117
    %v182 = vunpack.c.l.bf16 %v118
    %v183 = vunpack.c.l.bf16 %v119
    %v184 = vunpack.c.l.bf16 %v120
    %v185 = vunpack.c.l.bf16 %v121
    %v186 = vunpack.c.l.bf16 %v122
    %v187 = vunpack.c.l.bf16 %v123
    %v188 = vunpack.c.l.bf16 %v124
    %v189 = vunpack.c.l.bf16 %v125
    %v190 = vunpack.c.l.bf16 %v126
    %v191 = vunpack.c.l.bf16 %v127
    %v192 = vunpack.c.l.bf16 %v128
    %v193 = vunpack.c.l.bf16 %v129
    %v194 = vunpack.c.l.bf16 %v130
    %v195 = vunpack.c.l.bf16 %v131
    %v196 = vunpack.c.l.bf16 %v132
    %v197 = vld [vmem:[#allocation8] sm:$0xf]
    %v198 = vld [vmem:[#allocation8 + $0x4] sm:$0xf]
    %v199 = vld [vmem:[#allocation8 + $0x8] sm:$0xf]
    %v200 = vld [vmem:[#allocation8 + $0xc] sm:$0xf]
    %v201 = vld [vmem:[#allocation8 + $0x10] sm:$0xf]
    %v202 = vld [vmem:[#allocation8 + $0x14] sm:$0xf]
    %v203 = vld [vmem:[#allocation8 + $0x18] sm:$0xf]
    %v204 = vld [vmem:[#allocation8 + $0x1c] sm:$0xf]
    %v205 = vld [vmem:[#allocation8 + $0x20] sm:$0xf]
    %v206 = vld [vmem:[#allocation8 + $0x24] sm:$0xf]
    %v207 = vld [vmem:[#allocation8 + $0x28] sm:$0xf]
    %v208 = vld [vmem:[#allocation8 + $0x2c] sm:$0xf]
    %v209 = vld [vmem:[#allocation8 + $0x30] sm:$0xf]
    %v210 = vld [vmem:[#allocation8 + $0x34] sm:$0xf]
    %v211 = vld [vmem:[#allocation8 + $0x38] sm:$0xf]
    %v212 = vld [vmem:[#allocation8 + $0x3c] sm:$0xf]
    %v213 = vld [vmem:[#allocation8 + $0x40] sm:$0xf]
    %v214 = vld [vmem:[#allocation8 + $0x44] sm:$0xf]
    %v215 = vld [vmem:[#allocation8 + $0x48] sm:$0xf]
    %v216 = vld [vmem:[#allocation8 + $0x4c] sm:$0xf]
    %v217 = vld [vmem:[#allocation8 + $0x50] sm:$0xf]
    %v218 = vld [vmem:[#allocation8 + $0x54] sm:$0xf]
    %v219 = vld [vmem:[#allocation8 + $0x58] sm:$0xf]
    %v220 = vld [vmem:[#allocation8 + $0x5c] sm:$0xf]
    %v221 = vld [vmem:[#allocation8 + $0x60] sm:$0xf]
    %v222 = vld [vmem:[#allocation8 + $0x64] sm:$0xf]
    %v223 = vld [vmem:[#allocation8 + $0x68] sm:$0xf]
    %v224 = vld [vmem:[#allocation8 + $0x6c] sm:$0xf]
    %v225 = vld [vmem:[#allocation8 + $0x70] sm:$0xf]
    %v226 = vld [vmem:[#allocation8 + $0x74] sm:$0xf]
    %v227 = vld [vmem:[#allocation8 + $0x78] sm:$0xf]
    %v228 = vld [vmem:[#allocation8 + $0x7c] sm:$0xf]
    %v229 = vld [vmem:[#allocation8 + $0x80] sm:$0xf]
    %v230 = vld [vmem:[#allocation8 + $0x84] sm:$0xf]
    %v231 = vld [vmem:[#allocation8 + $0x88] sm:$0xf]
    %v232 = vld [vmem:[#allocation8 + $0x8c] sm:$0xf]
    %v233 = vld [vmem:[#allocation8 + $0x90] sm:$0xf]
    %v234 = vld [vmem:[#allocation8 + $0x94] sm:$0xf]
    %v235 = vld [vmem:[#allocation8 + $0x98] sm:$0xf]
    %v236 = vld [vmem:[#allocation8 + $0x9c] sm:$0xf]
    %v237 = vld [vmem:[#allocation8 + $0xa0] sm:$0xf]
    %v238 = vld [vmem:[#allocation8 + $0xa4] sm:$0xf]
    %v239 = vld [vmem:[#allocation8 + $0xa8] sm:$0xf]
    %v240 = vld [vmem:[#allocation8 + $0xac] sm:$0xf]
    %v241 = vld [vmem:[#allocation8 + $0xb0] sm:$0xf]
    %v242 = vld [vmem:[#allocation8 + $0xb4] sm:$0xf]
    %v243 = vld [vmem:[#allocation8 + $0xb8] sm:$0xf]
    %v244 = vld [vmem:[#allocation8 + $0xbc] sm:$0xf]
    %v245 = vld [vmem:[#allocation8 + $0xc0] sm:$0xf]
    %v246 = vld [vmem:[#allocation8 + $0xc4] sm:$0xf]
    %v247 = vld [vmem:[#allocation8 + $0xc8] sm:$0xf]
    %v248 = vld [vmem:[#allocation8 + $0xcc] sm:$0xf]
    %v249 = vld [vmem:[#allocation8 + $0xd0] sm:$0xf]
    %v250 = vld [vmem:[#allocation8 + $0xd4] sm:$0xf]
    %v251 = vld [vmem:[#allocation8 + $0xd8] sm:$0xf]
    %v252 = vld [vmem:[#allocation8 + $0xdc] sm:$0xf]
    %v253 = vld [vmem:[#allocation8 + $0xe0] sm:$0xf]
    %v254 = vld [vmem:[#allocation8 + $0xe4] sm:$0xf]
    %v255 = vld [vmem:[#allocation8 + $0xe8] sm:$0xf]
    %v256 = vld [vmem:[#allocation8 + $0xec] sm:$0xf]
    %v257 = vld [vmem:[#allocation8 + $0xf0] sm:$0xf]
    %v258 = vld [vmem:[#allocation8 + $0xf4] sm:$0xf]
    %v259 = vld [vmem:[#allocation8 + $0xf8] sm:$0xf]
    %v260 = vld [vmem:[#allocation8 + $0xfc] sm:$0xf]
    %v261 = vunpack.c.l.bf16 %v197
    %v262 = vunpack.c.l.bf16 %v198
    %v263 = vunpack.c.l.bf16 %v199
    %v264 = vunpack.c.l.bf16 %v200
    %v265 = vunpack.c.l.bf16 %v201
    %v266 = vunpack.c.l.bf16 %v202
    %v267 = vunpack.c.l.bf16 %v203
    %v268 = vunpack.c.l.bf16 %v204
    %v269 = vunpack.c.l.bf16 %v205
    %v270 = vunpack.c.l.bf16 %v206
    %v271 = vunpack.c.l.bf16 %v207
    %v272 = vunpack.c.l.bf16 %v208
    %v273 = vunpack.c.l.bf16 %v209
    %v274 = vunpack.c.l.bf16 %v210
    %v275 = vunpack.c.l.bf16 %v211
    %v276 = vunpack.c.l.bf16 %v212
    %v277 = vunpack.c.l.bf16 %v213
    %v278 = vunpack.c.l.bf16 %v214
    %v279 = vunpack.c.l.bf16 %v215
    %v280 = vunpack.c.l.bf16 %v216
    %v281 = vunpack.c.l.bf16 %v217
    %v282 = vunpack.c.l.bf16 %v218
    %v283 = vunpack.c.l.bf16 %v219
    %v284 = vunpack.c.l.bf16 %v220
    %v285 = vunpack.c.l.bf16 %v221
    %v286 = vunpack.c.l.bf16 %v222
    %v287 = vunpack.c.l.bf16 %v223
    %v288 = vunpack.c.l.bf16 %v224
    %v289 = vunpack.c.l.bf16 %v225
    %v290 = vunpack.c.l.bf16 %v226
    %v291 = vunpack.c.l.bf16 %v227
    %v292 = vunpack.c.l.bf16 %v228
    %v293 = vunpack.c.l.bf16 %v229
    %v294 = vunpack.c.l.bf16 %v230
    %v295 = vunpack.c.l.bf16 %v231
    %v296 = vunpack.c.l.bf16 %v232
    %v297 = vunpack.c.l.bf16 %v233
    %v298 = vunpack.c.l.bf16 %v234
    %v299 = vunpack.c.l.bf16 %v235
    %v300 = vunpack.c.l.bf16 %v236
    %v301 = vunpack.c.l.bf16 %v237
    %v302 = vunpack.c.l.bf16 %v238
    %v303 = vunpack.c.l.bf16 %v239
    %v304 = vunpack.c.l.bf16 %v240
    %v305 = vunpack.c.l.bf16 %v241
    %v306 = vunpack.c.l.bf16 %v242
    %v307 = vunpack.c.l.bf16 %v243
    %v308 = vunpack.c.l.bf16 %v244
    %v309 = vunpack.c.l.bf16 %v245
    %v310 = vunpack.c.l.bf16 %v246
    %v311 = vunpack.c.l.bf16 %v247
    %v312 = vunpack.c.l.bf16 %v248
    %v313 = vunpack.c.l.bf16 %v249
    %v314 = vunpack.c.l.bf16 %v250
    %v315 = vunpack.c.l.bf16 %v251
    %v316 = vunpack.c.l.bf16 %v252
    %v317 = vunpack.c.l.bf16 %v253
    %v318 = vunpack.c.l.bf16 %v254
    %v319 = vunpack.c.l.bf16 %v255
    %v320 = vunpack.c.l.bf16 %v256
    %v321 = vunpack.c.l.bf16 %v257
    %v322 = vunpack.c.l.bf16 %v258
    %v323 = vunpack.c.l.bf16 %v259
    %v324 = vunpack.c.l.bf16 %v260
    %v325 = vld [vmem:[#allocation5] sm:$0x1]
    %v327 = vlaneseq
    %v328 = vshrl.u32 %v327, 7
    %v329 = vsub.s32 0, %v328
    %v330 = vrot.slane %v325, %v329
    %v332 = vmul.f32 %v133, %v330
    %v333 = vmul.f32 %v134, %v330
    %v334 = vmul.f32 %v135, %v330
    %v335 = vmul.f32 %v136, %v330
    %v336 = vmul.f32 %v137, %v330
    %v337 = vmul.f32 %v138, %v330
    %v338 = vmul.f32 %v139, %v330
    %v339 = vmul.f32 %v140, %v330
    %v340 = vmul.f32 %v141, %v330
    %v341 = vmul.f32 %v142, %v330
    %v342 = vmul.f32 %v143, %v330
    %v343 = vmul.f32 %v144, %v330
    %v344 = vmul.f32 %v145, %v330
    %v345 = vmul.f32 %v146, %v330
    %v346 = vmul.f32 %v147, %v330
    %v347 = vmul.f32 %v148, %v330
    %v348 = vmul.f32 %v149, %v330
    %v349 = vmul.f32 %v150, %v330
    %v350 = vmul.f32 %v151, %v330
    %v351 = vmul.f32 %v152, %v330
    %v352 = vmul.f32 %v153, %v330
    %v353 = vmul.f32 %v154, %v330
    %v354 = vmul.f32 %v155, %v330
    %v355 = vmul.f32 %v156, %v330
    %v356 = vmul.f32 %v157, %v330
    %v357 = vmul.f32 %v158, %v330
    %v358 = vmul.f32 %v159, %v330
    %v359 = vmul.f32 %v160, %v330
    %v360 = vmul.f32 %v161, %v330
    %v361 = vmul.f32 %v162, %v330
    %v362 = vmul.f32 %v163, %v330
    %v363 = vmul.f32 %v164, %v330
    %v364 = vmul.f32 %v165, %v330
    %v365 = vmul.f32 %v166, %v330
    %v366 = vmul.f32 %v167, %v330
    %v367 = vmul.f32 %v168, %v330
    %v368 = vmul.f32 %v169, %v330
    %v369 = vmul.f32 %v170, %v330
    %v370 = vmul.f32 %v171, %v330
    %v371 = vmul.f32 %v172, %v330
    %v372 = vmul.f32 %v173, %v330
    %v373 = vmul.f32 %v174, %v330
    %v374 = vmul.f32 %v175, %v330
    %v375 = vmul.f32 %v176, %v330
    %v376 = vmul.f32 %v177, %v330
    %v377 = vmul.f32 %v178, %v330
    %v378 = vmul.f32 %v179, %v330
    %v379 = vmul.f32 %v180, %v330
    %v380 = vmul.f32 %v181, %v330
    %v381 = vmul.f32 %v182, %v330
    %v382 = vmul.f32 %v183, %v330
    %v383 = vmul.f32 %v184, %v330
    %v384 = vmul.f32 %v185, %v330
    %v385 = vmul.f32 %v186, %v330
    %v386 = vmul.f32 %v187, %v330
    %v387 = vmul.f32 %v188, %v330
    %v388 = vmul.f32 %v189, %v330
    %v389 = vmul.f32 %v190, %v330
    %v390 = vmul.f32 %v191, %v330
    %v391 = vmul.f32 %v192, %v330
    %v392 = vmul.f32 %v193, %v330
    %v393 = vmul.f32 %v194, %v330
    %v394 = vmul.f32 %v195, %v330
    %v395 = vmul.f32 %v196, %v330
    %v396 = vld [vmem:[#allocation7] sm:$0x1]
    %v398 = vlaneseq
    %v399 = vshrl.u32 %v398, 7
    %v400 = vsub.s32 0, %v399
    %v401 = vrot.slane %v396, %v400
    %v403 = vadd.f32 %v332, %v401
    %v404 = vadd.f32 %v333, %v401
    %v405 = vadd.f32 %v334, %v401
    %v406 = vadd.f32 %v335, %v401
    %v407 = vadd.f32 %v336, %v401
    %v408 = vadd.f32 %v337, %v401
    %v409 = vadd.f32 %v338, %v401
    %v410 = vadd.f32 %v339, %v401
    %v411 = vadd.f32 %v340, %v401
    %v412 = vadd.f32 %v341, %v401
    %v413 = vadd.f32 %v342, %v401
    %v414 = vadd.f32 %v343, %v401
    %v415 = vadd.f32 %v344, %v401
    %v416 = vadd.f32 %v345, %v401
    %v417 = vadd.f32 %v346, %v401
    %v418 = vadd.f32 %v347, %v401
    %v419 = vadd.f32 %v348, %v401
    %v420 = vadd.f32 %v349, %v401
    %v421 = vadd.f32 %v350, %v401
    %v422 = vadd.f32 %v351, %v401
    %v423 = vadd.f32 %v352, %v401
    %v424 = vadd.f32 %v353, %v401
    %v425 = vadd.f32 %v354, %v401
    %v426 = vadd.f32 %v355, %v401
    %v427 = vadd.f32 %v356, %v401
    %v428 = vadd.f32 %v357, %v401
    %v429 = vadd.f32 %v358, %v401
    %v430 = vadd.f32 %v359, %v401
    %v431 = vadd.f32 %v360, %v401
    %v432 = vadd.f32 %v361, %v401
    %v433 = vadd.f32 %v362, %v401
    %v434 = vadd.f32 %v363, %v401
    %v435 = vadd.f32 %v364, %v401
    %v436 = vadd.f32 %v365, %v401
    %v437 = vadd.f32 %v366, %v401
    %v438 = vadd.f32 %v367, %v401
    %v439 = vadd.f32 %v368, %v401
    %v440 = vadd.f32 %v369, %v401
    %v441 = vadd.f32 %v370, %v401
    %v442 = vadd.f32 %v371, %v401
    %v443 = vadd.f32 %v372, %v401
    %v444 = vadd.f32 %v373, %v401
    %v445 = vadd.f32 %v374, %v401
    %v446 = vadd.f32 %v375, %v401
    %v447 = vadd.f32 %v376, %v401
    %v448 = vadd.f32 %v377, %v401
    %v449 = vadd.f32 %v378, %v401
    %v450 = vadd.f32 %v379, %v401
    %v451 = vadd.f32 %v380, %v401
    %v452 = vadd.f32 %v381, %v401
    %v453 = vadd.f32 %v382, %v401
    %v454 = vadd.f32 %v383, %v401
    %v455 = vadd.f32 %v384, %v401
    %v456 = vadd.f32 %v385, %v401
    %v457 = vadd.f32 %v386, %v401
    %v458 = vadd.f32 %v387, %v401
    %v459 = vadd.f32 %v388, %v401
    %v460 = vadd.f32 %v389, %v401
    %v461 = vadd.f32 %v390, %v401
    %v462 = vadd.f32 %v391, %v401
    %v463 = vadd.f32 %v392, %v401
    %v464 = vadd.f32 %v393, %v401
    %v465 = vadd.f32 %v394, %v401
    %v466 = vadd.f32 %v395, %v401
    %v467 = vadd.f32 %v403, %v261
    %v468 = vadd.f32 %v404, %v262
    %v469 = vadd.f32 %v405, %v263
    %v470 = vadd.f32 %v406, %v264
    %v471 = vadd.f32 %v407, %v265
    %v472 = vadd.f32 %v408, %v266
    %v473 = vadd.f32 %v409, %v267
    %v474 = vadd.f32 %v410, %v268
    %v475 = vadd.f32 %v411, %v269
    %v476 = vadd.f32 %v412, %v270
    %v477 = vadd.f32 %v413, %v271
    %v478 = vadd.f32 %v414, %v272
    %v479 = vadd.f32 %v415, %v273
    %v480 = vadd.f32 %v416, %v274
    %v481 = vadd.f32 %v417, %v275
    %v482 = vadd.f32 %v418, %v276
    %v483 = vadd.f32 %v419, %v277
    %v484 = vadd.f32 %v420, %v278
    %v485 = vadd.f32 %v421, %v279
    %v486 = vadd.f32 %v422, %v280
    %v487 = vadd.f32 %v423, %v281
    %v488 = vadd.f32 %v424, %v282
    %v489 = vadd.f32 %v425, %v283
    %v490 = vadd.f32 %v426, %v284
    %v491 = vadd.f32 %v427, %v285
    %v492 = vadd.f32 %v428, %v286
    %v493 = vadd.f32 %v429, %v287
    %v494 = vadd.f32 %v430, %v288
    %v495 = vadd.f32 %v431, %v289
    %v496 = vadd.f32 %v432, %v290
    %v497 = vadd.f32 %v433, %v291
    %v498 = vadd.f32 %v434, %v292
    %v499 = vadd.f32 %v435, %v293
    %v500 = vadd.f32 %v436, %v294
    %v501 = vadd.f32 %v437, %v295
    %v502 = vadd.f32 %v438, %v296
    %v503 = vadd.f32 %v439, %v297
    %v504 = vadd.f32 %v440, %v298
    %v505 = vadd.f32 %v441, %v299
    %v506 = vadd.f32 %v442, %v300
    %v507 = vadd.f32 %v443, %v301
    %v508 = vadd.f32 %v444, %v302
    %v509 = vadd.f32 %v445, %v303
    %v510 = vadd.f32 %v446, %v304
    %v511 = vadd.f32 %v447, %v305
    %v512 = vadd.f32 %v448, %v306
    %v513 = vadd.f32 %v449, %v307
    %v514 = vadd.f32 %v450, %v308
    %v515 = vadd.f32 %v451, %v309
    %v516 = vadd.f32 %v452, %v310
    %v517 = vadd.f32 %v453, %v311
    %v518 = vadd.f32 %v454, %v312
    %v519 = vadd.f32 %v455, %v313
    %v520 = vadd.f32 %v456, %v314
    %v521 = vadd.f32 %v457, %v315
    %v522 = vadd.f32 %v458, %v316
    %v523 = vadd.f32 %v459, %v317
    %v524 = vadd.f32 %v460, %v318
    %v525 = vadd.f32 %v461, %v319
    %v526 = vadd.f32 %v462, %v320
    %v527 = vadd.f32 %v463, %v321
    %v528 = vadd.f32 %v464, %v322
    %v529 = vadd.f32 %v465, %v323
    %v530 = vadd.f32 %v466, %v324
    %v531 = vmax.f32 %v467, 0.0
    %v532 = vmax.f32 %v468, 0.0
    %v533 = vmax.f32 %v469, 0.0
    %v534 = vmax.f32 %v470, 0.0
    %v535 = vmax.f32 %v471, 0.0
    %v536 = vmax.f32 %v472, 0.0
    %v537 = vmax.f32 %v473, 0.0
    %v538 = vmax.f32 %v474, 0.0
    %v539 = vmax.f32 %v475, 0.0
    %v540 = vmax.f32 %v476, 0.0
    %v541 = vmax.f32 %v477, 0.0
    %v542 = vmax.f32 %v478, 0.0
    %v543 = vmax.f32 %v479, 0.0
    %v544 = vmax.f32 %v480, 0.0
    %v545 = vmax.f32 %v481, 0.0
    %v546 = vmax.f32 %v482, 0.0
    %v547 = vmax.f32 %v483, 0.0
    %v548 = vmax.f32 %v484, 0.0
    %v549 = vmax.f32 %v485, 0.0
    %v550 = vmax.f32 %v486, 0.0
    %v551 = vmax.f32 %v487, 0.0
    %v552 = vmax.f32 %v488, 0.0
    %v553 = vmax.f32 %v489, 0.0
    %v554 = vmax.f32 %v490, 0.0
    %v555 = vmax.f32 %v491, 0.0
    %v556 = vmax.f32 %v492, 0.0
    %v557 = vmax.f32 %v493, 0.0
    %v558 = vmax.f32 %v494, 0.0
    %v559 = vmax.f32 %v495, 0.0
    %v560 = vmax.f32 %v496, 0.0
    %v561 = vmax.f32 %v497, 0.0
    %v562 = vmax.f32 %v498, 0.0
    %v563 = vmax.f32 %v499, 0.0
    %v564 = vmax.f32 %v500, 0.0
    %v565 = vmax.f32 %v501, 0.0
    %v566 = vmax.f32 %v502, 0.0
    %v567 = vmax.f32 %v503, 0.0
    %v568 = vmax.f32 %v504, 0.0
    %v569 = vmax.f32 %v505, 0.0
    %v570 = vmax.f32 %v506, 0.0
    %v571 = vmax.f32 %v507, 0.0
    %v572 = vmax.f32 %v508, 0.0
    %v573 = vmax.f32 %v509, 0.0
    %v574 = vmax.f32 %v510, 0.0
    %v575 = vmax.f32 %v511, 0.0
    %v576 = vmax.f32 %v512, 0.0
    %v577 = vmax.f32 %v513, 0.0
    %v578 = vmax.f32 %v514, 0.0
    %v579 = vmax.f32 %v515, 0.0
    %v580 = vmax.f32 %v516, 0.0
    %v581 = vmax.f32 %v517, 0.0
    %v582 = vmax.f32 %v518, 0.0
    %v583 = vmax.f32 %v519, 0.0
    %v584 = vmax.f32 %v520, 0.0
    %v585 = vmax.f32 %v521, 0.0
    %v586 = vmax.f32 %v522, 0.0
    %v587 = vmax.f32 %v523, 0.0
    %v588 = vmax.f32 %v524, 0.0
    %v589 = vmax.f32 %v525, 0.0
    %v590 = vmax.f32 %v526, 0.0
    %v591 = vmax.f32 %v527, 0.0
    %v592 = vmax.f32 %v528, 0.0
    %v593 = vmax.f32 %v529, 0.0
    %v594 = vmax.f32 %v530, 0.0
    %v595 = vpack.c.bf16 %v532, %v531
    %v596 = vpack.c.bf16 %v534, %v533
    %v597 = vpack.c.bf16 %v536, %v535
    %v598 = vpack.c.bf16 %v538, %v537
    %v599 = vpack.c.bf16 %v540, %v539
    %v600 = vpack.c.bf16 %v542, %v541
    %v601 = vpack.c.bf16 %v544, %v543
    %v602 = vpack.c.bf16 %v546, %v545
    %v603 = vpack.c.bf16 %v548, %v547
    %v604 = vpack.c.bf16 %v550, %v549
    %v605 = vpack.c.bf16 %v552, %v551
    %v606 = vpack.c.bf16 %v554, %v553
    %v607 = vpack.c.bf16 %v556, %v555
    %v608 = vpack.c.bf16 %v558, %v557
    %v609 = vpack.c.bf16 %v560, %v559
    %v610 = vpack.c.bf16 %v562, %v561
    %v611 = vpack.c.bf16 %v564, %v563
    %v612 = vpack.c.bf16 %v566, %v565
    %v613 = vpack.c.bf16 %v568, %v567
    %v614 = vpack.c.bf16 %v570, %v569
    %v615 = vpack.c.bf16 %v572, %v571
    %v616 = vpack.c.bf16 %v574, %v573
    %v617 = vpack.c.bf16 %v576, %v575
    %v618 = vpack.c.bf16 %v578, %v577
    %v619 = vpack.c.bf16 %v580, %v579
    %v620 = vpack.c.bf16 %v582, %v581
    %v621 = vpack.c.bf16 %v584, %v583
    %v622 = vpack.c.bf16 %v586, %v585
    %v623 = vpack.c.bf16 %v588, %v587
    %v624 = vpack.c.bf16 %v590, %v589
    %v625 = vpack.c.bf16 %v592, %v591
    %v626 = vpack.c.bf16 %v594, %v593
    %v659 = vunpack.c.l.b16 %v595
    %v660 = vunpack.c.h.b16 %v595
    %v661 = vunpack.c.l.b16 %v596
    %v662 = vunpack.c.h.b16 %v596
    %v663 = vunpack.c.l.b16 %v597
    %v664 = vunpack.c.h.b16 %v597
    %v665 = vunpack.c.l.b16 %v598
    %v666 = vunpack.c.h.b16 %v598
    %v667 = vunpack.c.l.b16 %v599
    %v668 = vunpack.c.h.b16 %v599
    %v669 = vunpack.c.l.b16 %v600
    %v670 = vunpack.c.h.b16 %v600
    %v671 = vunpack.c.l.b16 %v601
    %v672 = vunpack.c.h.b16 %v601
    %v673 = vunpack.c.l.b16 %v602
    %v674 = vunpack.c.h.b16 %v602
    %v675 = vunpack.c.l.b16 %v603
    %v676 = vunpack.c.h.b16 %v603
    %v677 = vunpack.c.l.b16 %v604
    %v678 = vunpack.c.h.b16 %v604
    %v679 = vunpack.c.l.b16 %v605
    %v680 = vunpack.c.h.b16 %v605
    %v681 = vunpack.c.l.b16 %v606
    %v682 = vunpack.c.h.b16 %v606
    %v683 = vunpack.c.l.b16 %v607
    %v684 = vunpack.c.h.b16 %v607
    %v685 = vunpack.c.l.b16 %v608
    %v686 = vunpack.c.h.b16 %v608
    %v687 = vunpack.c.l.b16 %v609
    %v688 = vunpack.c.h.b16 %v609
    %v689 = vunpack.c.l.b16 %v610
    %v690 = vunpack.c.h.b16 %v610
    %v691 = vunpack.c.l.b16 %v611
    %v692 = vunpack.c.h.b16 %v611
    %v693 = vunpack.c.l.b16 %v612
    %v694 = vunpack.c.h.b16 %v612
    %v695 = vunpack.c.l.b16 %v613
    %v696 = vunpack.c.h.b16 %v613
    %v697 = vunpack.c.l.b16 %v614
    %v698 = vunpack.c.h.b16 %v614
    %v699 = vunpack.c.l.b16 %v615
    %v700 = vunpack.c.h.b16 %v615
    %v701 = vunpack.c.l.b16 %v616
    %v702 = vunpack.c.h.b16 %v616
    %v703 = vunpack.c.l.b16 %v617
    %v704 = vunpack.c.h.b16 %v617
    %v705 = vunpack.c.l.b16 %v618
    %v706 = vunpack.c.h.b16 %v618
    %v707 = vunpack.c.l.b16 %v619
    %v708 = vunpack.c.h.b16 %v619
    %v709 = vunpack.c.l.b16 %v620
    %v710 = vunpack.c.h.b16 %v620
    %v711 = vunpack.c.l.b16 %v621
    %v712 = vunpack.c.h.b16 %v621
    %v713 = vunpack.c.l.b16 %v622
    %v714 = vunpack.c.h.b16 %v622
    %v715 = vunpack.c.l.b16 %v623
    %v716 = vunpack.c.h.b16 %v623
    %v717 = vunpack.c.l.b16 %v624
    %v718 = vunpack.c.h.b16 %v624
    %v719 = vunpack.c.l.b16 %v625
    %v720 = vunpack.c.h.b16 %v625
    %v721 = vunpack.c.l.b16 %v626
    %v722 = vunpack.c.h.b16 %v626
    %v723 = vpack.c.b16 %v659, %v659
    %v724 = vpack.c.b16 %v660, %v660
    %v725 = vpack.c.b16 %v661, %v661
    %v726 = vpack.c.b16 %v662, %v662
    %v727 = vpack.c.b16 %v663, %v663
    %v728 = vpack.c.b16 %v664, %v664
    %v729 = vpack.c.b16 %v665, %v665
    %v730 = vpack.c.b16 %v666, %v666
    %v731 = vpack.c.b16 %v667, %v667
    %v732 = vpack.c.b16 %v668, %v668
    %v733 = vpack.c.b16 %v669, %v669
    %v734 = vpack.c.b16 %v670, %v670
    %v735 = vpack.c.b16 %v671, %v671
    %v736 = vpack.c.b16 %v672, %v672
    %v737 = vpack.c.b16 %v673, %v673
    %v738 = vpack.c.b16 %v674, %v674
    %v739 = vpack.c.b16 %v675, %v675
    %v740 = vpack.c.b16 %v676, %v676
    %v741 = vpack.c.b16 %v677, %v677
    %v742 = vpack.c.b16 %v678, %v678
    %v743 = vpack.c.b16 %v679, %v679
    %v744 = vpack.c.b16 %v680, %v680
    %v745 = vpack.c.b16 %v681, %v681
    %v746 = vpack.c.b16 %v682, %v682
    %v747 = vpack.c.b16 %v683, %v683
    %v748 = vpack.c.b16 %v684, %v684
    %v749 = vpack.c.b16 %v685, %v685
    %v750 = vpack.c.b16 %v686, %v686
    %v751 = vpack.c.b16 %v687, %v687
    %v752 = vpack.c.b16 %v688, %v688
    %v753 = vpack.c.b16 %v689, %v689
    %v754 = vpack.c.b16 %v690, %v690
    %v755 = vpack.c.b16 %v691, %v691
    %v756 = vpack.c.b16 %v692, %v692
    %v757 = vpack.c.b16 %v693, %v693
    %v758 = vpack.c.b16 %v694, %v694
    %v759 = vpack.c.b16 %v695, %v695
    %v760 = vpack.c.b16 %v696, %v696
    %v761 = vpack.c.b16 %v697, %v697
    %v762 = vpack.c.b16 %v698, %v698
    %v763 = vpack.c.b16 %v699, %v699
    %v764 = vpack.c.b16 %v700, %v700
    %v765 = vpack.c.b16 %v701, %v701
    %v766 = vpack.c.b16 %v702, %v702
    %v767 = vpack.c.b16 %v703, %v703
    %v768 = vpack.c.b16 %v704, %v704
    %v769 = vpack.c.b16 %v705, %v705
    %v770 = vpack.c.b16 %v706, %v706
    %v771 = vpack.c.b16 %v707, %v707
    %v772 = vpack.c.b16 %v708, %v708
    %v773 = vpack.c.b16 %v709, %v709
    %v774 = vpack.c.b16 %v710, %v710
    %v775 = vpack.c.b16 %v711, %v711
    %v776 = vpack.c.b16 %v712, %v712
    %v777 = vpack.c.b16 %v713, %v713
    %v778 = vpack.c.b16 %v714, %v714
    %v779 = vpack.c.b16 %v715, %v715
    %v780 = vpack.c.b16 %v716, %v716
    %v781 = vpack.c.b16 %v717, %v717
    %v782 = vpack.c.b16 %v718, %v718
    %v783 = vpack.c.b16 %v719, %v719
    %v784 = vpack.c.b16 %v720, %v720
    %v785 = vpack.c.b16 %v721, %v721
    %v786 = vpack.c.b16 %v722, %v722
    %851 = vst [vmem:[#allocation10] sm:$0xf] %v723
    %852 = vst [vmem:[#allocation10 + $0x4] sm:$0xf] %v724
    %853 = vst [vmem:[#allocation10 + $0x8] sm:$0xf] %v725
    %854 = vst [vmem:[#allocation10 + $0xc] sm:$0xf] %v726
    %855 = vst [vmem:[#allocation10 + $0x10] sm:$0xf] %v727
    %856 = vst [vmem:[#allocation10 + $0x14] sm:$0xf] %v728
    %857 = vst [vmem:[#allocation10 + $0x18] sm:$0xf] %v729
    %858 = vst [vmem:[#allocation10 + $0x1c] sm:$0xf] %v730
    %859 = vst [vmem:[#allocation10 + $0x20] sm:$0xf] %v731
    %860 = vst [vmem:[#allocation10 + $0x24] sm:$0xf] %v732
    %861 = vst [vmem:[#allocation10 + $0x28] sm:$0xf] %v733
    %862 = vst [vmem:[#allocation10 + $0x2c] sm:$0xf] %v734
    %863 = vst [vmem:[#allocation10 + $0x30] sm:$0xf] %v735
    %864 = vst [vmem:[#allocation10 + $0x34] sm:$0xf] %v736
    %865 = vst [vmem:[#allocation10 + $0x38] sm:$0xf] %v737
    %866 = vst [vmem:[#allocation10 + $0x3c] sm:$0xf] %v738
    %867 = vst [vmem:[#allocation10 + $0x40] sm:$0xf] %v739
    %868 = vst [vmem:[#allocation10 + $0x44] sm:$0xf] %v740
    %869 = vst [vmem:[#allocation10 + $0x48] sm:$0xf] %v741
    %870 = vst [vmem:[#allocation10 + $0x4c] sm:$0xf] %v742
    %871 = vst [vmem:[#allocation10 + $0x50] sm:$0xf] %v743
    %872 = vst [vmem:[#allocation10 + $0x54] sm:$0xf] %v744
    %873 = vst [vmem:[#allocation10 + $0x58] sm:$0xf] %v745
    %874 = vst [vmem:[#allocation10 + $0x5c] sm:$0xf] %v746
    %875 = vst [vmem:[#allocation10 + $0x60] sm:$0xf] %v747
    %876 = vst [vmem:[#allocation10 + $0x64] sm:$0xf] %v748
    %877 = vst [vmem:[#allocation10 + $0x68] sm:$0xf] %v749
    %878 = vst [vmem:[#allocation10 + $0x6c] sm:$0xf] %v750
    %879 = vst [vmem:[#allocation10 + $0x70] sm:$0xf] %v751
    %880 = vst [vmem:[#allocation10 + $0x74] sm:$0xf] %v752
    %881 = vst [vmem:[#allocation10 + $0x78] sm:$0xf] %v753
    %882 = vst [vmem:[#allocation10 + $0x7c] sm:$0xf] %v754
    %883 = vst [vmem:[#allocation10 + $0x80] sm:$0xf] %v755
    %884 = vst [vmem:[#allocation10 + $0x84] sm:$0xf] %v756
    %885 = vst [vmem:[#allocation10 + $0x88] sm:$0xf] %v757
    %886 = vst [vmem:[#allocation10 + $0x8c] sm:$0xf] %v758
    %887 = vst [vmem:[#allocation10 + $0x90] sm:$0xf] %v759
    %888 = vst [vmem:[#allocation10 + $0x94] sm:$0xf] %v760
    %889 = vst [vmem:[#allocation10 + $0x98] sm:$0xf] %v761
    %890 = vst [vmem:[#allocation10 + $0x9c] sm:$0xf] %v762
    %891 = vst [vmem:[#allocation10 + $0xa0] sm:$0xf] %v763
    %892 = vst [vmem:[#allocation10 + $0xa4] sm:$0xf] %v764
    %893 = vst [vmem:[#allocation10 + $0xa8] sm:$0xf] %v765
    %894 = vst [vmem:[#allocation10 + $0xac] sm:$0xf] %v766
    %895 = vst [vmem:[#allocation10 + $0xb0] sm:$0xf] %v767
    %896 = vst [vmem:[#allocation10 + $0xb4] sm:$0xf] %v768
    %897 = vst [vmem:[#allocation10 + $0xb8] sm:$0xf] %v769
    %898 = vst [vmem:[#allocation10 + $0xbc] sm:$0xf] %v770
    %899 = vst [vmem:[#allocation10 + $0xc0] sm:$0xf] %v771
    %900 = vst [vmem:[#allocation10 + $0xc4] sm:$0xf] %v772
    %901 = vst [vmem:[#allocation10 + $0xc8] sm:$0xf] %v773
    %902 = vst [vmem:[#allocation10 + $0xcc] sm:$0xf] %v774
    %903 = vst [vmem:[#allocation10 + $0xd0] sm:$0xf] %v775
    %904 = vst [vmem:[#allocation10 + $0xd4] sm:$0xf] %v776
    %905 = vst [vmem:[#allocation10 + $0xd8] sm:$0xf] %v777
    %906 = vst [vmem:[#allocation10 + $0xdc] sm:$0xf] %v778
    %907 = vst [vmem:[#allocation10 + $0xe0] sm:$0xf] %v779
    %908 = vst [vmem:[#allocation10 + $0xe4] sm:$0xf] %v780
    %909 = vst [vmem:[#allocation10 + $0xe8] sm:$0xf] %v781
    %910 = vst [vmem:[#allocation10 + $0xec] sm:$0xf] %v782
    %911 = vst [vmem:[#allocation10 + $0xf0] sm:$0xf] %v783
    %912 = vst [vmem:[#allocation10 + $0xf4] sm:$0xf] %v784
    %913 = vst [vmem:[#allocation10 + $0xf8] sm:$0xf] %v785
    %914 = vst [vmem:[#allocation10 + $0xfc] sm:$0xf] %v786
    // Predicated region
    $region34: #{resnet_forward.20} parent=1 // pred_check
      _
    $region35: #{resnet_forward.20} parent=1 // pred_check_branch
      %916 = sbr.rel (0) target = $region37
    $region36: #{resnet_forward.20} parent=1 // pred_region
      %s918 = ssub.s32 4096, 4096
      %919 = vsyncadd [#allocation4], %s918
      %s920 = sshll.u32 [#allocation10], 4
      %s921 = int_to_ptr.vmem [resolvable:$true] %s920
      %926 = dma.vmem_to_hbm [thread:$0]  %s921, 4096, %s4, [#allocation4], 64, 64, 4
    $region37: #{resnet_forward.20} parent=1 // pred_fallthru
      _
    // Predicated region
    $region38: #{resnet_forward.20} parent=1 // pred_check
      _
    $region39: #{resnet_forward.20} parent=1 // pred_check_branch
      %928 = sbr.rel (0) target = $region41
    $region40: #{resnet_forward.20} parent=1 // pred_region
      %929 = dma.done [#allocation4], 4096
    $region41: #{resnet_forward.20} parent=1 // pred_fallthru
      _
    %930 = vsyncpa [#allocation3], 1
    %931 = vsyncpa [#allocation6], 1
    %932 = vsyncpa [#allocation9], 1
    %933 = vsyncpa [#allocation4], 1

// kernel: resnet_forward.17
$region0: #{resnet_forward.17}
  #allocation0 [shape = 'u32[]', space=smem, size = 0x4, offset = 0x4, fixed_abs, tag = 'smem constant byte address 0x4 - core index']
  #allocation1 [shape = 'u32[144,128]{1,0:T(1,128)}', space=vmem, size = 0x12000, scoped, tag = 'internal scratch']
  %s0 = inlined_call_operand.hbm [shape: bf16[512,256], index: 0, kind: input, shape index: {}]
  %s1 = inlined_call_operand.hbm [shape: bf16[256,128], index: 1, kind: input, shape index: {}]
  %s2 = inlined_call_operand.hbm [shape: bf16[512,128], index: 2, kind: output, shape index: {0}]
  %s3 = inlined_call_operand.hbm [shape: f32[1,8,128], index: 3, kind: output, shape index: {1}]
  %4 = xla_tuple %s2, %s3
  %s5 = sld [smem:[#allocation0]]
  $region34: #{resnet_forward.17} parent=0
    _
  %s7 = ssub.s32 1, %s5
  %s8 = scalar_select 0, %s7, %s5
  $region1: #{resnet_forward.17} parent=0
    #allocation2 [shape = 'u8[262144]{0}', space=vmem, size = 0x40000, scoped, tag = 'input window, operand 0, single buffered']
    #allocation3 [shape = 's32[1]{0}', space=sflag, size = 0x4, scoped, tag = 'scoped memory for resnet_forward.17']
    #allocation4 [shape = 's32[1]{0}', space=sflag, size = 0x4, scoped, tag = 'scoped memory for resnet_forward.17']
    #allocation5 [shape = 'u8[65536]{0}', space=vmem, size = 0x10000, scoped, tag = 'input window, operand 1, single buffered']
    #allocation6 [shape = 's32[1]{0}', space=sflag, size = 0x4, scoped, tag = 'scoped memory for resnet_forward.17']
    #allocation7 [shape = 'u8[131072]{0}', space=vmem, size = 0x20000, scoped, tag = 'output window, operand 0, single buffered']
    #allocation8 [shape = 'u8[4096]{0}', space=vmem, size = 0x1000, scoped, tag = 'output window, operand 1, single buffered']
    #allocation9 [shape = 's32[1]{0}', space=sflag, size = 0x4, scoped, tag = 'scoped memory for resnet_forward.17']
    %9 = vsyncpa [#allocation3], 0
    %10 = vsyncpa [#allocation6], 0
    %11 = vsyncpa [#allocation4], 0
    %12 = vsyncpa [#allocation9], 0
    // Predicated region
    $region2: #{resnet_forward.17} parent=1 // pred_check
      _
    $region3: #{resnet_forward.17} parent=1 // pred_check_branch
      %14 = sbr.rel (0) target = $region5
    $region4: #{resnet_forward.17} parent=1 // pred_region
      %s16 = ssub.s32 8192, 8192
      %17 = vsyncadd [#allocation3], %s16
      %s18 = sshll.u32 [#allocation2], 4
      %s19 = int_to_ptr.vmem [resolvable:$true] %s18
      %24 = dma.hbm_to_vmem [thread:$0]  %s0, 8192, %s19, [#allocation3], 128, 128, 8
    $region5: #{resnet_forward.17} parent=1 // pred_fallthru
      _
    // Predicated region
    $region6: #{resnet_forward.17} parent=1 // pred_check
      _
    $region7: #{resnet_forward.17} parent=1 // pred_check_branch
      %26 = sbr.rel (0) target = $region9
    $region8: #{resnet_forward.17} parent=1 // pred_region
      %s28 = ssub.s32 2048, 2048
      %29 = vsyncadd [#allocation6], %s28
      %s30 = sshll.u32 [#allocation5], 4
      %s31 = int_to_ptr.vmem [resolvable:$true] %s30
      %36 = dma.hbm_to_vmem [thread:$0]  %s1, 2048, %s31, [#allocation6], 64, 64, 4
    $region9: #{resnet_forward.17} parent=1 // pred_fallthru
      _
    // Predicated region
    $region10: #{resnet_forward.17} parent=1 // pred_check
      _
    $region11: #{resnet_forward.17} parent=1 // pred_check_branch
      %38 = sbr.rel (0) target = $region13
    $region12: #{resnet_forward.17} parent=1 // pred_region
      %39 = dma.done [#allocation3], 8192
    $region13: #{resnet_forward.17} parent=1 // pred_fallthru
      _
    // Predicated region
    $region14: #{resnet_forward.17} parent=1 // pred_check
      _
    $region15: #{resnet_forward.17} parent=1 // pred_check_branch
      %41 = sbr.rel (0) target = $region17
    $region16: #{resnet_forward.17} parent=1 // pred_region
      %42 = dma.done [#allocation6], 2048
    $region17: #{resnet_forward.17} parent=1 // pred_fallthru
      _
    %v44 = vld [vmem:[#allocation2] sm:$0xff]
    %v45 = vld [vmem:[#allocation2 + $0x8] sm:$0xff]
    %v46 = vld [vmem:[#allocation2 + $0x10] sm:$0xff]
    %v47 = vld [vmem:[#allocation2 + $0x18] sm:$0xff]
    %v48 = vld [vmem:[#allocation2 + $0x20] sm:$0xff]
    %v49 = vld [vmem:[#allocation2 + $0x28] sm:$0xff]
    %v50 = vld [vmem:[#allocation2 + $0x30] sm:$0xff]
    %v51 = vld [vmem:[#allocation2 + $0x38] sm:$0xff]
    %v52 = vld [vmem:[#allocation2 + $0x40] sm:$0xff]
    %v53 = vld [vmem:[#allocation2 + $0x48] sm:$0xff]
    %v54 = vld [vmem:[#allocation2 + $0x50] sm:$0xff]
    %v55 = vld [vmem:[#allocation2 + $0x58] sm:$0xff]
    %v56 = vld [vmem:[#allocation2 + $0x60] sm:$0xff]
    %v57 = vld [vmem:[#allocation2 + $0x68] sm:$0xff]
    %v58 = vld [vmem:[#allocation2 + $0x70] sm:$0xff]
    %v59 = vld [vmem:[#allocation2 + $0x78] sm:$0xff]
    %v60 = vld [vmem:[#allocation2 + $0x80] sm:$0xff]
    %v61 = vld [vmem:[#allocation2 + $0x88] sm:$0xff]
    %v62 = vld [vmem:[#allocation2 + $0x90] sm:$0xff]
    %v63 = vld [vmem:[#allocation2 + $0x98] sm:$0xff]
    %v64 = vld [vmem:[#allocation2 + $0xa0] sm:$0xff]
    %v65 = vld [vmem:[#allocation2 + $0xa8] sm:$0xff]
    %v66 = vld [vmem:[#allocation2 + $0xb0] sm:$0xff]
    %v67 = vld [vmem:[#allocation2 + $0xb8] sm:$0xff]
    %v68 = vld [vmem:[#allocation2 + $0xc0] sm:$0xff]
    %v69 = vld [vmem:[#allocation2 + $0xc8] sm:$0xff]
    %v70 = vld [vmem:[#allocation2 + $0xd0] sm:$0xff]
    %v71 = vld [vmem:[#allocation2 + $0xd8] sm:$0xff]
    %v72 = vld [vmem:[#allocation2 + $0xe0] sm:$0xff]
    %v73 = vld [vmem:[#allocation2 + $0xe8] sm:$0xff]
    %v74 = vld [vmem:[#allocation2 + $0xf0] sm:$0xff]
    %v75 = vld [vmem:[#allocation2 + $0xf8] sm:$0xff]
    %v76 = vld [vmem:[#allocation2 + $0x100] sm:$0xff]
    %v77 = vld [vmem:[#allocation2 + $0x108] sm:$0xff]
    %v78 = vld [vmem:[#allocation2 + $0x110] sm:$0xff]
    %v79 = vld [vmem:[#allocation2 + $0x118] sm:$0xff]
    %v80 = vld [vmem:[#allocation2 + $0x120] sm:$0xff]
    %v81 = vld [vmem:[#allocation2 + $0x128] sm:$0xff]
    %v82 = vld [vmem:[#allocation2 + $0x130] sm:$0xff]
    %v83 = vld [vmem:[#allocation2 + $0x138] sm:$0xff]
    %v84 = vld [vmem:[#allocation2 + $0x140] sm:$0xff]
    %v85 = vld [vmem:[#allocation2 + $0x148] sm:$0xff]
    %v86 = vld [vmem:[#allocation2 + $0x150] sm:$0xff]
    %v87 = vld [vmem:[#allocation2 + $0x158] sm:$0xff]
    %v88 = vld [vmem:[#allocation2 + $0x160] sm:$0xff]
    %v89 = vld [vmem:[#allocation2 + $0x168] sm:$0xff]
    %v90 = vld [vmem:[#allocation2 + $0x170] sm:$0xff]
    %v91 = vld [vmem:[#allocation2 + $0x178] sm:$0xff]
    %v92 = vld [vmem:[#allocation2 + $0x180] sm:$0xff]
    %v93 = vld [vmem:[#allocation2 + $0x188] sm:$0xff]
    %v94 = vld [vmem:[#allocation2 + $0x190] sm:$0xff]
    %v95 = vld [vmem:[#allocation2 + $0x198] sm:$0xff]
    %v96 = vld [vmem:[#allocation2 + $0x1a0] sm:$0xff]
    %v97 = vld [vmem:[#allocation2 + $0x1a8] sm:$0xff]
    %v98 = vld [vmem:[#allocation2 + $0x1b0] sm:$0xff]
    %v99 = vld [vmem:[#allocation2 + $0x1b8] sm:$0xff]
    %v100 = vld [vmem:[#allocation2 + $0x1c0] sm:$0xff]
    %v101 = vld [vmem:[#allocation2 + $0x1c8] sm:$0xff]
    %v102 = vld [vmem:[#allocation2 + $0x1d0] sm:$0xff]
    %v103 = vld [vmem:[#allocation2 + $0x1d8] sm:$0xff]
    %v104 = vld [vmem:[#allocation2 + $0x1e0] sm:$0xff]
    %v105 = vld [vmem:[#allocation2 + $0x1e8] sm:$0xff]
    %v106 = vld [vmem:[#allocation2 + $0x1f0] sm:$0xff]
    %v107 = vld [vmem:[#allocation2 + $0x1f8] sm:$0xff]
    %v108 = vld [vmem:[#allocation5] sm:$0xf]
    %v109 = vld [vmem:[#allocation5 + $0x4] sm:$0xf]
    %v110 = vld [vmem:[#allocation5 + $0x8] sm:$0xf]
    %v111 = vld [vmem:[#allocation5 + $0xc] sm:$0xf]
    %v112 = vld [vmem:[#allocation5 + $0x10] sm:$0xf]
    %v113 = vld [vmem:[#allocation5 + $0x14] sm:$0xf]
    %v114 = vld [vmem:[#allocation5 + $0x18] sm:$0xf]
    %v115 = vld [vmem:[#allocation5 + $0x1c] sm:$0xf]
    %v116 = vld [vmem:[#allocation5 + $0x20] sm:$0xf]
    %v117 = vld [vmem:[#allocation5 + $0x24] sm:$0xf]
    %v118 = vld [vmem:[#allocation5 + $0x28] sm:$0xf]
    %v119 = vld [vmem:[#allocation5 + $0x2c] sm:$0xf]
    %v120 = vld [vmem:[#allocation5 + $0x30] sm:$0xf]
    %v121 = vld [vmem:[#allocation5 + $0x34] sm:$0xf]
    %v122 = vld [vmem:[#allocation5 + $0x38] sm:$0xf]
    %v123 = vld [vmem:[#allocation5 + $0x3c] sm:$0xf]
    %v124 = vld [vmem:[#allocation5 + $0x40] sm:$0xf]
    %v125 = vld [vmem:[#allocation5 + $0x44] sm:$0xf]
    %v126 = vld [vmem:[#allocation5 + $0x48] sm:$0xf]
    %v127 = vld [vmem:[#allocation5 + $0x4c] sm:$0xf]
    %v128 = vld [vmem:[#allocation5 + $0x50] sm:$0xf]
    %v129 = vld [vmem:[#allocation5 + $0x54] sm:$0xf]
    %v130 = vld [vmem:[#allocation5 + $0x58] sm:$0xf]
    %v131 = vld [vmem:[#allocation5 + $0x5c] sm:$0xf]
    %v132 = vld [vmem:[#allocation5 + $0x60] sm:$0xf]
    %v133 = vld [vmem:[#allocation5 + $0x64] sm:$0xf]
    %v134 = vld [vmem:[#allocation5 + $0x68] sm:$0xf]
    %v135 = vld [vmem:[#allocation5 + $0x6c] sm:$0xf]
    %v136 = vld [vmem:[#allocation5 + $0x70] sm:$0xf]
    %v137 = vld [vmem:[#allocation5 + $0x74] sm:$0xf]
    %v138 = vld [vmem:[#allocation5 + $0x78] sm:$0xf]
    %v139 = vld [vmem:[#allocation5 + $0x7c] sm:$0xf]
    %v204 = vunpack.c.l.b16 %v44
    %v205 = vunpack.c.h.b16 %v44
    %v206 = vunpack.c.l.b16 %v45
    %v207 = vunpack.c.h.b16 %v45
    %v208 = vunpack.c.l.b16 %v46
    %v209 = vunpack.c.h.b16 %v46
    %v210 = vunpack.c.l.b16 %v47
    %v211 = vunpack.c.h.b16 %v47
    %v212 = vunpack.c.l.b16 %v48
    %v213 = vunpack.c.h.b16 %v48
    %v214 = vunpack.c.l.b16 %v49
    %v215 = vunpack.c.h.b16 %v49
    %v216 = vunpack.c.l.b16 %v50
    %v217 = vunpack.c.h.b16 %v50
    %v218 = vunpack.c.l.b16 %v51
    %v219 = vunpack.c.h.b16 %v51
    %v220 = vunpack.c.l.b16 %v52
    %v221 = vunpack.c.h.b16 %v52
    %v222 = vunpack.c.l.b16 %v53
    %v223 = vunpack.c.h.b16 %v53
    %v224 = vunpack.c.l.b16 %v54
    %v225 = vunpack.c.h.b16 %v54
    %v226 = vunpack.c.l.b16 %v55
    %v227 = vunpack.c.h.b16 %v55
    %v228 = vunpack.c.l.b16 %v56
    %v229 = vunpack.c.h.b16 %v56
    %v230 = vunpack.c.l.b16 %v57
    %v231 = vunpack.c.h.b16 %v57
    %v232 = vunpack.c.l.b16 %v58
    %v233 = vunpack.c.h.b16 %v58
    %v234 = vunpack.c.l.b16 %v59
    %v235 = vunpack.c.h.b16 %v59
    %v236 = vunpack.c.l.b16 %v60
    %v237 = vunpack.c.h.b16 %v60
    %v238 = vunpack.c.l.b16 %v61
    %v239 = vunpack.c.h.b16 %v61
    %v240 = vunpack.c.l.b16 %v62
    %v241 = vunpack.c.h.b16 %v62
    %v242 = vunpack.c.l.b16 %v63
    %v243 = vunpack.c.h.b16 %v63
    %v244 = vunpack.c.l.b16 %v64
    %v245 = vunpack.c.h.b16 %v64
    %v246 = vunpack.c.l.b16 %v65
    %v247 = vunpack.c.h.b16 %v65
    %v248 = vunpack.c.l.b16 %v66
    %v249 = vunpack.c.h.b16 %v66
    %v250 = vunpack.c.l.b16 %v67
    %v251 = vunpack.c.h.b16 %v67
    %v252 = vunpack.c.l.b16 %v68
    %v253 = vunpack.c.h.b16 %v68
    %v254 = vunpack.c.l.b16 %v69
    %v255 = vunpack.c.h.b16 %v69
    %v256 = vunpack.c.l.b16 %v70
    %v257 = vunpack.c.h.b16 %v70
    %v258 = vunpack.c.l.b16 %v71
    %v259 = vunpack.c.h.b16 %v71
    %v260 = vunpack.c.l.b16 %v72
    %v261 = vunpack.c.h.b16 %v72
    %v262 = vunpack.c.l.b16 %v73
    %v263 = vunpack.c.h.b16 %v73
    %v264 = vunpack.c.l.b16 %v74
    %v265 = vunpack.c.h.b16 %v74
    %v266 = vunpack.c.l.b16 %v75
    %v267 = vunpack.c.h.b16 %v75
    %v268 = vunpack.c.l.b16 %v76
    %v269 = vunpack.c.h.b16 %v76
    %v270 = vunpack.c.l.b16 %v77
    %v271 = vunpack.c.h.b16 %v77
    %v272 = vunpack.c.l.b16 %v78
    %v273 = vunpack.c.h.b16 %v78
    %v274 = vunpack.c.l.b16 %v79
    %v275 = vunpack.c.h.b16 %v79
    %v276 = vunpack.c.l.b16 %v80
    %v277 = vunpack.c.h.b16 %v80
    %v278 = vunpack.c.l.b16 %v81
    %v279 = vunpack.c.h.b16 %v81
    %v280 = vunpack.c.l.b16 %v82
    %v281 = vunpack.c.h.b16 %v82
    %v282 = vunpack.c.l.b16 %v83
    %v283 = vunpack.c.h.b16 %v83
    %v284 = vunpack.c.l.b16 %v84
    %v285 = vunpack.c.h.b16 %v84
    %v286 = vunpack.c.l.b16 %v85
    %v287 = vunpack.c.h.b16 %v85
    %v288 = vunpack.c.l.b16 %v86
    %v289 = vunpack.c.h.b16 %v86
    %v290 = vunpack.c.l.b16 %v87
    %v291 = vunpack.c.h.b16 %v87
    %v292 = vunpack.c.l.b16 %v88
    %v293 = vunpack.c.h.b16 %v88
    %v294 = vunpack.c.l.b16 %v89
    %v295 = vunpack.c.h.b16 %v89
    %v296 = vunpack.c.l.b16 %v90
    %v297 = vunpack.c.h.b16 %v90
    %v298 = vunpack.c.l.b16 %v91
    %v299 = vunpack.c.h.b16 %v91
    %v300 = vunpack.c.l.b16 %v92
    %v301 = vunpack.c.h.b16 %v92
    %v302 = vunpack.c.l.b16 %v93
    %v303 = vunpack.c.h.b16 %v93
    %v304 = vunpack.c.l.b16 %v94
    %v305 = vunpack.c.h.b16 %v94
    %v306 = vunpack.c.l.b16 %v95
    %v307 = vunpack.c.h.b16 %v95
    %v308 = vunpack.c.l.b16 %v96
    %v309 = vunpack.c.h.b16 %v96
    %v310 = vunpack.c.l.b16 %v97
    %v311 = vunpack.c.h.b16 %v97
    %v312 = vunpack.c.l.b16 %v98
    %v313 = vunpack.c.h.b16 %v98
    %v314 = vunpack.c.l.b16 %v99
    %v315 = vunpack.c.h.b16 %v99
    %v316 = vunpack.c.l.b16 %v100
    %v317 = vunpack.c.h.b16 %v100
    %v318 = vunpack.c.l.b16 %v101
    %v319 = vunpack.c.h.b16 %v101
    %v320 = vunpack.c.l.b16 %v102
    %v321 = vunpack.c.h.b16 %v102
    %v322 = vunpack.c.l.b16 %v103
    %v323 = vunpack.c.h.b16 %v103
    %v324 = vunpack.c.l.b16 %v104
    %v325 = vunpack.c.h.b16 %v104
    %v326 = vunpack.c.l.b16 %v105
    %v327 = vunpack.c.h.b16 %v105
    %v328 = vunpack.c.l.b16 %v106
    %v329 = vunpack.c.h.b16 %v106
    %v330 = vunpack.c.l.b16 %v107
    %v331 = vunpack.c.h.b16 %v107
    %v332 = vpack.c.b16 %v206, %v204
    %v333 = vpack.c.b16 %v207, %v205
    %v334 = vpack.c.b16 %v210, %v208
    %v335 = vpack.c.b16 %v211, %v209
    %v336 = vpack.c.b16 %v214, %v212
    %v337 = vpack.c.b16 %v215, %v213
    %v338 = vpack.c.b16 %v218, %v216
    %v339 = vpack.c.b16 %v219, %v217
    %v340 = vpack.c.b16 %v222, %v220
    %v341 = vpack.c.b16 %v223, %v221
    %v342 = vpack.c.b16 %v226, %v224
    %v343 = vpack.c.b16 %v227, %v225
    %v344 = vpack.c.b16 %v230, %v228
    %v345 = vpack.c.b16 %v231, %v229
    %v346 = vpack.c.b16 %v234, %v232
    %v347 = vpack.c.b16 %v235, %v233
    %v348 = vpack.c.b16 %v238, %v236
    %v349 = vpack.c.b16 %v239, %v237
    %v350 = vpack.c.b16 %v242, %v240
    %v351 = vpack.c.b16 %v243, %v241
    %v352 = vpack.c.b16 %v246, %v244
    %v353 = vpack.c.b16 %v247, %v245
    %v354 = vpack.c.b16 %v250, %v248
    %v355 = vpack.c.b16 %v251, %v249
    %v356 = vpack.c.b16 %v254, %v252
    %v357 = vpack.c.b16 %v255, %v253
    %v358 = vpack.c.b16 %v258, %v256
    %v359 = vpack.c.b16 %v259, %v257
    %v360 = vpack.c.b16 %v262, %v260
    %v361 = vpack.c.b16 %v263, %v261
    %v362 = vpack.c.b16 %v266, %v264
    %v363 = vpack.c.b16 %v267, %v265
    %v364 = vpack.c.b16 %v270, %v268
    %v365 = vpack.c.b16 %v271, %v269
    %v366 = vpack.c.b16 %v274, %v272
    %v367 = vpack.c.b16 %v275, %v273
    %v368 = vpack.c.b16 %v278, %v276
    %v369 = vpack.c.b16 %v279, %v277
    %v370 = vpack.c.b16 %v282, %v280
    %v371 = vpack.c.b16 %v283, %v281
    %v372 = vpack.c.b16 %v286, %v284
    %v373 = vpack.c.b16 %v287, %v285
    %v374 = vpack.c.b16 %v290, %v288
    %v375 = vpack.c.b16 %v291, %v289
    %v376 = vpack.c.b16 %v294, %v292
    %v377 = vpack.c.b16 %v295, %v293
    %v378 = vpack.c.b16 %v298, %v296
    %v379 = vpack.c.b16 %v299, %v297
    %v380 = vpack.c.b16 %v302, %v300
    %v381 = vpack.c.b16 %v303, %v301
    %v382 = vpack.c.b16 %v306, %v304
    %v383 = vpack.c.b16 %v307, %v305
    %v384 = vpack.c.b16 %v310, %v308
    %v385 = vpack.c.b16 %v311, %v309
    %v386 = vpack.c.b16 %v314, %v312
    %v387 = vpack.c.b16 %v315, %v313
    %v388 = vpack.c.b16 %v318, %v316
    %v389 = vpack.c.b16 %v319, %v317
    %v390 = vpack.c.b16 %v322, %v320
    %v391 = vpack.c.b16 %v323, %v321
    %v392 = vpack.c.b16 %v326, %v324
    %v393 = vpack.c.b16 %v327, %v325
    %v394 = vpack.c.b16 %v330, %v328
    %v395 = vpack.c.b16 %v331, %v329
    %v492 = vunpack.c.l.b16 %v108
    %v493 = vunpack.c.l.b16 %v109
    %v494 = vunpack.c.l.b16 %v110
    %v495 = vunpack.c.l.b16 %v111
    %v496 = vunpack.c.l.b16 %v112
    %v497 = vunpack.c.l.b16 %v113
    %v498 = vunpack.c.l.b16 %v114
    %v499 = vunpack.c.l.b16 %v115
    %v500 = vunpack.c.l.b16 %v116
    %v501 = vunpack.c.l.b16 %v117
    %v502 = vunpack.c.l.b16 %v118
    %v503 = vunpack.c.l.b16 %v119
    %v504 = vunpack.c.l.b16 %v120
    %v505 = vunpack.c.l.b16 %v121
    %v506 = vunpack.c.l.b16 %v122
    %v507 = vunpack.c.l.b16 %v123
    %v508 = vunpack.c.l.b16 %v124
    %v509 = vunpack.c.l.b16 %v125
    %v510 = vunpack.c.l.b16 %v126
    %v511 = vunpack.c.l.b16 %v127
    %v512 = vunpack.c.l.b16 %v128
    %v513 = vunpack.c.l.b16 %v129
    %v514 = vunpack.c.l.b16 %v130
    %v515 = vunpack.c.l.b16 %v131
    %v516 = vunpack.c.l.b16 %v132
    %v517 = vunpack.c.l.b16 %v133
    %v518 = vunpack.c.l.b16 %v134
    %v519 = vunpack.c.l.b16 %v135
    %v520 = vunpack.c.l.b16 %v136
    %v521 = vunpack.c.l.b16 %v137
    %v522 = vunpack.c.l.b16 %v138
    %v523 = vunpack.c.l.b16 %v139
    %v524 = vpack.c.b16 %v493, %v492
    %v525 = vpack.c.b16 %v495, %v494
    %v526 = vpack.c.b16 %v497, %v496
    %v527 = vpack.c.b16 %v499, %v498
    %v528 = vpack.c.b16 %v501, %v500
    %v529 = vpack.c.b16 %v503, %v502
    %v530 = vpack.c.b16 %v505, %v504
    %v531 = vpack.c.b16 %v507, %v506
    %v532 = vpack.c.b16 %v509, %v508
    %v533 = vpack.c.b16 %v511, %v510
    %v534 = vpack.c.b16 %v513, %v512
    %v535 = vpack.c.b16 %v515, %v514
    %v536 = vpack.c.b16 %v517, %v516
    %v537 = vpack.c.b16 %v519, %v518
    %v538 = vpack.c.b16 %v521, %v520
    %v539 = vpack.c.b16 %v523, %v522
    %556 = vmatprep.subr.bf16.mxu0 0
    %557 = vmatpush1.bf16.msra.mxu0 %v524
    %558 = vmatprep.subr.bf16.mxu0 0
    %559 = vmatpush1.bf16.msra.mxu0 %v525
    %560 = vmatprep.subr.bf16.mxu0 0
    %561 = vmatpush1.bf16.msra.mxu0 %v526
    %562 = vmatprep.subr.bf16.mxu0 0
    %563 = vmatpush1.bf16.msra.mxu0 %v527
    %564 = vmatprep.subr.bf16.mxu0 0
    %565 = vmatpush1.bf16.msra.mxu0 %v528
    %566 = vmatprep.subr.bf16.mxu0 0
    %567 = vmatpush1.bf16.msra.mxu0 %v529
    %568 = vmatprep.subr.bf16.mxu0 0
    %569 = vmatpush1.bf16.msra.mxu0 %v530
    %570 = vmatprep.subr.bf16.mxu0 0
    %571 = vmatpush1.bf16.msra.mxu0 %v531
    %572 = vmatprep.subr.bf16.mxu0 0
    %573 = vmatpush1.bf16.msra.mxu0 %v532
    %574 = vmatprep.subr.bf16.mxu0 0
    %575 = vmatpush1.bf16.msra.mxu0 %v533
    %576 = vmatprep.subr.bf16.mxu0 0
    %577 = vmatpush1.bf16.msra.mxu0 %v534
    %578 = vmatprep.subr.bf16.mxu0 0
    %579 = vmatpush1.bf16.msra.mxu0 %v535
    %580 = vmatprep.subr.bf16.mxu0 0
    %581 = vmatpush1.bf16.msra.mxu0 %v536
    %582 = vmatprep.subr.bf16.mxu0 0
    %583 = vmatpush1.bf16.msra.mxu0 %v537
    %584 = vmatprep.subr.bf16.mxu0 0
    %585 = vmatpush1.bf16.msra.mxu0 %v538
    %586 = vmatprep.subr.bf16.mxu0 0
    %587 = vmatpush1.bf16.msra.mxu0 %v539
    %588 = vmatprep.mubr.bf16.mxu0 %v333
    %589 = vmatmul.mubr.bf16.gmra.mrb[0].mxu0 %v332
    %v590 = vpop.f32.mrb[0].mxu0
    %v591 = vadd.f32 0.0, %v590
    %v592 = vpop.f32.mrb[0].mxu0
    %v593 = vpop.f32.mrb[0].mxu0
    %v594 = vadd.f32 0.0, %v593
    %v595 = vpop.f32.mrb[0].mxu0
    %596 = vmatprep.mubr.bf16.mxu0 %v335
    %597 = vmatmul.mubr.bf16.gmra.mrb[0].mxu0 %v334
    %v598 = vpop.f32.mrb[0].mxu0
    %v599 = vadd.f32 0.0, %v598
    %v600 = vpop.f32.mrb[0].mxu0
    %v601 = vpop.f32.mrb[0].mxu0
    %v602 = vadd.f32 0.0, %v601
    %v603 = vpop.f32.mrb[0].mxu0
    %604 = vmatprep.mubr.bf16.mxu0 %v337
    %605 = vmatmul.mubr.bf16.gmra.mrb[0].mxu0 %v336
    %v606 = vpop.f32.mrb[0].mxu0
    %v607 = vadd.f32 0.0, %v606
    %v608 = vpop.f32.mrb[0].mxu0
    %v609 = vpop.f32.mrb[0].mxu0
    %v610 = vadd.f32 0.0, %v609
    %v611 = vpop.f32.mrb[0].mxu0
    %612 = vmatprep.mubr.bf16.mxu0 %v339
    %613 = vmatmul.mubr.bf16.gmra.mrb[0].mxu0 %v338
    %v614 = vpop.f32.mrb[0].mxu0
    %v615 = vadd.f32 0.0, %v614
    %v616 = vpop.f32.mrb[0].mxu0
    %v617 = vpop.f32.mrb[0].mxu0
    %v618 = vadd.f32 0.0, %v617
    %v619 = vpop.f32.mrb[0].mxu0
    %620 = vmatprep.mubr.bf16.mxu0 %v341
    %621 = vmatmul.mubr.bf16.gmra.mrb[0].mxu0 %v340
    %v622 = vpop.f32.mrb[0].mxu0
    %v623 = vadd.f32 0.0, %v622
    %v624 = vpop.f32.mrb[0].mxu0
    %v625 = vpop.f32.mrb[0].mxu0
    %v626 = vadd.f32 0.0, %v625
    %v627 = vpop.f32.mrb[0].mxu0
    %628 = vmatprep.mubr.bf16.mxu0 %v343
    %629 = vmatmul.mubr.bf16.gmra.mrb[0].mxu0 %v342
    %v630 = vpop.f32.mrb[0].mxu0
    %v631 = vadd.f32 0.0, %v630
    %v632 = vpop.f32.mrb[0].mxu0
    %v633 = vpop.f32.mrb[0].mxu0
    %v634 = vadd.f32 0.0, %v633
    %v635 = vpop.f32.mrb[0].mxu0
    %636 = vmatprep.mubr.bf16.mxu0 %v345
    %637 = vmatmul.mubr.bf16.gmra.mrb[0].mxu0 %v344
    %v638 = vpop.f32.mrb[0].mxu0
    %v639 = vadd.f32 0.0, %v638
    %v640 = vpop.f32.mrb[0].mxu0
    %v641 = vpop.f32.mrb[0].mxu0
    %v642 = vadd.f32 0.0, %v641
    %v643 = vpop.f32.mrb[0].mxu0
    %644 = vmatprep.mubr.bf16.mxu0 %v347
    %645 = vmatmul.mubr.bf16.gmra.mrb[0].mxu0 %v346
    %v646 = vpop.f32.mrb[0].mxu0
    %v647 = vadd.f32 0.0, %v646
    %v648 = vpop.f32.mrb[0].mxu0
    %v649 = vpop.f32.mrb[0].mxu0
    %v650 = vadd.f32 0.0, %v649
    %v651 = vpop.f32.mrb[0].mxu0
    %652 = vmatprep.mubr.bf16.mxu0 %v349
    %653 = vmatmul.mubr.bf16.gmra.mrb[0].mxu0 %v348
    %v654 = vpop.f32.mrb[0].mxu0
    %v655 = vadd.f32 0.0, %v654
    %v656 = vpop.f32.mrb[0].mxu0
    %v657 = vpop.f32.mrb[0].mxu0
    %v658 = vadd.f32 0.0, %v657
    %v659 = vpop.f32.mrb[0].mxu0
    %660 = vmatprep.mubr.bf16.mxu0 %v351
    %661 = vmatmul.mubr.bf16.gmra.mrb[0].mxu0 %v350
    %v662 = vpop.f32.mrb[0].mxu0
    %v663 = vadd.f32 0.0, %v662
    %v664 = vpop.f32.mrb[0].mxu0
    %v665 = vpop.f32.mrb[0].mxu0
    %v666 = vadd.f32 0.0, %v665
    %v667 = vpop.f32.mrb[0].mxu0
    %668 = vmatprep.mubr.bf16.mxu0 %v353
    %669 = vmatmul.mubr.bf16.gmra.mrb[0].mxu0 %v352
    %v670 = vpop.f32.mrb[0].mxu0
    %v671 = vadd.f32 0.0, %v670
    %v672 = vpop.f32.mrb[0].mxu0
    %v673 = vpop.f32.mrb[0].mxu0
    %v674 = vadd.f32 0.0, %v673
    %v675 = vpop.f32.mrb[0].mxu0
    %676 = vmatprep.mubr.bf16.mxu0 %v355
    %677 = vmatmul.mubr.bf16.gmra.mrb[0].mxu0 %v354
    %v678 = vpop.f32.mrb[0].mxu0
    %v679 = vadd.f32 0.0, %v678
    %v680 = vpop.f32.mrb[0].mxu0
    %v681 = vpop.f32.mrb[0].mxu0
    %v682 = vadd.f32 0.0, %v681
    %v683 = vpop.f32.mrb[0].mxu0
    %684 = vmatprep.mubr.bf16.mxu0 %v357
    %685 = vmatmul.mubr.bf16.gmra.mrb[0].mxu0 %v356
    %v686 = vpop.f32.mrb[0].mxu0
    %v687 = vadd.f32 0.0, %v686
    %v688 = vpop.f32.mrb[0].mxu0
    %v689 = vpop.f32.mrb[0].mxu0
    %v690 = vadd.f32 0.0, %v689
    %v691 = vpop.f32.mrb[0].mxu0
    %692 = vmatprep.mubr.bf16.mxu0 %v359
    %693 = vmatmul.mubr.bf16.gmra.mrb[0].mxu0 %v358
    %v694 = vpop.f32.mrb[0].mxu0
    %v695 = vadd.f32 0.0, %v694
    %v696 = vpop.f32.mrb[0].mxu0
    %v697 = vpop.f32.mrb[0].mxu0
    %v698 = vadd.f32 0.0, %v697
    %v699 = vpop.f32.mrb[0].mxu0
    %700 = vmatprep.mubr.bf16.mxu0 %v361
    %701 = vmatmul.mubr.bf16.gmra.mrb[0].mxu0 %v360
    %v702 = vpop.f32.mrb[0].mxu0
    %v703 = vadd.f32 0.0, %v702
    %v704 = vpop.f32.mrb[0].mxu0
    %v705 = vpop.f32.mrb[0].mxu0
    %v706 = vadd.f32 0.0, %v705
    %v707 = vpop.f32.mrb[0].mxu0
    %708 = vmatprep.mubr.bf16.mxu0 %v363
    %709 = vmatmul.mubr.bf16.gmra.mrb[0].mxu0 %v362
    %v710 = vpop.f32.mrb[0].mxu0
    %v711 = vadd.f32 0.0, %v710
    %v712 = vpop.f32.mrb[0].mxu0
    %v713 = vpop.f32.mrb[0].mxu0
    %v714 = vadd.f32 0.0, %v713
    %v715 = vpop.f32.mrb[0].mxu0
    %716 = vmatprep.mubr.bf16.mxu0 %v365
    %717 = vmatmul.mubr.bf16.gmra.mrb[0].mxu0 %v364
    %v718 = vpop.f32.mrb[0].mxu0
    %v719 = vadd.f32 0.0, %v718
    %v720 = vpop.f32.mrb[0].mxu0
    %v721 = vpop.f32.mrb[0].mxu0
    %v722 = vadd.f32 0.0, %v721
    %v723 = vpop.f32.mrb[0].mxu0
    %724 = vmatprep.mubr.bf16.mxu0 %v367
    %725 = vmatmul.mubr.bf16.gmra.mrb[0].mxu0 %v366
    %v726 = vpop.f32.mrb[0].mxu0
    %v727 = vadd.f32 0.0, %v726
    %v728 = vpop.f32.mrb[0].mxu0
    %v729 = vpop.f32.mrb[0].mxu0
    %v730 = vadd.f32 0.0, %v729
    %v731 = vpop.f32.mrb[0].mxu0
    %732 = vmatprep.mubr.bf16.mxu0 %v369
    %733 = vmatmul.mubr.bf16.gmra.mrb[0].mxu0 %v368
    %v734 = vpop.f32.mrb[0].mxu0
    %v735 = vadd.f32 0.0, %v734
    %v736 = vpop.f32.mrb[0].mxu0
    %v737 = vpop.f32.mrb[0].mxu0
    %v738 = vadd.f32 0.0, %v737
    %v739 = vpop.f32.mrb[0].mxu0
    %740 = vmatprep.mubr.bf16.mxu0 %v371
    %741 = vmatmul.mubr.bf16.gmra.mrb[0].mxu0 %v370
    %v742 = vpop.f32.mrb[0].mxu0
    %v743 = vadd.f32 0.0, %v742
    %v744 = vpop.f32.mrb[0].mxu0
    %v745 = vpop.f32.mrb[0].mxu0
    %v746 = vadd.f32 0.0, %v745
    %v747 = vpop.f32.mrb[0].mxu0
    %748 = vmatprep.mubr.bf16.mxu0 %v373
    %749 = vmatmul.mubr.bf16.gmra.mrb[0].mxu0 %v372
    %v750 = vpop.f32.mrb[0].mxu0
    %v751 = vadd.f32 0.0, %v750
    %v752 = vpop.f32.mrb[0].mxu0
    %v753 = vpop.f32.mrb[0].mxu0
    %v754 = vadd.f32 0.0, %v753
    %v755 = vpop.f32.mrb[0].mxu0
    %756 = vmatprep.mubr.bf16.mxu0 %v375
    %757 = vmatmul.mubr.bf16.gmra.mrb[0].mxu0 %v374
    %v758 = vpop.f32.mrb[0].mxu0
    %v759 = vadd.f32 0.0, %v758
    %v760 = vpop.f32.mrb[0].mxu0
    %v761 = vpop.f32.mrb[0].mxu0
    %v762 = vadd.f32 0.0, %v761
    %v763 = vpop.f32.mrb[0].mxu0
    %764 = vmatprep.mubr.bf16.mxu0 %v377
    %765 = vmatmul.mubr.bf16.gmra.mrb[0].mxu0 %v376
    %v766 = vpop.f32.mrb[0].mxu0
    %v767 = vadd.f32 0.0, %v766
    %v768 = vpop.f32.mrb[0].mxu0
    %v769 = vpop.f32.mrb[0].mxu0
    %v770 = vadd.f32 0.0, %v769
    %v771 = vpop.f32.mrb[0].mxu0
    %772 = vmatprep.mubr.bf16.mxu0 %v379
    %773 = vmatmul.mubr.bf16.gmra.mrb[0].mxu0 %v378
    %v774 = vpop.f32.mrb[0].mxu0
    %v775 = vadd.f32 0.0, %v774
    %v776 = vpop.f32.mrb[0].mxu0
    %v777 = vpop.f32.mrb[0].mxu0
    %v778 = vadd.f32 0.0, %v777
    %v779 = vpop.f32.mrb[0].mxu0
    %780 = vmatprep.mubr.bf16.mxu0 %v381
    %781 = vmatmul.mubr.bf16.gmra.mrb[0].mxu0 %v380
    %v782 = vpop.f32.mrb[0].mxu0
    %v783 = vadd.f32 0.0, %v782
    %v784 = vpop.f32.mrb[0].mxu0
    %v785 = vpop.f32.mrb[0].mxu0
    %v786 = vadd.f32 0.0, %v785
    %v787 = vpop.f32.mrb[0].mxu0
    %788 = vmatprep.mubr.bf16.mxu0 %v383
    %789 = vmatmul.mubr.bf16.gmra.mrb[0].mxu0 %v382
    %v790 = vpop.f32.mrb[0].mxu0
    %v791 = vadd.f32 0.0, %v790
    %v792 = vpop.f32.mrb[0].mxu0
    %v793 = vpop.f32.mrb[0].mxu0
    %v794 = vadd.f32 0.0, %v793
    %v795 = vpop.f32.mrb[0].mxu0
    %796 = vmatprep.mubr.bf16.mxu0 %v385
    %797 = vmatmul.mubr.bf16.gmra.mrb[0].mxu0 %v384
    %v798 = vpop.f32.mrb[0].mxu0
    %v799 = vadd.f32 0.0, %v798
    %v800 = vpop.f32.mrb[0].mxu0
    %v801 = vpop.f32.mrb[0].mxu0
    %v802 = vadd.f32 0.0, %v801
    %v803 = vpop.f32.mrb[0].mxu0
    %804 = vmatprep.mubr.bf16.mxu0 %v387
    %805 = vmatmul.mubr.bf16.gmra.mrb[0].mxu0 %v386
    %v806 = vpop.f32.mrb[0].mxu0
    %v807 = vadd.f32 0.0, %v806
    %v808 = vpop.f32.mrb[0].mxu0
    %v809 = vpop.f32.mrb[0].mxu0
    %v810 = vadd.f32 0.0, %v809
    %v811 = vpop.f32.mrb[0].mxu0
    %812 = vmatprep.mubr.bf16.mxu0 %v389
    %813 = vmatmul.mubr.bf16.gmra.mrb[0].mxu0 %v388
    %v814 = vpop.f32.mrb[0].mxu0
    %v815 = vadd.f32 0.0, %v814
    %v816 = vpop.f32.mrb[0].mxu0
    %v817 = vpop.f32.mrb[0].mxu0
    %v818 = vadd.f32 0.0, %v817
    %v819 = vpop.f32.mrb[0].mxu0
    %820 = vmatprep.mubr.bf16.mxu0 %v391
    %821 = vmatmul.mubr.bf16.gmra.mrb[0].mxu0 %v390
    %v822 = vpop.f32.mrb[0].mxu0
    %v823 = vadd.f32 0.0, %v822
    %v824 = vpop.f32.mrb[0].mxu0
    %v825 = vpop.f32.mrb[0].mxu0
    %v826 = vadd.f32 0.0, %v825
    %v827 = vpop.f32.mrb[0].mxu0
    %828 = vmatprep.mubr.bf16.mxu0 %v393
    %829 = vmatmul.mubr.bf16.gmra.mrb[0].mxu0 %v392
    %v830 = vpop.f32.mrb[0].mxu0
    %v831 = vadd.f32 0.0, %v830
    %v832 = vpop.f32.mrb[0].mxu0
    %v833 = vpop.f32.mrb[0].mxu0
    %v834 = vadd.f32 0.0, %v833
    %v835 = vpop.f32.mrb[0].mxu0
    %836 = vmatprep.mubr.bf16.mxu0 %v395
    %837 = vmatmul.mubr.bf16.gmra.mrb[0].mxu0 %v394
    %v838 = vpop.f32.mrb[0].mxu0
    %v839 = vadd.f32 0.0, %v838
    %v840 = vpop.f32.mrb[0].mxu0
    %v841 = vpop.f32.mrb[0].mxu0
    %v842 = vadd.f32 0.0, %v841
    %v843 = vpop.f32.mrb[0].mxu0
    %844 = vdwg.mxu0
    %v845 = vpack.c.bf16 %v594, %v591
    %v846 = vpack.c.bf16 %v602, %v599
    %v847 = vpack.c.bf16 %v610, %v607
    %v848 = vpack.c.bf16 %v618, %v615
    %v849 = vpack.c.bf16 %v626, %v623
    %v850 = vpack.c.bf16 %v634, %v631
    %v851 = vpack.c.bf16 %v642, %v639
    %v852 = vpack.c.bf16 %v650, %v647
    %v853 = vpack.c.bf16 %v658, %v655
    %v854 = vpack.c.bf16 %v666, %v663
    %v855 = vpack.c.bf16 %v674, %v671
    %v856 = vpack.c.bf16 %v682, %v679
    %v857 = vpack.c.bf16 %v690, %v687
    %v858 = vpack.c.bf16 %v698, %v695
    %v859 = vpack.c.bf16 %v706, %v703
    %v860 = vpack.c.bf16 %v714, %v711
    %v861 = vpack.c.bf16 %v722, %v719
    %v862 = vpack.c.bf16 %v730, %v727
    %v863 = vpack.c.bf16 %v738, %v735
    %v864 = vpack.c.bf16 %v746, %v743
    %v865 = vpack.c.bf16 %v754, %v751
    %v866 = vpack.c.bf16 %v762, %v759
    %v867 = vpack.c.bf16 %v770, %v767
    %v868 = vpack.c.bf16 %v778, %v775
    %v869 = vpack.c.bf16 %v786, %v783
    %v870 = vpack.c.bf16 %v794, %v791
    %v871 = vpack.c.bf16 %v802, %v799
    %v872 = vpack.c.bf16 %v810, %v807
    %v873 = vpack.c.bf16 %v818, %v815
    %v874 = vpack.c.bf16 %v826, %v823
    %v875 = vpack.c.bf16 %v834, %v831
    %v876 = vpack.c.bf16 %v842, %v839
    %v909 = vunpack.c.l.b16 %v845
    %v910 = vunpack.c.h.b16 %v845
    %v911 = vunpack.c.l.b16 %v846
    %v912 = vunpack.c.h.b16 %v846
    %v913 = vunpack.c.l.b16 %v847
    %v914 = vunpack.c.h.b16 %v847
    %v915 = vunpack.c.l.b16 %v848
    %v916 = vunpack.c.h.b16 %v848
    %v917 = vunpack.c.l.b16 %v849
    %v918 = vunpack.c.h.b16 %v849
    %v919 = vunpack.c.l.b16 %v850
    %v920 = vunpack.c.h.b16 %v850
    %v921 = vunpack.c.l.b16 %v851
    %v922 = vunpack.c.h.b16 %v851
    %v923 = vunpack.c.l.b16 %v852
    %v924 = vunpack.c.h.b16 %v852
    %v925 = vunpack.c.l.b16 %v853
    %v926 = vunpack.c.h.b16 %v853
    %v927 = vunpack.c.l.b16 %v854
    %v928 = vunpack.c.h.b16 %v854
    %v929 = vunpack.c.l.b16 %v855
    %v930 = vunpack.c.h.b16 %v855
    %v931 = vunpack.c.l.b16 %v856
    %v932 = vunpack.c.h.b16 %v856
    %v933 = vunpack.c.l.b16 %v857
    %v934 = vunpack.c.h.b16 %v857
    %v935 = vunpack.c.l.b16 %v858
    %v936 = vunpack.c.h.b16 %v858
    %v937 = vunpack.c.l.b16 %v859
    %v938 = vunpack.c.h.b16 %v859
    %v939 = vunpack.c.l.b16 %v860
    %v940 = vunpack.c.h.b16 %v860
    %v941 = vunpack.c.l.b16 %v861
    %v942 = vunpack.c.h.b16 %v861
    %v943 = vunpack.c.l.b16 %v862
    %v944 = vunpack.c.h.b16 %v862
    %v945 = vunpack.c.l.b16 %v863
    %v946 = vunpack.c.h.b16 %v863
    %v947 = vunpack.c.l.b16 %v864
    %v948 = vunpack.c.h.b16 %v864
    %v949 = vunpack.c.l.b16 %v865
    %v950 = vunpack.c.h.b16 %v865
    %v951 = vunpack.c.l.b16 %v866
    %v952 = vunpack.c.h.b16 %v866
    %v953 = vunpack.c.l.b16 %v867
    %v954 = vunpack.c.h.b16 %v867
    %v955 = vunpack.c.l.b16 %v868
    %v956 = vunpack.c.h.b16 %v868
    %v957 = vunpack.c.l.b16 %v869
    %v958 = vunpack.c.h.b16 %v869
    %v959 = vunpack.c.l.b16 %v870
    %v960 = vunpack.c.h.b16 %v870
    %v961 = vunpack.c.l.b16 %v871
    %v962 = vunpack.c.h.b16 %v871
    %v963 = vunpack.c.l.b16 %v872
    %v964 = vunpack.c.h.b16 %v872
    %v965 = vunpack.c.l.b16 %v873
    %v966 = vunpack.c.h.b16 %v873
    %v967 = vunpack.c.l.b16 %v874
    %v968 = vunpack.c.h.b16 %v874
    %v969 = vunpack.c.l.b16 %v875
    %v970 = vunpack.c.h.b16 %v875
    %v971 = vunpack.c.l.b16 %v876
    %v972 = vunpack.c.h.b16 %v876
    %v973 = vpack.c.b16 %v909, %v909
    %v974 = vpack.c.b16 %v910, %v910
    %v975 = vpack.c.b16 %v911, %v911
    %v976 = vpack.c.b16 %v912, %v912
    %v977 = vpack.c.b16 %v913, %v913
    %v978 = vpack.c.b16 %v914, %v914
    %v979 = vpack.c.b16 %v915, %v915
    %v980 = vpack.c.b16 %v916, %v916
    %v981 = vpack.c.b16 %v917, %v917
    %v982 = vpack.c.b16 %v918, %v918
    %v983 = vpack.c.b16 %v919, %v919
    %v984 = vpack.c.b16 %v920, %v920
    %v985 = vpack.c.b16 %v921, %v921
    %v986 = vpack.c.b16 %v922, %v922
    %v987 = vpack.c.b16 %v923, %v923
    %v988 = vpack.c.b16 %v924, %v924
    %v989 = vpack.c.b16 %v925, %v925
    %v990 = vpack.c.b16 %v926, %v926
    %v991 = vpack.c.b16 %v927, %v927
    %v992 = vpack.c.b16 %v928, %v928
    %v993 = vpack.c.b16 %v929, %v929
    %v994 = vpack.c.b16 %v930, %v930
    %v995 = vpack.c.b16 %v931, %v931
    %v996 = vpack.c.b16 %v932, %v932
    %v997 = vpack.c.b16 %v933, %v933
    %v998 = vpack.c.b16 %v934, %v934
    %v999 = vpack.c.b16 %v935, %v935
    %v1000 = vpack.c.b16 %v936, %v936
    %v1001 = vpack.c.b16 %v937, %v937
    %v1002 = vpack.c.b16 %v938, %v938
    %v1003 = vpack.c.b16 %v939, %v939
    %v1004 = vpack.c.b16 %v940, %v940
    %v1005 = vpack.c.b16 %v941, %v941
    %v1006 = vpack.c.b16 %v942, %v942
    %v1007 = vpack.c.b16 %v943, %v943
    %v1008 = vpack.c.b16 %v944, %v944
    %v1009 = vpack.c.b16 %v945, %v945
    %v1010 = vpack.c.b16 %v946, %v946
    %v1011 = vpack.c.b16 %v947, %v947
    %v1012 = vpack.c.b16 %v948, %v948
    %v1013 = vpack.c.b16 %v949, %v949
    %v1014 = vpack.c.b16 %v950, %v950
    %v1015 = vpack.c.b16 %v951, %v951
    %v1016 = vpack.c.b16 %v952, %v952
    %v1017 = vpack.c.b16 %v953, %v953
    %v1018 = vpack.c.b16 %v954, %v954
    %v1019 = vpack.c.b16 %v955, %v955
    %v1020 = vpack.c.b16 %v956, %v956
    %v1021 = vpack.c.b16 %v957, %v957
    %v1022 = vpack.c.b16 %v958, %v958
    %v1023 = vpack.c.b16 %v959, %v959
    %v1024 = vpack.c.b16 %v960, %v960
    %v1025 = vpack.c.b16 %v961, %v961
    %v1026 = vpack.c.b16 %v962, %v962
    %v1027 = vpack.c.b16 %v963, %v963
    %v1028 = vpack.c.b16 %v964, %v964
    %v1029 = vpack.c.b16 %v965, %v965
    %v1030 = vpack.c.b16 %v966, %v966
    %v1031 = vpack.c.b16 %v967, %v967
    %v1032 = vpack.c.b16 %v968, %v968
    %v1033 = vpack.c.b16 %v969, %v969
    %v1034 = vpack.c.b16 %v970, %v970
    %v1035 = vpack.c.b16 %v971, %v971
    %v1036 = vpack.c.b16 %v972, %v972
    %1101 = vst [vmem:[#allocation7] sm:$0xf] %v973
    %1102 = vst [vmem:[#allocation7 + $0x4] sm:$0xf] %v974
    %1103 = vst [vmem:[#allocation7 + $0x8] sm:$0xf] %v975
    %1104 = vst [vmem:[#allocation7 + $0xc] sm:$0xf] %v976
    %1105 = vst [vmem:[#allocation7 + $0x10] sm:$0xf] %v977
    %1106 = vst [vmem:[#allocation7 + $0x14] sm:$0xf] %v978
    %1107 = vst [vmem:[#allocation7 + $0x18] sm:$0xf] %v979
    %1108 = vst [vmem:[#allocation7 + $0x1c] sm:$0xf] %v980
    %1109 = vst [vmem:[#allocation7 + $0x20] sm:$0xf] %v981
    %1110 = vst [vmem:[#allocation7 + $0x24] sm:$0xf] %v982
    %1111 = vst [vmem:[#allocation7 + $0x28] sm:$0xf] %v983
    %1112 = vst [vmem:[#allocation7 + $0x2c] sm:$0xf] %v984
    %1113 = vst [vmem:[#allocation7 + $0x30] sm:$0xf] %v985
    %1114 = vst [vmem:[#allocation7 + $0x34] sm:$0xf] %v986
    %1115 = vst [vmem:[#allocation7 + $0x38] sm:$0xf] %v987
    %1116 = vst [vmem:[#allocation7 + $0x3c] sm:$0xf] %v988
    %1117 = vst [vmem:[#allocation7 + $0x40] sm:$0xf] %v989
    %1118 = vst [vmem:[#allocation7 + $0x44] sm:$0xf] %v990
    %1119 = vst [vmem:[#allocation7 + $0x48] sm:$0xf] %v991
    %1120 = vst [vmem:[#allocation7 + $0x4c] sm:$0xf] %v992
    %1121 = vst [vmem:[#allocation7 + $0x50] sm:$0xf] %v993
    %1122 = vst [vmem:[#allocation7 + $0x54] sm:$0xf] %v994
    %1123 = vst [vmem:[#allocation7 + $0x58] sm:$0xf] %v995
    %1124 = vst [vmem:[#allocation7 + $0x5c] sm:$0xf] %v996
    %1125 = vst [vmem:[#allocation7 + $0x60] sm:$0xf] %v997
    %1126 = vst [vmem:[#allocation7 + $0x64] sm:$0xf] %v998
    %1127 = vst [vmem:[#allocation7 + $0x68] sm:$0xf] %v999
    %1128 = vst [vmem:[#allocation7 + $0x6c] sm:$0xf] %v1000
    %1129 = vst [vmem:[#allocation7 + $0x70] sm:$0xf] %v1001
    %1130 = vst [vmem:[#allocation7 + $0x74] sm:$0xf] %v1002
    %1131 = vst [vmem:[#allocation7 + $0x78] sm:$0xf] %v1003
    %1132 = vst [vmem:[#allocation7 + $0x7c] sm:$0xf] %v1004
    %1133 = vst [vmem:[#allocation7 + $0x80] sm:$0xf] %v1005
    %1134 = vst [vmem:[#allocation7 + $0x84] sm:$0xf] %v1006
    %1135 = vst [vmem:[#allocation7 + $0x88] sm:$0xf] %v1007
    %1136 = vst [vmem:[#allocation7 + $0x8c] sm:$0xf] %v1008
    %1137 = vst [vmem:[#allocation7 + $0x90] sm:$0xf] %v1009
    %1138 = vst [vmem:[#allocation7 + $0x94] sm:$0xf] %v1010
    %1139 = vst [vmem:[#allocation7 + $0x98] sm:$0xf] %v1011
    %1140 = vst [vmem:[#allocation7 + $0x9c] sm:$0xf] %v1012
    %1141 = vst [vmem:[#allocation7 + $0xa0] sm:$0xf] %v1013
    %1142 = vst [vmem:[#allocation7 + $0xa4] sm:$0xf] %v1014
    %1143 = vst [vmem:[#allocation7 + $0xa8] sm:$0xf] %v1015
    %1144 = vst [vmem:[#allocation7 + $0xac] sm:$0xf] %v1016
    %1145 = vst [vmem:[#allocation7 + $0xb0] sm:$0xf] %v1017
    %1146 = vst [vmem:[#allocation7 + $0xb4] sm:$0xf] %v1018
    %1147 = vst [vmem:[#allocation7 + $0xb8] sm:$0xf] %v1019
    %1148 = vst [vmem:[#allocation7 + $0xbc] sm:$0xf] %v1020
    %1149 = vst [vmem:[#allocation7 + $0xc0] sm:$0xf] %v1021
    %1150 = vst [vmem:[#allocation7 + $0xc4] sm:$0xf] %v1022
    %1151 = vst [vmem:[#allocation7 + $0xc8] sm:$0xf] %v1023
    %1152 = vst [vmem:[#allocation7 + $0xcc] sm:$0xf] %v1024
    %1153 = vst [vmem:[#allocation7 + $0xd0] sm:$0xf] %v1025
    %1154 = vst [vmem:[#allocation7 + $0xd4] sm:$0xf] %v1026
    %1155 = vst [vmem:[#allocation7 + $0xd8] sm:$0xf] %v1027
    %1156 = vst [vmem:[#allocation7 + $0xdc] sm:$0xf] %v1028
    %1157 = vst [vmem:[#allocation7 + $0xe0] sm:$0xf] %v1029
    %1158 = vst [vmem:[#allocation7 + $0xe4] sm:$0xf] %v1030
    %1159 = vst [vmem:[#allocation7 + $0xe8] sm:$0xf] %v1031
    %1160 = vst [vmem:[#allocation7 + $0xec] sm:$0xf] %v1032
    %1161 = vst [vmem:[#allocation7 + $0xf0] sm:$0xf] %v1033
    %1162 = vst [vmem:[#allocation7 + $0xf4] sm:$0xf] %v1034
    %1163 = vst [vmem:[#allocation7 + $0xf8] sm:$0xf] %v1035
    %1164 = vst [vmem:[#allocation7 + $0xfc] sm:$0xf] %v1036
    %v1165 = vadd.f32 %v591, %v594
    %v1166 = vadd.f32 %v1165, %v599
    %v1167 = vadd.f32 %v1166, %v602
    %v1168 = vadd.f32 %v1167, %v607
    %v1169 = vadd.f32 %v1168, %v610
    %v1170 = vadd.f32 %v1169, %v615
    %v1171 = vadd.f32 %v1170, %v618
    %v1172 = vadd.f32 %v1171, %v623
    %v1173 = vadd.f32 %v1172, %v626
    %v1174 = vadd.f32 %v1173, %v631
    %v1175 = vadd.f32 %v1174, %v634
    %v1176 = vadd.f32 %v1175, %v639
    %v1177 = vadd.f32 %v1176, %v642
    %v1178 = vadd.f32 %v1177, %v647
    %v1179 = vadd.f32 %v1178, %v650
    %v1180 = vadd.f32 %v1179, %v655
    %v1181 = vadd.f32 %v1180, %v658
    %v1182 = vadd.f32 %v1181, %v663
    %v1183 = vadd.f32 %v1182, %v666
    %v1184 = vadd.f32 %v1183, %v671
    %v1185 = vadd.f32 %v1184, %v674
    %v1186 = vadd.f32 %v1185, %v679
    %v1187 = vadd.f32 %v1186, %v682
    %v1188 = vadd.f32 %v1187, %v687
    %v1189 = vadd.f32 %v1188, %v690
    %v1190 = vadd.f32 %v1189, %v695
    %v1191 = vadd.f32 %v1190, %v698
    %v1192 = vadd.f32 %v1191, %v703
    %v1193 = vadd.f32 %v1192, %v706
    %v1194 = vadd.f32 %v1193, %v711
    %v1195 = vadd.f32 %v1194, %v714
    %v1196 = vadd.f32 %v1195, %v719
    %v1197 = vadd.f32 %v1196, %v722
    %v1198 = vadd.f32 %v1197, %v727
    %v1199 = vadd.f32 %v1198, %v730
    %v1200 = vadd.f32 %v1199, %v735
    %v1201 = vadd.f32 %v1200, %v738
    %v1202 = vadd.f32 %v1201, %v743
    %v1203 = vadd.f32 %v1202, %v746
    %v1204 = vadd.f32 %v1203, %v751
    %v1205 = vadd.f32 %v1204, %v754
    %v1206 = vadd.f32 %v1205, %v759
    %v1207 = vadd.f32 %v1206, %v762
    %v1208 = vadd.f32 %v1207, %v767
    %v1209 = vadd.f32 %v1208, %v770
    %v1210 = vadd.f32 %v1209, %v775
    %v1211 = vadd.f32 %v1210, %v778
    %v1212 = vadd.f32 %v1211, %v783
    %v1213 = vadd.f32 %v1212, %v786
    %v1214 = vadd.f32 %v1213, %v791
    %v1215 = vadd.f32 %v1214, %v794
    %v1216 = vadd.f32 %v1215, %v799
    %v1217 = vadd.f32 %v1216, %v802
    %v1218 = vadd.f32 %v1217, %v807
    %v1219 = vadd.f32 %v1218, %v810
    %v1220 = vadd.f32 %v1219, %v815
    %v1221 = vadd.f32 %v1220, %v818
    %v1222 = vadd.f32 %v1221, %v823
    %v1223 = vadd.f32 %v1222, %v826
    %v1224 = vadd.f32 %v1223, %v831
    %v1225 = vadd.f32 %v1224, %v834
    %v1226 = vadd.f32 %v1225, %v839
    %v1227 = vadd.f32 %v1226, %v842
    %v1228 = vrot.slane %v1227, 4
    %v1229 = vadd.f32 %v1227, %v1228
    %v1230 = vrot.slane %v1229, 2
    %v1231 = vadd.f32 %v1229, %v1230
    %v1232 = vrot.slane %v1231, 1
    %v1233 = vadd.f32 %v1231, %v1232
    %v1234 = vmul.f32 %v591, %v591
    %v1235 = vmul.f32 %v594, %v594
    %v1236 = vmul.f32 %v599, %v599
    %v1237 = vmul.f32 %v602, %v602
    %v1238 = vmul.f32 %v607, %v607
    %v1239 = vmul.f32 %v610, %v610
    %v1240 = vmul.f32 %v615, %v615
    %v1241 = vmul.f32 %v618, %v618
    %v1242 = vmul.f32 %v623, %v623
    %v1243 = vmul.f32 %v626, %v626
    %v1244 = vmul.f32 %v631, %v631
    %v1245 = vmul.f32 %v634, %v634
    %v1246 = vmul.f32 %v639, %v639
    %v1247 = vmul.f32 %v642, %v642
    %v1248 = vmul.f32 %v647, %v647
    %v1249 = vmul.f32 %v650, %v650
    %v1250 = vmul.f32 %v655, %v655
    %v1251 = vmul.f32 %v658, %v658
    %v1252 = vmul.f32 %v663, %v663
    %v1253 = vmul.f32 %v666, %v666
    %v1254 = vmul.f32 %v671, %v671
    %v1255 = vmul.f32 %v674, %v674
    %v1256 = vmul.f32 %v679, %v679
    %v1257 = vmul.f32 %v682, %v682
    %v1258 = vmul.f32 %v687, %v687
    %v1259 = vmul.f32 %v690, %v690
    %v1260 = vmul.f32 %v695, %v695
    %v1261 = vmul.f32 %v698, %v698
    %v1262 = vmul.f32 %v703, %v703
    %v1263 = vmul.f32 %v706, %v706
    %v1264 = vmul.f32 %v711, %v711
    %v1265 = vmul.f32 %v714, %v714
    %v1266 = vmul.f32 %v719, %v719
    %v1267 = vmul.f32 %v722, %v722
    %v1268 = vmul.f32 %v727, %v727
    %v1269 = vmul.f32 %v730, %v730
    %v1270 = vmul.f32 %v735, %v735
    %v1271 = vmul.f32 %v738, %v738
    %v1272 = vmul.f32 %v743, %v743
    %v1273 = vmul.f32 %v746, %v746
    %v1274 = vmul.f32 %v751, %v751
    %v1275 = vmul.f32 %v754, %v754
    %v1276 = vmul.f32 %v759, %v759
    %v1277 = vmul.f32 %v762, %v762
    %v1278 = vmul.f32 %v767, %v767
    %v1279 = vmul.f32 %v770, %v770
    %v1280 = vmul.f32 %v775, %v775
    %v1281 = vmul.f32 %v778, %v778
    %v1282 = vmul.f32 %v783, %v783
    %v1283 = vmul.f32 %v786, %v786
    %v1284 = vmul.f32 %v791, %v791
    %v1285 = vmul.f32 %v794, %v794
    %v1286 = vmul.f32 %v799, %v799
    %v1287 = vmul.f32 %v802, %v802
    %v1288 = vmul.f32 %v807, %v807
    %v1289 = vmul.f32 %v810, %v810
    %v1290 = vmul.f32 %v815, %v815
    %v1291 = vmul.f32 %v818, %v818
    %v1292 = vmul.f32 %v823, %v823
    %v1293 = vmul.f32 %v826, %v826
    %v1294 = vmul.f32 %v831, %v831
    %v1295 = vmul.f32 %v834, %v834
    %v1296 = vmul.f32 %v839, %v839
    %v1297 = vmul.f32 %v842, %v842
    %v1298 = vadd.f32 %v1234, %v1235
    %v1299 = vadd.f32 %v1298, %v1236
    %v1300 = vadd.f32 %v1299, %v1237
    %v1301 = vadd.f32 %v1300, %v1238
    %v1302 = vadd.f32 %v1301, %v1239
    %v1303 = vadd.f32 %v1302, %v1240
    %v1304 = vadd.f32 %v1303, %v1241
    %v1305 = vadd.f32 %v1304, %v1242
    %v1306 = vadd.f32 %v1305, %v1243
    %v1307 = vadd.f32 %v1306, %v1244
    %v1308 = vadd.f32 %v1307, %v1245
    %v1309 = vadd.f32 %v1308, %v1246
    %v1310 = vadd.f32 %v1309, %v1247
    %v1311 = vadd.f32 %v1310, %v1248
    %v1312 = vadd.f32 %v1311, %v1249
    %v1313 = vadd.f32 %v1312, %v1250
    %v1314 = vadd.f32 %v1313, %v1251
    %v1315 = vadd.f32 %v1314, %v1252
    %v1316 = vadd.f32 %v1315, %v1253
    %v1317 = vadd.f32 %v1316, %v1254
    %v1318 = vadd.f32 %v1317, %v1255
    %v1319 = vadd.f32 %v1318, %v1256
    %v1320 = vadd.f32 %v1319, %v1257
    %v1321 = vadd.f32 %v1320, %v1258
    %v1322 = vadd.f32 %v1321, %v1259
    %v1323 = vadd.f32 %v1322, %v1260
    %v1324 = vadd.f32 %v1323, %v1261
    %v1325 = vadd.f32 %v1324, %v1262
    %v1326 = vadd.f32 %v1325, %v1263
    %v1327 = vadd.f32 %v1326, %v1264
    %v1328 = vadd.f32 %v1327, %v1265
    %v1329 = vadd.f32 %v1328, %v1266
    %v1330 = vadd.f32 %v1329, %v1267
    %v1331 = vadd.f32 %v1330, %v1268
    %v1332 = vadd.f32 %v1331, %v1269
    %v1333 = vadd.f32 %v1332, %v1270
    %v1334 = vadd.f32 %v1333, %v1271
    %v1335 = vadd.f32 %v1334, %v1272
    %v1336 = vadd.f32 %v1335, %v1273
    %v1337 = vadd.f32 %v1336, %v1274
    %v1338 = vadd.f32 %v1337, %v1275
    %v1339 = vadd.f32 %v1338, %v1276
    %v1340 = vadd.f32 %v1339, %v1277
    %v1341 = vadd.f32 %v1340, %v1278
    %v1342 = vadd.f32 %v1341, %v1279
    %v1343 = vadd.f32 %v1342, %v1280
    %v1344 = vadd.f32 %v1343, %v1281
    %v1345 = vadd.f32 %v1344, %v1282
    %v1346 = vadd.f32 %v1345, %v1283
    %v1347 = vadd.f32 %v1346, %v1284
    %v1348 = vadd.f32 %v1347, %v1285
    %v1349 = vadd.f32 %v1348, %v1286
    %v1350 = vadd.f32 %v1349, %v1287
    %v1351 = vadd.f32 %v1350, %v1288
    %v1352 = vadd.f32 %v1351, %v1289
    %v1353 = vadd.f32 %v1352, %v1290
    %v1354 = vadd.f32 %v1353, %v1291
    %v1355 = vadd.f32 %v1354, %v1292
    %v1356 = vadd.f32 %v1355, %v1293
    %v1357 = vadd.f32 %v1356, %v1294
    %v1358 = vadd.f32 %v1357, %v1295
    %v1359 = vadd.f32 %v1358, %v1296
    %v1360 = vadd.f32 %v1359, %v1297
    %v1361 = vrot.slane %v1360, 4
    %v1362 = vadd.f32 %v1360, %v1361
    %v1363 = vrot.slane %v1362, 2
    %v1364 = vadd.f32 %v1362, %v1363
    %v1365 = vrot.slane %v1364, 1
    %v1366 = vadd.f32 %v1364, %v1365
    %vm1367 = vcmask 1040384
    %v1368 = vsel %vm1367, %v1233, %v1366
    %vm1369 = vcmask 1041408
    %v1370 = vsel %vm1369, %v1368, 0.0
    %1371 = vst [vmem:[#allocation8] sm:$0xff] %v1370
    // Predicated region
    $region18: #{resnet_forward.17} parent=1 // pred_check
      _
    $region19: #{resnet_forward.17} parent=1 // pred_check_branch
      %1373 = sbr.rel (0) target = $region21
    $region20: #{resnet_forward.17} parent=1 // pred_region
      %s1375 = ssub.s32 4096, 4096
      %1376 = vsyncadd [#allocation4], %s1375
      %s1377 = sshll.u32 [#allocation7], 4
      %s1378 = int_to_ptr.vmem [resolvable:$true] %s1377
      %1383 = dma.vmem_to_hbm [thread:$0]  %s1378, 4096, %s2, [#allocation4], 64, 64, 4
    $region21: #{resnet_forward.17} parent=1 // pred_fallthru
      _
    // Predicated region
    $region22: #{resnet_forward.17} parent=1 // pred_check
      _
    $region23: #{resnet_forward.17} parent=1 // pred_check_branch
      %1385 = sbr.rel (0) target = $region25
    $region24: #{resnet_forward.17} parent=1 // pred_region
      %s1387 = ssub.s32 128, 128
      %1388 = vsyncadd [#allocation9], %s1387
      %s1390 = sshll.u32 [#allocation8], 4
      %s1391 = int_to_ptr.vmem [resolvable:$true] %s1390
      %1393 = dma.vmem_to_hbm [thread:$0]  %s1391, 128, %s3, [#allocation9]
    $region25: #{resnet_forward.17} parent=1 // pred_fallthru
      _
    // Predicated region
    $region26: #{resnet_forward.17} parent=1 // pred_check
      _
    $region27: #{resnet_forward.17} parent=1 // pred_check_branch
      %1395 = sbr.rel (0) target = $region29
    $region28: #{resnet_forward.17} parent=1 // pred_region
      %1396 = dma.done [#allocation4], 4096
    $region29: #{resnet_forward.17} parent=1 // pred_fallthru
      _
    // Predicated region
    $region30: #{resnet_forward.17} parent=1 // pred_check
      _
    $region31: #{resnet_forward.17} parent=1 // pred_check_branch
      %1398 = sbr.rel (0) target = $region33
    $region32: #{resnet_forward.17} parent=1 // pred_region
      %1399 = dma.done [#allocation9], 128
    $region33: #{resnet_forward.17} parent=1 // pred_fallthru
      _
    %1400 = vsyncpa [#allocation3], 1
    %1401 = vsyncpa [#allocation6], 1
    %1402 = vsyncpa [#allocation4], 1
    %1403 = vsyncpa [#allocation9], 1

// kernel: resnet_forward.22
$region0: #{resnet_forward.22}
  #allocation0 [shape = 'u32[]', space=smem, size = 0x4, offset = 0x4, fixed_abs, tag = 'smem constant byte address 0x4 - core index']
  #allocation1 [shape = 'u32[144,128]{1,0:T(1,128)}', space=vmem, size = 0x12000, scoped, tag = 'internal scratch']
  %s0 = inlined_call_operand.hbm [shape: bf16[128,128], index: 0, kind: input, shape index: {}]
  %s1 = inlined_call_operand.hbm [shape: f32[1,128], index: 1, kind: input, shape index: {}]
  %s2 = inlined_call_operand.hbm [shape: f32[1,128], index: 2, kind: input, shape index: {}]
  %s3 = inlined_call_operand.hbm [shape: bf16[128,128], index: 3, kind: output, shape index: {}]
  %s4 = sld [smem:[#allocation0]]
  $region34: #{resnet_forward.22} parent=0
    _
  %s6 = ssub.s32 1, %s4
  %s7 = scalar_select 0, %s6, %s4
  $region1: #{resnet_forward.22} parent=0
    #allocation2 [shape = 'u8[32768]{0}', space=vmem, size = 0x8000, scoped, tag = 'input window, operand 0, single buffered']
    #allocation3 [shape = 's32[1]{0}', space=sflag, size = 0x4, scoped, tag = 'scoped memory for resnet_forward.22']
    #allocation4 [shape = 's32[1]{0}', space=sflag, size = 0x4, scoped, tag = 'scoped memory for resnet_forward.22']
    #allocation5 [shape = 'u8[512]{0}', space=vmem, size = 0x400, scoped, tag = 'input window, operand 1, single buffered']
    #allocation6 [shape = 's32[1]{0}', space=sflag, size = 0x4, scoped, tag = 'scoped memory for resnet_forward.22']
    #allocation7 [shape = 'u8[512]{0}', space=vmem, size = 0x400, scoped, tag = 'input window, operand 2, single buffered']
    #allocation8 [shape = 'u8[32768]{0}', space=vmem, size = 0x8000, scoped, tag = 'output window, operand 0, single buffered']
    %8 = vsyncpa [#allocation3], 0
    %9 = vsyncpa [#allocation6], 0
    %10 = vsyncpa [#allocation4], 0
    // Predicated region
    $region2: #{resnet_forward.22} parent=1 // pred_check
      _
    $region3: #{resnet_forward.22} parent=1 // pred_check_branch
      %12 = sbr.rel (0) target = $region5
    $region4: #{resnet_forward.22} parent=1 // pred_region
      %s14 = ssub.s32 1024, 1024
      %15 = vsyncadd [#allocation3], %s14
      %s16 = sshll.u32 [#allocation2], 4
      %s17 = int_to_ptr.vmem [resolvable:$true] %s16
      %22 = dma.hbm_to_vmem [thread:$0]  %s0, 1024, %s17, [#allocation3], 64, 64, 4
    $region5: #{resnet_forward.22} parent=1 // pred_fallthru
      _
    // Predicated region
    $region6: #{resnet_forward.22} parent=1 // pred_check
      _
    $region7: #{resnet_forward.22} parent=1 // pred_check_branch
      %24 = sbr.rel (0) target = $region9
    $region8: #{resnet_forward.22} parent=1 // pred_region
      %s26 = ssub.s32 16, 16
      %27 = vsyncadd [#allocation6], %s26
      %s29 = sshll.u32 [#allocation5], 4
      %s30 = int_to_ptr.vmem [resolvable:$true] %s29
      %32 = dma.hbm_to_vmem [thread:$0]  %s1, 16, %s30, [#allocation6]
    $region9: #{resnet_forward.22} parent=1 // pred_fallthru
      _
    // Predicated region
    $region10: #{resnet_forward.22} parent=1 // pred_check
      _
    $region11: #{resnet_forward.22} parent=1 // pred_check_branch
      %34 = sbr.rel (0) target = $region13
    $region12: #{resnet_forward.22} parent=1 // pred_region
      %s36 = ssub.s32 16, 16
      %37 = vsyncadd [#allocation6], %s36
      %s39 = sshll.u32 [#allocation7], 4
      %s40 = int_to_ptr.vmem [resolvable:$true] %s39
      %42 = dma.hbm_to_vmem [thread:$0]  %s2, 16, %s40, [#allocation6]
    $region13: #{resnet_forward.22} parent=1 // pred_fallthru
      _
    // Predicated region
    $region14: #{resnet_forward.22} parent=1 // pred_check
      _
    $region15: #{resnet_forward.22} parent=1 // pred_check_branch
      %44 = sbr.rel (0) target = $region17
    $region16: #{resnet_forward.22} parent=1 // pred_region
      %45 = dma.done [#allocation3], 1024
    $region17: #{resnet_forward.22} parent=1 // pred_fallthru
      _
    // Predicated region
    $region18: #{resnet_forward.22} parent=1 // pred_check
      _
    $region19: #{resnet_forward.22} parent=1 // pred_check_branch
      %47 = sbr.rel (0) target = $region21
    $region20: #{resnet_forward.22} parent=1 // pred_region
      %48 = dma.done [#allocation6], 16
    $region21: #{resnet_forward.22} parent=1 // pred_fallthru
      _
    // Predicated region
    $region22: #{resnet_forward.22} parent=1 // pred_check
      _
    $region23: #{resnet_forward.22} parent=1 // pred_check_branch
      %50 = sbr.rel (0) target = $region25
    $region24: #{resnet_forward.22} parent=1 // pred_region
      %51 = dma.done [#allocation6], 16
    $region25: #{resnet_forward.22} parent=1 // pred_fallthru
      _
    %v52 = vld [vmem:[#allocation2] sm:$0xf]
    %v53 = vld [vmem:[#allocation2 + $0x4] sm:$0xf]
    %v54 = vld [vmem:[#allocation2 + $0x8] sm:$0xf]
    %v55 = vld [vmem:[#allocation2 + $0xc] sm:$0xf]
    %v56 = vld [vmem:[#allocation2 + $0x10] sm:$0xf]
    %v57 = vld [vmem:[#allocation2 + $0x14] sm:$0xf]
    %v58 = vld [vmem:[#allocation2 + $0x18] sm:$0xf]
    %v59 = vld [vmem:[#allocation2 + $0x1c] sm:$0xf]
    %v60 = vld [vmem:[#allocation2 + $0x20] sm:$0xf]
    %v61 = vld [vmem:[#allocation2 + $0x24] sm:$0xf]
    %v62 = vld [vmem:[#allocation2 + $0x28] sm:$0xf]
    %v63 = vld [vmem:[#allocation2 + $0x2c] sm:$0xf]
    %v64 = vld [vmem:[#allocation2 + $0x30] sm:$0xf]
    %v65 = vld [vmem:[#allocation2 + $0x34] sm:$0xf]
    %v66 = vld [vmem:[#allocation2 + $0x38] sm:$0xf]
    %v67 = vld [vmem:[#allocation2 + $0x3c] sm:$0xf]
    %v68 = vunpack.c.l.bf16 %v52
    %v69 = vunpack.c.l.bf16 %v53
    %v70 = vunpack.c.l.bf16 %v54
    %v71 = vunpack.c.l.bf16 %v55
    %v72 = vunpack.c.l.bf16 %v56
    %v73 = vunpack.c.l.bf16 %v57
    %v74 = vunpack.c.l.bf16 %v58
    %v75 = vunpack.c.l.bf16 %v59
    %v76 = vunpack.c.l.bf16 %v60
    %v77 = vunpack.c.l.bf16 %v61
    %v78 = vunpack.c.l.bf16 %v62
    %v79 = vunpack.c.l.bf16 %v63
    %v80 = vunpack.c.l.bf16 %v64
    %v81 = vunpack.c.l.bf16 %v65
    %v82 = vunpack.c.l.bf16 %v66
    %v83 = vunpack.c.l.bf16 %v67
    %v84 = vld [vmem:[#allocation5] sm:$0x1]
    %v86 = vlaneseq
    %v87 = vshrl.u32 %v86, 7
    %v88 = vsub.s32 0, %v87
    %v89 = vrot.slane %v84, %v88
    %v91 = vmul.f32 %v68, %v89
    %v92 = vmul.f32 %v69, %v89
    %v93 = vmul.f32 %v70, %v89
    %v94 = vmul.f32 %v71, %v89
    %v95 = vmul.f32 %v72, %v89
    %v96 = vmul.f32 %v73, %v89
    %v97 = vmul.f32 %v74, %v89
    %v98 = vmul.f32 %v75, %v89
    %v99 = vmul.f32 %v76, %v89
    %v100 = vmul.f32 %v77, %v89
    %v101 = vmul.f32 %v78, %v89
    %v102 = vmul.f32 %v79, %v89
    %v103 = vmul.f32 %v80, %v89
    %v104 = vmul.f32 %v81, %v89
    %v105 = vmul.f32 %v82, %v89
    %v106 = vmul.f32 %v83, %v89
    %v107 = vld [vmem:[#allocation7] sm:$0x1]
    %v109 = vlaneseq
    %v110 = vshrl.u32 %v109, 7
    %v111 = vsub.s32 0, %v110
    %v112 = vrot.slane %v107, %v111
    %v114 = vadd.f32 %v91, %v112
    %v115 = vadd.f32 %v92, %v112
    %v116 = vadd.f32 %v93, %v112
    %v117 = vadd.f32 %v94, %v112
    %v118 = vadd.f32 %v95, %v112
    %v119 = vadd.f32 %v96, %v112
    %v120 = vadd.f32 %v97, %v112
    %v121 = vadd.f32 %v98, %v112
    %v122 = vadd.f32 %v99, %v112
    %v123 = vadd.f32 %v100, %v112
    %v124 = vadd.f32 %v101, %v112
    %v125 = vadd.f32 %v102, %v112
    %v126 = vadd.f32 %v103, %v112
    %v127 = vadd.f32 %v104, %v112
    %v128 = vadd.f32 %v105, %v112
    %v129 = vadd.f32 %v106, %v112
    %v130 = vmax.f32 %v114, 0.0
    %v131 = vmax.f32 %v115, 0.0
    %v132 = vmax.f32 %v116, 0.0
    %v133 = vmax.f32 %v117, 0.0
    %v134 = vmax.f32 %v118, 0.0
    %v135 = vmax.f32 %v119, 0.0
    %v136 = vmax.f32 %v120, 0.0
    %v137 = vmax.f32 %v121, 0.0
    %v138 = vmax.f32 %v122, 0.0
    %v139 = vmax.f32 %v123, 0.0
    %v140 = vmax.f32 %v124, 0.0
    %v141 = vmax.f32 %v125, 0.0
    %v142 = vmax.f32 %v126, 0.0
    %v143 = vmax.f32 %v127, 0.0
    %v144 = vmax.f32 %v128, 0.0
    %v145 = vmax.f32 %v129, 0.0
    %v146 = vpack.c.bf16 %v131, %v130
    %v147 = vpack.c.bf16 %v133, %v132
    %v148 = vpack.c.bf16 %v135, %v134
    %v149 = vpack.c.bf16 %v137, %v136
    %v150 = vpack.c.bf16 %v139, %v138
    %v151 = vpack.c.bf16 %v141, %v140
    %v152 = vpack.c.bf16 %v143, %v142
    %v153 = vpack.c.bf16 %v145, %v144
    %v162 = vunpack.c.l.b16 %v146
    %v163 = vunpack.c.h.b16 %v146
    %v164 = vunpack.c.l.b16 %v147
    %v165 = vunpack.c.h.b16 %v147
    %v166 = vunpack.c.l.b16 %v148
    %v167 = vunpack.c.h.b16 %v148
    %v168 = vunpack.c.l.b16 %v149
    %v169 = vunpack.c.h.b16 %v149
    %v170 = vunpack.c.l.b16 %v150
    %v171 = vunpack.c.h.b16 %v150
    %v172 = vunpack.c.l.b16 %v151
    %v173 = vunpack.c.h.b16 %v151
    %v174 = vunpack.c.l.b16 %v152
    %v175 = vunpack.c.h.b16 %v152
    %v176 = vunpack.c.l.b16 %v153
    %v177 = vunpack.c.h.b16 %v153
    %v178 = vpack.c.b16 %v162, %v162
    %v179 = vpack.c.b16 %v163, %v163
    %v180 = vpack.c.b16 %v164, %v164
    %v181 = vpack.c.b16 %v165, %v165
    %v182 = vpack.c.b16 %v166, %v166
    %v183 = vpack.c.b16 %v167, %v167
    %v184 = vpack.c.b16 %v168, %v168
    %v185 = vpack.c.b16 %v169, %v169
    %v186 = vpack.c.b16 %v170, %v170
    %v187 = vpack.c.b16 %v171, %v171
    %v188 = vpack.c.b16 %v172, %v172
    %v189 = vpack.c.b16 %v173, %v173
    %v190 = vpack.c.b16 %v174, %v174
    %v191 = vpack.c.b16 %v175, %v175
    %v192 = vpack.c.b16 %v176, %v176
    %v193 = vpack.c.b16 %v177, %v177
    %210 = vst [vmem:[#allocation8] sm:$0xf] %v178
    %211 = vst [vmem:[#allocation8 + $0x4] sm:$0xf] %v179
    %212 = vst [vmem:[#allocation8 + $0x8] sm:$0xf] %v180
    %213 = vst [vmem:[#allocation8 + $0xc] sm:$0xf] %v181
    %214 = vst [vmem:[#allocation8 + $0x10] sm:$0xf] %v182
    %215 = vst [vmem:[#allocation8 + $0x14] sm:$0xf] %v183
    %216 = vst [vmem:[#allocation8 + $0x18] sm:$0xf] %v184
    %217 = vst [vmem:[#allocation8 + $0x1c] sm:$0xf] %v185
    %218 = vst [vmem:[#allocation8 + $0x20] sm:$0xf] %v186
    %219 = vst [vmem:[#allocation8 + $0x24] sm:$0xf] %v187
    %220 = vst [vmem:[#allocation8 + $0x28] sm:$0xf] %v188
    %221 = vst [vmem:[#allocation8 + $0x2c] sm:$0xf] %v189
    %222 = vst [vmem:[#allocation8 + $0x30] sm:$0xf] %v190
    %223 = vst [vmem:[#allocation8 + $0x34] sm:$0xf] %v191
    %224 = vst [vmem:[#allocation8 + $0x38] sm:$0xf] %v192
    %225 = vst [vmem:[#allocation8 + $0x3c] sm:$0xf] %v193
    // Predicated region
    $region26: #{resnet_forward.22} parent=1 // pred_check
      _
    $region27: #{resnet_forward.22} parent=1 // pred_check_branch
      %227 = sbr.rel (0) target = $region29
    $region28: #{resnet_forward.22} parent=1 // pred_region
      %s229 = ssub.s32 1024, 1024
      %230 = vsyncadd [#allocation4], %s229
      %s231 = sshll.u32 [#allocation8], 4
      %s232 = int_to_ptr.vmem [resolvable:$true] %s231
      %237 = dma.vmem_to_hbm [thread:$0]  %s232, 1024, %s3, [#allocation4], 64, 64, 4
    $region29: #{resnet_forward.22} parent=1 // pred_fallthru
      _
    // Predicated region
    $region30: #{resnet_forward.22} parent=1 // pred_check
      _
    $region31: #{resnet_forward.22} parent=1 // pred_check_branch
      %239 = sbr.rel (0) target = $region33
    $region32: #{resnet_forward.22} parent=1 // pred_region
      %240 = dma.done [#allocation4], 1024
    $region33: #{resnet_forward.22} parent=1 // pred_fallthru
      _
    %241 = vsyncpa [#allocation3], 1
    %242 = vsyncpa [#allocation6], 1
    %243 = vsyncpa [#allocation4], 1

// kernel: resnet_forward.21
$region0: #{resnet_forward.21}
  #allocation0 [shape = 'u32[]', space=smem, size = 0x4, offset = 0x4, fixed_abs, tag = 'smem constant byte address 0x4 - core index']
  #allocation1 [shape = 'u32[144,128]{1,0:T(1,128)}', space=vmem, size = 0x12000, scoped, tag = 'internal scratch']
  %s0 = inlined_call_operand.hbm [shape: bf16[128,256], index: 0, kind: input, shape index: {}]
  %s1 = inlined_call_operand.hbm [shape: bf16[256,128], index: 1, kind: input, shape index: {}]
  %s2 = inlined_call_operand.hbm [shape: bf16[128,128], index: 2, kind: output, shape index: {0}]
  %s3 = inlined_call_operand.hbm [shape: f32[1,8,128], index: 3, kind: output, shape index: {1}]
  %4 = xla_tuple %s2, %s3
  %s5 = sld [smem:[#allocation0]]
  $region34: #{resnet_forward.21} parent=0
    _
  %s7 = ssub.s32 1, %s5
  %s8 = scalar_select 0, %s7, %s5
  $region1: #{resnet_forward.21} parent=0
    #allocation2 [shape = 'u8[65536]{0}', space=vmem, size = 0x10000, scoped, tag = 'input window, operand 0, single buffered']
    #allocation3 [shape = 's32[1]{0}', space=sflag, size = 0x4, scoped, tag = 'scoped memory for resnet_forward.21']
    #allocation4 [shape = 's32[1]{0}', space=sflag, size = 0x4, scoped, tag = 'scoped memory for resnet_forward.21']
    #allocation5 [shape = 'u8[65536]{0}', space=vmem, size = 0x10000, scoped, tag = 'input window, operand 1, single buffered']
    #allocation6 [shape = 's32[1]{0}', space=sflag, size = 0x4, scoped, tag = 'scoped memory for resnet_forward.21']
    #allocation7 [shape = 'u8[32768]{0}', space=vmem, size = 0x8000, scoped, tag = 'output window, operand 0, single buffered']
    #allocation8 [shape = 'u8[4096]{0}', space=vmem, size = 0x1000, scoped, tag = 'output window, operand 1, single buffered']
    #allocation9 [shape = 's32[1]{0}', space=sflag, size = 0x4, scoped, tag = 'scoped memory for resnet_forward.21']
    %9 = vsyncpa [#allocation3], 0
    %10 = vsyncpa [#allocation6], 0
    %11 = vsyncpa [#allocation4], 0
    %12 = vsyncpa [#allocation9], 0
    // Predicated region
    $region2: #{resnet_forward.21} parent=1 // pred_check
      _
    $region3: #{resnet_forward.21} parent=1 // pred_check_branch
      %14 = sbr.rel (0) target = $region5
    $region4: #{resnet_forward.21} parent=1 // pred_region
      %s16 = ssub.s32 2048, 2048
      %17 = vsyncadd [#allocation3], %s16
      %s18 = sshll.u32 [#allocation2], 4
      %s19 = int_to_ptr.vmem [resolvable:$true] %s18
      %24 = dma.hbm_to_vmem [thread:$0]  %s0, 2048, %s19, [#allocation3], 128, 128, 8
    $region5: #{resnet_forward.21} parent=1 // pred_fallthru
      _
    // Predicated region
    $region6: #{resnet_forward.21} parent=1 // pred_check
      _
    $region7: #{resnet_forward.21} parent=1 // pred_check_branch
      %26 = sbr.rel (0) target = $region9
    $region8: #{resnet_forward.21} parent=1 // pred_region
      %s28 = ssub.s32 2048, 2048
      %29 = vsyncadd [#allocation6], %s28
      %s30 = sshll.u32 [#allocation5], 4
      %s31 = int_to_ptr.vmem [resolvable:$true] %s30
      %36 = dma.hbm_to_vmem [thread:$0]  %s1, 2048, %s31, [#allocation6], 64, 64, 4
    $region9: #{resnet_forward.21} parent=1 // pred_fallthru
      _
    // Predicated region
    $region10: #{resnet_forward.21} parent=1 // pred_check
      _
    $region11: #{resnet_forward.21} parent=1 // pred_check_branch
      %38 = sbr.rel (0) target = $region13
    $region12: #{resnet_forward.21} parent=1 // pred_region
      %39 = dma.done [#allocation3], 2048
    $region13: #{resnet_forward.21} parent=1 // pred_fallthru
      _
    // Predicated region
    $region14: #{resnet_forward.21} parent=1 // pred_check
      _
    $region15: #{resnet_forward.21} parent=1 // pred_check_branch
      %41 = sbr.rel (0) target = $region17
    $region16: #{resnet_forward.21} parent=1 // pred_region
      %42 = dma.done [#allocation6], 2048
    $region17: #{resnet_forward.21} parent=1 // pred_fallthru
      _
    %v44 = vld [vmem:[#allocation2] sm:$0xff]
    %v45 = vld [vmem:[#allocation2 + $0x8] sm:$0xff]
    %v46 = vld [vmem:[#allocation2 + $0x10] sm:$0xff]
    %v47 = vld [vmem:[#allocation2 + $0x18] sm:$0xff]
    %v48 = vld [vmem:[#allocation2 + $0x20] sm:$0xff]
    %v49 = vld [vmem:[#allocation2 + $0x28] sm:$0xff]
    %v50 = vld [vmem:[#allocation2 + $0x30] sm:$0xff]
    %v51 = vld [vmem:[#allocation2 + $0x38] sm:$0xff]
    %v52 = vld [vmem:[#allocation2 + $0x40] sm:$0xff]
    %v53 = vld [vmem:[#allocation2 + $0x48] sm:$0xff]
    %v54 = vld [vmem:[#allocation2 + $0x50] sm:$0xff]
    %v55 = vld [vmem:[#allocation2 + $0x58] sm:$0xff]
    %v56 = vld [vmem:[#allocation2 + $0x60] sm:$0xff]
    %v57 = vld [vmem:[#allocation2 + $0x68] sm:$0xff]
    %v58 = vld [vmem:[#allocation2 + $0x70] sm:$0xff]
    %v59 = vld [vmem:[#allocation2 + $0x78] sm:$0xff]
    %v60 = vld [vmem:[#allocation5] sm:$0xf]
    %v61 = vld [vmem:[#allocation5 + $0x4] sm:$0xf]
    %v62 = vld [vmem:[#allocation5 + $0x8] sm:$0xf]
    %v63 = vld [vmem:[#allocation5 + $0xc] sm:$0xf]
    %v64 = vld [vmem:[#allocation5 + $0x10] sm:$0xf]
    %v65 = vld [vmem:[#allocation5 + $0x14] sm:$0xf]
    %v66 = vld [vmem:[#allocation5 + $0x18] sm:$0xf]
    %v67 = vld [vmem:[#allocation5 + $0x1c] sm:$0xf]
    %v68 = vld [vmem:[#allocation5 + $0x20] sm:$0xf]
    %v69 = vld [vmem:[#allocation5 + $0x24] sm:$0xf]
    %v70 = vld [vmem:[#allocation5 + $0x28] sm:$0xf]
    %v71 = vld [vmem:[#allocation5 + $0x2c] sm:$0xf]
    %v72 = vld [vmem:[#allocation5 + $0x30] sm:$0xf]
    %v73 = vld [vmem:[#allocation5 + $0x34] sm:$0xf]
    %v74 = vld [vmem:[#allocation5 + $0x38] sm:$0xf]
    %v75 = vld [vmem:[#allocation5 + $0x3c] sm:$0xf]
    %v76 = vld [vmem:[#allocation5 + $0x40] sm:$0xf]
    %v77 = vld [vmem:[#allocation5 + $0x44] sm:$0xf]
    %v78 = vld [vmem:[#allocation5 + $0x48] sm:$0xf]
    %v79 = vld [vmem:[#allocation5 + $0x4c] sm:$0xf]
    %v80 = vld [vmem:[#allocation5 + $0x50] sm:$0xf]
    %v81 = vld [vmem:[#allocation5 + $0x54] sm:$0xf]
    %v82 = vld [vmem:[#allocation5 + $0x58] sm:$0xf]
    %v83 = vld [vmem:[#allocation5 + $0x5c] sm:$0xf]
    %v84 = vld [vmem:[#allocation5 + $0x60] sm:$0xf]
    %v85 = vld [vmem:[#allocation5 + $0x64] sm:$0xf]
    %v86 = vld [vmem:[#allocation5 + $0x68] sm:$0xf]
    %v87 = vld [vmem:[#allocation5 + $0x6c] sm:$0xf]
    %v88 = vld [vmem:[#allocation5 + $0x70] sm:$0xf]
    %v89 = vld [vmem:[#allocation5 + $0x74] sm:$0xf]
    %v90 = vld [vmem:[#allocation5 + $0x78] sm:$0xf]
    %v91 = vld [vmem:[#allocation5 + $0x7c] sm:$0xf]
    %v108 = vunpack.c.l.b16 %v44
    %v109 = vunpack.c.h.b16 %v44
    %v110 = vunpack.c.l.b16 %v45
    %v111 = vunpack.c.h.b16 %v45
    %v112 = vunpack.c.l.b16 %v46
    %v113 = vunpack.c.h.b16 %v46
    %v114 = vunpack.c.l.b16 %v47
    %v115 = vunpack.c.h.b16 %v47
    %v116 = vunpack.c.l.b16 %v48
    %v117 = vunpack.c.h.b16 %v48
    %v118 = vunpack.c.l.b16 %v49
    %v119 = vunpack.c.h.b16 %v49
    %v120 = vunpack.c.l.b16 %v50
    %v121 = vunpack.c.h.b16 %v50
    %v122 = vunpack.c.l.b16 %v51
    %v123 = vunpack.c.h.b16 %v51
    %v124 = vunpack.c.l.b16 %v52
    %v125 = vunpack.c.h.b16 %v52
    %v126 = vunpack.c.l.b16 %v53
    %v127 = vunpack.c.h.b16 %v53
    %v128 = vunpack.c.l.b16 %v54
    %v129 = vunpack.c.h.b16 %v54
    %v130 = vunpack.c.l.b16 %v55
    %v131 = vunpack.c.h.b16 %v55
    %v132 = vunpack.c.l.b16 %v56
    %v133 = vunpack.c.h.b16 %v56
    %v134 = vunpack.c.l.b16 %v57
    %v135 = vunpack.c.h.b16 %v57
    %v136 = vunpack.c.l.b16 %v58
    %v137 = vunpack.c.h.b16 %v58
    %v138 = vunpack.c.l.b16 %v59
    %v139 = vunpack.c.h.b16 %v59
    %v140 = vpack.c.b16 %v110, %v108
    %v141 = vpack.c.b16 %v111, %v109
    %v142 = vpack.c.b16 %v114, %v112
    %v143 = vpack.c.b16 %v115, %v113
    %v144 = vpack.c.b16 %v118, %v116
    %v145 = vpack.c.b16 %v119, %v117
    %v146 = vpack.c.b16 %v122, %v120
    %v147 = vpack.c.b16 %v123, %v121
    %v148 = vpack.c.b16 %v126, %v124
    %v149 = vpack.c.b16 %v127, %v125
    %v150 = vpack.c.b16 %v130, %v128
    %v151 = vpack.c.b16 %v131, %v129
    %v152 = vpack.c.b16 %v134, %v132
    %v153 = vpack.c.b16 %v135, %v133
    %v154 = vpack.c.b16 %v138, %v136
    %v155 = vpack.c.b16 %v139, %v137
    %v204 = vunpack.c.l.b16 %v60
    %v205 = vunpack.c.l.b16 %v61
    %v206 = vunpack.c.l.b16 %v62
    %v207 = vunpack.c.l.b16 %v63
    %v208 = vunpack.c.l.b16 %v64
    %v209 = vunpack.c.l.b16 %v65
    %v210 = vunpack.c.l.b16 %v66
    %v211 = vunpack.c.l.b16 %v67
    %v212 = vunpack.c.l.b16 %v68
    %v213 = vunpack.c.l.b16 %v69
    %v214 = vunpack.c.l.b16 %v70
    %v215 = vunpack.c.l.b16 %v71
    %v216 = vunpack.c.l.b16 %v72
    %v217 = vunpack.c.l.b16 %v73
    %v218 = vunpack.c.l.b16 %v74
    %v219 = vunpack.c.l.b16 %v75
    %v220 = vunpack.c.l.b16 %v76
    %v221 = vunpack.c.l.b16 %v77
    %v222 = vunpack.c.l.b16 %v78
    %v223 = vunpack.c.l.b16 %v79
    %v224 = vunpack.c.l.b16 %v80
    %v225 = vunpack.c.l.b16 %v81
    %v226 = vunpack.c.l.b16 %v82
    %v227 = vunpack.c.l.b16 %v83
    %v228 = vunpack.c.l.b16 %v84
    %v229 = vunpack.c.l.b16 %v85
    %v230 = vunpack.c.l.b16 %v86
    %v231 = vunpack.c.l.b16 %v87
    %v232 = vunpack.c.l.b16 %v88
    %v233 = vunpack.c.l.b16 %v89
    %v234 = vunpack.c.l.b16 %v90
    %v235 = vunpack.c.l.b16 %v91
    %v236 = vpack.c.b16 %v205, %v204
    %v237 = vpack.c.b16 %v207, %v206
    %v238 = vpack.c.b16 %v209, %v208
    %v239 = vpack.c.b16 %v211, %v210
    %v240 = vpack.c.b16 %v213, %v212
    %v241 = vpack.c.b16 %v215, %v214
    %v242 = vpack.c.b16 %v217, %v216
    %v243 = vpack.c.b16 %v219, %v218
    %v244 = vpack.c.b16 %v221, %v220
    %v245 = vpack.c.b16 %v223, %v222
    %v246 = vpack.c.b16 %v225, %v224
    %v247 = vpack.c.b16 %v227, %v226
    %v248 = vpack.c.b16 %v229, %v228
    %v249 = vpack.c.b16 %v231, %v230
    %v250 = vpack.c.b16 %v233, %v232
    %v251 = vpack.c.b16 %v235, %v234
    %268 = vmatprep.subr.bf16.mxu0 0
    %269 = vmatpush1.bf16.msra.mxu0 %v236
    %270 = vmatprep.subr.bf16.mxu0 0
    %271 = vmatpush1.bf16.msra.mxu0 %v237
    %272 = vmatprep.subr.bf16.mxu0 0
    %273 = vmatpush1.bf16.msra.mxu0 %v238
    %274 = vmatprep.subr.bf16.mxu0 0
    %275 = vmatpush1.bf16.msra.mxu0 %v239
    %276 = vmatprep.subr.bf16.mxu0 0
    %277 = vmatpush1.bf16.msra.mxu0 %v240
    %278 = vmatprep.subr.bf16.mxu0 0
    %279 = vmatpush1.bf16.msra.mxu0 %v241
    %280 = vmatprep.subr.bf16.mxu0 0
    %281 = vmatpush1.bf16.msra.mxu0 %v242
    %282 = vmatprep.subr.bf16.mxu0 0
    %283 = vmatpush1.bf16.msra.mxu0 %v243
    %284 = vmatprep.subr.bf16.mxu0 0
    %285 = vmatpush1.bf16.msra.mxu0 %v244
    %286 = vmatprep.subr.bf16.mxu0 0
    %287 = vmatpush1.bf16.msra.mxu0 %v245
    %288 = vmatprep.subr.bf16.mxu0 0
    %289 = vmatpush1.bf16.msra.mxu0 %v246
    %290 = vmatprep.subr.bf16.mxu0 0
    %291 = vmatpush1.bf16.msra.mxu0 %v247
    %292 = vmatprep.subr.bf16.mxu0 0
    %293 = vmatpush1.bf16.msra.mxu0 %v248
    %294 = vmatprep.subr.bf16.mxu0 0
    %295 = vmatpush1.bf16.msra.mxu0 %v249
    %296 = vmatprep.subr.bf16.mxu0 0
    %297 = vmatpush1.bf16.msra.mxu0 %v250
    %298 = vmatprep.subr.bf16.mxu0 0
    %299 = vmatpush1.bf16.msra.mxu0 %v251
    %300 = vmatprep.mubr.bf16.mxu0 %v141
    %301 = vmatmul.mubr.bf16.gmra.mrb[0].mxu0 %v140
    %v302 = vpop.f32.mrb[0].mxu0
    %v303 = vadd.f32 0.0, %v302
    %v304 = vpop.f32.mrb[0].mxu0
    %v305 = vpop.f32.mrb[0].mxu0
    %v306 = vadd.f32 0.0, %v305
    %v307 = vpop.f32.mrb[0].mxu0
    %308 = vmatprep.mubr.bf16.mxu0 %v143
    %309 = vmatmul.mubr.bf16.gmra.mrb[0].mxu0 %v142
    %v310 = vpop.f32.mrb[0].mxu0
    %v311 = vadd.f32 0.0, %v310
    %v312 = vpop.f32.mrb[0].mxu0
    %v313 = vpop.f32.mrb[0].mxu0
    %v314 = vadd.f32 0.0, %v313
    %v315 = vpop.f32.mrb[0].mxu0
    %316 = vmatprep.mubr.bf16.mxu0 %v145
    %317 = vmatmul.mubr.bf16.gmra.mrb[0].mxu0 %v144
    %v318 = vpop.f32.mrb[0].mxu0
    %v319 = vadd.f32 0.0, %v318
    %v320 = vpop.f32.mrb[0].mxu0
    %v321 = vpop.f32.mrb[0].mxu0
    %v322 = vadd.f32 0.0, %v321
    %v323 = vpop.f32.mrb[0].mxu0
    %324 = vmatprep.mubr.bf16.mxu0 %v147
    %325 = vmatmul.mubr.bf16.gmra.mrb[0].mxu0 %v146
    %v326 = vpop.f32.mrb[0].mxu0
    %v327 = vadd.f32 0.0, %v326
    %v328 = vpop.f32.mrb[0].mxu0
    %v329 = vpop.f32.mrb[0].mxu0
    %v330 = vadd.f32 0.0, %v329
    %v331 = vpop.f32.mrb[0].mxu0
    %332 = vmatprep.mubr.bf16.mxu0 %v149
    %333 = vmatmul.mubr.bf16.gmra.mrb[0].mxu0 %v148
    %v334 = vpop.f32.mrb[0].mxu0
    %v335 = vadd.f32 0.0, %v334
    %v336 = vpop.f32.mrb[0].mxu0
    %v337 = vpop.f32.mrb[0].mxu0
    %v338 = vadd.f32 0.0, %v337
    %v339 = vpop.f32.mrb[0].mxu0
    %340 = vmatprep.mubr.bf16.mxu0 %v151
    %341 = vmatmul.mubr.bf16.gmra.mrb[0].mxu0 %v150
    %v342 = vpop.f32.mrb[0].mxu0
    %v343 = vadd.f32 0.0, %v342
    %v344 = vpop.f32.mrb[0].mxu0
    %v345 = vpop.f32.mrb[0].mxu0
    %v346 = vadd.f32 0.0, %v345
    %v347 = vpop.f32.mrb[0].mxu0
    %348 = vmatprep.mubr.bf16.mxu0 %v153
    %349 = vmatmul.mubr.bf16.gmra.mrb[0].mxu0 %v152
    %v350 = vpop.f32.mrb[0].mxu0
    %v351 = vadd.f32 0.0, %v350
    %v352 = vpop.f32.mrb[0].mxu0
    %v353 = vpop.f32.mrb[0].mxu0
    %v354 = vadd.f32 0.0, %v353
    %v355 = vpop.f32.mrb[0].mxu0
    %356 = vmatprep.mubr.bf16.mxu0 %v155
    %357 = vmatmul.mubr.bf16.gmra.mrb[0].mxu0 %v154
    %v358 = vpop.f32.mrb[0].mxu0
    %v359 = vadd.f32 0.0, %v358
    %v360 = vpop.f32.mrb[0].mxu0
    %v361 = vpop.f32.mrb[0].mxu0
    %v362 = vadd.f32 0.0, %v361
    %v363 = vpop.f32.mrb[0].mxu0
    %364 = vdwg.mxu0
    %v365 = vpack.c.bf16 %v306, %v303
    %v366 = vpack.c.bf16 %v314, %v311
    %v367 = vpack.c.bf16 %v322, %v319
    %v368 = vpack.c.bf16 %v330, %v327
    %v369 = vpack.c.bf16 %v338, %v335
    %v370 = vpack.c.bf16 %v346, %v343
    %v371 = vpack.c.bf16 %v354, %v351
    %v372 = vpack.c.bf16 %v362, %v359
    %v381 = vunpack.c.l.b16 %v365
    %v382 = vunpack.c.h.b16 %v365
    %v383 = vunpack.c.l.b16 %v366
    %v384 = vunpack.c.h.b16 %v366
    %v385 = vunpack.c.l.b16 %v367
    %v386 = vunpack.c.h.b16 %v367
    %v387 = vunpack.c.l.b16 %v368
    %v388 = vunpack.c.h.b16 %v368
    %v389 = vunpack.c.l.b16 %v369
    %v390 = vunpack.c.h.b16 %v369
    %v391 = vunpack.c.l.b16 %v370
    %v392 = vunpack.c.h.b16 %v370
    %v393 = vunpack.c.l.b16 %v371
    %v394 = vunpack.c.h.b16 %v371
    %v395 = vunpack.c.l.b16 %v372
    %v396 = vunpack.c.h.b16 %v372
    %v397 = vpack.c.b16 %v381, %v381
    %v398 = vpack.c.b16 %v382, %v382
    %v399 = vpack.c.b16 %v383, %v383
    %v400 = vpack.c.b16 %v384, %v384
    %v401 = vpack.c.b16 %v385, %v385
    %v402 = vpack.c.b16 %v386, %v386
    %v403 = vpack.c.b16 %v387, %v387
    %v404 = vpack.c.b16 %v388, %v388
    %v405 = vpack.c.b16 %v389, %v389
    %v406 = vpack.c.b16 %v390, %v390
    %v407 = vpack.c.b16 %v391, %v391
    %v408 = vpack.c.b16 %v392, %v392
    %v409 = vpack.c.b16 %v393, %v393
    %v410 = vpack.c.b16 %v394, %v394
    %v411 = vpack.c.b16 %v395, %v395
    %v412 = vpack.c.b16 %v396, %v396
    %429 = vst [vmem:[#allocation7] sm:$0xf] %v397
    %430 = vst [vmem:[#allocation7 + $0x4] sm:$0xf] %v398
    %431 = vst [vmem:[#allocation7 + $0x8] sm:$0xf] %v399
    %432 = vst [vmem:[#allocation7 + $0xc] sm:$0xf] %v400
    %433 = vst [vmem:[#allocation7 + $0x10] sm:$0xf] %v401
    %434 = vst [vmem:[#allocation7 + $0x14] sm:$0xf] %v402
    %435 = vst [vmem:[#allocation7 + $0x18] sm:$0xf] %v403
    %436 = vst [vmem:[#allocation7 + $0x1c] sm:$0xf] %v404
    %437 = vst [vmem:[#allocation7 + $0x20] sm:$0xf] %v405
    %438 = vst [vmem:[#allocation7 + $0x24] sm:$0xf] %v406
    %439 = vst [vmem:[#allocation7 + $0x28] sm:$0xf] %v407
    %440 = vst [vmem:[#allocation7 + $0x2c] sm:$0xf] %v408
    %441 = vst [vmem:[#allocation7 + $0x30] sm:$0xf] %v409
    %442 = vst [vmem:[#allocation7 + $0x34] sm:$0xf] %v410
    %443 = vst [vmem:[#allocation7 + $0x38] sm:$0xf] %v411
    %444 = vst [vmem:[#allocation7 + $0x3c] sm:$0xf] %v412
    %v445 = vadd.f32 %v303, %v306
    %v446 = vadd.f32 %v445, %v311
    %v447 = vadd.f32 %v446, %v314
    %v448 = vadd.f32 %v447, %v319
    %v449 = vadd.f32 %v448, %v322
    %v450 = vadd.f32 %v449, %v327
    %v451 = vadd.f32 %v450, %v330
    %v452 = vadd.f32 %v451, %v335
    %v453 = vadd.f32 %v452, %v338
    %v454 = vadd.f32 %v453, %v343
    %v455 = vadd.f32 %v454, %v346
    %v456 = vadd.f32 %v455, %v351
    %v457 = vadd.f32 %v456, %v354
    %v458 = vadd.f32 %v457, %v359
    %v459 = vadd.f32 %v458, %v362
    %v460 = vrot.slane %v459, 4
    %v461 = vadd.f32 %v459, %v460
    %v462 = vrot.slane %v461, 2
    %v463 = vadd.f32 %v461, %v462
    %v464 = vrot.slane %v463, 1
    %v465 = vadd.f32 %v463, %v464
    %v466 = vmul.f32 %v303, %v303
    %v467 = vmul.f32 %v306, %v306
    %v468 = vmul.f32 %v311, %v311
    %v469 = vmul.f32 %v314, %v314
    %v470 = vmul.f32 %v319, %v319
    %v471 = vmul.f32 %v322, %v322
    %v472 = vmul.f32 %v327, %v327
    %v473 = vmul.f32 %v330, %v330
    %v474 = vmul.f32 %v335, %v335
    %v475 = vmul.f32 %v338, %v338
    %v476 = vmul.f32 %v343, %v343
    %v477 = vmul.f32 %v346, %v346
    %v478 = vmul.f32 %v351, %v351
    %v479 = vmul.f32 %v354, %v354
    %v480 = vmul.f32 %v359, %v359
    %v481 = vmul.f32 %v362, %v362
    %v482 = vadd.f32 %v466, %v467
    %v483 = vadd.f32 %v482, %v468
    %v484 = vadd.f32 %v483, %v469
    %v485 = vadd.f32 %v484, %v470
    %v486 = vadd.f32 %v485, %v471
    %v487 = vadd.f32 %v486, %v472
    %v488 = vadd.f32 %v487, %v473
    %v489 = vadd.f32 %v488, %v474
    %v490 = vadd.f32 %v489, %v475
    %v491 = vadd.f32 %v490, %v476
    %v492 = vadd.f32 %v491, %v477
    %v493 = vadd.f32 %v492, %v478
    %v494 = vadd.f32 %v493, %v479
    %v495 = vadd.f32 %v494, %v480
    %v496 = vadd.f32 %v495, %v481
    %v497 = vrot.slane %v496, 4
    %v498 = vadd.f32 %v496, %v497
    %v499 = vrot.slane %v498, 2
    %v500 = vadd.f32 %v498, %v499
    %v501 = vrot.slane %v500, 1
    %v502 = vadd.f32 %v500, %v501
    %vm503 = vcmask 1040384
    %v504 = vsel %vm503, %v465, %v502
    %vm505 = vcmask 1041408
    %v506 = vsel %vm505, %v504, 0.0
    %507 = vst [vmem:[#allocation8] sm:$0xff] %v506
    // Predicated region
    $region18: #{resnet_forward.21} parent=1 // pred_check
      _
    $region19: #{resnet_forward.21} parent=1 // pred_check_branch
      %509 = sbr.rel (0) target = $region21
    $region20: #{resnet_forward.21} parent=1 // pred_region
      %s511 = ssub.s32 1024, 1024
      %512 = vsyncadd [#allocation4], %s511
      %s513 = sshll.u32 [#allocation7], 4
      %s514 = int_to_ptr.vmem [resolvable:$true] %s513
      %519 = dma.vmem_to_hbm [thread:$0]  %s514, 1024, %s2, [#allocation4], 64, 64, 4
    $region21: #{resnet_forward.21} parent=1 // pred_fallthru
      _
    // Predicated region
    $region22: #{resnet_forward.21} parent=1 // pred_check
      _
    $region23: #{resnet_forward.21} parent=1 // pred_check_branch
      %521 = sbr.rel (0) target = $region25
    $region24: #{resnet_forward.21} parent=1 // pred_region
      %s523 = ssub.s32 128, 128
      %524 = vsyncadd [#allocation9], %s523
      %s526 = sshll.u32 [#allocation8], 4
      %s527 = int_to_ptr.vmem [resolvable:$true] %s526
      %529 = dma.vmem_to_hbm [thread:$0]  %s527, 128, %s3, [#allocation9]
    $region25: #{resnet_forward.21} parent=1 // pred_fallthru
      _
    // Predicated region
    $region26: #{resnet_forward.21} parent=1 // pred_check
      _
    $region27: #{resnet_forward.21} parent=1 // pred_check_branch
      %531 = sbr.rel (0) target = $region29
    $region28: #{resnet_forward.21} parent=1 // pred_region
      %532 = dma.done [#allocation4], 1024
    $region29: #{resnet_forward.21} parent=1 // pred_fallthru
      _
    // Predicated region
    $region30: #{resnet_forward.21} parent=1 // pred_check
      _
    $region31: #{resnet_forward.21} parent=1 // pred_check_branch
      %534 = sbr.rel (0) target = $region33
    $region32: #{resnet_forward.21} parent=1 // pred_region
      %535 = dma.done [#allocation9], 128
    $region33: #{resnet_forward.21} parent=1 // pred_fallthru
      _
    %536 = vsyncpa [#allocation3], 1
    %537 = vsyncpa [#allocation6], 1
    %538 = vsyncpa [#allocation4], 1
    %539 = vsyncpa [#allocation9], 1

// kernel: resnet_forward.23
$region0: #{resnet_forward.23}
  #allocation0 [shape = 'u32[]', space=smem, size = 0x4, offset = 0x4, fixed_abs, tag = 'smem constant byte address 0x4 - core index']
  #allocation1 [shape = 'u32[144,128]{1,0:T(1,128)}', space=vmem, size = 0x12000, scoped, tag = 'internal scratch']
  %s0 = inlined_call_operand.hbm [shape: bf16[128,384], index: 0, kind: input, shape index: {}]
  %s1 = inlined_call_operand.hbm [shape: bf16[384,128], index: 1, kind: input, shape index: {}]
  %s2 = inlined_call_operand.hbm [shape: bf16[128,128], index: 2, kind: input, shape index: {}]
  %s3 = inlined_call_operand.hbm [shape: bf16[128,128], index: 3, kind: output, shape index: {0}]
  %s4 = inlined_call_operand.hbm [shape: f32[1,8,128], index: 4, kind: output, shape index: {1}]
  %5 = xla_tuple %s3, %s4
  %s6 = sld [smem:[#allocation0]]
  $region42: #{resnet_forward.23} parent=0
    _
  %s8 = ssub.s32 1, %s6
  %s9 = scalar_select 0, %s8, %s6
  $region1: #{resnet_forward.23} parent=0
    #allocation2 [shape = 'u8[98304]{0}', space=vmem, size = 0x18000, scoped, tag = 'input window, operand 0, single buffered']
    #allocation3 [shape = 's32[1]{0}', space=sflag, size = 0x4, scoped, tag = 'scoped memory for resnet_forward.23']
    #allocation4 [shape = 's32[1]{0}', space=sflag, size = 0x4, scoped, tag = 'scoped memory for resnet_forward.23']
    #allocation5 [shape = 'u8[98304]{0}', space=vmem, size = 0x18000, scoped, tag = 'input window, operand 1, single buffered']
    #allocation6 [shape = 's32[1]{0}', space=sflag, size = 0x4, scoped, tag = 'scoped memory for resnet_forward.23']
    #allocation7 [shape = 'u8[32768]{0}', space=vmem, size = 0x8000, scoped, tag = 'input window, operand 2, single buffered']
    #allocation8 [shape = 'u8[32768]{0}', space=vmem, size = 0x8000, scoped, tag = 'output window, operand 0, single buffered']
    #allocation9 [shape = 'u8[4096]{0}', space=vmem, size = 0x1000, scoped, tag = 'output window, operand 1, single buffered']
    #allocation10 [shape = 's32[1]{0}', space=sflag, size = 0x4, scoped, tag = 'scoped memory for resnet_forward.23']
    %10 = vsyncpa [#allocation3], 0
    %11 = vsyncpa [#allocation6], 0
    %12 = vsyncpa [#allocation4], 0
    %13 = vsyncpa [#allocation10], 0
    // Predicated region
    $region2: #{resnet_forward.23} parent=1 // pred_check
      _
    $region3: #{resnet_forward.23} parent=1 // pred_check_branch
      %15 = sbr.rel (0) target = $region5
    $region4: #{resnet_forward.23} parent=1 // pred_region
      %s17 = ssub.s32 3072, 3072
      %18 = vsyncadd [#allocation3], %s17
      %s19 = sshll.u32 [#allocation2], 4
      %s20 = int_to_ptr.vmem [resolvable:$true] %s19
      %25 = dma.hbm_to_vmem [thread:$0]  %s0, 3072, %s20, [#allocation3], 192, 192, 12
    $region5: #{resnet_forward.23} parent=1 // pred_fallthru
      _
    // Predicated region
    $region6: #{resnet_forward.23} parent=1 // pred_check
      _
    $region7: #{resnet_forward.23} parent=1 // pred_check_branch
      %27 = sbr.rel (0) target = $region9
    $region8: #{resnet_forward.23} parent=1 // pred_region
      %s29 = ssub.s32 3072, 3072
      %30 = vsyncadd [#allocation6], %s29
      %s31 = sshll.u32 [#allocation5], 4
      %s32 = int_to_ptr.vmem [resolvable:$true] %s31
      %37 = dma.hbm_to_vmem [thread:$0]  %s1, 3072, %s32, [#allocation6], 64, 64, 4
    $region9: #{resnet_forward.23} parent=1 // pred_fallthru
      _
    // Predicated region
    $region10: #{resnet_forward.23} parent=1 // pred_check
      _
    $region11: #{resnet_forward.23} parent=1 // pred_check_branch
      %39 = sbr.rel (0) target = $region13
    $region12: #{resnet_forward.23} parent=1 // pred_region
      %s41 = ssub.s32 1024, 1024
      %42 = vsyncadd [#allocation6], %s41
      %s43 = sshll.u32 [#allocation7], 4
      %s44 = int_to_ptr.vmem [resolvable:$true] %s43
      %49 = dma.hbm_to_vmem [thread:$0]  %s2, 1024, %s44, [#allocation6], 64, 64, 4
    $region13: #{resnet_forward.23} parent=1 // pred_fallthru
      _
    // Predicated region
    $region14: #{resnet_forward.23} parent=1 // pred_check
      _
    $region15: #{resnet_forward.23} parent=1 // pred_check_branch
      %51 = sbr.rel (0) target = $region17
    $region16: #{resnet_forward.23} parent=1 // pred_region
      %52 = dma.done [#allocation3], 3072
    $region17: #{resnet_forward.23} parent=1 // pred_fallthru
      _
    // Predicated region
    $region18: #{resnet_forward.23} parent=1 // pred_check
      _
    $region19: #{resnet_forward.23} parent=1 // pred_check_branch
      %54 = sbr.rel (0) target = $region21
    $region20: #{resnet_forward.23} parent=1 // pred_region
      %55 = dma.done [#allocation6], 3072
    $region21: #{resnet_forward.23} parent=1 // pred_fallthru
      _
    // Predicated region
    $region22: #{resnet_forward.23} parent=1 // pred_check
      _
    $region23: #{resnet_forward.23} parent=1 // pred_check_branch
      %57 = sbr.rel (0) target = $region25
    $region24: #{resnet_forward.23} parent=1 // pred_region
      %58 = dma.done [#allocation6], 1024
    $region25: #{resnet_forward.23} parent=1 // pred_fallthru
      _
    %v60 = vld [vmem:[#allocation2] sm:$0xff]
    %v61 = vld [vmem:[#allocation2 + $0x8] sm:$0xf]
    %v62 = vld [vmem:[#allocation2 + $0xc] sm:$0xff]
    %v63 = vld [vmem:[#allocation2 + $0x14] sm:$0xf]
    %v64 = vld [vmem:[#allocation2 + $0x18] sm:$0xff]
    %v65 = vld [vmem:[#allocation2 + $0x20] sm:$0xf]
    %v66 = vld [vmem:[#allocation2 + $0x24] sm:$0xff]
    %v67 = vld [vmem:[#allocation2 + $0x2c] sm:$0xf]
    %v68 = vld [vmem:[#allocation2 + $0x30] sm:$0xff]
    %v69 = vld [vmem:[#allocation2 + $0x38] sm:$0xf]
    %v70 = vld [vmem:[#allocation2 + $0x3c] sm:$0xff]
    %v71 = vld [vmem:[#allocation2 + $0x44] sm:$0xf]
    %v72 = vld [vmem:[#allocation2 + $0x48] sm:$0xff]
    %v73 = vld [vmem:[#allocation2 + $0x50] sm:$0xf]
    %v74 = vld [vmem:[#allocation2 + $0x54] sm:$0xff]
    %v75 = vld [vmem:[#allocation2 + $0x5c] sm:$0xf]
    %v76 = vld [vmem:[#allocation2 + $0x60] sm:$0xff]
    %v77 = vld [vmem:[#allocation2 + $0x68] sm:$0xf]
    %v78 = vld [vmem:[#allocation2 + $0x6c] sm:$0xff]
    %v79 = vld [vmem:[#allocation2 + $0x74] sm:$0xf]
    %v80 = vld [vmem:[#allocation2 + $0x78] sm:$0xff]
    %v81 = vld [vmem:[#allocation2 + $0x80] sm:$0xf]
    %v82 = vld [vmem:[#allocation2 + $0x84] sm:$0xff]
    %v83 = vld [vmem:[#allocation2 + $0x8c] sm:$0xf]
    %v84 = vld [vmem:[#allocation2 + $0x90] sm:$0xff]
    %v85 = vld [vmem:[#allocation2 + $0x98] sm:$0xf]
    %v86 = vld [vmem:[#allocation2 + $0x9c] sm:$0xff]
    %v87 = vld [vmem:[#allocation2 + $0xa4] sm:$0xf]
    %v88 = vld [vmem:[#allocation2 + $0xa8] sm:$0xff]
    %v89 = vld [vmem:[#allocation2 + $0xb0] sm:$0xf]
    %v90 = vld [vmem:[#allocation2 + $0xb4] sm:$0xff]
    %v91 = vld [vmem:[#allocation2 + $0xbc] sm:$0xf]
    %v92 = vld [vmem:[#allocation5] sm:$0xf]
    %v93 = vld [vmem:[#allocation5 + $0x4] sm:$0xf]
    %v94 = vld [vmem:[#allocation5 + $0x8] sm:$0xf]
    %v95 = vld [vmem:[#allocation5 + $0xc] sm:$0xf]
    %v96 = vld [vmem:[#allocation5 + $0x10] sm:$0xf]
    %v97 = vld [vmem:[#allocation5 + $0x14] sm:$0xf]
    %v98 = vld [vmem:[#allocation5 + $0x18] sm:$0xf]
    %v99 = vld [vmem:[#allocation5 + $0x1c] sm:$0xf]
    %v100 = vld [vmem:[#allocation5 + $0x20] sm:$0xf]
    %v101 = vld [vmem:[#allocation5 + $0x24] sm:$0xf]
    %v102 = vld [vmem:[#allocation5 + $0x28] sm:$0xf]
    %v103 = vld [vmem:[#allocation5 + $0x2c] sm:$0xf]
    %v104 = vld [vmem:[#allocation5 + $0x30] sm:$0xf]
    %v105 = vld [vmem:[#allocation5 + $0x34] sm:$0xf]
    %v106 = vld [vmem:[#allocation5 + $0x38] sm:$0xf]
    %v107 = vld [vmem:[#allocation5 + $0x3c] sm:$0xf]
    %v108 = vld [vmem:[#allocation5 + $0x40] sm:$0xf]
    %v109 = vld [vmem:[#allocation5 + $0x44] sm:$0xf]
    %v110 = vld [vmem:[#allocation5 + $0x48] sm:$0xf]
    %v111 = vld [vmem:[#allocation5 + $0x4c] sm:$0xf]
    %v112 = vld [vmem:[#allocation5 + $0x50] sm:$0xf]
    %v113 = vld [vmem:[#allocation5 + $0x54] sm:$0xf]
    %v114 = vld [vmem:[#allocation5 + $0x58] sm:$0xf]
    %v115 = vld [vmem:[#allocation5 + $0x5c] sm:$0xf]
    %v116 = vld [vmem:[#allocation5 + $0x60] sm:$0xf]
    %v117 = vld [vmem:[#allocation5 + $0x64] sm:$0xf]
    %v118 = vld [vmem:[#allocation5 + $0x68] sm:$0xf]
    %v119 = vld [vmem:[#allocation5 + $0x6c] sm:$0xf]
    %v120 = vld [vmem:[#allocation5 + $0x70] sm:$0xf]
    %v121 = vld [vmem:[#allocation5 + $0x74] sm:$0xf]
    %v122 = vld [vmem:[#allocation5 + $0x78] sm:$0xf]
    %v123 = vld [vmem:[#allocation5 + $0x7c] sm:$0xf]
    %v124 = vld [vmem:[#allocation5 + $0x80] sm:$0xf]
    %v125 = vld [vmem:[#allocation5 + $0x84] sm:$0xf]
    %v126 = vld [vmem:[#allocation5 + $0x88] sm:$0xf]
    %v127 = vld [vmem:[#allocation5 + $0x8c] sm:$0xf]
    %v128 = vld [vmem:[#allocation5 + $0x90] sm:$0xf]
    %v129 = vld [vmem:[#allocation5 + $0x94] sm:$0xf]
    %v130 = vld [vmem:[#allocation5 + $0x98] sm:$0xf]
    %v131 = vld [vmem:[#allocation5 + $0x9c] sm:$0xf]
    %v132 = vld [vmem:[#allocation5 + $0xa0] sm:$0xf]
    %v133 = vld [vmem:[#allocation5 + $0xa4] sm:$0xf]
    %v134 = vld [vmem:[#allocation5 + $0xa8] sm:$0xf]
    %v135 = vld [vmem:[#allocation5 + $0xac] sm:$0xf]
    %v136 = vld [vmem:[#allocation5 + $0xb0] sm:$0xf]
    %v137 = vld [vmem:[#allocation5 + $0xb4] sm:$0xf]
    %v138 = vld [vmem:[#allocation5 + $0xb8] sm:$0xf]
    %v139 = vld [vmem:[#allocation5 + $0xbc] sm:$0xf]
    %v172 = vunpack.c.l.b16 %v60
    %v173 = vunpack.c.h.b16 %v60
    %v174 = vunpack.c.l.b16 %v61
    %v175 = vunpack.c.l.b16 %v62
    %v176 = vunpack.c.h.b16 %v62
    %v177 = vunpack.c.l.b16 %v63
    %v178 = vunpack.c.l.b16 %v64
    %v179 = vunpack.c.h.b16 %v64
    %v180 = vunpack.c.l.b16 %v65
    %v181 = vunpack.c.l.b16 %v66
    %v182 = vunpack.c.h.b16 %v66
    %v183 = vunpack.c.l.b16 %v67
    %v184 = vunpack.c.l.b16 %v68
    %v185 = vunpack.c.h.b16 %v68
    %v186 = vunpack.c.l.b16 %v69
    %v187 = vunpack.c.l.b16 %v70
    %v188 = vunpack.c.h.b16 %v70
    %v189 = vunpack.c.l.b16 %v71
    %v190 = vunpack.c.l.b16 %v72
    %v191 = vunpack.c.h.b16 %v72
    %v192 = vunpack.c.l.b16 %v73
    %v193 = vunpack.c.l.b16 %v74
    %v194 = vunpack.c.h.b16 %v74
    %v195 = vunpack.c.l.b16 %v75
    %v196 = vunpack.c.l.b16 %v76
    %v197 = vunpack.c.h.b16 %v76
    %v198 = vunpack.c.l.b16 %v77
    %v199 = vunpack.c.l.b16 %v78
    %v200 = vunpack.c.h.b16 %v78
    %v201 = vunpack.c.l.b16 %v79
    %v202 = vunpack.c.l.b16 %v80
    %v203 = vunpack.c.h.b16 %v80
    %v204 = vunpack.c.l.b16 %v81
    %v205 = vunpack.c.l.b16 %v82
    %v206 = vunpack.c.h.b16 %v82
    %v207 = vunpack.c.l.b16 %v83
    %v208 = vunpack.c.l.b16 %v84
    %v209 = vunpack.c.h.b16 %v84
    %v210 = vunpack.c.l.b16 %v85
    %v211 = vunpack.c.l.b16 %v86
    %v212 = vunpack.c.h.b16 %v86
    %v213 = vunpack.c.l.b16 %v87
    %v214 = vunpack.c.l.b16 %v88
    %v215 = vunpack.c.h.b16 %v88
    %v216 = vunpack.c.l.b16 %v89
    %v217 = vunpack.c.l.b16 %v90
    %v218 = vunpack.c.h.b16 %v90
    %v219 = vunpack.c.l.b16 %v91
    %v220 = vpack.c.b16 %v175, %v172
    %v221 = vpack.c.b16 %v176, %v173
    %v222 = vpack.c.b16 %v177, %v174
    %v223 = vpack.c.b16 %v181, %v178
    %v224 = vpack.c.b16 %v182, %v179
    %v225 = vpack.c.b16 %v183, %v180
    %v226 = vpack.c.b16 %v187, %v184
    %v227 = vpack.c.b16 %v188, %v185
    %v228 = vpack.c.b16 %v189, %v186
    %v229 = vpack.c.b16 %v193, %v190
    %v230 = vpack.c.b16 %v194, %v191
    %v231 = vpack.c.b16 %v195, %v192
    %v232 = vpack.c.b16 %v199, %v196
    %v233 = vpack.c.b16 %v200, %v197
    %v234 = vpack.c.b16 %v201, %v198
    %v235 = vpack.c.b16 %v205, %v202
    %v236 = vpack.c.b16 %v206, %v203
    %v237 = vpack.c.b16 %v207, %v204
    %v238 = vpack.c.b16 %v211, %v208
    %v239 = vpack.c.b16 %v212, %v209
    %v240 = vpack.c.b16 %v213, %v210
    %v241 = vpack.c.b16 %v217, %v214
    %v242 = vpack.c.b16 %v218, %v215
    %v243 = vpack.c.b16 %v219, %v216
    %v316 = vunpack.c.l.b16 %v92
    %v317 = vunpack.c.l.b16 %v93
    %v318 = vunpack.c.l.b16 %v94
    %v319 = vunpack.c.l.b16 %v95
    %v320 = vunpack.c.l.b16 %v96
    %v321 = vunpack.c.l.b16 %v97
    %v322 = vunpack.c.l.b16 %v98
    %v323 = vunpack.c.l.b16 %v99
    %v324 = vunpack.c.l.b16 %v100
    %v325 = vunpack.c.l.b16 %v101
    %v326 = vunpack.c.l.b16 %v102
    %v327 = vunpack.c.l.b16 %v103
    %v328 = vunpack.c.l.b16 %v104
    %v329 = vunpack.c.l.b16 %v105
    %v330 = vunpack.c.l.b16 %v106
    %v331 = vunpack.c.l.b16 %v107
    %v332 = vunpack.c.l.b16 %v108
    %v333 = vunpack.c.l.b16 %v109
    %v334 = vunpack.c.l.b16 %v110
    %v335 = vunpack.c.l.b16 %v111
    %v336 = vunpack.c.l.b16 %v112
    %v337 = vunpack.c.l.b16 %v113
    %v338 = vunpack.c.l.b16 %v114
    %v339 = vunpack.c.l.b16 %v115
    %v340 = vunpack.c.l.b16 %v116
    %v341 = vunpack.c.l.b16 %v117
    %v342 = vunpack.c.l.b16 %v118
    %v343 = vunpack.c.l.b16 %v119
    %v344 = vunpack.c.l.b16 %v120
    %v345 = vunpack.c.l.b16 %v121
    %v346 = vunpack.c.l.b16 %v122
    %v347 = vunpack.c.l.b16 %v123
    %v348 = vunpack.c.l.b16 %v124
    %v349 = vunpack.c.l.b16 %v125
    %v350 = vunpack.c.l.b16 %v126
    %v351 = vunpack.c.l.b16 %v127
    %v352 = vunpack.c.l.b16 %v128
    %v353 = vunpack.c.l.b16 %v129
    %v354 = vunpack.c.l.b16 %v130
    %v355 = vunpack.c.l.b16 %v131
    %v356 = vunpack.c.l.b16 %v132
    %v357 = vunpack.c.l.b16 %v133
    %v358 = vunpack.c.l.b16 %v134
    %v359 = vunpack.c.l.b16 %v135
    %v360 = vunpack.c.l.b16 %v136
    %v361 = vunpack.c.l.b16 %v137
    %v362 = vunpack.c.l.b16 %v138
    %v363 = vunpack.c.l.b16 %v139
    %v364 = vpack.c.b16 %v317, %v316
    %v365 = vpack.c.b16 %v319, %v318
    %v366 = vpack.c.b16 %v321, %v320
    %v367 = vpack.c.b16 %v323, %v322
    %v368 = vpack.c.b16 %v325, %v324
    %v369 = vpack.c.b16 %v327, %v326
    %v370 = vpack.c.b16 %v329, %v328
    %v371 = vpack.c.b16 %v331, %v330
    %v372 = vpack.c.b16 %v333, %v332
    %v373 = vpack.c.b16 %v335, %v334
    %v374 = vpack.c.b16 %v337, %v336
    %v375 = vpack.c.b16 %v339, %v338
    %v376 = vpack.c.b16 %v341, %v340
    %v377 = vpack.c.b16 %v343, %v342
    %v378 = vpack.c.b16 %v345, %v344
    %v379 = vpack.c.b16 %v347, %v346
    %v380 = vpack.c.b16 %v349, %v348
    %v381 = vpack.c.b16 %v351, %v350
    %v382 = vpack.c.b16 %v353, %v352
    %v383 = vpack.c.b16 %v355, %v354
    %v384 = vpack.c.b16 %v357, %v356
    %v385 = vpack.c.b16 %v359, %v358
    %v386 = vpack.c.b16 %v361, %v360
    %v387 = vpack.c.b16 %v363, %v362
    %412 = vmatprep.subr.bf16.mxu0 0
    %413 = vmatpush1.bf16.msra.mxu0 %v364
    %414 = vmatprep.subr.bf16.mxu0 0
    %415 = vmatpush1.bf16.msra.mxu0 %v365
    %416 = vmatprep.subr.bf16.mxu0 0
    %417 = vmatpush1.bf16.msra.mxu0 %v366
    %418 = vmatprep.subr.bf16.mxu0 0
    %419 = vmatpush1.bf16.msra.mxu0 %v367
    %420 = vmatprep.subr.bf16.mxu0 0
    %421 = vmatpush1.bf16.msra.mxu0 %v368
    %422 = vmatprep.subr.bf16.mxu0 0
    %423 = vmatpush1.bf16.msra.mxu0 %v369
    %424 = vmatprep.subr.bf16.mxu0 0
    %425 = vmatpush1.bf16.msra.mxu0 %v370
    %426 = vmatprep.subr.bf16.mxu0 0
    %427 = vmatpush1.bf16.msra.mxu0 %v371
    %428 = vmatprep.subr.bf16.mxu0 0
    %429 = vmatpush1.bf16.msra.mxu0 %v372
    %430 = vmatprep.subr.bf16.mxu0 0
    %431 = vmatpush1.bf16.msra.mxu0 %v373
    %432 = vmatprep.subr.bf16.mxu0 0
    %433 = vmatpush1.bf16.msra.mxu0 %v374
    %434 = vmatprep.subr.bf16.mxu0 0
    %435 = vmatpush1.bf16.msra.mxu0 %v375
    %436 = vmatprep.subr.bf16.mxu0 0
    %437 = vmatpush1.bf16.msra.mxu0 %v376
    %438 = vmatprep.subr.bf16.mxu0 0
    %439 = vmatpush1.bf16.msra.mxu0 %v377
    %440 = vmatprep.subr.bf16.mxu0 0
    %441 = vmatpush1.bf16.msra.mxu0 %v378
    %442 = vmatprep.subr.bf16.mxu0 0
    %443 = vmatpush1.bf16.msra.mxu0 %v379
    %444 = vmatprep.mubr.bf16.mxu0 %v221
    %445 = vmatmul.mubr.bf16.gmra.mrb[0].mxu0 %v220
    %v446 = vpop.f32.mrb[0].mxu0
    %v447 = vadd.f32 0.0, %v446
    %v448 = vpop.f32.mrb[0].mxu0
    %v449 = vpop.f32.mrb[0].mxu0
    %v450 = vadd.f32 0.0, %v449
    %v451 = vpop.f32.mrb[0].mxu0
    %452 = vmatprep.mubr.bf16.mxu0 %v224
    %453 = vmatmul.mubr.bf16.gmra.mrb[0].mxu0 %v223
    %v454 = vpop.f32.mrb[0].mxu0
    %v455 = vadd.f32 0.0, %v454
    %v456 = vpop.f32.mrb[0].mxu0
    %v457 = vpop.f32.mrb[0].mxu0
    %v458 = vadd.f32 0.0, %v457
    %v459 = vpop.f32.mrb[0].mxu0
    %460 = vmatprep.mubr.bf16.mxu0 %v227
    %461 = vmatmul.mubr.bf16.gmra.mrb[0].mxu0 %v226
    %v462 = vpop.f32.mrb[0].mxu0
    %v463 = vadd.f32 0.0, %v462
    %v464 = vpop.f32.mrb[0].mxu0
    %v465 = vpop.f32.mrb[0].mxu0
    %v466 = vadd.f32 0.0, %v465
    %v467 = vpop.f32.mrb[0].mxu0
    %468 = vmatprep.mubr.bf16.mxu0 %v230
    %469 = vmatmul.mubr.bf16.gmra.mrb[0].mxu0 %v229
    %v470 = vpop.f32.mrb[0].mxu0
    %v471 = vadd.f32 0.0, %v470
    %v472 = vpop.f32.mrb[0].mxu0
    %v473 = vpop.f32.mrb[0].mxu0
    %v474 = vadd.f32 0.0, %v473
    %v475 = vpop.f32.mrb[0].mxu0
    %476 = vmatprep.mubr.bf16.mxu0 %v233
    %477 = vmatmul.mubr.bf16.gmra.mrb[0].mxu0 %v232
    %v478 = vpop.f32.mrb[0].mxu0
    %v479 = vadd.f32 0.0, %v478
    %v480 = vpop.f32.mrb[0].mxu0
    %v481 = vpop.f32.mrb[0].mxu0
    %v482 = vadd.f32 0.0, %v481
    %v483 = vpop.f32.mrb[0].mxu0
    %484 = vmatprep.mubr.bf16.mxu0 %v236
    %485 = vmatmul.mubr.bf16.gmra.mrb[0].mxu0 %v235
    %v486 = vpop.f32.mrb[0].mxu0
    %v487 = vadd.f32 0.0, %v486
    %v488 = vpop.f32.mrb[0].mxu0
    %v489 = vpop.f32.mrb[0].mxu0
    %v490 = vadd.f32 0.0, %v489
    %v491 = vpop.f32.mrb[0].mxu0
    %492 = vmatprep.mubr.bf16.mxu0 %v239
    %493 = vmatmul.mubr.bf16.gmra.mrb[0].mxu0 %v238
    %v494 = vpop.f32.mrb[0].mxu0
    %v495 = vadd.f32 0.0, %v494
    %v496 = vpop.f32.mrb[0].mxu0
    %v497 = vpop.f32.mrb[0].mxu0
    %v498 = vadd.f32 0.0, %v497
    %v499 = vpop.f32.mrb[0].mxu0
    %500 = vmatprep.mubr.bf16.mxu0 %v242
    %501 = vmatmul.mubr.bf16.gmra.mrb[0].mxu0 %v241
    %v502 = vpop.f32.mrb[0].mxu0
    %v503 = vadd.f32 0.0, %v502
    %v504 = vpop.f32.mrb[0].mxu0
    %v505 = vpop.f32.mrb[0].mxu0
    %v506 = vadd.f32 0.0, %v505
    %v507 = vpop.f32.mrb[0].mxu0
    %508 = vdwg.mxu0
    %509 = vmatprep.subr.bf16.mxu0 0
    %510 = vmatpush1.bf16.msra.mxu0 %v380
    %511 = vmatprep.subr.bf16.mxu0 0
    %512 = vmatpush1.bf16.msra.mxu0 %v381
    %513 = vmatprep.subr.bf16.mxu0 0
    %514 = vmatpush1.bf16.msra.mxu0 %v382
    %515 = vmatprep.subr.bf16.mxu0 0
    %516 = vmatpush1.bf16.msra.mxu0 %v383
    %517 = vmatprep.subr.bf16.mxu0 0
    %518 = vmatpush1.bf16.msra.mxu0 %v384
    %519 = vmatprep.subr.bf16.mxu0 0
    %520 = vmatpush1.bf16.msra.mxu0 %v385
    %521 = vmatprep.subr.bf16.mxu0 0
    %522 = vmatpush1.bf16.msra.mxu0 %v386
    %523 = vmatprep.subr.bf16.mxu0 0
    %524 = vmatpush1.bf16.msra.mxu0 %v387
    %525 = vmatprep.subr.bf16.mxu0 0
    %526 = vmatpush1.bf16.msra.mxu0 0
    %527 = vmatprep.subr.bf16.mxu0 0
    %528 = vmatpush1.bf16.msra.mxu0 0
    %529 = vmatprep.subr.bf16.mxu0 0
    %530 = vmatpush1.bf16.msra.mxu0 0
    %531 = vmatprep.subr.bf16.mxu0 0
    %532 = vmatpush1.bf16.msra.mxu0 0
    %533 = vmatprep.subr.bf16.mxu0 0
    %534 = vmatpush1.bf16.msra.mxu0 0
    %535 = vmatprep.subr.bf16.mxu0 0
    %536 = vmatpush1.bf16.msra.mxu0 0
    %537 = vmatprep.subr.bf16.mxu0 0
    %538 = vmatpush1.bf16.msra.mxu0 0
    %539 = vmatprep.subr.bf16.mxu0 0
    %540 = vmatpush1.bf16.msra.mxu0 0
    %541 = vmatprep.mubr.bf16.mxu0 0
    %542 = vmatmul.mubr.bf16.gmra.mrb[0].mxu0 %v222
    %v543 = vpop.f32.mrb[0].mxu0
    %v544 = vadd.f32 %v447, %v543
    %v545 = vpop.f32.mrb[0].mxu0
    %v546 = vpop.f32.mrb[0].mxu0
    %v547 = vadd.f32 %v450, %v546
    %v548 = vpop.f32.mrb[0].mxu0
    %549 = vmatprep.mubr.bf16.mxu0 0
    %550 = vmatmul.mubr.bf16.gmra.mrb[0].mxu0 %v225
    %v551 = vpop.f32.mrb[0].mxu0
    %v552 = vadd.f32 %v455, %v551
    %v553 = vpop.f32.mrb[0].mxu0
    %v554 = vpop.f32.mrb[0].mxu0
    %v555 = vadd.f32 %v458, %v554
    %v556 = vpop.f32.mrb[0].mxu0
    %557 = vmatprep.mubr.bf16.mxu0 0
    %558 = vmatmul.mubr.bf16.gmra.mrb[0].mxu0 %v228
    %v559 = vpop.f32.mrb[0].mxu0
    %v560 = vadd.f32 %v463, %v559
    %v561 = vpop.f32.mrb[0].mxu0
    %v562 = vpop.f32.mrb[0].mxu0
    %v563 = vadd.f32 %v466, %v562
    %v564 = vpop.f32.mrb[0].mxu0
    %565 = vmatprep.mubr.bf16.mxu0 0
    %566 = vmatmul.mubr.bf16.gmra.mrb[0].mxu0 %v231
    %v567 = vpop.f32.mrb[0].mxu0
    %v568 = vadd.f32 %v471, %v567
    %v569 = vpop.f32.mrb[0].mxu0
    %v570 = vpop.f32.mrb[0].mxu0
    %v571 = vadd.f32 %v474, %v570
    %v572 = vpop.f32.mrb[0].mxu0
    %573 = vmatprep.mubr.bf16.mxu0 0
    %574 = vmatmul.mubr.bf16.gmra.mrb[0].mxu0 %v234
    %v575 = vpop.f32.mrb[0].mxu0
    %v576 = vadd.f32 %v479, %v575
    %v577 = vpop.f32.mrb[0].mxu0
    %v578 = vpop.f32.mrb[0].mxu0
    %v579 = vadd.f32 %v482, %v578
    %v580 = vpop.f32.mrb[0].mxu0
    %581 = vmatprep.mubr.bf16.mxu0 0
    %582 = vmatmul.mubr.bf16.gmra.mrb[0].mxu0 %v237
    %v583 = vpop.f32.mrb[0].mxu0
    %v584 = vadd.f32 %v487, %v583
    %v585 = vpop.f32.mrb[0].mxu0
    %v586 = vpop.f32.mrb[0].mxu0
    %v587 = vadd.f32 %v490, %v586
    %v588 = vpop.f32.mrb[0].mxu0
    %589 = vmatprep.mubr.bf16.mxu0 0
    %590 = vmatmul.mubr.bf16.gmra.mrb[0].mxu0 %v240
    %v591 = vpop.f32.mrb[0].mxu0
    %v592 = vadd.f32 %v495, %v591
    %v593 = vpop.f32.mrb[0].mxu0
    %v594 = vpop.f32.mrb[0].mxu0
    %v595 = vadd.f32 %v498, %v594
    %v596 = vpop.f32.mrb[0].mxu0
    %597 = vmatprep.mubr.bf16.mxu0 0
    %598 = vmatmul.mubr.bf16.gmra.mrb[0].mxu0 %v243
    %v599 = vpop.f32.mrb[0].mxu0
    %v600 = vadd.f32 %v503, %v599
    %v601 = vpop.f32.mrb[0].mxu0
    %v602 = vpop.f32.mrb[0].mxu0
    %v603 = vadd.f32 %v506, %v602
    %v604 = vpop.f32.mrb[0].mxu0
    %605 = vdwg.mxu0
    %v606 = vpack.c.bf16 %v547, %v544
    %v607 = vpack.c.bf16 %v555, %v552
    %v608 = vpack.c.bf16 %v563, %v560
    %v609 = vpack.c.bf16 %v571, %v568
    %v610 = vpack.c.bf16 %v579, %v576
    %v611 = vpack.c.bf16 %v587, %v584
    %v612 = vpack.c.bf16 %v595, %v592
    %v613 = vpack.c.bf16 %v603, %v600
    %v622 = vunpack.c.l.b16 %v606
    %v623 = vunpack.c.h.b16 %v606
    %v624 = vunpack.c.l.b16 %v607
    %v625 = vunpack.c.h.b16 %v607
    %v626 = vunpack.c.l.b16 %v608
    %v627 = vunpack.c.h.b16 %v608
    %v628 = vunpack.c.l.b16 %v609
    %v629 = vunpack.c.h.b16 %v609
    %v630 = vunpack.c.l.b16 %v610
    %v631 = vunpack.c.h.b16 %v610
    %v632 = vunpack.c.l.b16 %v611
    %v633 = vunpack.c.h.b16 %v611
    %v634 = vunpack.c.l.b16 %v612
    %v635 = vunpack.c.h.b16 %v612
    %v636 = vunpack.c.l.b16 %v613
    %v637 = vunpack.c.h.b16 %v613
    %v638 = vpack.c.b16 %v622, %v622
    %v639 = vpack.c.b16 %v623, %v623
    %v640 = vpack.c.b16 %v624, %v624
    %v641 = vpack.c.b16 %v625, %v625
    %v642 = vpack.c.b16 %v626, %v626
    %v643 = vpack.c.b16 %v627, %v627
    %v644 = vpack.c.b16 %v628, %v628
    %v645 = vpack.c.b16 %v629, %v629
    %v646 = vpack.c.b16 %v630, %v630
    %v647 = vpack.c.b16 %v631, %v631
    %v648 = vpack.c.b16 %v632, %v632
    %v649 = vpack.c.b16 %v633, %v633
    %v650 = vpack.c.b16 %v634, %v634
    %v651 = vpack.c.b16 %v635, %v635
    %v652 = vpack.c.b16 %v636, %v636
    %v653 = vpack.c.b16 %v637, %v637
    %670 = vst [vmem:[#allocation8] sm:$0xf] %v638
    %671 = vst [vmem:[#allocation8 + $0x4] sm:$0xf] %v639
    %672 = vst [vmem:[#allocation8 + $0x8] sm:$0xf] %v640
    %673 = vst [vmem:[#allocation8 + $0xc] sm:$0xf] %v641
    %674 = vst [vmem:[#allocation8 + $0x10] sm:$0xf] %v642
    %675 = vst [vmem:[#allocation8 + $0x14] sm:$0xf] %v643
    %676 = vst [vmem:[#allocation8 + $0x18] sm:$0xf] %v644
    %677 = vst [vmem:[#allocation8 + $0x1c] sm:$0xf] %v645
    %678 = vst [vmem:[#allocation8 + $0x20] sm:$0xf] %v646
    %679 = vst [vmem:[#allocation8 + $0x24] sm:$0xf] %v647
    %680 = vst [vmem:[#allocation8 + $0x28] sm:$0xf] %v648
    %681 = vst [vmem:[#allocation8 + $0x2c] sm:$0xf] %v649
    %682 = vst [vmem:[#allocation8 + $0x30] sm:$0xf] %v650
    %683 = vst [vmem:[#allocation8 + $0x34] sm:$0xf] %v651
    %684 = vst [vmem:[#allocation8 + $0x38] sm:$0xf] %v652
    %685 = vst [vmem:[#allocation8 + $0x3c] sm:$0xf] %v653
    %v686 = vld [vmem:[#allocation7] sm:$0xf]
    %v687 = vld [vmem:[#allocation7 + $0x4] sm:$0xf]
    %v688 = vld [vmem:[#allocation7 + $0x8] sm:$0xf]
    %v689 = vld [vmem:[#allocation7 + $0xc] sm:$0xf]
    %v690 = vld [vmem:[#allocation7 + $0x10] sm:$0xf]
    %v691 = vld [vmem:[#allocation7 + $0x14] sm:$0xf]
    %v692 = vld [vmem:[#allocation7 + $0x18] sm:$0xf]
    %v693 = vld [vmem:[#allocation7 + $0x1c] sm:$0xf]
    %v694 = vld [vmem:[#allocation7 + $0x20] sm:$0xf]
    %v695 = vld [vmem:[#allocation7 + $0x24] sm:$0xf]
    %v696 = vld [vmem:[#allocation7 + $0x28] sm:$0xf]
    %v697 = vld [vmem:[#allocation7 + $0x2c] sm:$0xf]
    %v698 = vld [vmem:[#allocation7 + $0x30] sm:$0xf]
    %v699 = vld [vmem:[#allocation7 + $0x34] sm:$0xf]
    %v700 = vld [vmem:[#allocation7 + $0x38] sm:$0xf]
    %v701 = vld [vmem:[#allocation7 + $0x3c] sm:$0xf]
    %v702 = vunpack.c.l.bf16 %v686
    %v703 = vunpack.c.l.bf16 %v687
    %v704 = vunpack.c.l.bf16 %v688
    %v705 = vunpack.c.l.bf16 %v689
    %v706 = vunpack.c.l.bf16 %v690
    %v707 = vunpack.c.l.bf16 %v691
    %v708 = vunpack.c.l.bf16 %v692
    %v709 = vunpack.c.l.bf16 %v693
    %v710 = vunpack.c.l.bf16 %v694
    %v711 = vunpack.c.l.bf16 %v695
    %v712 = vunpack.c.l.bf16 %v696
    %v713 = vunpack.c.l.bf16 %v697
    %v714 = vunpack.c.l.bf16 %v698
    %v715 = vunpack.c.l.bf16 %v699
    %v716 = vunpack.c.l.bf16 %v700
    %v717 = vunpack.c.l.bf16 %v701
    %v718 = vadd.f32 %v544, %v547
    %v719 = vadd.f32 %v718, %v552
    %v720 = vadd.f32 %v719, %v555
    %v721 = vadd.f32 %v720, %v560
    %v722 = vadd.f32 %v721, %v563
    %v723 = vadd.f32 %v722, %v568
    %v724 = vadd.f32 %v723, %v571
    %v725 = vadd.f32 %v724, %v576
    %v726 = vadd.f32 %v725, %v579
    %v727 = vadd.f32 %v726, %v584
    %v728 = vadd.f32 %v727, %v587
    %v729 = vadd.f32 %v728, %v592
    %v730 = vadd.f32 %v729, %v595
    %v731 = vadd.f32 %v730, %v600
    %v732 = vadd.f32 %v731, %v603
    %v733 = vrot.slane %v732, 4
    %v734 = vadd.f32 %v732, %v733
    %v735 = vrot.slane %v734, 2
    %v736 = vadd.f32 %v734, %v735
    %v737 = vrot.slane %v736, 1
    %v738 = vadd.f32 %v736, %v737
    %v739 = vmul.f32 %v544, %v544
    %v740 = vmul.f32 %v547, %v547
    %v741 = vmul.f32 %v552, %v552
    %v742 = vmul.f32 %v555, %v555
    %v743 = vmul.f32 %v560, %v560
    %v744 = vmul.f32 %v563, %v563
    %v745 = vmul.f32 %v568, %v568
    %v746 = vmul.f32 %v571, %v571
    %v747 = vmul.f32 %v576, %v576
    %v748 = vmul.f32 %v579, %v579
    %v749 = vmul.f32 %v584, %v584
    %v750 = vmul.f32 %v587, %v587
    %v751 = vmul.f32 %v592, %v592
    %v752 = vmul.f32 %v595, %v595
    %v753 = vmul.f32 %v600, %v600
    %v754 = vmul.f32 %v603, %v603
    %v755 = vadd.f32 %v739, %v740
    %v756 = vadd.f32 %v755, %v741
    %v757 = vadd.f32 %v756, %v742
    %v758 = vadd.f32 %v757, %v743
    %v759 = vadd.f32 %v758, %v744
    %v760 = vadd.f32 %v759, %v745
    %v761 = vadd.f32 %v760, %v746
    %v762 = vadd.f32 %v761, %v747
    %v763 = vadd.f32 %v762, %v748
    %v764 = vadd.f32 %v763, %v749
    %v765 = vadd.f32 %v764, %v750
    %v766 = vadd.f32 %v765, %v751
    %v767 = vadd.f32 %v766, %v752
    %v768 = vadd.f32 %v767, %v753
    %v769 = vadd.f32 %v768, %v754
    %v770 = vrot.slane %v769, 4
    %v771 = vadd.f32 %v769, %v770
    %v772 = vrot.slane %v771, 2
    %v773 = vadd.f32 %v771, %v772
    %v774 = vrot.slane %v773, 1
    %v775 = vadd.f32 %v773, %v774
    %v776 = vadd.f32 %v702, %v703
    %v777 = vadd.f32 %v776, %v704
    %v778 = vadd.f32 %v777, %v705
    %v779 = vadd.f32 %v778, %v706
    %v780 = vadd.f32 %v779, %v707
    %v781 = vadd.f32 %v780, %v708
    %v782 = vadd.f32 %v781, %v709
    %v783 = vadd.f32 %v782, %v710
    %v784 = vadd.f32 %v783, %v711
    %v785 = vadd.f32 %v784, %v712
    %v786 = vadd.f32 %v785, %v713
    %v787 = vadd.f32 %v786, %v714
    %v788 = vadd.f32 %v787, %v715
    %v789 = vadd.f32 %v788, %v716
    %v790 = vadd.f32 %v789, %v717
    %v791 = vrot.slane %v790, 4
    %v792 = vadd.f32 %v790, %v791
    %v793 = vrot.slane %v792, 2
    %v794 = vadd.f32 %v792, %v793
    %v795 = vrot.slane %v794, 1
    %v796 = vadd.f32 %v794, %v795
    %v797 = vmul.f32 %v702, %v702
    %v798 = vmul.f32 %v703, %v703
    %v799 = vmul.f32 %v704, %v704
    %v800 = vmul.f32 %v705, %v705
    %v801 = vmul.f32 %v706, %v706
    %v802 = vmul.f32 %v707, %v707
    %v803 = vmul.f32 %v708, %v708
    %v804 = vmul.f32 %v709, %v709
    %v805 = vmul.f32 %v710, %v710
    %v806 = vmul.f32 %v711, %v711
    %v807 = vmul.f32 %v712, %v712
    %v808 = vmul.f32 %v713, %v713
    %v809 = vmul.f32 %v714, %v714
    %v810 = vmul.f32 %v715, %v715
    %v811 = vmul.f32 %v716, %v716
    %v812 = vmul.f32 %v717, %v717
    %v813 = vadd.f32 %v797, %v798
    %v814 = vadd.f32 %v813, %v799
    %v815 = vadd.f32 %v814, %v800
    %v816 = vadd.f32 %v815, %v801
    %v817 = vadd.f32 %v816, %v802
    %v818 = vadd.f32 %v817, %v803
    %v819 = vadd.f32 %v818, %v804
    %v820 = vadd.f32 %v819, %v805
    %v821 = vadd.f32 %v820, %v806
    %v822 = vadd.f32 %v821, %v807
    %v823 = vadd.f32 %v822, %v808
    %v824 = vadd.f32 %v823, %v809
    %v825 = vadd.f32 %v824, %v810
    %v826 = vadd.f32 %v825, %v811
    %v827 = vadd.f32 %v826, %v812
    %v828 = vrot.slane %v827, 4
    %v829 = vadd.f32 %v827, %v828
    %v830 = vrot.slane %v829, 2
    %v831 = vadd.f32 %v829, %v830
    %v832 = vrot.slane %v831, 1
    %v833 = vadd.f32 %v831, %v832
    %vm834 = vcmask 1040384
    %v835 = vsel %vm834, %v738, %v775
    %vm836 = vcmask 1041408
    %v837 = vsel %vm836, %v835, %v796
    %vm838 = vcmask 1042432
    %v839 = vsel %vm838, %v837, %v833
    %vm840 = vcmask 1043456
    %v841 = vsel %vm840, %v839, 0.0
    %842 = vst [vmem:[#allocation9] sm:$0xff] %v841
    // Predicated region
    $region26: #{resnet_forward.23} parent=1 // pred_check
      _
    $region27: #{resnet_forward.23} parent=1 // pred_check_branch
      %844 = sbr.rel (0) target = $region29
    $region28: #{resnet_forward.23} parent=1 // pred_region
      %s846 = ssub.s32 1024, 1024
      %847 = vsyncadd [#allocation4], %s846
      %s848 = sshll.u32 [#allocation8], 4
      %s849 = int_to_ptr.vmem [resolvable:$true] %s848
      %854 = dma.vmem_to_hbm [thread:$0]  %s849, 1024, %s3, [#allocation4], 64, 64, 4
    $region29: #{resnet_forward.23} parent=1 // pred_fallthru
      _
    // Predicated region
    $region30: #{resnet_forward.23} parent=1 // pred_check
      _
    $region31: #{resnet_forward.23} parent=1 // pred_check_branch
      %856 = sbr.rel (0) target = $region33
    $region32: #{resnet_forward.23} parent=1 // pred_region
      %s858 = ssub.s32 128, 128
      %859 = vsyncadd [#allocation10], %s858
      %s861 = sshll.u32 [#allocation9], 4
      %s862 = int_to_ptr.vmem [resolvable:$true] %s861
      %864 = dma.vmem_to_hbm [thread:$0]  %s862, 128, %s4, [#allocation10]
    $region33: #{resnet_forward.23} parent=1 // pred_fallthru
      _
    // Predicated region
    $region34: #{resnet_forward.23} parent=1 // pred_check
      _
    $region35: #{resnet_forward.23} parent=1 // pred_check_branch
      %866 = sbr.rel (0) target = $region37
    $region36: #{resnet_forward.23} parent=1 // pred_region
      %867 = dma.done [#allocation4], 1024
    $region37: #{resnet_forward.23} parent=1 // pred_fallthru
      _
    // Predicated region
    $region38: #{resnet_forward.23} parent=1 // pred_check
      _
    $region39: #{resnet_forward.23} parent=1 // pred_check_branch
      %869 = sbr.rel (0) target = $region41
    $region40: #{resnet_forward.23} parent=1 // pred_region
      %870 = dma.done [#allocation10], 128
    $region41: #{resnet_forward.23} parent=1 // pred_fallthru
      _
    %871 = vsyncpa [#allocation3], 1
    %872 = vsyncpa [#allocation6], 1
    %873 = vsyncpa [#allocation4], 1
    %874 = vsyncpa [#allocation10], 1

// kernel: resnet_forward.24
$region0: #{resnet_forward.24}
  #allocation0 [shape = 'u32[]', space=smem, size = 0x4, offset = 0x4, fixed_abs, tag = 'smem constant byte address 0x4 - core index']
  #allocation1 [shape = 'u32[144,128]{1,0:T(1,128)}', space=vmem, size = 0x12000, scoped, tag = 'internal scratch']
  %s0 = inlined_call_operand.hbm [shape: bf16[128,128], index: 0, kind: input, shape index: {}]
  %s1 = inlined_call_operand.hbm [shape: f32[1,128], index: 1, kind: input, shape index: {}]
  %s2 = inlined_call_operand.hbm [shape: f32[1,128], index: 2, kind: input, shape index: {}]
  %s3 = inlined_call_operand.hbm [shape: bf16[128,128], index: 3, kind: input, shape index: {}]
  %s4 = inlined_call_operand.hbm [shape: f32[1,128], index: 4, kind: input, shape index: {}]
  %s5 = inlined_call_operand.hbm [shape: f32[1,128], index: 5, kind: input, shape index: {}]
  %s6 = inlined_call_operand.hbm [shape: bf16[128,128], index: 6, kind: output, shape index: {}]
  %s7 = sld [smem:[#allocation0]]
  $region58: #{resnet_forward.24} parent=0
    _
  %s9 = ssub.s32 1, %s7
  %s10 = scalar_select 0, %s9, %s7
  $region1: #{resnet_forward.24} parent=0
    #allocation2 [shape = 'u8[32768]{0}', space=vmem, size = 0x8000, scoped, tag = 'input window, operand 0, single buffered']
    #allocation3 [shape = 's32[1]{0}', space=sflag, size = 0x4, scoped, tag = 'scoped memory for resnet_forward.24']
    #allocation4 [shape = 's32[1]{0}', space=sflag, size = 0x4, scoped, tag = 'scoped memory for resnet_forward.24']
    #allocation5 [shape = 'u8[512]{0}', space=vmem, size = 0x400, scoped, tag = 'input window, operand 1, single buffered']
    #allocation6 [shape = 's32[1]{0}', space=sflag, size = 0x4, scoped, tag = 'scoped memory for resnet_forward.24']
    #allocation7 [shape = 'u8[512]{0}', space=vmem, size = 0x400, scoped, tag = 'input window, operand 2, single buffered']
    #allocation8 [shape = 'u8[32768]{0}', space=vmem, size = 0x8000, scoped, tag = 'input window, operand 3, single buffered']
    #allocation9 [shape = 's32[1]{0}', space=sflag, size = 0x4, scoped, tag = 'scoped memory for resnet_forward.24']
    #allocation10 [shape = 'u8[512]{0}', space=vmem, size = 0x400, scoped, tag = 'input window, operand 4, single buffered']
    #allocation11 [shape = 'u8[512]{0}', space=vmem, size = 0x400, scoped, tag = 'input window, operand 5, single buffered']
    #allocation12 [shape = 's32[1]{0}', space=sflag, size = 0x4, scoped, tag = 'scoped memory for resnet_forward.24']
    #allocation13 [shape = 'u8[32768]{0}', space=vmem, size = 0x8000, scoped, tag = 'output window, operand 0, single buffered']
    %11 = vsyncpa [#allocation3], 0
    %12 = vsyncpa [#allocation6], 0
    %13 = vsyncpa [#allocation9], 0
    %14 = vsyncpa [#allocation12], 0
    %15 = vsyncpa [#allocation4], 0
    // Predicated region
    $region2: #{resnet_forward.24} parent=1 // pred_check
      _
    $region3: #{resnet_forward.24} parent=1 // pred_check_branch
      %17 = sbr.rel (0) target = $region5
    $region4: #{resnet_forward.24} parent=1 // pred_region
      %s19 = ssub.s32 1024, 1024
      %20 = vsyncadd [#allocation3], %s19
      %s21 = sshll.u32 [#allocation2], 4
      %s22 = int_to_ptr.vmem [resolvable:$true] %s21
      %27 = dma.hbm_to_vmem [thread:$0]  %s0, 1024, %s22, [#allocation3], 64, 64, 4
    $region5: #{resnet_forward.24} parent=1 // pred_fallthru
      _
    // Predicated region
    $region6: #{resnet_forward.24} parent=1 // pred_check
      _
    $region7: #{resnet_forward.24} parent=1 // pred_check_branch
      %29 = sbr.rel (0) target = $region9
    $region8: #{resnet_forward.24} parent=1 // pred_region
      %s31 = ssub.s32 16, 16
      %32 = vsyncadd [#allocation6], %s31
      %s34 = sshll.u32 [#allocation5], 4
      %s35 = int_to_ptr.vmem [resolvable:$true] %s34
      %37 = dma.hbm_to_vmem [thread:$0]  %s1, 16, %s35, [#allocation6]
    $region9: #{resnet_forward.24} parent=1 // pred_fallthru
      _
    // Predicated region
    $region10: #{resnet_forward.24} parent=1 // pred_check
      _
    $region11: #{resnet_forward.24} parent=1 // pred_check_branch
      %39 = sbr.rel (0) target = $region13
    $region12: #{resnet_forward.24} parent=1 // pred_region
      %s41 = ssub.s32 16, 16
      %42 = vsyncadd [#allocation6], %s41
      %s44 = sshll.u32 [#allocation7], 4
      %s45 = int_to_ptr.vmem [resolvable:$true] %s44
      %47 = dma.hbm_to_vmem [thread:$0]  %s2, 16, %s45, [#allocation6]
    $region13: #{resnet_forward.24} parent=1 // pred_fallthru
      _
    // Predicated region
    $region14: #{resnet_forward.24} parent=1 // pred_check
      _
    $region15: #{resnet_forward.24} parent=1 // pred_check_branch
      %49 = sbr.rel (0) target = $region17
    $region16: #{resnet_forward.24} parent=1 // pred_region
      %s51 = ssub.s32 1024, 1024
      %52 = vsyncadd [#allocation9], %s51
      %s53 = sshll.u32 [#allocation8], 4
      %s54 = int_to_ptr.vmem [resolvable:$true] %s53
      %59 = dma.hbm_to_vmem [thread:$0]  %s3, 1024, %s54, [#allocation9], 64, 64, 4
    $region17: #{resnet_forward.24} parent=1 // pred_fallthru
      _
    // Predicated region
    $region18: #{resnet_forward.24} parent=1 // pred_check
      _
    $region19: #{resnet_forward.24} parent=1 // pred_check_branch
      %61 = sbr.rel (0) target = $region21
    $region20: #{resnet_forward.24} parent=1 // pred_region
      %s63 = ssub.s32 16, 16
      %64 = vsyncadd [#allocation9], %s63
      %s66 = sshll.u32 [#allocation10], 4
      %s67 = int_to_ptr.vmem [resolvable:$true] %s66
      %69 = dma.hbm_to_vmem [thread:$0]  %s4, 16, %s67, [#allocation9]
    $region21: #{resnet_forward.24} parent=1 // pred_fallthru
      _
    // Predicated region
    $region22: #{resnet_forward.24} parent=1 // pred_check
      _
    $region23: #{resnet_forward.24} parent=1 // pred_check_branch
      %71 = sbr.rel (0) target = $region25
    $region24: #{resnet_forward.24} parent=1 // pred_region
      %s73 = ssub.s32 16, 16
      %74 = vsyncadd [#allocation12], %s73
      %s76 = sshll.u32 [#allocation11], 4
      %s77 = int_to_ptr.vmem [resolvable:$true] %s76
      %79 = dma.hbm_to_vmem [thread:$0]  %s5, 16, %s77, [#allocation12]
    $region25: #{resnet_forward.24} parent=1 // pred_fallthru
      _
    // Predicated region
    $region26: #{resnet_forward.24} parent=1 // pred_check
      _
    $region27: #{resnet_forward.24} parent=1 // pred_check_branch
      %81 = sbr.rel (0) target = $region29
    $region28: #{resnet_forward.24} parent=1 // pred_region
      %82 = dma.done [#allocation3], 1024
    $region29: #{resnet_forward.24} parent=1 // pred_fallthru
      _
    // Predicated region
    $region30: #{resnet_forward.24} parent=1 // pred_check
      _
    $region31: #{resnet_forward.24} parent=1 // pred_check_branch
      %84 = sbr.rel (0) target = $region33
    $region32: #{resnet_forward.24} parent=1 // pred_region
      %85 = dma.done [#allocation6], 16
    $region33: #{resnet_forward.24} parent=1 // pred_fallthru
      _
    // Predicated region
    $region34: #{resnet_forward.24} parent=1 // pred_check
      _
    $region35: #{resnet_forward.24} parent=1 // pred_check_branch
      %87 = sbr.rel (0) target = $region37
    $region36: #{resnet_forward.24} parent=1 // pred_region
      %88 = dma.done [#allocation6], 16
    $region37: #{resnet_forward.24} parent=1 // pred_fallthru
      _
    // Predicated region
    $region38: #{resnet_forward.24} parent=1 // pred_check
      _
    $region39: #{resnet_forward.24} parent=1 // pred_check_branch
      %90 = sbr.rel (0) target = $region41
    $region40: #{resnet_forward.24} parent=1 // pred_region
      %91 = dma.done [#allocation9], 1024
    $region41: #{resnet_forward.24} parent=1 // pred_fallthru
      _
    // Predicated region
    $region42: #{resnet_forward.24} parent=1 // pred_check
      _
    $region43: #{resnet_forward.24} parent=1 // pred_check_branch
      %93 = sbr.rel (0) target = $region45
    $region44: #{resnet_forward.24} parent=1 // pred_region
      %94 = dma.done [#allocation9], 16
    $region45: #{resnet_forward.24} parent=1 // pred_fallthru
      _
    // Predicated region
    $region46: #{resnet_forward.24} parent=1 // pred_check
      _
    $region47: #{resnet_forward.24} parent=1 // pred_check_branch
      %96 = sbr.rel (0) target = $region49
    $region48: #{resnet_forward.24} parent=1 // pred_region
      %97 = dma.done [#allocation12], 16
    $region49: #{resnet_forward.24} parent=1 // pred_fallthru
      _
    %v98 = vld [vmem:[#allocation2] sm:$0xf]
    %v99 = vld [vmem:[#allocation2 + $0x4] sm:$0xf]
    %v100 = vld [vmem:[#allocation2 + $0x8] sm:$0xf]
    %v101 = vld [vmem:[#allocation2 + $0xc] sm:$0xf]
    %v102 = vld [vmem:[#allocation2 + $0x10] sm:$0xf]
    %v103 = vld [vmem:[#allocation2 + $0x14] sm:$0xf]
    %v104 = vld [vmem:[#allocation2 + $0x18] sm:$0xf]
    %v105 = vld [vmem:[#allocation2 + $0x1c] sm:$0xf]
    %v106 = vld [vmem:[#allocation2 + $0x20] sm:$0xf]
    %v107 = vld [vmem:[#allocation2 + $0x24] sm:$0xf]
    %v108 = vld [vmem:[#allocation2 + $0x28] sm:$0xf]
    %v109 = vld [vmem:[#allocation2 + $0x2c] sm:$0xf]
    %v110 = vld [vmem:[#allocation2 + $0x30] sm:$0xf]
    %v111 = vld [vmem:[#allocation2 + $0x34] sm:$0xf]
    %v112 = vld [vmem:[#allocation2 + $0x38] sm:$0xf]
    %v113 = vld [vmem:[#allocation2 + $0x3c] sm:$0xf]
    %v114 = vunpack.c.l.bf16 %v98
    %v115 = vunpack.c.l.bf16 %v99
    %v116 = vunpack.c.l.bf16 %v100
    %v117 = vunpack.c.l.bf16 %v101
    %v118 = vunpack.c.l.bf16 %v102
    %v119 = vunpack.c.l.bf16 %v103
    %v120 = vunpack.c.l.bf16 %v104
    %v121 = vunpack.c.l.bf16 %v105
    %v122 = vunpack.c.l.bf16 %v106
    %v123 = vunpack.c.l.bf16 %v107
    %v124 = vunpack.c.l.bf16 %v108
    %v125 = vunpack.c.l.bf16 %v109
    %v126 = vunpack.c.l.bf16 %v110
    %v127 = vunpack.c.l.bf16 %v111
    %v128 = vunpack.c.l.bf16 %v112
    %v129 = vunpack.c.l.bf16 %v113
    %v130 = vld [vmem:[#allocation8] sm:$0xf]
    %v131 = vld [vmem:[#allocation8 + $0x4] sm:$0xf]
    %v132 = vld [vmem:[#allocation8 + $0x8] sm:$0xf]
    %v133 = vld [vmem:[#allocation8 + $0xc] sm:$0xf]
    %v134 = vld [vmem:[#allocation8 + $0x10] sm:$0xf]
    %v135 = vld [vmem:[#allocation8 + $0x14] sm:$0xf]
    %v136 = vld [vmem:[#allocation8 + $0x18] sm:$0xf]
    %v137 = vld [vmem:[#allocation8 + $0x1c] sm:$0xf]
    %v138 = vld [vmem:[#allocation8 + $0x20] sm:$0xf]
    %v139 = vld [vmem:[#allocation8 + $0x24] sm:$0xf]
    %v140 = vld [vmem:[#allocation8 + $0x28] sm:$0xf]
    %v141 = vld [vmem:[#allocation8 + $0x2c] sm:$0xf]
    %v142 = vld [vmem:[#allocation8 + $0x30] sm:$0xf]
    %v143 = vld [vmem:[#allocation8 + $0x34] sm:$0xf]
    %v144 = vld [vmem:[#allocation8 + $0x38] sm:$0xf]
    %v145 = vld [vmem:[#allocation8 + $0x3c] sm:$0xf]
    %v146 = vunpack.c.l.bf16 %v130
    %v147 = vunpack.c.l.bf16 %v131
    %v148 = vunpack.c.l.bf16 %v132
    %v149 = vunpack.c.l.bf16 %v133
    %v150 = vunpack.c.l.bf16 %v134
    %v151 = vunpack.c.l.bf16 %v135
    %v152 = vunpack.c.l.bf16 %v136
    %v153 = vunpack.c.l.bf16 %v137
    %v154 = vunpack.c.l.bf16 %v138
    %v155 = vunpack.c.l.bf16 %v139
    %v156 = vunpack.c.l.bf16 %v140
    %v157 = vunpack.c.l.bf16 %v141
    %v158 = vunpack.c.l.bf16 %v142
    %v159 = vunpack.c.l.bf16 %v143
    %v160 = vunpack.c.l.bf16 %v144
    %v161 = vunpack.c.l.bf16 %v145
    %v162 = vld [vmem:[#allocation5] sm:$0x1]
    %v164 = vlaneseq
    %v165 = vshrl.u32 %v164, 7
    %v166 = vsub.s32 0, %v165
    %v167 = vrot.slane %v162, %v166
    %v169 = vmul.f32 %v114, %v167
    %v170 = vmul.f32 %v115, %v167
    %v171 = vmul.f32 %v116, %v167
    %v172 = vmul.f32 %v117, %v167
    %v173 = vmul.f32 %v118, %v167
    %v174 = vmul.f32 %v119, %v167
    %v175 = vmul.f32 %v120, %v167
    %v176 = vmul.f32 %v121, %v167
    %v177 = vmul.f32 %v122, %v167
    %v178 = vmul.f32 %v123, %v167
    %v179 = vmul.f32 %v124, %v167
    %v180 = vmul.f32 %v125, %v167
    %v181 = vmul.f32 %v126, %v167
    %v182 = vmul.f32 %v127, %v167
    %v183 = vmul.f32 %v128, %v167
    %v184 = vmul.f32 %v129, %v167
    %v185 = vld [vmem:[#allocation7] sm:$0x1]
    %v187 = vlaneseq
    %v188 = vshrl.u32 %v187, 7
    %v189 = vsub.s32 0, %v188
    %v190 = vrot.slane %v185, %v189
    %v192 = vadd.f32 %v169, %v190
    %v193 = vadd.f32 %v170, %v190
    %v194 = vadd.f32 %v171, %v190
    %v195 = vadd.f32 %v172, %v190
    %v196 = vadd.f32 %v173, %v190
    %v197 = vadd.f32 %v174, %v190
    %v198 = vadd.f32 %v175, %v190
    %v199 = vadd.f32 %v176, %v190
    %v200 = vadd.f32 %v177, %v190
    %v201 = vadd.f32 %v178, %v190
    %v202 = vadd.f32 %v179, %v190
    %v203 = vadd.f32 %v180, %v190
    %v204 = vadd.f32 %v181, %v190
    %v205 = vadd.f32 %v182, %v190
    %v206 = vadd.f32 %v183, %v190
    %v207 = vadd.f32 %v184, %v190
    %v208 = vld [vmem:[#allocation10] sm:$0x1]
    %v210 = vlaneseq
    %v211 = vshrl.u32 %v210, 7
    %v212 = vsub.s32 0, %v211
    %v213 = vrot.slane %v208, %v212
    %v215 = vmul.f32 %v146, %v213
    %v216 = vmul.f32 %v147, %v213
    %v217 = vmul.f32 %v148, %v213
    %v218 = vmul.f32 %v149, %v213
    %v219 = vmul.f32 %v150, %v213
    %v220 = vmul.f32 %v151, %v213
    %v221 = vmul.f32 %v152, %v213
    %v222 = vmul.f32 %v153, %v213
    %v223 = vmul.f32 %v154, %v213
    %v224 = vmul.f32 %v155, %v213
    %v225 = vmul.f32 %v156, %v213
    %v226 = vmul.f32 %v157, %v213
    %v227 = vmul.f32 %v158, %v213
    %v228 = vmul.f32 %v159, %v213
    %v229 = vmul.f32 %v160, %v213
    %v230 = vmul.f32 %v161, %v213
    %v231 = vadd.f32 %v192, %v215
    %v232 = vadd.f32 %v193, %v216
    %v233 = vadd.f32 %v194, %v217
    %v234 = vadd.f32 %v195, %v218
    %v235 = vadd.f32 %v196, %v219
    %v236 = vadd.f32 %v197, %v220
    %v237 = vadd.f32 %v198, %v221
    %v238 = vadd.f32 %v199, %v222
    %v239 = vadd.f32 %v200, %v223
    %v240 = vadd.f32 %v201, %v224
    %v241 = vadd.f32 %v202, %v225
    %v242 = vadd.f32 %v203, %v226
    %v243 = vadd.f32 %v204, %v227
    %v244 = vadd.f32 %v205, %v228
    %v245 = vadd.f32 %v206, %v229
    %v246 = vadd.f32 %v207, %v230
    %v247 = vld [vmem:[#allocation11] sm:$0x1]
    %v249 = vlaneseq
    %v250 = vshrl.u32 %v249, 7
    %v251 = vsub.s32 0, %v250
    %v252 = vrot.slane %v247, %v251
    %v254 = vadd.f32 %v231, %v252
    %v255 = vadd.f32 %v232, %v252
    %v256 = vadd.f32 %v233, %v252
    %v257 = vadd.f32 %v234, %v252
    %v258 = vadd.f32 %v235, %v252
    %v259 = vadd.f32 %v236, %v252
    %v260 = vadd.f32 %v237, %v252
    %v261 = vadd.f32 %v238, %v252
    %v262 = vadd.f32 %v239, %v252
    %v263 = vadd.f32 %v240, %v252
    %v264 = vadd.f32 %v241, %v252
    %v265 = vadd.f32 %v242, %v252
    %v266 = vadd.f32 %v243, %v252
    %v267 = vadd.f32 %v244, %v252
    %v268 = vadd.f32 %v245, %v252
    %v269 = vadd.f32 %v246, %v252
    %v270 = vmax.f32 %v254, 0.0
    %v271 = vmax.f32 %v255, 0.0
    %v272 = vmax.f32 %v256, 0.0
    %v273 = vmax.f32 %v257, 0.0
    %v274 = vmax.f32 %v258, 0.0
    %v275 = vmax.f32 %v259, 0.0
    %v276 = vmax.f32 %v260, 0.0
    %v277 = vmax.f32 %v261, 0.0
    %v278 = vmax.f32 %v262, 0.0
    %v279 = vmax.f32 %v263, 0.0
    %v280 = vmax.f32 %v264, 0.0
    %v281 = vmax.f32 %v265, 0.0
    %v282 = vmax.f32 %v266, 0.0
    %v283 = vmax.f32 %v267, 0.0
    %v284 = vmax.f32 %v268, 0.0
    %v285 = vmax.f32 %v269, 0.0
    %v286 = vpack.c.bf16 %v271, %v270
    %v287 = vpack.c.bf16 %v273, %v272
    %v288 = vpack.c.bf16 %v275, %v274
    %v289 = vpack.c.bf16 %v277, %v276
    %v290 = vpack.c.bf16 %v279, %v278
    %v291 = vpack.c.bf16 %v281, %v280
    %v292 = vpack.c.bf16 %v283, %v282
    %v293 = vpack.c.bf16 %v285, %v284
    %v302 = vunpack.c.l.b16 %v286
    %v303 = vunpack.c.h.b16 %v286
    %v304 = vunpack.c.l.b16 %v287
    %v305 = vunpack.c.h.b16 %v287
    %v306 = vunpack.c.l.b16 %v288
    %v307 = vunpack.c.h.b16 %v288
    %v308 = vunpack.c.l.b16 %v289
    %v309 = vunpack.c.h.b16 %v289
    %v310 = vunpack.c.l.b16 %v290
    %v311 = vunpack.c.h.b16 %v290
    %v312 = vunpack.c.l.b16 %v291
    %v313 = vunpack.c.h.b16 %v291
    %v314 = vunpack.c.l.b16 %v292
    %v315 = vunpack.c.h.b16 %v292
    %v316 = vunpack.c.l.b16 %v293
    %v317 = vunpack.c.h.b16 %v293
    %v318 = vpack.c.b16 %v302, %v302
    %v319 = vpack.c.b16 %v303, %v303
    %v320 = vpack.c.b16 %v304, %v304
    %v321 = vpack.c.b16 %v305, %v305
    %v322 = vpack.c.b16 %v306, %v306
    %v323 = vpack.c.b16 %v307, %v307
    %v324 = vpack.c.b16 %v308, %v308
    %v325 = vpack.c.b16 %v309, %v309
    %v326 = vpack.c.b16 %v310, %v310
    %v327 = vpack.c.b16 %v311, %v311
    %v328 = vpack.c.b16 %v312, %v312
    %v329 = vpack.c.b16 %v313, %v313
    %v330 = vpack.c.b16 %v314, %v314
    %v331 = vpack.c.b16 %v315, %v315
    %v332 = vpack.c.b16 %v316, %v316
    %v333 = vpack.c.b16 %v317, %v317
    %350 = vst [vmem:[#allocation13] sm:$0xf] %v318
    %351 = vst [vmem:[#allocation13 + $0x4] sm:$0xf] %v319
    %352 = vst [vmem:[#allocation13 + $0x8] sm:$0xf] %v320
    %353 = vst [vmem:[#allocation13 + $0xc] sm:$0xf] %v321
    %354 = vst [vmem:[#allocation13 + $0x10] sm:$0xf] %v322
    %355 = vst [vmem:[#allocation13 + $0x14] sm:$0xf] %v323
    %356 = vst [vmem:[#allocation13 + $0x18] sm:$0xf] %v324
    %357 = vst [vmem:[#allocation13 + $0x1c] sm:$0xf] %v325
    %358 = vst [vmem:[#allocation13 + $0x20] sm:$0xf] %v326
    %359 = vst [vmem:[#allocation13 + $0x24] sm:$0xf] %v327
    %360 = vst [vmem:[#allocation13 + $0x28] sm:$0xf] %v328
    %361 = vst [vmem:[#allocation13 + $0x2c] sm:$0xf] %v329
    %362 = vst [vmem:[#allocation13 + $0x30] sm:$0xf] %v330
    %363 = vst [vmem:[#allocation13 + $0x34] sm:$0xf] %v331
    %364 = vst [vmem:[#allocation13 + $0x38] sm:$0xf] %v332
    %365 = vst [vmem:[#allocation13 + $0x3c] sm:$0xf] %v333
    // Predicated region
    $region50: #{resnet_forward.24} parent=1 // pred_check
      _
    $region51: #{resnet_forward.24} parent=1 // pred_check_branch
      %367 = sbr.rel (0) target = $region53
    $region52: #{resnet_forward.24} parent=1 // pred_region
      %s369 = ssub.s32 1024, 1024
      %370 = vsyncadd [#allocation4], %s369
      %s371 = sshll.u32 [#allocation13], 4
      %s372 = int_to_ptr.vmem [resolvable:$true] %s371
      %377 = dma.vmem_to_hbm [thread:$0]  %s372, 1024, %s6, [#allocation4], 64, 64, 4
    $region53: #{resnet_forward.24} parent=1 // pred_fallthru
      _
    // Predicated region
    $region54: #{resnet_forward.24} parent=1 // pred_check
      _
    $region55: #{resnet_forward.24} parent=1 // pred_check_branch
      %379 = sbr.rel (0) target = $region57
    $region56: #{resnet_forward.24} parent=1 // pred_region
      %380 = dma.done [#allocation4], 1024
    $region57: #{resnet_forward.24} parent=1 // pred_fallthru
      _
    %381 = vsyncpa [#allocation3], 1
    %382 = vsyncpa [#allocation6], 1
    %383 = vsyncpa [#allocation9], 1
    %384 = vsyncpa [#allocation12], 1
    %385 = vsyncpa [#allocation4], 1

// kernel: resnet_forward.25
$region0: #{resnet_forward.25}
  #allocation0 [shape = 'u32[]', space=smem, size = 0x4, offset = 0x4, fixed_abs, tag = 'smem constant byte address 0x4 - core index']
  #allocation1 [shape = 'u32[144,128]{1,0:T(1,128)}', space=vmem, size = 0x12000, scoped, tag = 'internal scratch']
  %s0 = inlined_call_operand.hbm [shape: bf16[32,384], index: 0, kind: input, shape index: {}]
  %s1 = inlined_call_operand.hbm [shape: bf16[384,128], index: 1, kind: input, shape index: {}]
  %s2 = inlined_call_operand.hbm [shape: bf16[32,128], index: 2, kind: output, shape index: {0}]
  %s3 = inlined_call_operand.hbm [shape: f32[1,8,128], index: 3, kind: output, shape index: {1}]
  %4 = xla_tuple %s2, %s3
  %s5 = sld [smem:[#allocation0]]
  $region34: #{resnet_forward.25} parent=0
    _
  %s7 = ssub.s32 1, %s5
  %s8 = scalar_select 0, %s7, %s5
  $region1: #{resnet_forward.25} parent=0
    #allocation2 [shape = 'u8[24576]{0}', space=vmem, size = 0x6000, scoped, tag = 'input window, operand 0, single buffered']
    #allocation3 [shape = 's32[1]{0}', space=sflag, size = 0x4, scoped, tag = 'scoped memory for resnet_forward.25']
    #allocation4 [shape = 's32[1]{0}', space=sflag, size = 0x4, scoped, tag = 'scoped memory for resnet_forward.25']
    #allocation5 [shape = 'u8[98304]{0}', space=vmem, size = 0x18000, scoped, tag = 'input window, operand 1, single buffered']
    #allocation6 [shape = 's32[1]{0}', space=sflag, size = 0x4, scoped, tag = 'scoped memory for resnet_forward.25']
    #allocation7 [shape = 'u8[8192]{0}', space=vmem, size = 0x2000, scoped, tag = 'output window, operand 0, single buffered']
    #allocation8 [shape = 'u8[4096]{0}', space=vmem, size = 0x1000, scoped, tag = 'output window, operand 1, single buffered']
    #allocation9 [shape = 's32[1]{0}', space=sflag, size = 0x4, scoped, tag = 'scoped memory for resnet_forward.25']
    %9 = vsyncpa [#allocation3], 0
    %10 = vsyncpa [#allocation6], 0
    %11 = vsyncpa [#allocation4], 0
    %12 = vsyncpa [#allocation9], 0
    // Predicated region
    $region2: #{resnet_forward.25} parent=1 // pred_check
      _
    $region3: #{resnet_forward.25} parent=1 // pred_check_branch
      %14 = sbr.rel (0) target = $region5
    $region4: #{resnet_forward.25} parent=1 // pred_region
      %s16 = ssub.s32 768, 768
      %17 = vsyncadd [#allocation3], %s16
      %s18 = sshll.u32 [#allocation2], 4
      %s19 = int_to_ptr.vmem [resolvable:$true] %s18
      %24 = dma.hbm_to_vmem [thread:$0]  %s0, 768, %s19, [#allocation3], 192, 192, 12
    $region5: #{resnet_forward.25} parent=1 // pred_fallthru
      _
    // Predicated region
    $region6: #{resnet_forward.25} parent=1 // pred_check
      _
    $region7: #{resnet_forward.25} parent=1 // pred_check_branch
      %26 = sbr.rel (0) target = $region9
    $region8: #{resnet_forward.25} parent=1 // pred_region
      %s28 = ssub.s32 3072, 3072
      %29 = vsyncadd [#allocation6], %s28
      %s30 = sshll.u32 [#allocation5], 4
      %s31 = int_to_ptr.vmem [resolvable:$true] %s30
      %36 = dma.hbm_to_vmem [thread:$0]  %s1, 3072, %s31, [#allocation6], 64, 64, 4
    $region9: #{resnet_forward.25} parent=1 // pred_fallthru
      _
    // Predicated region
    $region10: #{resnet_forward.25} parent=1 // pred_check
      _
    $region11: #{resnet_forward.25} parent=1 // pred_check_branch
      %38 = sbr.rel (0) target = $region13
    $region12: #{resnet_forward.25} parent=1 // pred_region
      %39 = dma.done [#allocation3], 768
    $region13: #{resnet_forward.25} parent=1 // pred_fallthru
      _
    // Predicated region
    $region14: #{resnet_forward.25} parent=1 // pred_check
      _
    $region15: #{resnet_forward.25} parent=1 // pred_check_branch
      %41 = sbr.rel (0) target = $region17
    $region16: #{resnet_forward.25} parent=1 // pred_region
      %42 = dma.done [#allocation6], 3072
    $region17: #{resnet_forward.25} parent=1 // pred_fallthru
      _
    %v44 = vld [vmem:[#allocation2] sm:$0xff]
    %v45 = vld [vmem:[#allocation2 + $0x8] sm:$0xf]
    %v46 = vld [vmem:[#allocation2 + $0xc] sm:$0xff]
    %v47 = vld [vmem:[#allocation2 + $0x14] sm:$0xf]
    %v48 = vld [vmem:[#allocation2 + $0x18] sm:$0xff]
    %v49 = vld [vmem:[#allocation2 + $0x20] sm:$0xf]
    %v50 = vld [vmem:[#allocation2 + $0x24] sm:$0xff]
    %v51 = vld [vmem:[#allocation2 + $0x2c] sm:$0xf]
    %v52 = vld [vmem:[#allocation5] sm:$0xf]
    %v53 = vld [vmem:[#allocation5 + $0x4] sm:$0xf]
    %v54 = vld [vmem:[#allocation5 + $0x8] sm:$0xf]
    %v55 = vld [vmem:[#allocation5 + $0xc] sm:$0xf]
    %v56 = vld [vmem:[#allocation5 + $0x10] sm:$0xf]
    %v57 = vld [vmem:[#allocation5 + $0x14] sm:$0xf]
    %v58 = vld [vmem:[#allocation5 + $0x18] sm:$0xf]
    %v59 = vld [vmem:[#allocation5 + $0x1c] sm:$0xf]
    %v60 = vld [vmem:[#allocation5 + $0x20] sm:$0xf]
    %v61 = vld [vmem:[#allocation5 + $0x24] sm:$0xf]
    %v62 = vld [vmem:[#allocation5 + $0x28] sm:$0xf]
    %v63 = vld [vmem:[#allocation5 + $0x2c] sm:$0xf]
    %v64 = vld [vmem:[#allocation5 + $0x30] sm:$0xf]
    %v65 = vld [vmem:[#allocation5 + $0x34] sm:$0xf]
    %v66 = vld [vmem:[#allocation5 + $0x38] sm:$0xf]
    %v67 = vld [vmem:[#allocation5 + $0x3c] sm:$0xf]
    %v68 = vld [vmem:[#allocation5 + $0x40] sm:$0xf]
    %v69 = vld [vmem:[#allocation5 + $0x44] sm:$0xf]
    %v70 = vld [vmem:[#allocation5 + $0x48] sm:$0xf]
    %v71 = vld [vmem:[#allocation5 + $0x4c] sm:$0xf]
    %v72 = vld [vmem:[#allocation5 + $0x50] sm:$0xf]
    %v73 = vld [vmem:[#allocation5 + $0x54] sm:$0xf]
    %v74 = vld [vmem:[#allocation5 + $0x58] sm:$0xf]
    %v75 = vld [vmem:[#allocation5 + $0x5c] sm:$0xf]
    %v76 = vld [vmem:[#allocation5 + $0x60] sm:$0xf]
    %v77 = vld [vmem:[#allocation5 + $0x64] sm:$0xf]
    %v78 = vld [vmem:[#allocation5 + $0x68] sm:$0xf]
    %v79 = vld [vmem:[#allocation5 + $0x6c] sm:$0xf]
    %v80 = vld [vmem:[#allocation5 + $0x70] sm:$0xf]
    %v81 = vld [vmem:[#allocation5 + $0x74] sm:$0xf]
    %v82 = vld [vmem:[#allocation5 + $0x78] sm:$0xf]
    %v83 = vld [vmem:[#allocation5 + $0x7c] sm:$0xf]
    %v84 = vld [vmem:[#allocation5 + $0x80] sm:$0xf]
    %v85 = vld [vmem:[#allocation5 + $0x84] sm:$0xf]
    %v86 = vld [vmem:[#allocation5 + $0x88] sm:$0xf]
    %v87 = vld [vmem:[#allocation5 + $0x8c] sm:$0xf]
    %v88 = vld [vmem:[#allocation5 + $0x90] sm:$0xf]
    %v89 = vld [vmem:[#allocation5 + $0x94] sm:$0xf]
    %v90 = vld [vmem:[#allocation5 + $0x98] sm:$0xf]
    %v91 = vld [vmem:[#allocation5 + $0x9c] sm:$0xf]
    %v92 = vld [vmem:[#allocation5 + $0xa0] sm:$0xf]
    %v93 = vld [vmem:[#allocation5 + $0xa4] sm:$0xf]
    %v94 = vld [vmem:[#allocation5 + $0xa8] sm:$0xf]
    %v95 = vld [vmem:[#allocation5 + $0xac] sm:$0xf]
    %v96 = vld [vmem:[#allocation5 + $0xb0] sm:$0xf]
    %v97 = vld [vmem:[#allocation5 + $0xb4] sm:$0xf]
    %v98 = vld [vmem:[#allocation5 + $0xb8] sm:$0xf]
    %v99 = vld [vmem:[#allocation5 + $0xbc] sm:$0xf]
    %v108 = vunpack.c.l.b16 %v44
    %v109 = vunpack.c.h.b16 %v44
    %v110 = vunpack.c.l.b16 %v45
    %v111 = vunpack.c.l.b16 %v46
    %v112 = vunpack.c.h.b16 %v46
    %v113 = vunpack.c.l.b16 %v47
    %v114 = vunpack.c.l.b16 %v48
    %v115 = vunpack.c.h.b16 %v48
    %v116 = vunpack.c.l.b16 %v49
    %v117 = vunpack.c.l.b16 %v50
    %v118 = vunpack.c.h.b16 %v50
    %v119 = vunpack.c.l.b16 %v51
    %v120 = vpack.c.b16 %v111, %v108
    %v121 = vpack.c.b16 %v112, %v109
    %v122 = vpack.c.b16 %v113, %v110
    %v123 = vpack.c.b16 %v117, %v114
    %v124 = vpack.c.b16 %v118, %v115
    %v125 = vpack.c.b16 %v119, %v116
    %v180 = vunpack.c.l.b16 %v52
    %v181 = vunpack.c.l.b16 %v53
    %v182 = vunpack.c.l.b16 %v54
    %v183 = vunpack.c.l.b16 %v55
    %v184 = vunpack.c.l.b16 %v56
    %v185 = vunpack.c.l.b16 %v57
    %v186 = vunpack.c.l.b16 %v58
    %v187 = vunpack.c.l.b16 %v59
    %v188 = vunpack.c.l.b16 %v60
    %v189 = vunpack.c.l.b16 %v61
    %v190 = vunpack.c.l.b16 %v62
    %v191 = vunpack.c.l.b16 %v63
    %v192 = vunpack.c.l.b16 %v64
    %v193 = vunpack.c.l.b16 %v65
    %v194 = vunpack.c.l.b16 %v66
    %v195 = vunpack.c.l.b16 %v67
    %v196 = vunpack.c.l.b16 %v68
    %v197 = vunpack.c.l.b16 %v69
    %v198 = vunpack.c.l.b16 %v70
    %v199 = vunpack.c.l.b16 %v71
    %v200 = vunpack.c.l.b16 %v72
    %v201 = vunpack.c.l.b16 %v73
    %v202 = vunpack.c.l.b16 %v74
    %v203 = vunpack.c.l.b16 %v75
    %v204 = vunpack.c.l.b16 %v76
    %v205 = vunpack.c.l.b16 %v77
    %v206 = vunpack.c.l.b16 %v78
    %v207 = vunpack.c.l.b16 %v79
    %v208 = vunpack.c.l.b16 %v80
    %v209 = vunpack.c.l.b16 %v81
    %v210 = vunpack.c.l.b16 %v82
    %v211 = vunpack.c.l.b16 %v83
    %v212 = vunpack.c.l.b16 %v84
    %v213 = vunpack.c.l.b16 %v85
    %v214 = vunpack.c.l.b16 %v86
    %v215 = vunpack.c.l.b16 %v87
    %v216 = vunpack.c.l.b16 %v88
    %v217 = vunpack.c.l.b16 %v89
    %v218 = vunpack.c.l.b16 %v90
    %v219 = vunpack.c.l.b16 %v91
    %v220 = vunpack.c.l.b16 %v92
    %v221 = vunpack.c.l.b16 %v93
    %v222 = vunpack.c.l.b16 %v94
    %v223 = vunpack.c.l.b16 %v95
    %v224 = vunpack.c.l.b16 %v96
    %v225 = vunpack.c.l.b16 %v97
    %v226 = vunpack.c.l.b16 %v98
    %v227 = vunpack.c.l.b16 %v99
    %v228 = vpack.c.b16 %v181, %v180
    %v229 = vpack.c.b16 %v183, %v182
    %v230 = vpack.c.b16 %v185, %v184
    %v231 = vpack.c.b16 %v187, %v186
    %v232 = vpack.c.b16 %v189, %v188
    %v233 = vpack.c.b16 %v191, %v190
    %v234 = vpack.c.b16 %v193, %v192
    %v235 = vpack.c.b16 %v195, %v194
    %v236 = vpack.c.b16 %v197, %v196
    %v237 = vpack.c.b16 %v199, %v198
    %v238 = vpack.c.b16 %v201, %v200
    %v239 = vpack.c.b16 %v203, %v202
    %v240 = vpack.c.b16 %v205, %v204
    %v241 = vpack.c.b16 %v207, %v206
    %v242 = vpack.c.b16 %v209, %v208
    %v243 = vpack.c.b16 %v211, %v210
    %v244 = vpack.c.b16 %v213, %v212
    %v245 = vpack.c.b16 %v215, %v214
    %v246 = vpack.c.b16 %v217, %v216
    %v247 = vpack.c.b16 %v219, %v218
    %v248 = vpack.c.b16 %v221, %v220
    %v249 = vpack.c.b16 %v223, %v222
    %v250 = vpack.c.b16 %v225, %v224
    %v251 = vpack.c.b16 %v227, %v226
    %276 = vmatprep.subr.bf16.mxu0 0
    %277 = vmatpush1.bf16.msra.mxu0 %v228
    %278 = vmatprep.subr.bf16.mxu0 0
    %279 = vmatpush1.bf16.msra.mxu0 %v229
    %280 = vmatprep.subr.bf16.mxu0 0
    %281 = vmatpush1.bf16.msra.mxu0 %v230
    %282 = vmatprep.subr.bf16.mxu0 0
    %283 = vmatpush1.bf16.msra.mxu0 %v231
    %284 = vmatprep.subr.bf16.mxu0 0
    %285 = vmatpush1.bf16.msra.mxu0 %v232
    %286 = vmatprep.subr.bf16.mxu0 0
    %287 = vmatpush1.bf16.msra.mxu0 %v233
    %288 = vmatprep.subr.bf16.mxu0 0
    %289 = vmatpush1.bf16.msra.mxu0 %v234
    %290 = vmatprep.subr.bf16.mxu0 0
    %291 = vmatpush1.bf16.msra.mxu0 %v235
    %292 = vmatprep.subr.bf16.mxu0 0
    %293 = vmatpush1.bf16.msra.mxu0 %v236
    %294 = vmatprep.subr.bf16.mxu0 0
    %295 = vmatpush1.bf16.msra.mxu0 %v237
    %296 = vmatprep.subr.bf16.mxu0 0
    %297 = vmatpush1.bf16.msra.mxu0 %v238
    %298 = vmatprep.subr.bf16.mxu0 0
    %299 = vmatpush1.bf16.msra.mxu0 %v239
    %300 = vmatprep.subr.bf16.mxu0 0
    %301 = vmatpush1.bf16.msra.mxu0 %v240
    %302 = vmatprep.subr.bf16.mxu0 0
    %303 = vmatpush1.bf16.msra.mxu0 %v241
    %304 = vmatprep.subr.bf16.mxu0 0
    %305 = vmatpush1.bf16.msra.mxu0 %v242
    %306 = vmatprep.subr.bf16.mxu0 0
    %307 = vmatpush1.bf16.msra.mxu0 %v243
    %308 = vmatprep.mubr.bf16.mxu0 %v121
    %309 = vmatmul.mubr.bf16.gmra.mrb[0].mxu0 %v120
    %v310 = vpop.f32.mrb[0].mxu0
    %v311 = vadd.f32 0.0, %v310
    %v312 = vpop.f32.mrb[0].mxu0
    %v313 = vpop.f32.mrb[0].mxu0
    %v314 = vadd.f32 0.0, %v313
    %v315 = vpop.f32.mrb[0].mxu0
    %316 = vmatprep.mubr.bf16.mxu0 %v124
    %317 = vmatmul.mubr.bf16.gmra.mrb[0].mxu0 %v123
    %v318 = vpop.f32.mrb[0].mxu0
    %v319 = vadd.f32 0.0, %v318
    %v320 = vpop.f32.mrb[0].mxu0
    %v321 = vpop.f32.mrb[0].mxu0
    %v322 = vadd.f32 0.0, %v321
    %v323 = vpop.f32.mrb[0].mxu0
    %324 = vdwg.mxu0
    %325 = vmatprep.subr.bf16.mxu0 0
    %326 = vmatpush1.bf16.msra.mxu0 %v244
    %327 = vmatprep.subr.bf16.mxu0 0
    %328 = vmatpush1.bf16.msra.mxu0 %v245
    %329 = vmatprep.subr.bf16.mxu0 0
    %330 = vmatpush1.bf16.msra.mxu0 %v246
    %331 = vmatprep.subr.bf16.mxu0 0
    %332 = vmatpush1.bf16.msra.mxu0 %v247
    %333 = vmatprep.subr.bf16.mxu0 0
    %334 = vmatpush1.bf16.msra.mxu0 %v248
    %335 = vmatprep.subr.bf16.mxu0 0
    %336 = vmatpush1.bf16.msra.mxu0 %v249
    %337 = vmatprep.subr.bf16.mxu0 0
    %338 = vmatpush1.bf16.msra.mxu0 %v250
    %339 = vmatprep.subr.bf16.mxu0 0
    %340 = vmatpush1.bf16.msra.mxu0 %v251
    %341 = vmatprep.subr.bf16.mxu0 0
    %342 = vmatpush1.bf16.msra.mxu0 0
    %343 = vmatprep.subr.bf16.mxu0 0
    %344 = vmatpush1.bf16.msra.mxu0 0
    %345 = vmatprep.subr.bf16.mxu0 0
    %346 = vmatpush1.bf16.msra.mxu0 0
    %347 = vmatprep.subr.bf16.mxu0 0
    %348 = vmatpush1.bf16.msra.mxu0 0
    %349 = vmatprep.subr.bf16.mxu0 0
    %350 = vmatpush1.bf16.msra.mxu0 0
    %351 = vmatprep.subr.bf16.mxu0 0
    %352 = vmatpush1.bf16.msra.mxu0 0
    %353 = vmatprep.subr.bf16.mxu0 0
    %354 = vmatpush1.bf16.msra.mxu0 0
    %355 = vmatprep.subr.bf16.mxu0 0
    %356 = vmatpush1.bf16.msra.mxu0 0
    %357 = vmatprep.mubr.bf16.mxu0 0
    %358 = vmatmul.mubr.bf16.gmra.mrb[0].mxu0 %v122
    %v359 = vpop.f32.mrb[0].mxu0
    %v360 = vadd.f32 %v311, %v359
    %v361 = vpop.f32.mrb[0].mxu0
    %v362 = vpop.f32.mrb[0].mxu0
    %v363 = vadd.f32 %v314, %v362
    %v364 = vpop.f32.mrb[0].mxu0
    %365 = vmatprep.mubr.bf16.mxu0 0
    %366 = vmatmul.mubr.bf16.gmra.mrb[0].mxu0 %v125
    %v367 = vpop.f32.mrb[0].mxu0
    %v368 = vadd.f32 %v319, %v367
    %v369 = vpop.f32.mrb[0].mxu0
    %v370 = vpop.f32.mrb[0].mxu0
    %v371 = vadd.f32 %v322, %v370
    %v372 = vpop.f32.mrb[0].mxu0
    %373 = vdwg.mxu0
    %v374 = vpack.c.bf16 %v363, %v360
    %v375 = vpack.c.bf16 %v371, %v368
    %v378 = vunpack.c.l.b16 %v374
    %v379 = vunpack.c.h.b16 %v374
    %v380 = vunpack.c.l.b16 %v375
    %v381 = vunpack.c.h.b16 %v375
    %v382 = vpack.c.b16 %v378, %v378
    %v383 = vpack.c.b16 %v379, %v379
    %v384 = vpack.c.b16 %v380, %v380
    %v385 = vpack.c.b16 %v381, %v381
    %390 = vst [vmem:[#allocation7] sm:$0xf] %v382
    %391 = vst [vmem:[#allocation7 + $0x4] sm:$0xf] %v383
    %392 = vst [vmem:[#allocation7 + $0x8] sm:$0xf] %v384
    %393 = vst [vmem:[#allocation7 + $0xc] sm:$0xf] %v385
    %v394 = vadd.f32 %v360, %v363
    %v395 = vadd.f32 %v394, %v368
    %v396 = vadd.f32 %v395, %v371
    %v397 = vrot.slane %v396, 4
    %v398 = vadd.f32 %v396, %v397
    %v399 = vrot.slane %v398, 2
    %v400 = vadd.f32 %v398, %v399
    %v401 = vrot.slane %v400, 1
    %v402 = vadd.f32 %v400, %v401
    %v403 = vmul.f32 %v360, %v360
    %v404 = vmul.f32 %v363, %v363
    %v405 = vmul.f32 %v368, %v368
    %v406 = vmul.f32 %v371, %v371
    %v407 = vadd.f32 %v403, %v404
    %v408 = vadd.f32 %v407, %v405
    %v409 = vadd.f32 %v408, %v406
    %v410 = vrot.slane %v409, 4
    %v411 = vadd.f32 %v409, %v410
    %v412 = vrot.slane %v411, 2
    %v413 = vadd.f32 %v411, %v412
    %v414 = vrot.slane %v413, 1
    %v415 = vadd.f32 %v413, %v414
    %vm416 = vcmask 1040384
    %v417 = vsel %vm416, %v402, %v415
    %vm418 = vcmask 1041408
    %v419 = vsel %vm418, %v417, 0.0
    %420 = vst [vmem:[#allocation8] sm:$0xff] %v419
    // Predicated region
    $region18: #{resnet_forward.25} parent=1 // pred_check
      _
    $region19: #{resnet_forward.25} parent=1 // pred_check_branch
      %422 = sbr.rel (0) target = $region21
    $region20: #{resnet_forward.25} parent=1 // pred_region
      %s424 = ssub.s32 256, 256
      %425 = vsyncadd [#allocation4], %s424
      %s426 = sshll.u32 [#allocation7], 4
      %s427 = int_to_ptr.vmem [resolvable:$true] %s426
      %432 = dma.vmem_to_hbm [thread:$0]  %s427, 256, %s2, [#allocation4], 64, 64, 4
    $region21: #{resnet_forward.25} parent=1 // pred_fallthru
      _
    // Predicated region
    $region22: #{resnet_forward.25} parent=1 // pred_check
      _
    $region23: #{resnet_forward.25} parent=1 // pred_check_branch
      %434 = sbr.rel (0) target = $region25
    $region24: #{resnet_forward.25} parent=1 // pred_region
      %s436 = ssub.s32 128, 128
      %437 = vsyncadd [#allocation9], %s436
      %s439 = sshll.u32 [#allocation8], 4
      %s440 = int_to_ptr.vmem [resolvable:$true] %s439
      %442 = dma.vmem_to_hbm [thread:$0]  %s440, 128, %s3, [#allocation9]
    $region25: #{resnet_forward.25} parent=1 // pred_fallthru
      _
    // Predicated region
    $region26: #{resnet_forward.25} parent=1 // pred_check
      _
    $region27: #{resnet_forward.25} parent=1 // pred_check_branch
      %444 = sbr.rel (0) target = $region29
    $region28: #{resnet_forward.25} parent=1 // pred_region
      %445 = dma.done [#allocation4], 256
    $region29: #{resnet_forward.25} parent=1 // pred_fallthru
      _
    // Predicated region
    $region30: #{resnet_forward.25} parent=1 // pred_check
      _
    $region31: #{resnet_forward.25} parent=1 // pred_check_branch
      %447 = sbr.rel (0) target = $region33
    $region32: #{resnet_forward.25} parent=1 // pred_region
      %448 = dma.done [#allocation9], 128
    $region33: #{resnet_forward.25} parent=1 // pred_fallthru
      _
    %449 = vsyncpa [#allocation3], 1
    %450 = vsyncpa [#allocation6], 1
    %451 = vsyncpa [#allocation4], 1
    %452 = vsyncpa [#allocation9], 1

// kernel: resnet_forward.26
$region0: #{resnet_forward.26}
  #allocation0 [shape = 'u32[]', space=smem, size = 0x4, offset = 0x4, fixed_abs, tag = 'smem constant byte address 0x4 - core index']
  #allocation1 [shape = 'u32[144,128]{1,0:T(1,128)}', space=vmem, size = 0x12000, scoped, tag = 'internal scratch']
  %s0 = inlined_call_operand.hbm [shape: bf16[32,128], index: 0, kind: input, shape index: {}]
  %s1 = inlined_call_operand.hbm [shape: f32[1,128], index: 1, kind: input, shape index: {}]
  %s2 = inlined_call_operand.hbm [shape: f32[1,128], index: 2, kind: input, shape index: {}]
  %s3 = inlined_call_operand.hbm [shape: bf16[32,128], index: 3, kind: output, shape index: {}]
  %s4 = sld [smem:[#allocation0]]
  $region34: #{resnet_forward.26} parent=0
    _
  %s6 = ssub.s32 1, %s4
  %s7 = scalar_select 0, %s6, %s4
  $region1: #{resnet_forward.26} parent=0
    #allocation2 [shape = 'u8[8192]{0}', space=vmem, size = 0x2000, scoped, tag = 'input window, operand 0, single buffered']
    #allocation3 [shape = 's32[1]{0}', space=sflag, size = 0x4, scoped, tag = 'scoped memory for resnet_forward.26']
    #allocation4 [shape = 's32[1]{0}', space=sflag, size = 0x4, scoped, tag = 'scoped memory for resnet_forward.26']
    #allocation5 [shape = 'u8[512]{0}', space=vmem, size = 0x400, scoped, tag = 'input window, operand 1, single buffered']
    #allocation6 [shape = 's32[1]{0}', space=sflag, size = 0x4, scoped, tag = 'scoped memory for resnet_forward.26']
    #allocation7 [shape = 'u8[512]{0}', space=vmem, size = 0x400, scoped, tag = 'input window, operand 2, single buffered']
    #allocation8 [shape = 'u8[8192]{0}', space=vmem, size = 0x2000, scoped, tag = 'output window, operand 0, single buffered']
    %8 = vsyncpa [#allocation3], 0
    %9 = vsyncpa [#allocation6], 0
    %10 = vsyncpa [#allocation4], 0
    // Predicated region
    $region2: #{resnet_forward.26} parent=1 // pred_check
      _
    $region3: #{resnet_forward.26} parent=1 // pred_check_branch
      %12 = sbr.rel (0) target = $region5
    $region4: #{resnet_forward.26} parent=1 // pred_region
      %s14 = ssub.s32 256, 256
      %15 = vsyncadd [#allocation3], %s14
      %s16 = sshll.u32 [#allocation2], 4
      %s17 = int_to_ptr.vmem [resolvable:$true] %s16
      %22 = dma.hbm_to_vmem [thread:$0]  %s0, 256, %s17, [#allocation3], 64, 64, 4
    $region5: #{resnet_forward.26} parent=1 // pred_fallthru
      _
    // Predicated region
    $region6: #{resnet_forward.26} parent=1 // pred_check
      _
    $region7: #{resnet_forward.26} parent=1 // pred_check_branch
      %24 = sbr.rel (0) target = $region9
    $region8: #{resnet_forward.26} parent=1 // pred_region
      %s26 = ssub.s32 16, 16
      %27 = vsyncadd [#allocation6], %s26
      %s29 = sshll.u32 [#allocation5], 4
      %s30 = int_to_ptr.vmem [resolvable:$true] %s29
      %32 = dma.hbm_to_vmem [thread:$0]  %s1, 16, %s30, [#allocation6]
    $region9: #{resnet_forward.26} parent=1 // pred_fallthru
      _
    // Predicated region
    $region10: #{resnet_forward.26} parent=1 // pred_check
      _
    $region11: #{resnet_forward.26} parent=1 // pred_check_branch
      %34 = sbr.rel (0) target = $region13
    $region12: #{resnet_forward.26} parent=1 // pred_region
      %s36 = ssub.s32 16, 16
      %37 = vsyncadd [#allocation6], %s36
      %s39 = sshll.u32 [#allocation7], 4
      %s40 = int_to_ptr.vmem [resolvable:$true] %s39
      %42 = dma.hbm_to_vmem [thread:$0]  %s2, 16, %s40, [#allocation6]
    $region13: #{resnet_forward.26} parent=1 // pred_fallthru
      _
    // Predicated region
    $region14: #{resnet_forward.26} parent=1 // pred_check
      _
    $region15: #{resnet_forward.26} parent=1 // pred_check_branch
      %44 = sbr.rel (0) target = $region17
    $region16: #{resnet_forward.26} parent=1 // pred_region
      %45 = dma.done [#allocation3], 256
    $region17: #{resnet_forward.26} parent=1 // pred_fallthru
      _
    // Predicated region
    $region18: #{resnet_forward.26} parent=1 // pred_check
      _
    $region19: #{resnet_forward.26} parent=1 // pred_check_branch
      %47 = sbr.rel (0) target = $region21
    $region20: #{resnet_forward.26} parent=1 // pred_region
      %48 = dma.done [#allocation6], 16
    $region21: #{resnet_forward.26} parent=1 // pred_fallthru
      _
    // Predicated region
    $region22: #{resnet_forward.26} parent=1 // pred_check
      _
    $region23: #{resnet_forward.26} parent=1 // pred_check_branch
      %50 = sbr.rel (0) target = $region25
    $region24: #{resnet_forward.26} parent=1 // pred_region
      %51 = dma.done [#allocation6], 16
    $region25: #{resnet_forward.26} parent=1 // pred_fallthru
      _
    %v52 = vld [vmem:[#allocation2] sm:$0xf]
    %v53 = vld [vmem:[#allocation2 + $0x4] sm:$0xf]
    %v54 = vld [vmem:[#allocation2 + $0x8] sm:$0xf]
    %v55 = vld [vmem:[#allocation2 + $0xc] sm:$0xf]
    %v56 = vunpack.c.l.bf16 %v52
    %v57 = vunpack.c.l.bf16 %v53
    %v58 = vunpack.c.l.bf16 %v54
    %v59 = vunpack.c.l.bf16 %v55
    %v60 = vld [vmem:[#allocation5] sm:$0x1]
    %v62 = vlaneseq
    %v63 = vshrl.u32 %v62, 7
    %v64 = vsub.s32 0, %v63
    %v65 = vrot.slane %v60, %v64
    %v67 = vmul.f32 %v56, %v65
    %v68 = vmul.f32 %v57, %v65
    %v69 = vmul.f32 %v58, %v65
    %v70 = vmul.f32 %v59, %v65
    %v71 = vld [vmem:[#allocation7] sm:$0x1]
    %v73 = vlaneseq
    %v74 = vshrl.u32 %v73, 7
    %v75 = vsub.s32 0, %v74
    %v76 = vrot.slane %v71, %v75
    %v78 = vadd.f32 %v67, %v76
    %v79 = vadd.f32 %v68, %v76
    %v80 = vadd.f32 %v69, %v76
    %v81 = vadd.f32 %v70, %v76
    %v82 = vmax.f32 %v78, 0.0
    %v83 = vmax.f32 %v79, 0.0
    %v84 = vmax.f32 %v80, 0.0
    %v85 = vmax.f32 %v81, 0.0
    %v86 = vpack.c.bf16 %v83, %v82
    %v87 = vpack.c.bf16 %v85, %v84
    %v90 = vunpack.c.l.b16 %v86
    %v91 = vunpack.c.h.b16 %v86
    %v92 = vunpack.c.l.b16 %v87
    %v93 = vunpack.c.h.b16 %v87
    %v94 = vpack.c.b16 %v90, %v90
    %v95 = vpack.c.b16 %v91, %v91
    %v96 = vpack.c.b16 %v92, %v92
    %v97 = vpack.c.b16 %v93, %v93
    %102 = vst [vmem:[#allocation8] sm:$0xf] %v94
    %103 = vst [vmem:[#allocation8 + $0x4] sm:$0xf] %v95
    %104 = vst [vmem:[#allocation8 + $0x8] sm:$0xf] %v96
    %105 = vst [vmem:[#allocation8 + $0xc] sm:$0xf] %v97
    // Predicated region
    $region26: #{resnet_forward.26} parent=1 // pred_check
      _
    $region27: #{resnet_forward.26} parent=1 // pred_check_branch
      %107 = sbr.rel (0) target = $region29
    $region28: #{resnet_forward.26} parent=1 // pred_region
      %s109 = ssub.s32 256, 256
      %110 = vsyncadd [#allocation4], %s109
      %s111 = sshll.u32 [#allocation8], 4
      %s112 = int_to_ptr.vmem [resolvable:$true] %s111
      %117 = dma.vmem_to_hbm [thread:$0]  %s112, 256, %s3, [#allocation4], 64, 64, 4
    $region29: #{resnet_forward.26} parent=1 // pred_fallthru
      _
    // Predicated region
    $region30: #{resnet_forward.26} parent=1 // pred_check
      _
    $region31: #{resnet_forward.26} parent=1 // pred_check_branch
      %119 = sbr.rel (0) target = $region33
    $region32: #{resnet_forward.26} parent=1 // pred_region
      %120 = dma.done [#allocation4], 256
    $region33: #{resnet_forward.26} parent=1 // pred_fallthru
      _
    %121 = vsyncpa [#allocation3], 1
    %122 = vsyncpa [#allocation6], 1
    %123 = vsyncpa [#allocation4], 1

// kernel: resnet_forward.28
$region0: #{resnet_forward.28}
  #allocation0 [shape = 'u32[]', space=smem, size = 0x4, offset = 0x4, fixed_abs, tag = 'smem constant byte address 0x4 - core index']
  #allocation1 [shape = 'u32[144,128]{1,0:T(1,128)}', space=vmem, size = 0x12000, scoped, tag = 'internal scratch']
  %s0 = inlined_call_operand.hbm [shape: bf16[32,128], index: 0, kind: input, shape index: {}]
  %s1 = inlined_call_operand.hbm [shape: f32[1,128], index: 1, kind: input, shape index: {}]
  %s2 = inlined_call_operand.hbm [shape: f32[1,128], index: 2, kind: input, shape index: {}]
  %s3 = inlined_call_operand.hbm [shape: bf16[32,128], index: 3, kind: input, shape index: {}]
  %s4 = inlined_call_operand.hbm [shape: f32[1,128], index: 4, kind: input, shape index: {}]
  %s5 = inlined_call_operand.hbm [shape: f32[1,128], index: 5, kind: input, shape index: {}]
  %s6 = inlined_call_operand.hbm [shape: bf16[32,128], index: 6, kind: output, shape index: {}]
  %s7 = sld [smem:[#allocation0]]
  $region58: #{resnet_forward.28} parent=0
    _
  %s9 = ssub.s32 1, %s7
  %s10 = scalar_select 0, %s9, %s7
  $region1: #{resnet_forward.28} parent=0
    #allocation2 [shape = 'u8[8192]{0}', space=vmem, size = 0x2000, scoped, tag = 'input window, operand 0, single buffered']
    #allocation3 [shape = 's32[1]{0}', space=sflag, size = 0x4, scoped, tag = 'scoped memory for resnet_forward.28']
    #allocation4 [shape = 's32[1]{0}', space=sflag, size = 0x4, scoped, tag = 'scoped memory for resnet_forward.28']
    #allocation5 [shape = 'u8[512]{0}', space=vmem, size = 0x400, scoped, tag = 'input window, operand 1, single buffered']
    #allocation6 [shape = 's32[1]{0}', space=sflag, size = 0x4, scoped, tag = 'scoped memory for resnet_forward.28']
    #allocation7 [shape = 'u8[512]{0}', space=vmem, size = 0x400, scoped, tag = 'input window, operand 2, single buffered']
    #allocation8 [shape = 'u8[8192]{0}', space=vmem, size = 0x2000, scoped, tag = 'input window, operand 3, single buffered']
    #allocation9 [shape = 's32[1]{0}', space=sflag, size = 0x4, scoped, tag = 'scoped memory for resnet_forward.28']
    #allocation10 [shape = 'u8[512]{0}', space=vmem, size = 0x400, scoped, tag = 'input window, operand 4, single buffered']
    #allocation11 [shape = 'u8[512]{0}', space=vmem, size = 0x400, scoped, tag = 'input window, operand 5, single buffered']
    #allocation12 [shape = 's32[1]{0}', space=sflag, size = 0x4, scoped, tag = 'scoped memory for resnet_forward.28']
    #allocation13 [shape = 'u8[8192]{0}', space=vmem, size = 0x2000, scoped, tag = 'output window, operand 0, single buffered']
    %11 = vsyncpa [#allocation3], 0
    %12 = vsyncpa [#allocation6], 0
    %13 = vsyncpa [#allocation9], 0
    %14 = vsyncpa [#allocation12], 0
    %15 = vsyncpa [#allocation4], 0
    // Predicated region
    $region2: #{resnet_forward.28} parent=1 // pred_check
      _
    $region3: #{resnet_forward.28} parent=1 // pred_check_branch
      %17 = sbr.rel (0) target = $region5
    $region4: #{resnet_forward.28} parent=1 // pred_region
      %s19 = ssub.s32 256, 256
      %20 = vsyncadd [#allocation3], %s19
      %s21 = sshll.u32 [#allocation2], 4
      %s22 = int_to_ptr.vmem [resolvable:$true] %s21
      %27 = dma.hbm_to_vmem [thread:$0]  %s0, 256, %s22, [#allocation3], 64, 64, 4
    $region5: #{resnet_forward.28} parent=1 // pred_fallthru
      _
    // Predicated region
    $region6: #{resnet_forward.28} parent=1 // pred_check
      _
    $region7: #{resnet_forward.28} parent=1 // pred_check_branch
      %29 = sbr.rel (0) target = $region9
    $region8: #{resnet_forward.28} parent=1 // pred_region
      %s31 = ssub.s32 16, 16
      %32 = vsyncadd [#allocation6], %s31
      %s34 = sshll.u32 [#allocation5], 4
      %s35 = int_to_ptr.vmem [resolvable:$true] %s34
      %37 = dma.hbm_to_vmem [thread:$0]  %s1, 16, %s35, [#allocation6]
    $region9: #{resnet_forward.28} parent=1 // pred_fallthru
      _
    // Predicated region
    $region10: #{resnet_forward.28} parent=1 // pred_check
      _
    $region11: #{resnet_forward.28} parent=1 // pred_check_branch
      %39 = sbr.rel (0) target = $region13
    $region12: #{resnet_forward.28} parent=1 // pred_region
      %s41 = ssub.s32 16, 16
      %42 = vsyncadd [#allocation6], %s41
      %s44 = sshll.u32 [#allocation7], 4
      %s45 = int_to_ptr.vmem [resolvable:$true] %s44
      %47 = dma.hbm_to_vmem [thread:$0]  %s2, 16, %s45, [#allocation6]
    $region13: #{resnet_forward.28} parent=1 // pred_fallthru
      _
    // Predicated region
    $region14: #{resnet_forward.28} parent=1 // pred_check
      _
    $region15: #{resnet_forward.28} parent=1 // pred_check_branch
      %49 = sbr.rel (0) target = $region17
    $region16: #{resnet_forward.28} parent=1 // pred_region
      %s51 = ssub.s32 256, 256
      %52 = vsyncadd [#allocation9], %s51
      %s53 = sshll.u32 [#allocation8], 4
      %s54 = int_to_ptr.vmem [resolvable:$true] %s53
      %59 = dma.hbm_to_vmem [thread:$0]  %s3, 256, %s54, [#allocation9], 64, 64, 4
    $region17: #{resnet_forward.28} parent=1 // pred_fallthru
      _
    // Predicated region
    $region18: #{resnet_forward.28} parent=1 // pred_check
      _
    $region19: #{resnet_forward.28} parent=1 // pred_check_branch
      %61 = sbr.rel (0) target = $region21
    $region20: #{resnet_forward.28} parent=1 // pred_region
      %s63 = ssub.s32 16, 16
      %64 = vsyncadd [#allocation9], %s63
      %s66 = sshll.u32 [#allocation10], 4
      %s67 = int_to_ptr.vmem [resolvable:$true] %s66
      %69 = dma.hbm_to_vmem [thread:$0]  %s4, 16, %s67, [#allocation9]
    $region21: #{resnet_forward.28} parent=1 // pred_fallthru
      _
    // Predicated region
    $region22: #{resnet_forward.28} parent=1 // pred_check
      _
    $region23: #{resnet_forward.28} parent=1 // pred_check_branch
      %71 = sbr.rel (0) target = $region25
    $region24: #{resnet_forward.28} parent=1 // pred_region
      %s73 = ssub.s32 16, 16
      %74 = vsyncadd [#allocation12], %s73
      %s76 = sshll.u32 [#allocation11], 4
      %s77 = int_to_ptr.vmem [resolvable:$true] %s76
      %79 = dma.hbm_to_vmem [thread:$0]  %s5, 16, %s77, [#allocation12]
    $region25: #{resnet_forward.28} parent=1 // pred_fallthru
      _
    // Predicated region
    $region26: #{resnet_forward.28} parent=1 // pred_check
      _
    $region27: #{resnet_forward.28} parent=1 // pred_check_branch
      %81 = sbr.rel (0) target = $region29
    $region28: #{resnet_forward.28} parent=1 // pred_region
      %82 = dma.done [#allocation3], 256
    $region29: #{resnet_forward.28} parent=1 // pred_fallthru
      _
    // Predicated region
    $region30: #{resnet_forward.28} parent=1 // pred_check
      _
    $region31: #{resnet_forward.28} parent=1 // pred_check_branch
      %84 = sbr.rel (0) target = $region33
    $region32: #{resnet_forward.28} parent=1 // pred_region
      %85 = dma.done [#allocation6], 16
    $region33: #{resnet_forward.28} parent=1 // pred_fallthru
      _
    // Predicated region
    $region34: #{resnet_forward.28} parent=1 // pred_check
      _
    $region35: #{resnet_forward.28} parent=1 // pred_check_branch
      %87 = sbr.rel (0) target = $region37
    $region36: #{resnet_forward.28} parent=1 // pred_region
      %88 = dma.done [#allocation6], 16
    $region37: #{resnet_forward.28} parent=1 // pred_fallthru
      _
    // Predicated region
    $region38: #{resnet_forward.28} parent=1 // pred_check
      _
    $region39: #{resnet_forward.28} parent=1 // pred_check_branch
      %90 = sbr.rel (0) target = $region41
    $region40: #{resnet_forward.28} parent=1 // pred_region
      %91 = dma.done [#allocation9], 256
    $region41: #{resnet_forward.28} parent=1 // pred_fallthru
      _
    // Predicated region
    $region42: #{resnet_forward.28} parent=1 // pred_check
      _
    $region43: #{resnet_forward.28} parent=1 // pred_check_branch
      %93 = sbr.rel (0) target = $region45
    $region44: #{resnet_forward.28} parent=1 // pred_region
      %94 = dma.done [#allocation9], 16
    $region45: #{resnet_forward.28} parent=1 // pred_fallthru
      _
    // Predicated region
    $region46: #{resnet_forward.28} parent=1 // pred_check
      _
    $region47: #{resnet_forward.28} parent=1 // pred_check_branch
      %96 = sbr.rel (0) target = $region49
    $region48: #{resnet_forward.28} parent=1 // pred_region
      %97 = dma.done [#allocation12], 16
    $region49: #{resnet_forward.28} parent=1 // pred_fallthru
      _
    %v98 = vld [vmem:[#allocation2] sm:$0xf]
    %v99 = vld [vmem:[#allocation2 + $0x4] sm:$0xf]
    %v100 = vld [vmem:[#allocation2 + $0x8] sm:$0xf]
    %v101 = vld [vmem:[#allocation2 + $0xc] sm:$0xf]
    %v102 = vunpack.c.l.bf16 %v98
    %v103 = vunpack.c.l.bf16 %v99
    %v104 = vunpack.c.l.bf16 %v100
    %v105 = vunpack.c.l.bf16 %v101
    %v106 = vld [vmem:[#allocation8] sm:$0xf]
    %v107 = vld [vmem:[#allocation8 + $0x4] sm:$0xf]
    %v108 = vld [vmem:[#allocation8 + $0x8] sm:$0xf]
    %v109 = vld [vmem:[#allocation8 + $0xc] sm:$0xf]
    %v110 = vunpack.c.l.bf16 %v106
    %v111 = vunpack.c.l.bf16 %v107
    %v112 = vunpack.c.l.bf16 %v108
    %v113 = vunpack.c.l.bf16 %v109
    %v114 = vld [vmem:[#allocation5] sm:$0x1]
    %v116 = vlaneseq
    %v117 = vshrl.u32 %v116, 7
    %v118 = vsub.s32 0, %v117
    %v119 = vrot.slane %v114, %v118
    %v121 = vmul.f32 %v102, %v119
    %v122 = vmul.f32 %v103, %v119
    %v123 = vmul.f32 %v104, %v119
    %v124 = vmul.f32 %v105, %v119
    %v125 = vld [vmem:[#allocation7] sm:$0x1]
    %v127 = vlaneseq
    %v128 = vshrl.u32 %v127, 7
    %v129 = vsub.s32 0, %v128
    %v130 = vrot.slane %v125, %v129
    %v132 = vadd.f32 %v121, %v130
    %v133 = vadd.f32 %v122, %v130
    %v134 = vadd.f32 %v123, %v130
    %v135 = vadd.f32 %v124, %v130
    %v136 = vld [vmem:[#allocation10] sm:$0x1]
    %v138 = vlaneseq
    %v139 = vshrl.u32 %v138, 7
    %v140 = vsub.s32 0, %v139
    %v141 = vrot.slane %v136, %v140
    %v143 = vmul.f32 %v110, %v141
    %v144 = vmul.f32 %v111, %v141
    %v145 = vmul.f32 %v112, %v141
    %v146 = vmul.f32 %v113, %v141
    %v147 = vadd.f32 %v132, %v143
    %v148 = vadd.f32 %v133, %v144
    %v149 = vadd.f32 %v134, %v145
    %v150 = vadd.f32 %v135, %v146
    %v151 = vld [vmem:[#allocation11] sm:$0x1]
    %v153 = vlaneseq
    %v154 = vshrl.u32 %v153, 7
    %v155 = vsub.s32 0, %v154
    %v156 = vrot.slane %v151, %v155
    %v158 = vadd.f32 %v147, %v156
    %v159 = vadd.f32 %v148, %v156
    %v160 = vadd.f32 %v149, %v156
    %v161 = vadd.f32 %v150, %v156
    %v162 = vmax.f32 %v158, 0.0
    %v163 = vmax.f32 %v159, 0.0
    %v164 = vmax.f32 %v160, 0.0
    %v165 = vmax.f32 %v161, 0.0
    %v166 = vpack.c.bf16 %v163, %v162
    %v167 = vpack.c.bf16 %v165, %v164
    %v170 = vunpack.c.l.b16 %v166
    %v171 = vunpack.c.h.b16 %v166
    %v172 = vunpack.c.l.b16 %v167
    %v173 = vunpack.c.h.b16 %v167
    %v174 = vpack.c.b16 %v170, %v170
    %v175 = vpack.c.b16 %v171, %v171
    %v176 = vpack.c.b16 %v172, %v172
    %v177 = vpack.c.b16 %v173, %v173
    %182 = vst [vmem:[#allocation13] sm:$0xf] %v174
    %183 = vst [vmem:[#allocation13 + $0x4] sm:$0xf] %v175
    %184 = vst [vmem:[#allocation13 + $0x8] sm:$0xf] %v176
    %185 = vst [vmem:[#allocation13 + $0xc] sm:$0xf] %v177
    // Predicated region
    $region50: #{resnet_forward.28} parent=1 // pred_check
      _
    $region51: #{resnet_forward.28} parent=1 // pred_check_branch
      %187 = sbr.rel (0) target = $region53
    $region52: #{resnet_forward.28} parent=1 // pred_region
      %s189 = ssub.s32 256, 256
      %190 = vsyncadd [#allocation4], %s189
      %s191 = sshll.u32 [#allocation13], 4
      %s192 = int_to_ptr.vmem [resolvable:$true] %s191
      %197 = dma.vmem_to_hbm [thread:$0]  %s192, 256, %s6, [#allocation4], 64, 64, 4
    $region53: #{resnet_forward.28} parent=1 // pred_fallthru
      _
    // Predicated region
    $region54: #{resnet_forward.28} parent=1 // pred_check
      _
    $region55: #{resnet_forward.28} parent=1 // pred_check_branch
      %199 = sbr.rel (0) target = $region57
    $region56: #{resnet_forward.28} parent=1 // pred_region
      %200 = dma.done [#allocation4], 256
    $region57: #{resnet_forward.28} parent=1 // pred_fallthru
      _
    %201 = vsyncpa [#allocation3], 1
    %202 = vsyncpa [#allocation6], 1
    %203 = vsyncpa [#allocation9], 1
    %204 = vsyncpa [#allocation12], 1
    %205 = vsyncpa [#allocation4], 1

// kernel: resnet_forward.29
$region0: #{resnet_forward.29}
  #allocation0 [shape = 'u32[]', space=smem, size = 0x4, offset = 0x4, fixed_abs, tag = 'smem constant byte address 0x4 - core index']
  #allocation1 [shape = 'u32[144,128]{1,0:T(1,128)}', space=vmem, size = 0x12000, scoped, tag = 'internal scratch']
  %s0 = inlined_call_operand.hbm [shape: bf16[2,16,128], index: 0, kind: input, shape index: {}]
  %s1 = inlined_call_operand.hbm [shape: f32[128,128], index: 1, kind: input, shape index: {}]
  %s2 = inlined_call_operand.hbm [shape: f32[1,128], index: 2, kind: input, shape index: {}]
  %s3 = inlined_call_operand.hbm [shape: f32[2,128], index: 3, kind: output, shape index: {}]
  %s4 = sld [smem:[#allocation0]]
  $region34: #{resnet_forward.29} parent=0
    _
  %s6 = ssub.s32 1, %s4
  %s7 = scalar_select 0, %s6, %s4
  $region1: #{resnet_forward.29} parent=0
    #allocation2 [shape = 'u8[8192]{0}', space=vmem, size = 0x2000, scoped, tag = 'input window, operand 0, single buffered']
    #allocation3 [shape = 's32[1]{0}', space=sflag, size = 0x4, scoped, tag = 'scoped memory for resnet_forward.29']
    #allocation4 [shape = 's32[1]{0}', space=sflag, size = 0x4, scoped, tag = 'scoped memory for resnet_forward.29']
    #allocation5 [shape = 'u8[65536]{0}', space=vmem, size = 0x10000, scoped, tag = 'input window, operand 1, single buffered']
    #allocation6 [shape = 's32[1]{0}', space=sflag, size = 0x4, scoped, tag = 'scoped memory for resnet_forward.29']
    #allocation7 [shape = 'u8[512]{0}', space=vmem, size = 0x400, scoped, tag = 'input window, operand 2, single buffered']
    #allocation8 [shape = 'u8[1024]{0}', space=vmem, size = 0x400, scoped, tag = 'output window, operand 0, single buffered']
    %8 = vsyncpa [#allocation3], 0
    %9 = vsyncpa [#allocation6], 0
    %10 = vsyncpa [#allocation4], 0
    // Predicated region
    $region2: #{resnet_forward.29} parent=1 // pred_check
      _
    $region3: #{resnet_forward.29} parent=1 // pred_check_branch
      %12 = sbr.rel (0) target = $region5
    $region4: #{resnet_forward.29} parent=1 // pred_region
      %s14 = ssub.s32 256, 256
      %15 = vsyncadd [#allocation3], %s14
      %s16 = sshll.u32 [#allocation2], 4
      %s17 = int_to_ptr.vmem [resolvable:$true] %s16
      %22 = dma.hbm_to_vmem [thread:$0]  %s0, 256, %s17, [#allocation3], 64, 64, 4
    $region5: #{resnet_forward.29} parent=1 // pred_fallthru
      _
    // Predicated region
    $region6: #{resnet_forward.29} parent=1 // pred_check
      _
    $region7: #{resnet_forward.29} parent=1 // pred_check_branch
      %24 = sbr.rel (0) target = $region9
    $region8: #{resnet_forward.29} parent=1 // pred_region
      %s26 = ssub.s32 2048, 2048
      %27 = vsyncadd [#allocation6], %s26
      %s28 = sshll.u32 [#allocation5], 4
      %s29 = int_to_ptr.vmem [resolvable:$true] %s28
      %34 = dma.hbm_to_vmem [thread:$0]  %s1, 2048, %s29, [#allocation6], 128, 128, 8
    $region9: #{resnet_forward.29} parent=1 // pred_fallthru
      _
    // Predicated region
    $region10: #{resnet_forward.29} parent=1 // pred_check
      _
    $region11: #{resnet_forward.29} parent=1 // pred_check_branch
      %36 = sbr.rel (0) target = $region13
    $region12: #{resnet_forward.29} parent=1 // pred_region
      %s38 = ssub.s32 16, 16
      %39 = vsyncadd [#allocation6], %s38
      %s41 = sshll.u32 [#allocation7], 4
      %s42 = int_to_ptr.vmem [resolvable:$true] %s41
      %44 = dma.hbm_to_vmem [thread:$0]  %s2, 16, %s42, [#allocation6]
    $region13: #{resnet_forward.29} parent=1 // pred_fallthru
      _
    // Predicated region
    $region14: #{resnet_forward.29} parent=1 // pred_check
      _
    $region15: #{resnet_forward.29} parent=1 // pred_check_branch
      %46 = sbr.rel (0) target = $region17
    $region16: #{resnet_forward.29} parent=1 // pred_region
      %47 = dma.done [#allocation3], 256
    $region17: #{resnet_forward.29} parent=1 // pred_fallthru
      _
    // Predicated region
    $region18: #{resnet_forward.29} parent=1 // pred_check
      _
    $region19: #{resnet_forward.29} parent=1 // pred_check_branch
      %49 = sbr.rel (0) target = $region21
    $region20: #{resnet_forward.29} parent=1 // pred_region
      %50 = dma.done [#allocation6], 2048
    $region21: #{resnet_forward.29} parent=1 // pred_fallthru
      _
    // Predicated region
    $region22: #{resnet_forward.29} parent=1 // pred_check
      _
    $region23: #{resnet_forward.29} parent=1 // pred_check_branch
      %52 = sbr.rel (0) target = $region25
    $region24: #{resnet_forward.29} parent=1 // pred_region
      %53 = dma.done [#allocation6], 16
    $region25: #{resnet_forward.29} parent=1 // pred_fallthru
      _
    %v54 = vld [vmem:[#allocation2] sm:$0xf]
    %v55 = vld [vmem:[#allocation2 + $0x4] sm:$0xf]
    %v56 = vld [vmem:[#allocation2 + $0x8] sm:$0xf]
    %v57 = vld [vmem:[#allocation2 + $0xc] sm:$0xf]
    %v58 = vunpack.c.l.bf16 %v54
    %v59 = vunpack.c.l.bf16 %v55
    %v60 = vunpack.c.l.bf16 %v56
    %v61 = vunpack.c.l.bf16 %v57
    %v62 = vadd.f32 %v58, %v59
    %v63 = vrot.slane %v62, 4
    %v64 = vadd.f32 %v62, %v63
    %v65 = vrot.slane %v64, 2
    %v66 = vadd.f32 %v64, %v65
    %v67 = vrot.slane %v66, 1
    %v68 = vadd.f32 %v66, %v67
    %v69 = vadd.f32 %v60, %v61
    %v70 = vrot.slane %v69, 4
    %v71 = vadd.f32 %v69, %v70
    %v72 = vrot.slane %v71, 2
    %v73 = vadd.f32 %v71, %v72
    %v74 = vrot.slane %v73, 1
    %v75 = vadd.f32 %v73, %v74
    %v76 = vrcp.pop 16.0
    %v77 = vmul.f32 %v68, %v76
    %v78 = vmul.f32 %v75, %v76
    %v79 = vld [vmem:[#allocation5] sm:$0xff]
    %v80 = vld [vmem:[#allocation5 + $0x8] sm:$0xff]
    %v81 = vld [vmem:[#allocation5 + $0x10] sm:$0xff]
    %v82 = vld [vmem:[#allocation5 + $0x18] sm:$0xff]
    %v83 = vld [vmem:[#allocation5 + $0x20] sm:$0xff]
    %v84 = vld [vmem:[#allocation5 + $0x28] sm:$0xff]
    %v85 = vld [vmem:[#allocation5 + $0x30] sm:$0xff]
    %v86 = vld [vmem:[#allocation5 + $0x38] sm:$0xff]
    %v87 = vld [vmem:[#allocation5 + $0x40] sm:$0xff]
    %v88 = vld [vmem:[#allocation5 + $0x48] sm:$0xff]
    %v89 = vld [vmem:[#allocation5 + $0x50] sm:$0xff]
    %v90 = vld [vmem:[#allocation5 + $0x58] sm:$0xff]
    %v91 = vld [vmem:[#allocation5 + $0x60] sm:$0xff]
    %v92 = vld [vmem:[#allocation5 + $0x68] sm:$0xff]
    %v93 = vld [vmem:[#allocation5 + $0x70] sm:$0xff]
    %v94 = vld [vmem:[#allocation5 + $0x78] sm:$0xff]
    %v95 = vld [vmem:[#allocation7] sm:$0x1]
    %v97 = vlaneseq
    %v98 = vshrl.u32 %v97, 7
    %v99 = vsub.s32 0, %v98
    %v100 = vrot.slane %v95, %v99
    %vm104 = vcmask 1041409
    %v105 = vsel %vm104, %v78, %v77
    %107 = vmatprep.subr.mxu0 0.0
    %108 = vmatpush1.msra.mxu0 %v79
    %109 = vmatprep.subr.mxu0 0.0
    %110 = vmatpush1.msra.mxu0 %v80
    %111 = vmatprep.subr.mxu0 0.0
    %112 = vmatpush1.msra.mxu0 %v81
    %113 = vmatprep.subr.mxu0 0.0
    %114 = vmatpush1.msra.mxu0 %v82
    %115 = vmatprep.subr.mxu0 0.0
    %116 = vmatpush1.msra.mxu0 %v83
    %117 = vmatprep.subr.mxu0 0.0
    %118 = vmatpush1.msra.mxu0 %v84
    %119 = vmatprep.subr.mxu0 0.0
    %120 = vmatpush1.msra.mxu0 %v85
    %121 = vmatprep.subr.mxu0 0.0
    %122 = vmatpush1.msra.mxu0 %v86
    %123 = vmatprep.subr.mxu0 0.0
    %124 = vmatpush1.msra.mxu0 %v87
    %125 = vmatprep.subr.mxu0 0.0
    %126 = vmatpush1.msra.mxu0 %v88
    %127 = vmatprep.subr.mxu0 0.0
    %128 = vmatpush1.msra.mxu0 %v89
    %129 = vmatprep.subr.mxu0 0.0
    %130 = vmatpush1.msra.mxu0 %v90
    %131 = vmatprep.subr.mxu0 0.0
    %132 = vmatpush1.msra.mxu0 %v91
    %133 = vmatprep.subr.mxu0 0.0
    %134 = vmatpush1.msra.mxu0 %v92
    %135 = vmatprep.subr.mxu0 0.0
    %136 = vmatpush1.msra.mxu0 %v93
    %137 = vmatprep.subr.mxu0 0.0
    %138 = vmatpush1.msra.mxu0 %v94
    %139 = vmatprep.subr.mxu0 0.0
    %140 = vmatpush1.msra.mxu0 0.0
    %141 = vmatprep.subr.mxu0 0.0
    %142 = vmatpush1.msra.mxu0 0.0
    %143 = vmatprep.subr.mxu0 0.0
    %144 = vmatpush1.msra.mxu0 0.0
    %145 = vmatprep.subr.mxu0 0.0
    %146 = vmatpush1.msra.mxu0 0.0
    %147 = vmatprep.subr.mxu0 0.0
    %148 = vmatpush1.msra.mxu0 0.0
    %149 = vmatprep.subr.mxu0 0.0
    %150 = vmatpush1.msra.mxu0 0.0
    %151 = vmatprep.subr.mxu0 0.0
    %152 = vmatpush1.msra.mxu0 0.0
    %153 = vmatprep.subr.mxu0 0.0
    %154 = vmatpush1.msra.mxu0 0.0
    %155 = vmatprep.subr.mxu0 0.0
    %156 = vmatpush1.msra.mxu0 0.0
    %157 = vmatprep.subr.mxu0 0.0
    %158 = vmatpush1.msra.mxu0 0.0
    %159 = vmatprep.subr.mxu0 0.0
    %160 = vmatpush1.msra.mxu0 0.0
    %161 = vmatprep.subr.mxu0 0.0
    %162 = vmatpush1.msra.mxu0 0.0
    %163 = vmatprep.subr.mxu0 0.0
    %164 = vmatpush1.msra.mxu0 0.0
    %165 = vmatprep.subr.mxu0 0.0
    %166 = vmatpush1.msra.mxu0 0.0
    %167 = vmatprep.subr.mxu0 0.0
    %168 = vmatpush1.msra.mxu0 0.0
    %169 = vmatprep.subr.mxu0 0.0
    %170 = vmatpush1.msra.mxu0 0.0
    %171 = vmatprep.mubr.f32.mxu0 0.0
    %172 = vmatmul.mubr.f32.gmra.mrb[0].mxu0 %v105
    %v173 = vpop.f32.mrb[0].mxu0
    %v174 = vadd.f32 %v100, %v173
    %v175 = vpop.f32.mrb[0].mxu0
    %176 = vdwg.mxu0
    %177 = vst [vmem:[#allocation8] sm:$0x3] %v174
    // Predicated region
    $region26: #{resnet_forward.29} parent=1 // pred_check
      _
    $region27: #{resnet_forward.29} parent=1 // pred_check_branch
      %179 = sbr.rel (0) target = $region29
    $region28: #{resnet_forward.29} parent=1 // pred_region
      %s181 = ssub.s32 32, 32
      %182 = vsyncadd [#allocation4], %s181
      %s184 = sshll.u32 [#allocation8], 4
      %s185 = int_to_ptr.vmem [resolvable:$true] %s184
      %187 = dma.vmem_to_hbm [thread:$0]  %s185, 32, %s3, [#allocation4]
    $region29: #{resnet_forward.29} parent=1 // pred_fallthru
      _
    // Predicated region
    $region30: #{resnet_forward.29} parent=1 // pred_check
      _
    $region31: #{resnet_forward.29} parent=1 // pred_check_branch
      %189 = sbr.rel (0) target = $region33
    $region32: #{resnet_forward.29} parent=1 // pred_region
      %190 = dma.done [#allocation4], 32
    $region33: #{resnet_forward.29} parent=1 // pred_fallthru
      _
    %191 = vsyncpa [#allocation3], 1
    %192 = vsyncpa [#allocation6], 1
    %193 = vsyncpa [#allocation4], 1

// kernel: resnet_forward.27
$region0: #{resnet_forward.27}
  #allocation0 [shape = 'u32[]', space=smem, size = 0x4, offset = 0x4, fixed_abs, tag = 'smem constant byte address 0x4 - core index']
  #allocation1 [shape = 'u32[144,128]{1,0:T(1,128)}', space=vmem, size = 0x12000, scoped, tag = 'internal scratch']
  %s0 = inlined_call_operand.hbm [shape: bf16[32,640], index: 0, kind: input, shape index: {}]
  %s1 = inlined_call_operand.hbm [shape: bf16[640,128], index: 1, kind: input, shape index: {}]
  %s2 = inlined_call_operand.hbm [shape: bf16[32,128], index: 2, kind: input, shape index: {}]
  %s3 = inlined_call_operand.hbm [shape: bf16[32,128], index: 3, kind: output, shape index: {0}]
  %s4 = inlined_call_operand.hbm [shape: f32[1,8,128], index: 4, kind: output, shape index: {1}]
  %5 = xla_tuple %s3, %s4
  %s6 = sld [smem:[#allocation0]]
  $region42: #{resnet_forward.27} parent=0
    _
  %s8 = ssub.s32 1, %s6
  %s9 = scalar_select 0, %s8, %s6
  $region1: #{resnet_forward.27} parent=0
    #allocation2 [shape = 'u8[40960]{0}', space=vmem, size = 0xa000, scoped, tag = 'input window, operand 0, single buffered']
    #allocation3 [shape = 's32[1]{0}', space=sflag, size = 0x4, scoped, tag = 'scoped memory for resnet_forward.27']
    #allocation4 [shape = 's32[1]{0}', space=sflag, size = 0x4, scoped, tag = 'scoped memory for resnet_forward.27']
    #allocation5 [shape = 'u8[163840]{0}', space=vmem, size = 0x28000, scoped, tag = 'input window, operand 1, single buffered']
    #allocation6 [shape = 's32[1]{0}', space=sflag, size = 0x4, scoped, tag = 'scoped memory for resnet_forward.27']
    #allocation7 [shape = 'u8[8192]{0}', space=vmem, size = 0x2000, scoped, tag = 'input window, operand 2, single buffered']
    #allocation8 [shape = 'u8[8192]{0}', space=vmem, size = 0x2000, scoped, tag = 'output window, operand 0, single buffered']
    #allocation9 [shape = 'u8[4096]{0}', space=vmem, size = 0x1000, scoped, tag = 'output window, operand 1, single buffered']
    #allocation10 [shape = 's32[1]{0}', space=sflag, size = 0x4, scoped, tag = 'scoped memory for resnet_forward.27']
    %10 = vsyncpa [#allocation3], 0
    %11 = vsyncpa [#allocation6], 0
    %12 = vsyncpa [#allocation4], 0
    %13 = vsyncpa [#allocation10], 0
    // Predicated region
    $region2: #{resnet_forward.27} parent=1 // pred_check
      _
    $region3: #{resnet_forward.27} parent=1 // pred_check_branch
      %15 = sbr.rel (0) target = $region5
    $region4: #{resnet_forward.27} parent=1 // pred_region
      %s17 = ssub.s32 1280, 1280
      %18 = vsyncadd [#allocation3], %s17
      %s19 = sshll.u32 [#allocation2], 4
      %s20 = int_to_ptr.vmem [resolvable:$true] %s19
      %25 = dma.hbm_to_vmem [thread:$0]  %s0, 1280, %s20, [#allocation3], 320, 320, 20
    $region5: #{resnet_forward.27} parent=1 // pred_fallthru
      _
    // Predicated region
    $region6: #{resnet_forward.27} parent=1 // pred_check
      _
    $region7: #{resnet_forward.27} parent=1 // pred_check_branch
      %27 = sbr.rel (0) target = $region9
    $region8: #{resnet_forward.27} parent=1 // pred_region
      %s29 = ssub.s32 5120, 5120
      %30 = vsyncadd [#allocation6], %s29
      %s31 = sshll.u32 [#allocation5], 4
      %s32 = int_to_ptr.vmem [resolvable:$true] %s31
      %37 = dma.hbm_to_vmem [thread:$0]  %s1, 5120, %s32, [#allocation6], 64, 64, 4
    $region9: #{resnet_forward.27} parent=1 // pred_fallthru
      _
    // Predicated region
    $region10: #{resnet_forward.27} parent=1 // pred_check
      _
    $region11: #{resnet_forward.27} parent=1 // pred_check_branch
      %39 = sbr.rel (0) target = $region13
    $region12: #{resnet_forward.27} parent=1 // pred_region
      %s41 = ssub.s32 256, 256
      %42 = vsyncadd [#allocation6], %s41
      %s43 = sshll.u32 [#allocation7], 4
      %s44 = int_to_ptr.vmem [resolvable:$true] %s43
      %49 = dma.hbm_to_vmem [thread:$0]  %s2, 256, %s44, [#allocation6], 64, 64, 4
    $region13: #{resnet_forward.27} parent=1 // pred_fallthru
      _
    // Predicated region
    $region14: #{resnet_forward.27} parent=1 // pred_check
      _
    $region15: #{resnet_forward.27} parent=1 // pred_check_branch
      %51 = sbr.rel (0) target = $region17
    $region16: #{resnet_forward.27} parent=1 // pred_region
      %52 = dma.done [#allocation3], 1280
    $region17: #{resnet_forward.27} parent=1 // pred_fallthru
      _
    // Predicated region
    $region18: #{resnet_forward.27} parent=1 // pred_check
      _
    $region19: #{resnet_forward.27} parent=1 // pred_check_branch
      %54 = sbr.rel (0) target = $region21
    $region20: #{resnet_forward.27} parent=1 // pred_region
      %55 = dma.done [#allocation6], 5120
    $region21: #{resnet_forward.27} parent=1 // pred_fallthru
      _
    // Predicated region
    $region22: #{resnet_forward.27} parent=1 // pred_check
      _
    $region23: #{resnet_forward.27} parent=1 // pred_check_branch
      %57 = sbr.rel (0) target = $region25
    $region24: #{resnet_forward.27} parent=1 // pred_region
      %58 = dma.done [#allocation6], 256
    $region25: #{resnet_forward.27} parent=1 // pred_fallthru
      _
    %v60 = vld [vmem:[#allocation2] sm:$0xff]
    %v61 = vld [vmem:[#allocation2 + $0x8] sm:$0xff]
    %v62 = vld [vmem:[#allocation2 + $0x10] sm:$0xf]
    %v63 = vld [vmem:[#allocation2 + $0x14] sm:$0xff]
    %v64 = vld [vmem:[#allocation2 + $0x1c] sm:$0xff]
    %v65 = vld [vmem:[#allocation2 + $0x24] sm:$0xf]
    %v66 = vld [vmem:[#allocation2 + $0x28] sm:$0xff]
    %v67 = vld [vmem:[#allocation2 + $0x30] sm:$0xff]
    %v68 = vld [vmem:[#allocation2 + $0x38] sm:$0xf]
    %v69 = vld [vmem:[#allocation2 + $0x3c] sm:$0xff]
    %v70 = vld [vmem:[#allocation2 + $0x44] sm:$0xff]
    %v71 = vld [vmem:[#allocation2 + $0x4c] sm:$0xf]
    %v72 = vld [vmem:[#allocation5] sm:$0xf]
    %v73 = vld [vmem:[#allocation5 + $0x4] sm:$0xf]
    %v74 = vld [vmem:[#allocation5 + $0x8] sm:$0xf]
    %v75 = vld [vmem:[#allocation5 + $0xc] sm:$0xf]
    %v76 = vld [vmem:[#allocation5 + $0x10] sm:$0xf]
    %v77 = vld [vmem:[#allocation5 + $0x14] sm:$0xf]
    %v78 = vld [vmem:[#allocation5 + $0x18] sm:$0xf]
    %v79 = vld [vmem:[#allocation5 + $0x1c] sm:$0xf]
    %v80 = vld [vmem:[#allocation5 + $0x20] sm:$0xf]
    %v81 = vld [vmem:[#allocation5 + $0x24] sm:$0xf]
    %v82 = vld [vmem:[#allocation5 + $0x28] sm:$0xf]
    %v83 = vld [vmem:[#allocation5 + $0x2c] sm:$0xf]
    %v84 = vld [vmem:[#allocation5 + $0x30] sm:$0xf]
    %v85 = vld [vmem:[#allocation5 + $0x34] sm:$0xf]
    %v86 = vld [vmem:[#allocation5 + $0x38] sm:$0xf]
    %v87 = vld [vmem:[#allocation5 + $0x3c] sm:$0xf]
    %v88 = vld [vmem:[#allocation5 + $0x40] sm:$0xf]
    %v89 = vld [vmem:[#allocation5 + $0x44] sm:$0xf]
    %v90 = vld [vmem:[#allocation5 + $0x48] sm:$0xf]
    %v91 = vld [vmem:[#allocation5 + $0x4c] sm:$0xf]
    %v92 = vld [vmem:[#allocation5 + $0x50] sm:$0xf]
    %v93 = vld [vmem:[#allocation5 + $0x54] sm:$0xf]
    %v94 = vld [vmem:[#allocation5 + $0x58] sm:$0xf]
    %v95 = vld [vmem:[#allocation5 + $0x5c] sm:$0xf]
    %v96 = vld [vmem:[#allocation5 + $0x60] sm:$0xf]
    %v97 = vld [vmem:[#allocation5 + $0x64] sm:$0xf]
    %v98 = vld [vmem:[#allocation5 + $0x68] sm:$0xf]
    %v99 = vld [vmem:[#allocation5 + $0x6c] sm:$0xf]
    %v100 = vld [vmem:[#allocation5 + $0x70] sm:$0xf]
    %v101 = vld [vmem:[#allocation5 + $0x74] sm:$0xf]
    %v102 = vld [vmem:[#allocation5 + $0x78] sm:$0xf]
    %v103 = vld [vmem:[#allocation5 + $0x7c] sm:$0xf]
    %v104 = vld [vmem:[#allocation5 + $0x80] sm:$0xf]
    %v105 = vld [vmem:[#allocation5 + $0x84] sm:$0xf]
    %v106 = vld [vmem:[#allocation5 + $0x88] sm:$0xf]
    %v107 = vld [vmem:[#allocation5 + $0x8c] sm:$0xf]
    %v108 = vld [vmem:[#allocation5 + $0x90] sm:$0xf]
    %v109 = vld [vmem:[#allocation5 + $0x94] sm:$0xf]
    %v110 = vld [vmem:[#allocation5 + $0x98] sm:$0xf]
    %v111 = vld [vmem:[#allocation5 + $0x9c] sm:$0xf]
    %v112 = vld [vmem:[#allocation5 + $0xa0] sm:$0xf]
    %v113 = vld [vmem:[#allocation5 + $0xa4] sm:$0xf]
    %v114 = vld [vmem:[#allocation5 + $0xa8] sm:$0xf]
    %v115 = vld [vmem:[#allocation5 + $0xac] sm:$0xf]
    %v116 = vld [vmem:[#allocation5 + $0xb0] sm:$0xf]
    %v117 = vld [vmem:[#allocation5 + $0xb4] sm:$0xf]
    %v118 = vld [vmem:[#allocation5 + $0xb8] sm:$0xf]
    %v119 = vld [vmem:[#allocation5 + $0xbc] sm:$0xf]
    %v120 = vld [vmem:[#allocation5 + $0xc0] sm:$0xf]
    %v121 = vld [vmem:[#allocation5 + $0xc4] sm:$0xf]
    %v122 = vld [vmem:[#allocation5 + $0xc8] sm:$0xf]
    %v123 = vld [vmem:[#allocation5 + $0xcc] sm:$0xf]
    %v124 = vld [vmem:[#allocation5 + $0xd0] sm:$0xf]
    %v125 = vld [vmem:[#allocation5 + $0xd4] sm:$0xf]
    %v126 = vld [vmem:[#allocation5 + $0xd8] sm:$0xf]
    %v127 = vld [vmem:[#allocation5 + $0xdc] sm:$0xf]
    %v128 = vld [vmem:[#allocation5 + $0xe0] sm:$0xf]
    %v129 = vld [vmem:[#allocation5 + $0xe4] sm:$0xf]
    %v130 = vld [vmem:[#allocation5 + $0xe8] sm:$0xf]
    %v131 = vld [vmem:[#allocation5 + $0xec] sm:$0xf]
    %v132 = vld [vmem:[#allocation5 + $0xf0] sm:$0xf]
    %v133 = vld [vmem:[#allocation5 + $0xf4] sm:$0xf]
    %v134 = vld [vmem:[#allocation5 + $0xf8] sm:$0xf]
    %v135 = vld [vmem:[#allocation5 + $0xfc] sm:$0xf]
    %v136 = vld [vmem:[#allocation5 + $0x100] sm:$0xf]
    %v137 = vld [vmem:[#allocation5 + $0x104] sm:$0xf]
    %v138 = vld [vmem:[#allocation5 + $0x108] sm:$0xf]
    %v139 = vld [vmem:[#allocation5 + $0x10c] sm:$0xf]
    %v140 = vld [vmem:[#allocation5 + $0x110] sm:$0xf]
    %v141 = vld [vmem:[#allocation5 + $0x114] sm:$0xf]
    %v142 = vld [vmem:[#allocation5 + $0x118] sm:$0xf]
    %v143 = vld [vmem:[#allocation5 + $0x11c] sm:$0xf]
    %v144 = vld [vmem:[#allocation5 + $0x120] sm:$0xf]
    %v145 = vld [vmem:[#allocation5 + $0x124] sm:$0xf]
    %v146 = vld [vmem:[#allocation5 + $0x128] sm:$0xf]
    %v147 = vld [vmem:[#allocation5 + $0x12c] sm:$0xf]
    %v148 = vld [vmem:[#allocation5 + $0x130] sm:$0xf]
    %v149 = vld [vmem:[#allocation5 + $0x134] sm:$0xf]
    %v150 = vld [vmem:[#allocation5 + $0x138] sm:$0xf]
    %v151 = vld [vmem:[#allocation5 + $0x13c] sm:$0xf]
    %v164 = vunpack.c.l.b16 %v60
    %v165 = vunpack.c.h.b16 %v60
    %v166 = vunpack.c.l.b16 %v61
    %v167 = vunpack.c.h.b16 %v61
    %v168 = vunpack.c.l.b16 %v62
    %v169 = vunpack.c.l.b16 %v63
    %v170 = vunpack.c.h.b16 %v63
    %v171 = vunpack.c.l.b16 %v64
    %v172 = vunpack.c.h.b16 %v64
    %v173 = vunpack.c.l.b16 %v65
    %v174 = vunpack.c.l.b16 %v66
    %v175 = vunpack.c.h.b16 %v66
    %v176 = vunpack.c.l.b16 %v67
    %v177 = vunpack.c.h.b16 %v67
    %v178 = vunpack.c.l.b16 %v68
    %v179 = vunpack.c.l.b16 %v69
    %v180 = vunpack.c.h.b16 %v69
    %v181 = vunpack.c.l.b16 %v70
    %v182 = vunpack.c.h.b16 %v70
    %v183 = vunpack.c.l.b16 %v71
    %v184 = vpack.c.b16 %v169, %v164
    %v185 = vpack.c.b16 %v170, %v165
    %v186 = vpack.c.b16 %v171, %v166
    %v187 = vpack.c.b16 %v172, %v167
    %v188 = vpack.c.b16 %v173, %v168
    %v189 = vpack.c.b16 %v179, %v174
    %v190 = vpack.c.b16 %v180, %v175
    %v191 = vpack.c.b16 %v181, %v176
    %v192 = vpack.c.b16 %v182, %v177
    %v193 = vpack.c.b16 %v183, %v178
    %v284 = vunpack.c.l.b16 %v72
    %v285 = vunpack.c.l.b16 %v73
    %v286 = vunpack.c.l.b16 %v74
    %v287 = vunpack.c.l.b16 %v75
    %v288 = vunpack.c.l.b16 %v76
    %v289 = vunpack.c.l.b16 %v77
    %v290 = vunpack.c.l.b16 %v78
    %v291 = vunpack.c.l.b16 %v79
    %v292 = vunpack.c.l.b16 %v80
    %v293 = vunpack.c.l.b16 %v81
    %v294 = vunpack.c.l.b16 %v82
    %v295 = vunpack.c.l.b16 %v83
    %v296 = vunpack.c.l.b16 %v84
    %v297 = vunpack.c.l.b16 %v85
    %v298 = vunpack.c.l.b16 %v86
    %v299 = vunpack.c.l.b16 %v87
    %v300 = vunpack.c.l.b16 %v88
    %v301 = vunpack.c.l.b16 %v89
    %v302 = vunpack.c.l.b16 %v90
    %v303 = vunpack.c.l.b16 %v91
    %v304 = vunpack.c.l.b16 %v92
    %v305 = vunpack.c.l.b16 %v93
    %v306 = vunpack.c.l.b16 %v94
    %v307 = vunpack.c.l.b16 %v95
    %v308 = vunpack.c.l.b16 %v96
    %v309 = vunpack.c.l.b16 %v97
    %v310 = vunpack.c.l.b16 %v98
    %v311 = vunpack.c.l.b16 %v99
    %v312 = vunpack.c.l.b16 %v100
    %v313 = vunpack.c.l.b16 %v101
    %v314 = vunpack.c.l.b16 %v102
    %v315 = vunpack.c.l.b16 %v103
    %v316 = vunpack.c.l.b16 %v104
    %v317 = vunpack.c.l.b16 %v105
    %v318 = vunpack.c.l.b16 %v106
    %v319 = vunpack.c.l.b16 %v107
    %v320 = vunpack.c.l.b16 %v108
    %v321 = vunpack.c.l.b16 %v109
    %v322 = vunpack.c.l.b16 %v110
    %v323 = vunpack.c.l.b16 %v111
    %v324 = vunpack.c.l.b16 %v112
    %v325 = vunpack.c.l.b16 %v113
    %v326 = vunpack.c.l.b16 %v114
    %v327 = vunpack.c.l.b16 %v115
    %v328 = vunpack.c.l.b16 %v116
    %v329 = vunpack.c.l.b16 %v117
    %v330 = vunpack.c.l.b16 %v118
    %v331 = vunpack.c.l.b16 %v119
    %v332 = vunpack.c.l.b16 %v120
    %v333 = vunpack.c.l.b16 %v121
    %v334 = vunpack.c.l.b16 %v122
    %v335 = vunpack.c.l.b16 %v123
    %v336 = vunpack.c.l.b16 %v124
    %v337 = vunpack.c.l.b16 %v125
    %v338 = vunpack.c.l.b16 %v126
    %v339 = vunpack.c.l.b16 %v127
    %v340 = vunpack.c.l.b16 %v128
    %v341 = vunpack.c.l.b16 %v129
    %v342 = vunpack.c.l.b16 %v130
    %v343 = vunpack.c.l.b16 %v131
    %v344 = vunpack.c.l.b16 %v132
    %v345 = vunpack.c.l.b16 %v133
    %v346 = vunpack.c.l.b16 %v134
    %v347 = vunpack.c.l.b16 %v135
    %v348 = vunpack.c.l.b16 %v136
    %v349 = vunpack.c.l.b16 %v137
    %v350 = vunpack.c.l.b16 %v138
    %v351 = vunpack.c.l.b16 %v139
    %v352 = vunpack.c.l.b16 %v140
    %v353 = vunpack.c.l.b16 %v141
    %v354 = vunpack.c.l.b16 %v142
    %v355 = vunpack.c.l.b16 %v143
    %v356 = vunpack.c.l.b16 %v144
    %v357 = vunpack.c.l.b16 %v145
    %v358 = vunpack.c.l.b16 %v146
    %v359 = vunpack.c.l.b16 %v147
    %v360 = vunpack.c.l.b16 %v148
    %v361 = vunpack.c.l.b16 %v149
    %v362 = vunpack.c.l.b16 %v150
    %v363 = vunpack.c.l.b16 %v151
    %v364 = vpack.c.b16 %v285, %v284
    %v365 = vpack.c.b16 %v287, %v286
    %v366 = vpack.c.b16 %v289, %v288
    %v367 = vpack.c.b16 %v291, %v290
    %v368 = vpack.c.b16 %v293, %v292
    %v369 = vpack.c.b16 %v295, %v294
    %v370 = vpack.c.b16 %v297, %v296
    %v371 = vpack.c.b16 %v299, %v298
    %v372 = vpack.c.b16 %v301, %v300
    %v373 = vpack.c.b16 %v303, %v302
    %v374 = vpack.c.b16 %v305, %v304
    %v375 = vpack.c.b16 %v307, %v306
    %v376 = vpack.c.b16 %v309, %v308
    %v377 = vpack.c.b16 %v311, %v310
    %v378 = vpack.c.b16 %v313, %v312
    %v379 = vpack.c.b16 %v315, %v314
    %v380 = vpack.c.b16 %v317, %v316
    %v381 = vpack.c.b16 %v319, %v318
    %v382 = vpack.c.b16 %v321, %v320
    %v383 = vpack.c.b16 %v323, %v322
    %v384 = vpack.c.b16 %v325, %v324
    %v385 = vpack.c.b16 %v327, %v326
    %v386 = vpack.c.b16 %v329, %v328
    %v387 = vpack.c.b16 %v331, %v330
    %v388 = vpack.c.b16 %v333, %v332
    %v389 = vpack.c.b16 %v335, %v334
    %v390 = vpack.c.b16 %v337, %v336
    %v391 = vpack.c.b16 %v339, %v338
    %v392 = vpack.c.b16 %v341, %v340
    %v393 = vpack.c.b16 %v343, %v342
    %v394 = vpack.c.b16 %v345, %v344
    %v395 = vpack.c.b16 %v347, %v346
    %v396 = vpack.c.b16 %v349, %v348
    %v397 = vpack.c.b16 %v351, %v350
    %v398 = vpack.c.b16 %v353, %v352
    %v399 = vpack.c.b16 %v355, %v354
    %v400 = vpack.c.b16 %v357, %v356
    %v401 = vpack.c.b16 %v359, %v358
    %v402 = vpack.c.b16 %v361, %v360
    %v403 = vpack.c.b16 %v363, %v362
    %444 = vmatprep.subr.bf16.mxu0 0
    %445 = vmatpush1.bf16.msra.mxu0 %v364
    %446 = vmatprep.subr.bf16.mxu0 0
    %447 = vmatpush1.bf16.msra.mxu0 %v365
    %448 = vmatprep.subr.bf16.mxu0 0
    %449 = vmatpush1.bf16.msra.mxu0 %v366
    %450 = vmatprep.subr.bf16.mxu0 0
    %451 = vmatpush1.bf16.msra.mxu0 %v367
    %452 = vmatprep.subr.bf16.mxu0 0
    %453 = vmatpush1.bf16.msra.mxu0 %v368
    %454 = vmatprep.subr.bf16.mxu0 0
    %455 = vmatpush1.bf16.msra.mxu0 %v369
    %456 = vmatprep.subr.bf16.mxu0 0
    %457 = vmatpush1.bf16.msra.mxu0 %v370
    %458 = vmatprep.subr.bf16.mxu0 0
    %459 = vmatpush1.bf16.msra.mxu0 %v371
    %460 = vmatprep.subr.bf16.mxu0 0
    %461 = vmatpush1.bf16.msra.mxu0 %v372
    %462 = vmatprep.subr.bf16.mxu0 0
    %463 = vmatpush1.bf16.msra.mxu0 %v373
    %464 = vmatprep.subr.bf16.mxu0 0
    %465 = vmatpush1.bf16.msra.mxu0 %v374
    %466 = vmatprep.subr.bf16.mxu0 0
    %467 = vmatpush1.bf16.msra.mxu0 %v375
    %468 = vmatprep.subr.bf16.mxu0 0
    %469 = vmatpush1.bf16.msra.mxu0 %v376
    %470 = vmatprep.subr.bf16.mxu0 0
    %471 = vmatpush1.bf16.msra.mxu0 %v377
    %472 = vmatprep.subr.bf16.mxu0 0
    %473 = vmatpush1.bf16.msra.mxu0 %v378
    %474 = vmatprep.subr.bf16.mxu0 0
    %475 = vmatpush1.bf16.msra.mxu0 %v379
    %476 = vmatprep.mubr.bf16.mxu0 %v185
    %477 = vmatmul.mubr.bf16.gmra.mrb[0].mxu0 %v184
    %v478 = vpop.f32.mrb[0].mxu0
    %v479 = vadd.f32 0.0, %v478
    %v480 = vpop.f32.mrb[0].mxu0
    %v481 = vpop.f32.mrb[0].mxu0
    %v482 = vadd.f32 0.0, %v481
    %v483 = vpop.f32.mrb[0].mxu0
    %484 = vmatprep.mubr.bf16.mxu0 %v190
    %485 = vmatmul.mubr.bf16.gmra.mrb[0].mxu0 %v189
    %v486 = vpop.f32.mrb[0].mxu0
    %v487 = vadd.f32 0.0, %v486
    %v488 = vpop.f32.mrb[0].mxu0
    %v489 = vpop.f32.mrb[0].mxu0
    %v490 = vadd.f32 0.0, %v489
    %v491 = vpop.f32.mrb[0].mxu0
    %492 = vdwg.mxu0
    %493 = vmatprep.subr.bf16.mxu0 0
    %494 = vmatpush1.bf16.msra.mxu0 %v380
    %495 = vmatprep.subr.bf16.mxu0 0
    %496 = vmatpush1.bf16.msra.mxu0 %v381
    %497 = vmatprep.subr.bf16.mxu0 0
    %498 = vmatpush1.bf16.msra.mxu0 %v382
    %499 = vmatprep.subr.bf16.mxu0 0
    %500 = vmatpush1.bf16.msra.mxu0 %v383
    %501 = vmatprep.subr.bf16.mxu0 0
    %502 = vmatpush1.bf16.msra.mxu0 %v384
    %503 = vmatprep.subr.bf16.mxu0 0
    %504 = vmatpush1.bf16.msra.mxu0 %v385
    %505 = vmatprep.subr.bf16.mxu0 0
    %506 = vmatpush1.bf16.msra.mxu0 %v386
    %507 = vmatprep.subr.bf16.mxu0 0
    %508 = vmatpush1.bf16.msra.mxu0 %v387
    %509 = vmatprep.subr.bf16.mxu0 0
    %510 = vmatpush1.bf16.msra.mxu0 %v388
    %511 = vmatprep.subr.bf16.mxu0 0
    %512 = vmatpush1.bf16.msra.mxu0 %v389
    %513 = vmatprep.subr.bf16.mxu0 0
    %514 = vmatpush1.bf16.msra.mxu0 %v390
    %515 = vmatprep.subr.bf16.mxu0 0
    %516 = vmatpush1.bf16.msra.mxu0 %v391
    %517 = vmatprep.subr.bf16.mxu0 0
    %518 = vmatpush1.bf16.msra.mxu0 %v392
    %519 = vmatprep.subr.bf16.mxu0 0
    %520 = vmatpush1.bf16.msra.mxu0 %v393
    %521 = vmatprep.subr.bf16.mxu0 0
    %522 = vmatpush1.bf16.msra.mxu0 %v394
    %523 = vmatprep.subr.bf16.mxu0 0
    %524 = vmatpush1.bf16.msra.mxu0 %v395
    %525 = vmatprep.mubr.bf16.mxu0 %v187
    %526 = vmatmul.mubr.bf16.gmra.mrb[0].mxu0 %v186
    %v527 = vpop.f32.mrb[0].mxu0
    %v528 = vadd.f32 %v479, %v527
    %v529 = vpop.f32.mrb[0].mxu0
    %v530 = vpop.f32.mrb[0].mxu0
    %v531 = vadd.f32 %v482, %v530
    %v532 = vpop.f32.mrb[0].mxu0
    %533 = vmatprep.mubr.bf16.mxu0 %v192
    %534 = vmatmul.mubr.bf16.gmra.mrb[0].mxu0 %v191
    %v535 = vpop.f32.mrb[0].mxu0
    %v536 = vadd.f32 %v487, %v535
    %v537 = vpop.f32.mrb[0].mxu0
    %v538 = vpop.f32.mrb[0].mxu0
    %v539 = vadd.f32 %v490, %v538
    %v540 = vpop.f32.mrb[0].mxu0
    %541 = vdwg.mxu0
    %542 = vmatprep.subr.bf16.mxu0 0
    %543 = vmatpush1.bf16.msra.mxu0 %v396
    %544 = vmatprep.subr.bf16.mxu0 0
    %545 = vmatpush1.bf16.msra.mxu0 %v397
    %546 = vmatprep.subr.bf16.mxu0 0
    %547 = vmatpush1.bf16.msra.mxu0 %v398
    %548 = vmatprep.subr.bf16.mxu0 0
    %549 = vmatpush1.bf16.msra.mxu0 %v399
    %550 = vmatprep.subr.bf16.mxu0 0
    %551 = vmatpush1.bf16.msra.mxu0 %v400
    %552 = vmatprep.subr.bf16.mxu0 0
    %553 = vmatpush1.bf16.msra.mxu0 %v401
    %554 = vmatprep.subr.bf16.mxu0 0
    %555 = vmatpush1.bf16.msra.mxu0 %v402
    %556 = vmatprep.subr.bf16.mxu0 0
    %557 = vmatpush1.bf16.msra.mxu0 %v403
    %558 = vmatprep.subr.bf16.mxu0 0
    %559 = vmatpush1.bf16.msra.mxu0 0
    %560 = vmatprep.subr.bf16.mxu0 0
    %561 = vmatpush1.bf16.msra.mxu0 0
    %562 = vmatprep.subr.bf16.mxu0 0
    %563 = vmatpush1.bf16.msra.mxu0 0
    %564 = vmatprep.subr.bf16.mxu0 0
    %565 = vmatpush1.bf16.msra.mxu0 0
    %566 = vmatprep.subr.bf16.mxu0 0
    %567 = vmatpush1.bf16.msra.mxu0 0
    %568 = vmatprep.subr.bf16.mxu0 0
    %569 = vmatpush1.bf16.msra.mxu0 0
    %570 = vmatprep.subr.bf16.mxu0 0
    %571 = vmatpush1.bf16.msra.mxu0 0
    %572 = vmatprep.subr.bf16.mxu0 0
    %573 = vmatpush1.bf16.msra.mxu0 0
    %574 = vmatprep.mubr.bf16.mxu0 0
    %575 = vmatmul.mubr.bf16.gmra.mrb[0].mxu0 %v188
    %v576 = vpop.f32.mrb[0].mxu0
    %v577 = vadd.f32 %v528, %v576
    %v578 = vpop.f32.mrb[0].mxu0
    %v579 = vpop.f32.mrb[0].mxu0
    %v580 = vadd.f32 %v531, %v579
    %v581 = vpop.f32.mrb[0].mxu0
    %582 = vmatprep.mubr.bf16.mxu0 0
    %583 = vmatmul.mubr.bf16.gmra.mrb[0].mxu0 %v193
    %v584 = vpop.f32.mrb[0].mxu0
    %v585 = vadd.f32 %v536, %v584
    %v586 = vpop.f32.mrb[0].mxu0
    %v587 = vpop.f32.mrb[0].mxu0
    %v588 = vadd.f32 %v539, %v587
    %v589 = vpop.f32.mrb[0].mxu0
    %590 = vdwg.mxu0
    %v591 = vpack.c.bf16 %v580, %v577
    %v592 = vpack.c.bf16 %v588, %v585
    %v595 = vunpack.c.l.b16 %v591
    %v596 = vunpack.c.h.b16 %v591
    %v597 = vunpack.c.l.b16 %v592
    %v598 = vunpack.c.h.b16 %v592
    %v599 = vpack.c.b16 %v595, %v595
    %v600 = vpack.c.b16 %v596, %v596
    %v601 = vpack.c.b16 %v597, %v597
    %v602 = vpack.c.b16 %v598, %v598
    %607 = vst [vmem:[#allocation8] sm:$0xf] %v599
    %608 = vst [vmem:[#allocation8 + $0x4] sm:$0xf] %v600
    %609 = vst [vmem:[#allocation8 + $0x8] sm:$0xf] %v601
    %610 = vst [vmem:[#allocation8 + $0xc] sm:$0xf] %v602
    %v611 = vld [vmem:[#allocation7] sm:$0xf]
    %v612 = vld [vmem:[#allocation7 + $0x4] sm:$0xf]
    %v613 = vld [vmem:[#allocation7 + $0x8] sm:$0xf]
    %v614 = vld [vmem:[#allocation7 + $0xc] sm:$0xf]
    %v615 = vunpack.c.l.bf16 %v611
    %v616 = vunpack.c.l.bf16 %v612
    %v617 = vunpack.c.l.bf16 %v613
    %v618 = vunpack.c.l.bf16 %v614
    %v619 = vadd.f32 %v577, %v580
    %v620 = vadd.f32 %v619, %v585
    %v621 = vadd.f32 %v620, %v588
    %v622 = vrot.slane %v621, 4
    %v623 = vadd.f32 %v621, %v622
    %v624 = vrot.slane %v623, 2
    %v625 = vadd.f32 %v623, %v624
    %v626 = vrot.slane %v625, 1
    %v627 = vadd.f32 %v625, %v626
    %v628 = vmul.f32 %v577, %v577
    %v629 = vmul.f32 %v580, %v580
    %v630 = vmul.f32 %v585, %v585
    %v631 = vmul.f32 %v588, %v588
    %v632 = vadd.f32 %v628, %v629
    %v633 = vadd.f32 %v632, %v630
    %v634 = vadd.f32 %v633, %v631
    %v635 = vrot.slane %v634, 4
    %v636 = vadd.f32 %v634, %v635
    %v637 = vrot.slane %v636, 2
    %v638 = vadd.f32 %v636, %v637
    %v639 = vrot.slane %v638, 1
    %v640 = vadd.f32 %v638, %v639
    %v641 = vadd.f32 %v615, %v616
    %v642 = vadd.f32 %v641, %v617
    %v643 = vadd.f32 %v642, %v618
    %v644 = vrot.slane %v643, 4
    %v645 = vadd.f32 %v643, %v644
    %v646 = vrot.slane %v645, 2
    %v647 = vadd.f32 %v645, %v646
    %v648 = vrot.slane %v647, 1
    %v649 = vadd.f32 %v647, %v648
    %v650 = vmul.f32 %v615, %v615
    %v651 = vmul.f32 %v616, %v616
    %v652 = vmul.f32 %v617, %v617
    %v653 = vmul.f32 %v618, %v618
    %v654 = vadd.f32 %v650, %v651
    %v655 = vadd.f32 %v654, %v652
    %v656 = vadd.f32 %v655, %v653
    %v657 = vrot.slane %v656, 4
    %v658 = vadd.f32 %v656, %v657
    %v659 = vrot.slane %v658, 2
    %v660 = vadd.f32 %v658, %v659
    %v661 = vrot.slane %v660, 1
    %v662 = vadd.f32 %v660, %v661
    %vm663 = vcmask 1040384
    %v664 = vsel %vm663, %v627, %v640
    %vm665 = vcmask 1041408
    %v666 = vsel %vm665, %v664, %v649
    %vm667 = vcmask 1042432
    %v668 = vsel %vm667, %v666, %v662
    %vm669 = vcmask 1043456
    %v670 = vsel %vm669, %v668, 0.0
    %671 = vst [vmem:[#allocation9] sm:$0xff] %v670
    // Predicated region
    $region26: #{resnet_forward.27} parent=1 // pred_check
      _
    $region27: #{resnet_forward.27} parent=1 // pred_check_branch
      %673 = sbr.rel (0) target = $region29
    $region28: #{resnet_forward.27} parent=1 // pred_region
      %s675 = ssub.s32 256, 256
      %676 = vsyncadd [#allocation4], %s675
      %s677 = sshll.u32 [#allocation8], 4
      %s678 = int_to_ptr.vmem [resolvable:$true] %s677
      %683 = dma.vmem_to_hbm [thread:$0]  %s678, 256, %s3, [#allocation4], 64, 64, 4
    $region29: #{resnet_forward.27} parent=1 // pred_fallthru
      _
    // Predicated region
    $region30: #{resnet_forward.27} parent=1 // pred_check
      _
    $region31: #{resnet_forward.27} parent=1 // pred_check_branch
      %685 = sbr.rel (0) target = $region33
    $region32: #{resnet_forward.27} parent=1 // pred_region
      %s687 = ssub.s32 128, 128
      %688 = vsyncadd [#allocation10], %s687
      %s690 = sshll.u32 [#allocation9], 4
      %s691 = int_to_ptr.vmem [resolvable:$true] %s690
      %693 = dma.vmem_to_hbm [thread:$0]  %s691, 128, %s4, [#allocation10]
    $region33: #{resnet_forward.27} parent=1 // pred_fallthru
      _
    // Predicated region
    $region34: #{resnet_forward.27} parent=1 // pred_check
      _
    $region35: #{resnet_forward.27} parent=1 // pred_check_branch
      %695 = sbr.rel (0) target = $region37
    $region36: #{resnet_forward.27} parent=1 // pred_region
      %696 = dma.done [#allocation4], 256
    $region37: #{resnet_forward.27} parent=1 // pred_fallthru
      _
    // Predicated region
    $region38: #{resnet_forward.27} parent=1 // pred_check
      _
    $region39: #{resnet_forward.27} parent=1 // pred_check_branch
      %698 = sbr.rel (0) target = $region41
    $region40: #{resnet_forward.27} parent=1 // pred_region
      %699 = dma.done [#allocation10], 128
    $region41: #{resnet_forward.27} parent=1 // pred_fallthru
      _
    %700 = vsyncpa [#allocation3], 1
    %701 = vsyncpa [#allocation6], 1
    %702 = vsyncpa [#allocation4], 1
    %703 = vsyncpa [#allocation10], 1

</llo_original>
